<compile_context>
chip_gen: v5e
topology: v5e:2x2
jax: 0.10.0
libtpu: 0.0.40
codegen_flags: <defaults>
</compile_context>

<pallas_src>
import functools

import jax
import jax.numpy as jnp
import numpy as np
from jax.experimental import pallas as pl
from jax.experimental.pallas import tpu as pltpu


def _time_enc_kernel(t_ref, wb_ref, o_ref):
    # t_ref: (bn, 1), wb_ref: (2, C) [row 0 = weight, row 1 = bias], o_ref: (bn, C)
    t = t_ref[...]             # (bn, 1)
    w = wb_ref[0:1, :]         # (1, C)
    b = wb_ref[1:2, :]         # (1, C)
    # outer-product broadcast: (bn,1)*(1,C) + (1,C) -> (bn, C), then cos.
    # Compute in f32, cast only at the store (supports bf16 output).
    o_ref[...] = jnp.cos(t * w + b).astype(o_ref.dtype)


def _round_up(x, m):
    return (x + m - 1) // m * m


@functools.partial(jax.jit, static_argnames=("block_n", "out_dtype"))
def time_encoder_mixer(t, weight, bias, *, block_n=1024, out_dtype=jnp.float32):
    """t: any shape (flattened, like t.view(-1, 1)); weight/bias: (C,) -> (N, C)."""
    t_flat = jnp.ravel(t).astype(jnp.float32)
    n = t_flat.shape[0]
    c = weight.shape[0]
    assert c % 128 == 0, "out_channels must be a multiple of 128 (lane width)"

    # Effective row tile: as large as requested but never bigger than (padded) N,
    # and kept sublane (8) aligned.
    bn = min(block_n, _round_up(n, 8))
    n_pad = _round_up(n, bn)
    if n_pad != n:
        t_flat = jnp.pad(t_flat, (0, n_pad - n))   # padded rows are sliced off below

    t2 = t_flat.reshape(n_pad, 1)                                   # (N, 1)
    wb = jnp.stack(
        [weight.astype(jnp.float32), bias.astype(jnp.float32)], axis=0
    )                                                               # (2, C) resident

    grid = (n_pad // bn,)
    out = pl.pallas_call(
        _time_enc_kernel,
        out_shape=jax.ShapeDtypeStruct((n_pad, c), out_dtype),
        grid=grid,
        in_specs=[
            pl.BlockSpec((bn, 1), lambda i: (i, 0)),   # t tile (streams)
            pl.BlockSpec((2, c), lambda i: (0, 0)),    # weight+bias (resident)
        ],
        out_specs=pl.BlockSpec((bn, c), lambda i: (i, 0)),
        compiler_params=pltpu.CompilerParams(
            dimension_semantics=("parallel",)
        ),
    )(t2, wb)
    return out[:n]


if __name__ == "__main__":
    out_channels = 128
    n = 2048

    key = jax.random.PRNGKey(0)
    k_t, k_b = jax.random.split(key)

    # Example time inputs (modest magnitude so f32 cos is well conditioned).
    t = jax.random.uniform(k_t, (n,), dtype=jnp.float32, maxval=10.0)

    # Fixed frequency weights as in TimeEncoderMixer.reset_parameters().
    weight = jnp.asarray(
        1.0 / 10 ** np.linspace(0, 9, out_channels, dtype=np.float32)
    )
    # Bias keeps PyTorch Linear's default (random) init; deterministic here.
    bias = jax.random.uniform(k_b, (out_channels,), dtype=jnp.float32,
                              minval=-1.0, maxval=1.0)

    # block_n=512 keeps a multi-step grid even at this small N (feeds both
    # v7x TensorCores); production sizes can use the default block_n=1024.
    out = time_encoder_mixer(t, weight, bias, block_n=512)
    out = jax.block_until_ready(out)

    # Reference check in plain JAX (same f32 math path).
    ref = jnp.cos(t.reshape(-1, 1) * weight.reshape(1, -1) + bias.reshape(1, -1))
    np.testing.assert_allclose(np.asarray(out), np.asarray(ref),
                               rtol=2e-5, atol=2e-5)

    print("KERNEL_OK")
</pallas_src>

<mosaic_0001>
module attributes {stable_mosaic.version = 11 : i64} {
  func.func @_time_enc_kernel(%arg0: i32, %arg1: memref<512x1xf32, #tpu.memory_space<vmem>>, %arg2: memref<2x128xf32, #tpu.memory_space<vmem>>, %arg3: memref<512x128xf32, #tpu.memory_space<vmem>>) attributes {dimension_semantics = [#tpu.dimension_semantics<parallel>], iteration_bounds = array<i64: 4>, scalar_prefetch = 0 : i64, scratch_operands = 0 : i64, tpu.core_type = #tpu.core_type<tc>, window_params = [{transform_indices = @transform_0, window_bounds = array<i64: 512, 1>}, {pipeline_mode = #tpu.pipeline_mode<synchronous>, transform_indices = @transform_1, window_bounds = array<i64: 2, 128>}, {transform_indices = @transform_2, window_bounds = array<i64: 512, 128>}]} {
    %c0 = arith.constant 0 : index
    %c0_0 = arith.constant 0 : index
    %0 = vector.load %arg1[%c0, %c0_0] : memref<512x1xf32, #tpu.memory_space<vmem>>, vector<512x1xf32>
    %c0_1 = arith.constant 0 : index
    %c0_2 = arith.constant 0 : index
    %1 = vector.load %arg2[%c0_1, %c0_2] : memref<2x128xf32, #tpu.memory_space<vmem>>, vector<1x128xf32>
    %c1 = arith.constant 1 : index
    %c0_3 = arith.constant 0 : index
    %2 = vector.load %arg2[%c1, %c0_3] : memref<2x128xf32, #tpu.memory_space<vmem>>, vector<1x128xf32>
    %3 = vector.broadcast %0 : vector<512x1xf32> to vector<512x128xf32>
    %4 = vector.broadcast %1 : vector<1x128xf32> to vector<512x128xf32>
    %5 = arith.mulf %3, %4 : vector<512x128xf32>
    %6 = vector.broadcast %2 : vector<1x128xf32> to vector<512x128xf32>
    %7 = arith.addf %5, %6 : vector<512x128xf32>
    %8 = math.cos %7 : vector<512x128xf32>
    %c0_4 = arith.constant 0 : index
    %c0_5 = arith.constant 0 : index
    %9 = vector.load %arg3[%c0_4, %c0_5] : memref<512x128xf32, #tpu.memory_space<vmem>>, vector<512x128xf32>
    tpu.vector_store %arg3[%c0_4, %c0_5], %8 {strides = array<i32>} : memref<512x128xf32, #tpu.memory_space<vmem>>, vector<512x128xf32>,
    return
  }
  func.func @transform_0(%arg0: i32) -> (i32, i32) {
    %c0_i32 = arith.constant 0 : i32
    %c0_i32_0 = arith.constant 0 : i32
    return %arg0, %c0_i32 : i32, i32
  }
  func.func @transform_1(%arg0: i32) -> (i32, i32) {
    %c0_i32 = arith.constant 0 : i32
    %c0_i32_0 = arith.constant 0 : i32
    %c0_i32_1 = arith.constant 0 : i32
    return %c0_i32, %c0_i32_0 : i32, i32
  }
  func.func @transform_2(%arg0: i32) -> (i32, i32) {
    %c0_i32 = arith.constant 0 : i32
    %c0_i32_0 = arith.constant 0 : i32
    return %arg0, %c0_i32 : i32, i32
  }
}

</mosaic_0001>

<llo_original>
// kernel: time_encoder_mixer.1
$region0: #{time_encoder_mixer.1}
  #allocation0 [shape = 'u32[]', space=smem, size = 0x4, offset = 0x4, fixed_abs, tag = 'smem constant byte address 0x4 - core index']
  #allocation1 [shape = 'u32[72,128]{1,0:T(1,128)}', space=vmem, size = 0x9000, scoped, tag = 'internal scratch']
  %s0 = inlined_call_operand.vmem [shape: f32[2048,1], index: 0, kind: input, shape index: {}]
  %s1 = inlined_call_operand.vmem [shape: f32[2,128], index: 1, kind: input, shape index: {}]
  %s2 = inlined_call_operand.hbm [shape: f32[2048,128], index: 2, kind: output, shape index: {}]
  %s3 = sld [smem:[#allocation0]]
  $region41: #{time_encoder_mixer.1} parent=0
    _
  %s5 = ssub.s32 1, %s3
  %s6 = scalar_select 0, %s5, %s3
  $region1: #{time_encoder_mixer.1} parent=0
    #allocation2 [shape = 'u8[524288]{0}', space=vmem, size = 0x80000, scoped, tag = 'output window, operand 0']
    #allocation3 [shape = 's32[2]{0}', space=sflag, size = 0x8, scoped, tag = 'scoped memory for time_encoder_mixer.1']
    %7 = vsyncpa [#allocation3], 0
    %s8 = scalar_lea.sflag [#allocation3], 1
    %9 = vsyncpa %s8, 0
    loop: start=0, step=1, limit=6
    $region2: #{time_encoder_mixer.1} parent=1 // loop_pre_header
      _
    $region3: #{time_encoder_mixer.1} parent=1 // loop_header
      %s11 = sphi 0, %s15
      %p12 = scmp.ge.s32.totalorder %s11, 6
      %s21 = sphi 0, %s23
      %s24 = sphi 0, %s21
      %s25 = sphi 0, %s24
      %s41 = sphi 0, %s25
      %s45 = sphi 0, %s45
      %s47 = sphi 0, %s45
      %s48 = sphi 0, %s47
      %s62 = sphi 0, %s48
      %s68 = sphi 0, %s70
      %s71 = sphi 0, %s68
      %s72 = sphi 0, %s71
      %s88 = sphi 0, %s72
    $region4: #{time_encoder_mixer.1} parent=1 // loop_header_branch
      %14 = sbr.rel (%p12) target = $region8
    $region5: #{time_encoder_mixer.1} parent=1 // loop_body
      %s16 = ssub.s32 %s11, 1
      %s17 = ssub.s32 %s11, 2
      %s18 = sadd.s32 %s11, 1
      %s19 = ssub.s32 %s11, %s18
      %p20 = scmp.eq.s32.totalorder %s19, 0
      %s22 = sadd.s32 %s21, 1
      %s23 = scalar_select %p20, %s21, %s22
      %p26 = pneg %p20
      %p27 = scmp.eq.s32.totalorder %s11, 3
      %p28 = por %p26, %p27
      %p29 = scmp.ne.s32.totalorder %s21, %s24
      %p30 = scmp.eq.s32.totalorder %s11, 0
      %p31 = por %p29, %p30
      %p32 = scmp.ne.s32.totalorder %s21, %s24
      %p33 = scmp.eq.s32.totalorder %s16, 3
      %p34 = por %p32, %p33
      %p35 = scmp.ne.s32.totalorder %s24, %s25
      %p36 = scmp.eq.s32.totalorder %s16, 0
      %p37 = por %p35, %p36
      %p38 = scmp.ne.s32.totalorder %s24, %s25
      %p39 = scmp.eq.s32.totalorder %s17, 3
      %p40 = por %p38, %p39
      %p42 = scmp.ne.s32.totalorder %s25, %s41
      %p43 = scmp.eq.s32.totalorder %s17, 0
      %p44 = por %p42, %p43
      %s46 = sadd.s32 %s45, 1
      %p49 = scmp.eq.s32.totalorder %s11, 3
      %p50 = scmp.ne.s32.totalorder %s45, %s47
      %p51 = scmp.eq.s32.totalorder %s11, 0
      %p52 = por %p50, %p51
      %p53 = scmp.ne.s32.totalorder %s45, %s47
      %p54 = scmp.eq.s32.totalorder %s16, 3
      %p55 = por %p53, %p54
      %p56 = scmp.ne.s32.totalorder %s47, %s48
      %p57 = scmp.eq.s32.totalorder %s16, 0
      %p58 = por %p56, %p57
      %p59 = scmp.ne.s32.totalorder %s47, %s48
      %p60 = scmp.eq.s32.totalorder %s17, 3
      %p61 = por %p59, %p60
      %p63 = scmp.ne.s32.totalorder %s48, %s62
      %p64 = scmp.eq.s32.totalorder %s17, 0
      %p65 = por %p63, %p64
      %s66 = ssub.s32 %s11, %s18
      %p67 = scmp.eq.s32.totalorder %s66, 0
      %s69 = sadd.s32 %s68, 1
      %s70 = scalar_select %p67, %s68, %s69
      %p73 = pneg %p67
      %p74 = scmp.eq.s32.totalorder %s11, 3
      %p75 = por %p73, %p74
      %p76 = scmp.ne.s32.totalorder %s68, %s71
      %p77 = scmp.eq.s32.totalorder %s11, 0
      %p78 = por %p76, %p77
      %p79 = scmp.ne.s32.totalorder %s68, %s71
      %p80 = scmp.eq.s32.totalorder %s16, 3
      %p81 = por %p79, %p80
      %p82 = scmp.ne.s32.totalorder %s71, %s72
      %p83 = scmp.eq.s32.totalorder %s16, 0
      %p84 = por %p82, %p83
      %p85 = scmp.ne.s32.totalorder %s71, %s72
      %p86 = scmp.eq.s32.totalorder %s17, 3
      %p87 = por %p85, %p86
      %p89 = scmp.ne.s32.totalorder %s72, %s88
      %p90 = scmp.eq.s32.totalorder %s17, 0
      %p91 = por %p89, %p90
      %p92 = scmp.le.s32.totalorder 1, %s11
      %p93 = scmp.lt.s32.totalorder %s11, 5
      %p94 = pnand %p92, %p93
      %p95 = pneg %p94
      // Predicated region
      $region9: #{time_encoder_mixer.1} parent=5 // pred_check
        _
      $region10: #{time_encoder_mixer.1} parent=5 // pred_check_branch
        %97 = sbr.rel (%p94) target = $region12
      $region11: #{time_encoder_mixer.1} parent=5 // pred_region
        %s98 = ssub.s32 %s11, 1
        // Predicated region
        $region13: #{time_encoder_mixer.1} parent=11 // pred_check
          %p99 = pneg %p58
        $region14: #{time_encoder_mixer.1} parent=11 // pred_check_branch
          %101 = sbr.rel (%p99) target = $region16
        $region15: #{time_encoder_mixer.1} parent=11 // pred_region
          _
        $region16: #{time_encoder_mixer.1} parent=11 // pred_fallthru
          _
      $region12: #{time_encoder_mixer.1} parent=5 // pred_fallthru
        _
      %p102 = scmp.lt.s32.totalorder %s11, 4
      // Predicated region
      $region17: #{time_encoder_mixer.1} parent=5 // pred_check
        %p103 = pneg %p102
      $region18: #{time_encoder_mixer.1} parent=5 // pred_check_branch
        %105 = sbr.rel (%p103) target = $region20
      $region19: #{time_encoder_mixer.1} parent=5 // pred_region
        // Predicated region
        $region21: #{time_encoder_mixer.1} parent=19 // pred_check
          %p106 = pneg %p31
        $region22: #{time_encoder_mixer.1} parent=19 // pred_check_branch
          %108 = sbr.rel (%p106) target = $region24
        $region23: #{time_encoder_mixer.1} parent=19 // pred_region
          %s109 = smul.u32 64, %s11
          %p110 = scmp.lt.s32.totalorder %s109, 255
          %s111 = scalar_select %p110, %s109, 255
          %s112 = smul.addr %s111, 8
          %s113 = scalar_lea.vmem %s0, %s112
          %s114 = smul.u32 64, %s11
        $region24: #{time_encoder_mixer.1} parent=19 // pred_fallthru
          _
      $region20: #{time_encoder_mixer.1} parent=5 // pred_fallthru
        _
      %p115 = scmp.le.s32.totalorder 1, %s11
      %p116 = scmp.lt.s32.totalorder %s11, 5
      %p117 = pnand %p115, %p116
      %p118 = pneg %p117
      // Predicated region
      $region25: #{time_encoder_mixer.1} parent=5 // pred_check
        _
      $region26: #{time_encoder_mixer.1} parent=5 // pred_check_branch
        %120 = sbr.rel (%p117) target = $region28
      $region27: #{time_encoder_mixer.1} parent=5 // pred_region
        %s121 = ssub.s32 %s11, 1
        %s122 = smul.u32 64, %s16
        %p123 = scmp.lt.s32.totalorder %s122, 255
        %s124 = scalar_select %p123, %s122, 255
        %s125 = smul.addr %s124, 8
        %s126 = scalar_lea.vmem %s0, %s125
        %p127 = pneg %p37
        %p128 = pneg %p34
        %p129 = pneg %p58
        %p130 = pneg %p55
        %p131 = pneg %p84
        %p132 = pneg %p81
        %s133 = sand.u32 %s71, 1
        %s134 = scalar_lea.sflag [#allocation3], %s133
        %s135 = sand.u32 %s71, 1
        %s136 = smul.addr %s135, 512
        %s137 = scalar_lea.vmem [#allocation2], %s136
        %s138 = smul.u32 64, %s16
        %p139 = scmp.lt.s32.totalorder %s138, 255
        %s140 = scalar_select %p139, %s138, 255
        %s141 = smul.addr %s140, 8
        %s142 = scalar_lea.vmem %s0, %s141
        %s143 = smul.u32 64, %s16
        %s144 = smul.u32 64, %s16
        %v145 = vld [vmem:[%s142] sm:$0xff]
        %v146 = vld [vmem:[%s142 + $0x8] sm:$0xff]
        %v147 = vld [vmem:[%s142 + $0x10] sm:$0xff]
        %v148 = vld [vmem:[%s142 + $0x18] sm:$0xff]
        %v149 = vld [vmem:[%s142 + $0x20] sm:$0xff]
        %v150 = vld [vmem:[%s142 + $0x28] sm:$0xff]
        %v151 = vld [vmem:[%s142 + $0x30] sm:$0xff]
        %v152 = vld [vmem:[%s142 + $0x38] sm:$0xff]
        %v153 = vld [vmem:[%s142 + $0x40] sm:$0xff]
        %v154 = vld [vmem:[%s142 + $0x48] sm:$0xff]
        %v155 = vld [vmem:[%s142 + $0x50] sm:$0xff]
        %v156 = vld [vmem:[%s142 + $0x58] sm:$0xff]
        %v157 = vld [vmem:[%s142 + $0x60] sm:$0xff]
        %v158 = vld [vmem:[%s142 + $0x68] sm:$0xff]
        %v159 = vld [vmem:[%s142 + $0x70] sm:$0xff]
        %v160 = vld [vmem:[%s142 + $0x78] sm:$0xff]
        %v161 = vld [vmem:[%s142 + $0x80] sm:$0xff]
        %v162 = vld [vmem:[%s142 + $0x88] sm:$0xff]
        %v163 = vld [vmem:[%s142 + $0x90] sm:$0xff]
        %v164 = vld [vmem:[%s142 + $0x98] sm:$0xff]
        %v165 = vld [vmem:[%s142 + $0xa0] sm:$0xff]
        %v166 = vld [vmem:[%s142 + $0xa8] sm:$0xff]
        %v167 = vld [vmem:[%s142 + $0xb0] sm:$0xff]
        %v168 = vld [vmem:[%s142 + $0xb8] sm:$0xff]
        %v169 = vld [vmem:[%s142 + $0xc0] sm:$0xff]
        %v170 = vld [vmem:[%s142 + $0xc8] sm:$0xff]
        %v171 = vld [vmem:[%s142 + $0xd0] sm:$0xff]
        %v172 = vld [vmem:[%s142 + $0xd8] sm:$0xff]
        %v173 = vld [vmem:[%s142 + $0xe0] sm:$0xff]
        %v174 = vld [vmem:[%s142 + $0xe8] sm:$0xff]
        %v175 = vld [vmem:[%s142 + $0xf0] sm:$0xff]
        %v176 = vld [vmem:[%s142 + $0xf8] sm:$0xff]
        %v177 = vld [vmem:[%s142 + $0x100] sm:$0xff]
        %v178 = vld [vmem:[%s142 + $0x108] sm:$0xff]
        %v179 = vld [vmem:[%s142 + $0x110] sm:$0xff]
        %v180 = vld [vmem:[%s142 + $0x118] sm:$0xff]
        %v181 = vld [vmem:[%s142 + $0x120] sm:$0xff]
        %v182 = vld [vmem:[%s142 + $0x128] sm:$0xff]
        %v183 = vld [vmem:[%s142 + $0x130] sm:$0xff]
        %v184 = vld [vmem:[%s142 + $0x138] sm:$0xff]
        %v185 = vld [vmem:[%s142 + $0x140] sm:$0xff]
        %v186 = vld [vmem:[%s142 + $0x148] sm:$0xff]
        %v187 = vld [vmem:[%s142 + $0x150] sm:$0xff]
        %v188 = vld [vmem:[%s142 + $0x158] sm:$0xff]
        %v189 = vld [vmem:[%s142 + $0x160] sm:$0xff]
        %v190 = vld [vmem:[%s142 + $0x168] sm:$0xff]
        %v191 = vld [vmem:[%s142 + $0x170] sm:$0xff]
        %v192 = vld [vmem:[%s142 + $0x178] sm:$0xff]
        %v193 = vld [vmem:[%s142 + $0x180] sm:$0xff]
        %v194 = vld [vmem:[%s142 + $0x188] sm:$0xff]
        %v195 = vld [vmem:[%s142 + $0x190] sm:$0xff]
        %v196 = vld [vmem:[%s142 + $0x198] sm:$0xff]
        %v197 = vld [vmem:[%s142 + $0x1a0] sm:$0xff]
        %v198 = vld [vmem:[%s142 + $0x1a8] sm:$0xff]
        %v199 = vld [vmem:[%s142 + $0x1b0] sm:$0xff]
        %v200 = vld [vmem:[%s142 + $0x1b8] sm:$0xff]
        %v201 = vld [vmem:[%s142 + $0x1c0] sm:$0xff]
        %v202 = vld [vmem:[%s142 + $0x1c8] sm:$0xff]
        %v203 = vld [vmem:[%s142 + $0x1d0] sm:$0xff]
        %v204 = vld [vmem:[%s142 + $0x1d8] sm:$0xff]
        %v205 = vld [vmem:[%s142 + $0x1e0] sm:$0xff]
        %v206 = vld [vmem:[%s142 + $0x1e8] sm:$0xff]
        %v207 = vld [vmem:[%s142 + $0x1f0] sm:$0xff]
        %v208 = vld [vmem:[%s142 + $0x1f8] sm:$0xff]
        %v209 = vld [vmem:[%s1] sm:$0x1]
        %v210 = vld [vmem:[%s1 + $0x1] sm:$0x1]
        %212 = vset.pattern.permute.xlu0 0
        %213 = vperm.xlu0 %212, %v145
        %v214 = vpop.permute.xlu0 %213
        %217 = vset.pattern.permute.xlu0 0
        %218 = vperm.xlu0 %217, %v146
        %v219 = vpop.permute.xlu0 %218
        %222 = vset.pattern.permute.xlu0 0
        %223 = vperm.xlu0 %222, %v147
        %v224 = vpop.permute.xlu0 %223
        %227 = vset.pattern.permute.xlu0 0
        %228 = vperm.xlu0 %227, %v148
        %v229 = vpop.permute.xlu0 %228
        %232 = vset.pattern.permute.xlu0 0
        %233 = vperm.xlu0 %232, %v149
        %v234 = vpop.permute.xlu0 %233
        %237 = vset.pattern.permute.xlu0 0
        %238 = vperm.xlu0 %237, %v150
        %v239 = vpop.permute.xlu0 %238
        %242 = vset.pattern.permute.xlu0 0
        %243 = vperm.xlu0 %242, %v151
        %v244 = vpop.permute.xlu0 %243
        %247 = vset.pattern.permute.xlu0 0
        %248 = vperm.xlu0 %247, %v152
        %v249 = vpop.permute.xlu0 %248
        %252 = vset.pattern.permute.xlu0 0
        %253 = vperm.xlu0 %252, %v153
        %v254 = vpop.permute.xlu0 %253
        %257 = vset.pattern.permute.xlu0 0
        %258 = vperm.xlu0 %257, %v154
        %v259 = vpop.permute.xlu0 %258
        %262 = vset.pattern.permute.xlu0 0
        %263 = vperm.xlu0 %262, %v155
        %v264 = vpop.permute.xlu0 %263
        %267 = vset.pattern.permute.xlu0 0
        %268 = vperm.xlu0 %267, %v156
        %v269 = vpop.permute.xlu0 %268
        %272 = vset.pattern.permute.xlu0 0
        %273 = vperm.xlu0 %272, %v157
        %v274 = vpop.permute.xlu0 %273
        %277 = vset.pattern.permute.xlu0 0
        %278 = vperm.xlu0 %277, %v158
        %v279 = vpop.permute.xlu0 %278
        %282 = vset.pattern.permute.xlu0 0
        %283 = vperm.xlu0 %282, %v159
        %v284 = vpop.permute.xlu0 %283
        %287 = vset.pattern.permute.xlu0 0
        %288 = vperm.xlu0 %287, %v160
        %v289 = vpop.permute.xlu0 %288
        %292 = vset.pattern.permute.xlu0 0
        %293 = vperm.xlu0 %292, %v161
        %v294 = vpop.permute.xlu0 %293
        %297 = vset.pattern.permute.xlu0 0
        %298 = vperm.xlu0 %297, %v162
        %v299 = vpop.permute.xlu0 %298
        %302 = vset.pattern.permute.xlu0 0
        %303 = vperm.xlu0 %302, %v163
        %v304 = vpop.permute.xlu0 %303
        %307 = vset.pattern.permute.xlu0 0
        %308 = vperm.xlu0 %307, %v164
        %v309 = vpop.permute.xlu0 %308
        %312 = vset.pattern.permute.xlu0 0
        %313 = vperm.xlu0 %312, %v165
        %v314 = vpop.permute.xlu0 %313
        %317 = vset.pattern.permute.xlu0 0
        %318 = vperm.xlu0 %317, %v166
        %v319 = vpop.permute.xlu0 %318
        %322 = vset.pattern.permute.xlu0 0
        %323 = vperm.xlu0 %322, %v167
        %v324 = vpop.permute.xlu0 %323
        %327 = vset.pattern.permute.xlu0 0
        %328 = vperm.xlu0 %327, %v168
        %v329 = vpop.permute.xlu0 %328
        %332 = vset.pattern.permute.xlu0 0
        %333 = vperm.xlu0 %332, %v169
        %v334 = vpop.permute.xlu0 %333
        %337 = vset.pattern.permute.xlu0 0
        %338 = vperm.xlu0 %337, %v170
        %v339 = vpop.permute.xlu0 %338
        %342 = vset.pattern.permute.xlu0 0
        %343 = vperm.xlu0 %342, %v171
        %v344 = vpop.permute.xlu0 %343
        %347 = vset.pattern.permute.xlu0 0
        %348 = vperm.xlu0 %347, %v172
        %v349 = vpop.permute.xlu0 %348
        %352 = vset.pattern.permute.xlu0 0
        %353 = vperm.xlu0 %352, %v173
        %v354 = vpop.permute.xlu0 %353
        %357 = vset.pattern.permute.xlu0 0
        %358 = vperm.xlu0 %357, %v174
        %v359 = vpop.permute.xlu0 %358
        %362 = vset.pattern.permute.xlu0 0
        %363 = vperm.xlu0 %362, %v175
        %v364 = vpop.permute.xlu0 %363
        %367 = vset.pattern.permute.xlu0 0
        %368 = vperm.xlu0 %367, %v176
        %v369 = vpop.permute.xlu0 %368
        %372 = vset.pattern.permute.xlu0 0
        %373 = vperm.xlu0 %372, %v177
        %v374 = vpop.permute.xlu0 %373
        %377 = vset.pattern.permute.xlu0 0
        %378 = vperm.xlu0 %377, %v178
        %v379 = vpop.permute.xlu0 %378
        %382 = vset.pattern.permute.xlu0 0
        %383 = vperm.xlu0 %382, %v179
        %v384 = vpop.permute.xlu0 %383
        %387 = vset.pattern.permute.xlu0 0
        %388 = vperm.xlu0 %387, %v180
        %v389 = vpop.permute.xlu0 %388
        %392 = vset.pattern.permute.xlu0 0
        %393 = vperm.xlu0 %392, %v181
        %v394 = vpop.permute.xlu0 %393
        %397 = vset.pattern.permute.xlu0 0
        %398 = vperm.xlu0 %397, %v182
        %v399 = vpop.permute.xlu0 %398
        %402 = vset.pattern.permute.xlu0 0
        %403 = vperm.xlu0 %402, %v183
        %v404 = vpop.permute.xlu0 %403
        %407 = vset.pattern.permute.xlu0 0
        %408 = vperm.xlu0 %407, %v184
        %v409 = vpop.permute.xlu0 %408
        %412 = vset.pattern.permute.xlu0 0
        %413 = vperm.xlu0 %412, %v185
        %v414 = vpop.permute.xlu0 %413
        %417 = vset.pattern.permute.xlu0 0
        %418 = vperm.xlu0 %417, %v186
        %v419 = vpop.permute.xlu0 %418
        %422 = vset.pattern.permute.xlu0 0
        %423 = vperm.xlu0 %422, %v187
        %v424 = vpop.permute.xlu0 %423
        %427 = vset.pattern.permute.xlu0 0
        %428 = vperm.xlu0 %427, %v188
        %v429 = vpop.permute.xlu0 %428
        %432 = vset.pattern.permute.xlu0 0
        %433 = vperm.xlu0 %432, %v189
        %v434 = vpop.permute.xlu0 %433
        %437 = vset.pattern.permute.xlu0 0
        %438 = vperm.xlu0 %437, %v190
        %v439 = vpop.permute.xlu0 %438
        %442 = vset.pattern.permute.xlu0 0
        %443 = vperm.xlu0 %442, %v191
        %v444 = vpop.permute.xlu0 %443
        %447 = vset.pattern.permute.xlu0 0
        %448 = vperm.xlu0 %447, %v192
        %v449 = vpop.permute.xlu0 %448
        %452 = vset.pattern.permute.xlu0 0
        %453 = vperm.xlu0 %452, %v193
        %v454 = vpop.permute.xlu0 %453
        %457 = vset.pattern.permute.xlu0 0
        %458 = vperm.xlu0 %457, %v194
        %v459 = vpop.permute.xlu0 %458
        %462 = vset.pattern.permute.xlu0 0
        %463 = vperm.xlu0 %462, %v195
        %v464 = vpop.permute.xlu0 %463
        %467 = vset.pattern.permute.xlu0 0
        %468 = vperm.xlu0 %467, %v196
        %v469 = vpop.permute.xlu0 %468
        %472 = vset.pattern.permute.xlu0 0
        %473 = vperm.xlu0 %472, %v197
        %v474 = vpop.permute.xlu0 %473
        %477 = vset.pattern.permute.xlu0 0
        %478 = vperm.xlu0 %477, %v198
        %v479 = vpop.permute.xlu0 %478
        %482 = vset.pattern.permute.xlu0 0
        %483 = vperm.xlu0 %482, %v199
        %v484 = vpop.permute.xlu0 %483
        %487 = vset.pattern.permute.xlu0 0
        %488 = vperm.xlu0 %487, %v200
        %v489 = vpop.permute.xlu0 %488
        %492 = vset.pattern.permute.xlu0 0
        %493 = vperm.xlu0 %492, %v201
        %v494 = vpop.permute.xlu0 %493
        %497 = vset.pattern.permute.xlu0 0
        %498 = vperm.xlu0 %497, %v202
        %v499 = vpop.permute.xlu0 %498
        %502 = vset.pattern.permute.xlu0 0
        %503 = vperm.xlu0 %502, %v203
        %v504 = vpop.permute.xlu0 %503
        %507 = vset.pattern.permute.xlu0 0
        %508 = vperm.xlu0 %507, %v204
        %v509 = vpop.permute.xlu0 %508
        %512 = vset.pattern.permute.xlu0 0
        %513 = vperm.xlu0 %512, %v205
        %v514 = vpop.permute.xlu0 %513
        %517 = vset.pattern.permute.xlu0 0
        %518 = vperm.xlu0 %517, %v206
        %v519 = vpop.permute.xlu0 %518
        %522 = vset.pattern.permute.xlu0 0
        %523 = vperm.xlu0 %522, %v207
        %v524 = vpop.permute.xlu0 %523
        %527 = vset.pattern.permute.xlu0 0
        %528 = vperm.xlu0 %527, %v208
        %v529 = vpop.permute.xlu0 %528
        %v531 = vperm.slane %v209, 0
        %v532 = vmul.f32 %v214, %v531
        %v533 = vmul.f32 %v219, %v531
        %v534 = vmul.f32 %v224, %v531
        %v535 = vmul.f32 %v229, %v531
        %v536 = vmul.f32 %v234, %v531
        %v537 = vmul.f32 %v239, %v531
        %v538 = vmul.f32 %v244, %v531
        %v539 = vmul.f32 %v249, %v531
        %v540 = vmul.f32 %v254, %v531
        %v541 = vmul.f32 %v259, %v531
        %v542 = vmul.f32 %v264, %v531
        %v543 = vmul.f32 %v269, %v531
        %v544 = vmul.f32 %v274, %v531
        %v545 = vmul.f32 %v279, %v531
        %v546 = vmul.f32 %v284, %v531
        %v547 = vmul.f32 %v289, %v531
        %v548 = vmul.f32 %v294, %v531
        %v549 = vmul.f32 %v299, %v531
        %v550 = vmul.f32 %v304, %v531
        %v551 = vmul.f32 %v309, %v531
        %v552 = vmul.f32 %v314, %v531
        %v553 = vmul.f32 %v319, %v531
        %v554 = vmul.f32 %v324, %v531
        %v555 = vmul.f32 %v329, %v531
        %v556 = vmul.f32 %v334, %v531
        %v557 = vmul.f32 %v339, %v531
        %v558 = vmul.f32 %v344, %v531
        %v559 = vmul.f32 %v349, %v531
        %v560 = vmul.f32 %v354, %v531
        %v561 = vmul.f32 %v359, %v531
        %v562 = vmul.f32 %v364, %v531
        %v563 = vmul.f32 %v369, %v531
        %v564 = vmul.f32 %v374, %v531
        %v565 = vmul.f32 %v379, %v531
        %v566 = vmul.f32 %v384, %v531
        %v567 = vmul.f32 %v389, %v531
        %v568 = vmul.f32 %v394, %v531
        %v569 = vmul.f32 %v399, %v531
        %v570 = vmul.f32 %v404, %v531
        %v571 = vmul.f32 %v409, %v531
        %v572 = vmul.f32 %v414, %v531
        %v573 = vmul.f32 %v419, %v531
        %v574 = vmul.f32 %v424, %v531
        %v575 = vmul.f32 %v429, %v531
        %v576 = vmul.f32 %v434, %v531
        %v577 = vmul.f32 %v439, %v531
        %v578 = vmul.f32 %v444, %v531
        %v579 = vmul.f32 %v449, %v531
        %v580 = vmul.f32 %v454, %v531
        %v581 = vmul.f32 %v459, %v531
        %v582 = vmul.f32 %v464, %v531
        %v583 = vmul.f32 %v469, %v531
        %v584 = vmul.f32 %v474, %v531
        %v585 = vmul.f32 %v479, %v531
        %v586 = vmul.f32 %v484, %v531
        %v587 = vmul.f32 %v489, %v531
        %v588 = vmul.f32 %v494, %v531
        %v589 = vmul.f32 %v499, %v531
        %v590 = vmul.f32 %v504, %v531
        %v591 = vmul.f32 %v509, %v531
        %v592 = vmul.f32 %v514, %v531
        %v593 = vmul.f32 %v519, %v531
        %v594 = vmul.f32 %v524, %v531
        %v595 = vmul.f32 %v529, %v531
        %v596 = vperm.slane %v210, 0
        %v597 = vadd.f32 %v532, %v596
        %v598 = vadd.f32 %v533, %v596
        %v599 = vadd.f32 %v534, %v596
        %v600 = vadd.f32 %v535, %v596
        %v601 = vadd.f32 %v536, %v596
        %v602 = vadd.f32 %v537, %v596
        %v603 = vadd.f32 %v538, %v596
        %v604 = vadd.f32 %v539, %v596
        %v605 = vadd.f32 %v540, %v596
        %v606 = vadd.f32 %v541, %v596
        %v607 = vadd.f32 %v542, %v596
        %v608 = vadd.f32 %v543, %v596
        %v609 = vadd.f32 %v544, %v596
        %v610 = vadd.f32 %v545, %v596
        %v611 = vadd.f32 %v546, %v596
        %v612 = vadd.f32 %v547, %v596
        %v613 = vadd.f32 %v548, %v596
        %v614 = vadd.f32 %v549, %v596
        %v615 = vadd.f32 %v550, %v596
        %v616 = vadd.f32 %v551, %v596
        %v617 = vadd.f32 %v552, %v596
        %v618 = vadd.f32 %v553, %v596
        %v619 = vadd.f32 %v554, %v596
        %v620 = vadd.f32 %v555, %v596
        %v621 = vadd.f32 %v556, %v596
        %v622 = vadd.f32 %v557, %v596
        %v623 = vadd.f32 %v558, %v596
        %v624 = vadd.f32 %v559, %v596
        %v625 = vadd.f32 %v560, %v596
        %v626 = vadd.f32 %v561, %v596
        %v627 = vadd.f32 %v562, %v596
        %v628 = vadd.f32 %v563, %v596
        %v629 = vadd.f32 %v564, %v596
        %v630 = vadd.f32 %v565, %v596
        %v631 = vadd.f32 %v566, %v596
        %v632 = vadd.f32 %v567, %v596
        %v633 = vadd.f32 %v568, %v596
        %v634 = vadd.f32 %v569, %v596
        %v635 = vadd.f32 %v570, %v596
        %v636 = vadd.f32 %v571, %v596
        %v637 = vadd.f32 %v572, %v596
        %v638 = vadd.f32 %v573, %v596
        %v639 = vadd.f32 %v574, %v596
        %v640 = vadd.f32 %v575, %v596
        %v641 = vadd.f32 %v576, %v596
        %v642 = vadd.f32 %v577, %v596
        %v643 = vadd.f32 %v578, %v596
        %v644 = vadd.f32 %v579, %v596
        %v645 = vadd.f32 %v580, %v596
        %v646 = vadd.f32 %v581, %v596
        %v647 = vadd.f32 %v582, %v596
        %v648 = vadd.f32 %v583, %v596
        %v649 = vadd.f32 %v584, %v596
        %v650 = vadd.f32 %v585, %v596
        %v651 = vadd.f32 %v586, %v596
        %v652 = vadd.f32 %v587, %v596
        %v653 = vadd.f32 %v588, %v596
        %v654 = vadd.f32 %v589, %v596
        %v655 = vadd.f32 %v590, %v596
        %v656 = vadd.f32 %v591, %v596
        %v657 = vadd.f32 %v592, %v596
        %v658 = vadd.f32 %v593, %v596
        %v659 = vadd.f32 %v594, %v596
        %v660 = vadd.f32 %v595, %v596
        %v661 = vand.u32 2147483647, %v597
        %vm662 = vcmp.le.f32.partialorder %v661, 0.7853982
        %vm663 = vcmp.lt.s32.totalorder %v597, 0
        %v664 = vand.u32 %v597, 2139095040
        %v665 = vshrl.u32 %v664, 23
        %v666 = vsub.s32 %v665, 127
        %v667 = vand.u32 2147483647, %v597
        %v668 = vand.u32 %v667, 8388607
        %v669 = vor.u32 %v668, 8388608
        %v670 = vsub.s32 0, %v669
        %v671 = vadd.s32 %v666, 1
        %vm672 = vcmp.gt.s32.totalorder %v671, 0
        %v673 = vsel %vm672, %v671, 0
        %v674 = vshrl.u32 %v673, 5
        %v675 = vand.u32 %v673, 31
        %v676 = vsub.s32 32, %v675
        %v677 = vshrl.u32 683565275, %v676
        %v678 = vshll.u32 683565275, %v675
        %v679 = vshrl.u32 2475754826, %v676
        %v680 = vor.u32 %v678, %v679
        %v681 = vshll.u32 2475754826, %v675
        %v682 = vshrl.u32 2131351028, %v676
        %v683 = vor.u32 %v681, %v682
        %v684 = vshll.u32 2131351028, %v675
        %v685 = vshrl.u32 2102212464, %v676
        %v686 = vor.u32 %v684, %v685
        %v687 = vshll.u32 2102212464, %v675
        %v688 = vshrl.u32 920167782, %v676
        %v689 = vor.u32 %v687, %v688
        %v690 = vshll.u32 920167782, %v675
        %v691 = vshrl.u32 1326507024, %v676
        %v692 = vor.u32 %v690, %v691
        %vm693 = vcmp.lt.s32.totalorder %v674, 1
        %vm694 = vcmp.lt.s32.totalorder %v674, 2
        %vm695 = vcmp.lt.s32.totalorder %v674, 3
        %vm696 = vcmp.lt.s32.totalorder %v674, 4
        %v697 = vsel %vm693, %v677, %v680
        %v698 = vsel %vm696, %v686, 2102212464
        %v699 = vsel %vm695, %v683, %v698
        %v700 = vsel %vm694, %v697, %v699
        %v701 = vsel %vm693, %v680, %v683
        %v702 = vsel %vm696, %v689, 920167782
        %v703 = vsel %vm695, %v686, %v702
        %v704 = vsel %vm694, %v701, %v703
        %v705 = vsel %vm693, %v683, %v686
        %v706 = vsel %vm696, %v692, 1326507024
        %v707 = vsel %vm695, %v689, %v706
        %v708 = vsel %vm694, %v705, %v707
        %v709 = vshll.u32 %v669, 8
        %v710 = vand.u32 %v709, 65535
        %v711 = vshrl.u32 %v709, 16
        %v712 = vand.u32 %v708, 65535
        %v713 = vshrl.u32 %v708, 16
        %v714 = vmul.u32 %v710, %v712
        %v715 = vmul.u32 %v710, %v713
        %v716 = vmul.u32 %v711, %v712
        %v717 = vmul.u32 %v711, %v713
        %v718 = vshll.u32 %v715, 16
        %v719 = vshrl.u32 %v715, 16
        %v720 = vshll.u32 %v716, 16
        %v721 = vshrl.u32 %v716, 16
        %vm722 = vc.u32 %v714, %v718
        %v723 = vsel %vm722, 1, 0
        %v724 = vadd.s32 %v714, %v718
        %v725 = vadd.s32 %v717, %v723
        %vm726 = vc.u32 %v724, %v720
        %v727 = vsel %vm726, 1, 0
        %v728 = vadd.s32 %v724, %v720
        %v729 = vadd.s32 %v725, %v727
        %v730 = vadd.s32 %v729, %v719
        %v731 = vadd.s32 %v730, %v721
        %v732 = vand.u32 %v709, 65535
        %v733 = vshrl.u32 %v709, 16
        %v734 = vand.u32 %v704, 65535
        %v735 = vshrl.u32 %v704, 16
        %v736 = vmul.u32 %v732, %v734
        %v737 = vmul.u32 %v732, %v735
        %v738 = vmul.u32 %v733, %v734
        %v739 = vmul.u32 %v733, %v735
        %v740 = vshll.u32 %v737, 16
        %v741 = vshrl.u32 %v737, 16
        %v742 = vshll.u32 %v738, 16
        %v743 = vshrl.u32 %v738, 16
        %vm744 = vc.u32 %v736, %v740
        %v745 = vsel %vm744, 1, 0
        %v746 = vadd.s32 %v736, %v740
        %v747 = vadd.s32 %v739, %v745
        %vm748 = vc.u32 %v746, %v742
        %v749 = vsel %vm748, 1, 0
        %v750 = vadd.s32 %v746, %v742
        %v751 = vadd.s32 %v747, %v749
        %v752 = vadd.s32 %v751, %v741
        %v753 = vadd.s32 %v752, %v743
        %v754 = vmul.u32 %v709, %v700
        %v755 = vadd.s32 %v731, %v750
        %vm756 = vc.u32 %v731, %v750
        %v757 = vadd.s32 %v753, 1
        %v758 = vsel %vm756, %v757, %v753
        %v759 = vadd.s32 %v754, %v758
        %v760 = vadd.s32 %v759, 536870912
        %v761 = vshrl.u32 %v760, 30
        %v762 = vshll.u32 %v761, 30
        %v763 = vsub.s32 %v759, %v762
        %vm764 = vcmp.lt.s32.totalorder %v763, 0
        %v765 = vsub.s32 0, %v763
        %v766 = vsel %vm764, %v765, %v763
        %v767 = vclz %v766
        %v768 = vsub.s32 %v767, 2
        %vm769 = vcmp.gt.s32.totalorder 0, %v768
        %v770 = vsel %vm769, 0, %v768
        %v771 = vsub.s32 32, %v770
        %v772 = vshll.u32 %v763, %v770
        %v773 = vshrl.u32 %v755, %v771
        %v774 = vor.u32 %v772, %v773
        %v775 = vsub.s32 4294967266, %v770
        %v776 = vadd.s32 %v775, 127
        %v777 = vshll.u32 %v776, 23
        %v778 = vor.u32 4788187, %v777
        %v779 = vand.u32 2147483647, %v778
        %v781 = vcvt.s32.f32 %v774
        %v782 = vmul.f32 %v781, %v779
        %v783 = vxor.u32 %v782, 2147483648
        %v784 = vsel %vm663, %v783, %v782
        %v785 = vsub.s32 4, %v761
        %v786 = vsel %vm663, %v785, %v761
        %v787 = vsel %vm662, %v597, %v784
        %v788 = vsel %vm662, 0, %v786
        %v789 = vmul.f32 %v787, %v787
        %v790 = vmul.f32 %v789, -0.001358992
        %v791 = vadd.f32 %v790, 0.041655596
        %v792 = vmul.f32 %v789, %v791
        %v793 = vadd.f32 %v792, -0.4999988
        %v794 = vmul.f32 %v789, %v793
        %v795 = vadd.f32 1.0, %v794
        %v796 = vmul.f32 %v787, %v787
        %v797 = vmul.f32 %v796, -0.00019511016
        %v798 = vadd.f32 %v797, 0.008332121
        %v799 = vmul.f32 %v796, %v798
        %v800 = vadd.f32 %v799, -0.16666654
        %v801 = vmul.f32 %v796, %v800
        %v802 = vadd.f32 %v801, 1.0
        %v803 = vmul.f32 %v802, %v787
        %vm804 = vweird.f32 %v597
        %v805 = vand.u32 %v788, 3
        %vm806 = vcmp.lt.s32.totalorder %v805, 2
        %vm807 = vcmp.eq.s32.totalorder %v805, 0
        %v808 = vxor.u32 %v803, 2147483648
        %v809 = vsel %vm807, %v795, %v808
        %vm810 = vcmp.eq.s32.totalorder %v805, 2
        %v811 = vxor.u32 %v795, 2147483648
        %v812 = vsel %vm810, %v811, %v803
        %v813 = vsel %vm806, %v809, %v812
        %v814 = vsel %vm804, nan, %v813
        %v815 = vand.u32 2147483647, %v598
        %vm816 = vcmp.le.f32.partialorder %v815, 0.7853982
        %vm817 = vcmp.lt.s32.totalorder %v598, 0
        %v818 = vand.u32 %v598, 2139095040
        %v819 = vshrl.u32 %v818, 23
        %v820 = vsub.s32 %v819, 127
        %v821 = vand.u32 2147483647, %v598
        %v822 = vand.u32 %v821, 8388607
        %v823 = vor.u32 %v822, 8388608
        %v824 = vsub.s32 0, %v823
        %v825 = vadd.s32 %v820, 1
        %vm826 = vcmp.gt.s32.totalorder %v825, 0
        %v827 = vsel %vm826, %v825, 0
        %v828 = vshrl.u32 %v827, 5
        %v829 = vand.u32 %v827, 31
        %v830 = vsub.s32 32, %v829
        %v831 = vshrl.u32 683565275, %v830
        %v832 = vshll.u32 683565275, %v829
        %v833 = vshrl.u32 2475754826, %v830
        %v834 = vor.u32 %v832, %v833
        %v835 = vshll.u32 2475754826, %v829
        %v836 = vshrl.u32 2131351028, %v830
        %v837 = vor.u32 %v835, %v836
        %v838 = vshll.u32 2131351028, %v829
        %v839 = vshrl.u32 2102212464, %v830
        %v840 = vor.u32 %v838, %v839
        %v841 = vshll.u32 2102212464, %v829
        %v842 = vshrl.u32 920167782, %v830
        %v843 = vor.u32 %v841, %v842
        %v844 = vshll.u32 920167782, %v829
        %v845 = vshrl.u32 1326507024, %v830
        %v846 = vor.u32 %v844, %v845
        %vm847 = vcmp.lt.s32.totalorder %v828, 1
        %vm848 = vcmp.lt.s32.totalorder %v828, 2
        %vm849 = vcmp.lt.s32.totalorder %v828, 3
        %vm850 = vcmp.lt.s32.totalorder %v828, 4
        %v851 = vsel %vm847, %v831, %v834
        %v852 = vsel %vm850, %v840, 2102212464
        %v853 = vsel %vm849, %v837, %v852
        %v854 = vsel %vm848, %v851, %v853
        %v855 = vsel %vm847, %v834, %v837
        %v856 = vsel %vm850, %v843, 920167782
        %v857 = vsel %vm849, %v840, %v856
        %v858 = vsel %vm848, %v855, %v857
        %v859 = vsel %vm847, %v837, %v840
        %v860 = vsel %vm850, %v846, 1326507024
        %v861 = vsel %vm849, %v843, %v860
        %v862 = vsel %vm848, %v859, %v861
        %v863 = vshll.u32 %v823, 8
        %v864 = vand.u32 %v863, 65535
        %v865 = vshrl.u32 %v863, 16
        %v866 = vand.u32 %v862, 65535
        %v867 = vshrl.u32 %v862, 16
        %v868 = vmul.u32 %v864, %v866
        %v869 = vmul.u32 %v864, %v867
        %v870 = vmul.u32 %v865, %v866
        %v871 = vmul.u32 %v865, %v867
        %v872 = vshll.u32 %v869, 16
        %v873 = vshrl.u32 %v869, 16
        %v874 = vshll.u32 %v870, 16
        %v875 = vshrl.u32 %v870, 16
        %vm876 = vc.u32 %v868, %v872
        %v877 = vsel %vm876, 1, 0
        %v878 = vadd.s32 %v868, %v872
        %v879 = vadd.s32 %v871, %v877
        %vm880 = vc.u32 %v878, %v874
        %v881 = vsel %vm880, 1, 0
        %v882 = vadd.s32 %v878, %v874
        %v883 = vadd.s32 %v879, %v881
        %v884 = vadd.s32 %v883, %v873
        %v885 = vadd.s32 %v884, %v875
        %v886 = vand.u32 %v863, 65535
        %v887 = vshrl.u32 %v863, 16
        %v888 = vand.u32 %v858, 65535
        %v889 = vshrl.u32 %v858, 16
        %v890 = vmul.u32 %v886, %v888
        %v891 = vmul.u32 %v886, %v889
        %v892 = vmul.u32 %v887, %v888
        %v893 = vmul.u32 %v887, %v889
        %v894 = vshll.u32 %v891, 16
        %v895 = vshrl.u32 %v891, 16
        %v896 = vshll.u32 %v892, 16
        %v897 = vshrl.u32 %v892, 16
        %vm898 = vc.u32 %v890, %v894
        %v899 = vsel %vm898, 1, 0
        %v900 = vadd.s32 %v890, %v894
        %v901 = vadd.s32 %v893, %v899
        %vm902 = vc.u32 %v900, %v896
        %v903 = vsel %vm902, 1, 0
        %v904 = vadd.s32 %v900, %v896
        %v905 = vadd.s32 %v901, %v903
        %v906 = vadd.s32 %v905, %v895
        %v907 = vadd.s32 %v906, %v897
        %v908 = vmul.u32 %v863, %v854
        %v909 = vadd.s32 %v885, %v904
        %vm910 = vc.u32 %v885, %v904
        %v911 = vadd.s32 %v907, 1
        %v912 = vsel %vm910, %v911, %v907
        %v913 = vadd.s32 %v908, %v912
        %v914 = vadd.s32 %v913, 536870912
        %v915 = vshrl.u32 %v914, 30
        %v916 = vshll.u32 %v915, 30
        %v917 = vsub.s32 %v913, %v916
        %vm918 = vcmp.lt.s32.totalorder %v917, 0
        %v919 = vsub.s32 0, %v917
        %v920 = vsel %vm918, %v919, %v917
        %v921 = vclz %v920
        %v922 = vsub.s32 %v921, 2
        %vm923 = vcmp.gt.s32.totalorder 0, %v922
        %v924 = vsel %vm923, 0, %v922
        %v925 = vsub.s32 32, %v924
        %v926 = vshll.u32 %v917, %v924
        %v927 = vshrl.u32 %v909, %v925
        %v928 = vor.u32 %v926, %v927
        %v929 = vsub.s32 4294967266, %v924
        %v930 = vadd.s32 %v929, 127
        %v931 = vshll.u32 %v930, 23
        %v932 = vor.u32 4788187, %v931
        %v933 = vand.u32 2147483647, %v932
        %v935 = vcvt.s32.f32 %v928
        %v936 = vmul.f32 %v935, %v933
        %v937 = vxor.u32 %v936, 2147483648
        %v938 = vsel %vm817, %v937, %v936
        %v939 = vsub.s32 4, %v915
        %v940 = vsel %vm817, %v939, %v915
        %v941 = vsel %vm816, %v598, %v938
        %v942 = vsel %vm816, 0, %v940
        %v943 = vmul.f32 %v941, %v941
        %v944 = vmul.f32 %v943, -0.001358992
        %v945 = vadd.f32 %v944, 0.041655596
        %v946 = vmul.f32 %v943, %v945
        %v947 = vadd.f32 %v946, -0.4999988
        %v948 = vmul.f32 %v943, %v947
        %v949 = vadd.f32 1.0, %v948
        %v950 = vmul.f32 %v941, %v941
        %v951 = vmul.f32 %v950, -0.00019511016
        %v952 = vadd.f32 %v951, 0.008332121
        %v953 = vmul.f32 %v950, %v952
        %v954 = vadd.f32 %v953, -0.16666654
        %v955 = vmul.f32 %v950, %v954
        %v956 = vadd.f32 %v955, 1.0
        %v957 = vmul.f32 %v956, %v941
        %vm958 = vweird.f32 %v598
        %v959 = vand.u32 %v942, 3
        %vm960 = vcmp.lt.s32.totalorder %v959, 2
        %vm961 = vcmp.eq.s32.totalorder %v959, 0
        %v962 = vxor.u32 %v957, 2147483648
        %v963 = vsel %vm961, %v949, %v962
        %vm964 = vcmp.eq.s32.totalorder %v959, 2
        %v965 = vxor.u32 %v949, 2147483648
        %v966 = vsel %vm964, %v965, %v957
        %v967 = vsel %vm960, %v963, %v966
        %v968 = vsel %vm958, nan, %v967
        %v969 = vand.u32 2147483647, %v599
        %vm970 = vcmp.le.f32.partialorder %v969, 0.7853982
        %vm971 = vcmp.lt.s32.totalorder %v599, 0
        %v972 = vand.u32 %v599, 2139095040
        %v973 = vshrl.u32 %v972, 23
        %v974 = vsub.s32 %v973, 127
        %v975 = vand.u32 2147483647, %v599
        %v976 = vand.u32 %v975, 8388607
        %v977 = vor.u32 %v976, 8388608
        %v978 = vsub.s32 0, %v977
        %v979 = vadd.s32 %v974, 1
        %vm980 = vcmp.gt.s32.totalorder %v979, 0
        %v981 = vsel %vm980, %v979, 0
        %v982 = vshrl.u32 %v981, 5
        %v983 = vand.u32 %v981, 31
        %v984 = vsub.s32 32, %v983
        %v985 = vshrl.u32 683565275, %v984
        %v986 = vshll.u32 683565275, %v983
        %v987 = vshrl.u32 2475754826, %v984
        %v988 = vor.u32 %v986, %v987
        %v989 = vshll.u32 2475754826, %v983
        %v990 = vshrl.u32 2131351028, %v984
        %v991 = vor.u32 %v989, %v990
        %v992 = vshll.u32 2131351028, %v983
        %v993 = vshrl.u32 2102212464, %v984
        %v994 = vor.u32 %v992, %v993
        %v995 = vshll.u32 2102212464, %v983
        %v996 = vshrl.u32 920167782, %v984
        %v997 = vor.u32 %v995, %v996
        %v998 = vshll.u32 920167782, %v983
        %v999 = vshrl.u32 1326507024, %v984
        %v1000 = vor.u32 %v998, %v999
        %vm1001 = vcmp.lt.s32.totalorder %v982, 1
        %vm1002 = vcmp.lt.s32.totalorder %v982, 2
        %vm1003 = vcmp.lt.s32.totalorder %v982, 3
        %vm1004 = vcmp.lt.s32.totalorder %v982, 4
        %v1005 = vsel %vm1001, %v985, %v988
        %v1006 = vsel %vm1004, %v994, 2102212464
        %v1007 = vsel %vm1003, %v991, %v1006
        %v1008 = vsel %vm1002, %v1005, %v1007
        %v1009 = vsel %vm1001, %v988, %v991
        %v1010 = vsel %vm1004, %v997, 920167782
        %v1011 = vsel %vm1003, %v994, %v1010
        %v1012 = vsel %vm1002, %v1009, %v1011
        %v1013 = vsel %vm1001, %v991, %v994
        %v1014 = vsel %vm1004, %v1000, 1326507024
        %v1015 = vsel %vm1003, %v997, %v1014
        %v1016 = vsel %vm1002, %v1013, %v1015
        %v1017 = vshll.u32 %v977, 8
        %v1018 = vand.u32 %v1017, 65535
        %v1019 = vshrl.u32 %v1017, 16
        %v1020 = vand.u32 %v1016, 65535
        %v1021 = vshrl.u32 %v1016, 16
        %v1022 = vmul.u32 %v1018, %v1020
        %v1023 = vmul.u32 %v1018, %v1021
        %v1024 = vmul.u32 %v1019, %v1020
        %v1025 = vmul.u32 %v1019, %v1021
        %v1026 = vshll.u32 %v1023, 16
        %v1027 = vshrl.u32 %v1023, 16
        %v1028 = vshll.u32 %v1024, 16
        %v1029 = vshrl.u32 %v1024, 16
        %vm1030 = vc.u32 %v1022, %v1026
        %v1031 = vsel %vm1030, 1, 0
        %v1032 = vadd.s32 %v1022, %v1026
        %v1033 = vadd.s32 %v1025, %v1031
        %vm1034 = vc.u32 %v1032, %v1028
        %v1035 = vsel %vm1034, 1, 0
        %v1036 = vadd.s32 %v1032, %v1028
        %v1037 = vadd.s32 %v1033, %v1035
        %v1038 = vadd.s32 %v1037, %v1027
        %v1039 = vadd.s32 %v1038, %v1029
        %v1040 = vand.u32 %v1017, 65535
        %v1041 = vshrl.u32 %v1017, 16
        %v1042 = vand.u32 %v1012, 65535
        %v1043 = vshrl.u32 %v1012, 16
        %v1044 = vmul.u32 %v1040, %v1042
        %v1045 = vmul.u32 %v1040, %v1043
        %v1046 = vmul.u32 %v1041, %v1042
        %v1047 = vmul.u32 %v1041, %v1043
        %v1048 = vshll.u32 %v1045, 16
        %v1049 = vshrl.u32 %v1045, 16
        %v1050 = vshll.u32 %v1046, 16
        %v1051 = vshrl.u32 %v1046, 16
        %vm1052 = vc.u32 %v1044, %v1048
        %v1053 = vsel %vm1052, 1, 0
        %v1054 = vadd.s32 %v1044, %v1048
        %v1055 = vadd.s32 %v1047, %v1053
        %vm1056 = vc.u32 %v1054, %v1050
        %v1057 = vsel %vm1056, 1, 0
        %v1058 = vadd.s32 %v1054, %v1050
        %v1059 = vadd.s32 %v1055, %v1057
        %v1060 = vadd.s32 %v1059, %v1049
        %v1061 = vadd.s32 %v1060, %v1051
        %v1062 = vmul.u32 %v1017, %v1008
        %v1063 = vadd.s32 %v1039, %v1058
        %vm1064 = vc.u32 %v1039, %v1058
        %v1065 = vadd.s32 %v1061, 1
        %v1066 = vsel %vm1064, %v1065, %v1061
        %v1067 = vadd.s32 %v1062, %v1066
        %v1068 = vadd.s32 %v1067, 536870912
        %v1069 = vshrl.u32 %v1068, 30
        %v1070 = vshll.u32 %v1069, 30
        %v1071 = vsub.s32 %v1067, %v1070
        %vm1072 = vcmp.lt.s32.totalorder %v1071, 0
        %v1073 = vsub.s32 0, %v1071
        %v1074 = vsel %vm1072, %v1073, %v1071
        %v1075 = vclz %v1074
        %v1076 = vsub.s32 %v1075, 2
        %vm1077 = vcmp.gt.s32.totalorder 0, %v1076
        %v1078 = vsel %vm1077, 0, %v1076
        %v1079 = vsub.s32 32, %v1078
        %v1080 = vshll.u32 %v1071, %v1078
        %v1081 = vshrl.u32 %v1063, %v1079
        %v1082 = vor.u32 %v1080, %v1081
        %v1083 = vsub.s32 4294967266, %v1078
        %v1084 = vadd.s32 %v1083, 127
        %v1085 = vshll.u32 %v1084, 23
        %v1086 = vor.u32 4788187, %v1085
        %v1087 = vand.u32 2147483647, %v1086
        %v1089 = vcvt.s32.f32 %v1082
        %v1090 = vmul.f32 %v1089, %v1087
        %v1091 = vxor.u32 %v1090, 2147483648
        %v1092 = vsel %vm971, %v1091, %v1090
        %v1093 = vsub.s32 4, %v1069
        %v1094 = vsel %vm971, %v1093, %v1069
        %v1095 = vsel %vm970, %v599, %v1092
        %v1096 = vsel %vm970, 0, %v1094
        %v1097 = vmul.f32 %v1095, %v1095
        %v1098 = vmul.f32 %v1097, -0.001358992
        %v1099 = vadd.f32 %v1098, 0.041655596
        %v1100 = vmul.f32 %v1097, %v1099
        %v1101 = vadd.f32 %v1100, -0.4999988
        %v1102 = vmul.f32 %v1097, %v1101
        %v1103 = vadd.f32 1.0, %v1102
        %v1104 = vmul.f32 %v1095, %v1095
        %v1105 = vmul.f32 %v1104, -0.00019511016
        %v1106 = vadd.f32 %v1105, 0.008332121
        %v1107 = vmul.f32 %v1104, %v1106
        %v1108 = vadd.f32 %v1107, -0.16666654
        %v1109 = vmul.f32 %v1104, %v1108
        %v1110 = vadd.f32 %v1109, 1.0
        %v1111 = vmul.f32 %v1110, %v1095
        %vm1112 = vweird.f32 %v599
        %v1113 = vand.u32 %v1096, 3
        %vm1114 = vcmp.lt.s32.totalorder %v1113, 2
        %vm1115 = vcmp.eq.s32.totalorder %v1113, 0
        %v1116 = vxor.u32 %v1111, 2147483648
        %v1117 = vsel %vm1115, %v1103, %v1116
        %vm1118 = vcmp.eq.s32.totalorder %v1113, 2
        %v1119 = vxor.u32 %v1103, 2147483648
        %v1120 = vsel %vm1118, %v1119, %v1111
        %v1121 = vsel %vm1114, %v1117, %v1120
        %v1122 = vsel %vm1112, nan, %v1121
        %v1123 = vand.u32 2147483647, %v600
        %vm1124 = vcmp.le.f32.partialorder %v1123, 0.7853982
        %vm1125 = vcmp.lt.s32.totalorder %v600, 0
        %v1126 = vand.u32 %v600, 2139095040
        %v1127 = vshrl.u32 %v1126, 23
        %v1128 = vsub.s32 %v1127, 127
        %v1129 = vand.u32 2147483647, %v600
        %v1130 = vand.u32 %v1129, 8388607
        %v1131 = vor.u32 %v1130, 8388608
        %v1132 = vsub.s32 0, %v1131
        %v1133 = vadd.s32 %v1128, 1
        %vm1134 = vcmp.gt.s32.totalorder %v1133, 0
        %v1135 = vsel %vm1134, %v1133, 0
        %v1136 = vshrl.u32 %v1135, 5
        %v1137 = vand.u32 %v1135, 31
        %v1138 = vsub.s32 32, %v1137
        %v1139 = vshrl.u32 683565275, %v1138
        %v1140 = vshll.u32 683565275, %v1137
        %v1141 = vshrl.u32 2475754826, %v1138
        %v1142 = vor.u32 %v1140, %v1141
        %v1143 = vshll.u32 2475754826, %v1137
        %v1144 = vshrl.u32 2131351028, %v1138
        %v1145 = vor.u32 %v1143, %v1144
        %v1146 = vshll.u32 2131351028, %v1137
        %v1147 = vshrl.u32 2102212464, %v1138
        %v1148 = vor.u32 %v1146, %v1147
        %v1149 = vshll.u32 2102212464, %v1137
        %v1150 = vshrl.u32 920167782, %v1138
        %v1151 = vor.u32 %v1149, %v1150
        %v1152 = vshll.u32 920167782, %v1137
        %v1153 = vshrl.u32 1326507024, %v1138
        %v1154 = vor.u32 %v1152, %v1153
        %vm1155 = vcmp.lt.s32.totalorder %v1136, 1
        %vm1156 = vcmp.lt.s32.totalorder %v1136, 2
        %vm1157 = vcmp.lt.s32.totalorder %v1136, 3
        %vm1158 = vcmp.lt.s32.totalorder %v1136, 4
        %v1159 = vsel %vm1155, %v1139, %v1142
        %v1160 = vsel %vm1158, %v1148, 2102212464
        %v1161 = vsel %vm1157, %v1145, %v1160
        %v1162 = vsel %vm1156, %v1159, %v1161
        %v1163 = vsel %vm1155, %v1142, %v1145
        %v1164 = vsel %vm1158, %v1151, 920167782
        %v1165 = vsel %vm1157, %v1148, %v1164
        %v1166 = vsel %vm1156, %v1163, %v1165
        %v1167 = vsel %vm1155, %v1145, %v1148
        %v1168 = vsel %vm1158, %v1154, 1326507024
        %v1169 = vsel %vm1157, %v1151, %v1168
        %v1170 = vsel %vm1156, %v1167, %v1169
        %v1171 = vshll.u32 %v1131, 8
        %v1172 = vand.u32 %v1171, 65535
        %v1173 = vshrl.u32 %v1171, 16
        %v1174 = vand.u32 %v1170, 65535
        %v1175 = vshrl.u32 %v1170, 16
        %v1176 = vmul.u32 %v1172, %v1174
        %v1177 = vmul.u32 %v1172, %v1175
        %v1178 = vmul.u32 %v1173, %v1174
        %v1179 = vmul.u32 %v1173, %v1175
        %v1180 = vshll.u32 %v1177, 16
        %v1181 = vshrl.u32 %v1177, 16
        %v1182 = vshll.u32 %v1178, 16
        %v1183 = vshrl.u32 %v1178, 16
        %vm1184 = vc.u32 %v1176, %v1180
        %v1185 = vsel %vm1184, 1, 0
        %v1186 = vadd.s32 %v1176, %v1180
        %v1187 = vadd.s32 %v1179, %v1185
        %vm1188 = vc.u32 %v1186, %v1182
        %v1189 = vsel %vm1188, 1, 0
        %v1190 = vadd.s32 %v1186, %v1182
        %v1191 = vadd.s32 %v1187, %v1189
        %v1192 = vadd.s32 %v1191, %v1181
        %v1193 = vadd.s32 %v1192, %v1183
        %v1194 = vand.u32 %v1171, 65535
        %v1195 = vshrl.u32 %v1171, 16
        %v1196 = vand.u32 %v1166, 65535
        %v1197 = vshrl.u32 %v1166, 16
        %v1198 = vmul.u32 %v1194, %v1196
        %v1199 = vmul.u32 %v1194, %v1197
        %v1200 = vmul.u32 %v1195, %v1196
        %v1201 = vmul.u32 %v1195, %v1197
        %v1202 = vshll.u32 %v1199, 16
        %v1203 = vshrl.u32 %v1199, 16
        %v1204 = vshll.u32 %v1200, 16
        %v1205 = vshrl.u32 %v1200, 16
        %vm1206 = vc.u32 %v1198, %v1202
        %v1207 = vsel %vm1206, 1, 0
        %v1208 = vadd.s32 %v1198, %v1202
        %v1209 = vadd.s32 %v1201, %v1207
        %vm1210 = vc.u32 %v1208, %v1204
        %v1211 = vsel %vm1210, 1, 0
        %v1212 = vadd.s32 %v1208, %v1204
        %v1213 = vadd.s32 %v1209, %v1211
        %v1214 = vadd.s32 %v1213, %v1203
        %v1215 = vadd.s32 %v1214, %v1205
        %v1216 = vmul.u32 %v1171, %v1162
        %v1217 = vadd.s32 %v1193, %v1212
        %vm1218 = vc.u32 %v1193, %v1212
        %v1219 = vadd.s32 %v1215, 1
        %v1220 = vsel %vm1218, %v1219, %v1215
        %v1221 = vadd.s32 %v1216, %v1220
        %v1222 = vadd.s32 %v1221, 536870912
        %v1223 = vshrl.u32 %v1222, 30
        %v1224 = vshll.u32 %v1223, 30
        %v1225 = vsub.s32 %v1221, %v1224
        %vm1226 = vcmp.lt.s32.totalorder %v1225, 0
        %v1227 = vsub.s32 0, %v1225
        %v1228 = vsel %vm1226, %v1227, %v1225
        %v1229 = vclz %v1228
        %v1230 = vsub.s32 %v1229, 2
        %vm1231 = vcmp.gt.s32.totalorder 0, %v1230
        %v1232 = vsel %vm1231, 0, %v1230
        %v1233 = vsub.s32 32, %v1232
        %v1234 = vshll.u32 %v1225, %v1232
        %v1235 = vshrl.u32 %v1217, %v1233
        %v1236 = vor.u32 %v1234, %v1235
        %v1237 = vsub.s32 4294967266, %v1232
        %v1238 = vadd.s32 %v1237, 127
        %v1239 = vshll.u32 %v1238, 23
        %v1240 = vor.u32 4788187, %v1239
        %v1241 = vand.u32 2147483647, %v1240
        %v1243 = vcvt.s32.f32 %v1236
        %v1244 = vmul.f32 %v1243, %v1241
        %v1245 = vxor.u32 %v1244, 2147483648
        %v1246 = vsel %vm1125, %v1245, %v1244
        %v1247 = vsub.s32 4, %v1223
        %v1248 = vsel %vm1125, %v1247, %v1223
        %v1249 = vsel %vm1124, %v600, %v1246
        %v1250 = vsel %vm1124, 0, %v1248
        %v1251 = vmul.f32 %v1249, %v1249
        %v1252 = vmul.f32 %v1251, -0.001358992
        %v1253 = vadd.f32 %v1252, 0.041655596
        %v1254 = vmul.f32 %v1251, %v1253
        %v1255 = vadd.f32 %v1254, -0.4999988
        %v1256 = vmul.f32 %v1251, %v1255
        %v1257 = vadd.f32 1.0, %v1256
        %v1258 = vmul.f32 %v1249, %v1249
        %v1259 = vmul.f32 %v1258, -0.00019511016
        %v1260 = vadd.f32 %v1259, 0.008332121
        %v1261 = vmul.f32 %v1258, %v1260
        %v1262 = vadd.f32 %v1261, -0.16666654
        %v1263 = vmul.f32 %v1258, %v1262
        %v1264 = vadd.f32 %v1263, 1.0
        %v1265 = vmul.f32 %v1264, %v1249
        %vm1266 = vweird.f32 %v600
        %v1267 = vand.u32 %v1250, 3
        %vm1268 = vcmp.lt.s32.totalorder %v1267, 2
        %vm1269 = vcmp.eq.s32.totalorder %v1267, 0
        %v1270 = vxor.u32 %v1265, 2147483648
        %v1271 = vsel %vm1269, %v1257, %v1270
        %vm1272 = vcmp.eq.s32.totalorder %v1267, 2
        %v1273 = vxor.u32 %v1257, 2147483648
        %v1274 = vsel %vm1272, %v1273, %v1265
        %v1275 = vsel %vm1268, %v1271, %v1274
        %v1276 = vsel %vm1266, nan, %v1275
        %v1277 = vand.u32 2147483647, %v601
        %vm1278 = vcmp.le.f32.partialorder %v1277, 0.7853982
        %vm1279 = vcmp.lt.s32.totalorder %v601, 0
        %v1280 = vand.u32 %v601, 2139095040
        %v1281 = vshrl.u32 %v1280, 23
        %v1282 = vsub.s32 %v1281, 127
        %v1283 = vand.u32 2147483647, %v601
        %v1284 = vand.u32 %v1283, 8388607
        %v1285 = vor.u32 %v1284, 8388608
        %v1286 = vsub.s32 0, %v1285
        %v1287 = vadd.s32 %v1282, 1
        %vm1288 = vcmp.gt.s32.totalorder %v1287, 0
        %v1289 = vsel %vm1288, %v1287, 0
        %v1290 = vshrl.u32 %v1289, 5
        %v1291 = vand.u32 %v1289, 31
        %v1292 = vsub.s32 32, %v1291
        %v1293 = vshrl.u32 683565275, %v1292
        %v1294 = vshll.u32 683565275, %v1291
        %v1295 = vshrl.u32 2475754826, %v1292
        %v1296 = vor.u32 %v1294, %v1295
        %v1297 = vshll.u32 2475754826, %v1291
        %v1298 = vshrl.u32 2131351028, %v1292
        %v1299 = vor.u32 %v1297, %v1298
        %v1300 = vshll.u32 2131351028, %v1291
        %v1301 = vshrl.u32 2102212464, %v1292
        %v1302 = vor.u32 %v1300, %v1301
        %v1303 = vshll.u32 2102212464, %v1291
        %v1304 = vshrl.u32 920167782, %v1292
        %v1305 = vor.u32 %v1303, %v1304
        %v1306 = vshll.u32 920167782, %v1291
        %v1307 = vshrl.u32 1326507024, %v1292
        %v1308 = vor.u32 %v1306, %v1307
        %vm1309 = vcmp.lt.s32.totalorder %v1290, 1
        %vm1310 = vcmp.lt.s32.totalorder %v1290, 2
        %vm1311 = vcmp.lt.s32.totalorder %v1290, 3
        %vm1312 = vcmp.lt.s32.totalorder %v1290, 4
        %v1313 = vsel %vm1309, %v1293, %v1296
        %v1314 = vsel %vm1312, %v1302, 2102212464
        %v1315 = vsel %vm1311, %v1299, %v1314
        %v1316 = vsel %vm1310, %v1313, %v1315
        %v1317 = vsel %vm1309, %v1296, %v1299
        %v1318 = vsel %vm1312, %v1305, 920167782
        %v1319 = vsel %vm1311, %v1302, %v1318
        %v1320 = vsel %vm1310, %v1317, %v1319
        %v1321 = vsel %vm1309, %v1299, %v1302
        %v1322 = vsel %vm1312, %v1308, 1326507024
        %v1323 = vsel %vm1311, %v1305, %v1322
        %v1324 = vsel %vm1310, %v1321, %v1323
        %v1325 = vshll.u32 %v1285, 8
        %v1326 = vand.u32 %v1325, 65535
        %v1327 = vshrl.u32 %v1325, 16
        %v1328 = vand.u32 %v1324, 65535
        %v1329 = vshrl.u32 %v1324, 16
        %v1330 = vmul.u32 %v1326, %v1328
        %v1331 = vmul.u32 %v1326, %v1329
        %v1332 = vmul.u32 %v1327, %v1328
        %v1333 = vmul.u32 %v1327, %v1329
        %v1334 = vshll.u32 %v1331, 16
        %v1335 = vshrl.u32 %v1331, 16
        %v1336 = vshll.u32 %v1332, 16
        %v1337 = vshrl.u32 %v1332, 16
        %vm1338 = vc.u32 %v1330, %v1334
        %v1339 = vsel %vm1338, 1, 0
        %v1340 = vadd.s32 %v1330, %v1334
        %v1341 = vadd.s32 %v1333, %v1339
        %vm1342 = vc.u32 %v1340, %v1336
        %v1343 = vsel %vm1342, 1, 0
        %v1344 = vadd.s32 %v1340, %v1336
        %v1345 = vadd.s32 %v1341, %v1343
        %v1346 = vadd.s32 %v1345, %v1335
        %v1347 = vadd.s32 %v1346, %v1337
        %v1348 = vand.u32 %v1325, 65535
        %v1349 = vshrl.u32 %v1325, 16
        %v1350 = vand.u32 %v1320, 65535
        %v1351 = vshrl.u32 %v1320, 16
        %v1352 = vmul.u32 %v1348, %v1350
        %v1353 = vmul.u32 %v1348, %v1351
        %v1354 = vmul.u32 %v1349, %v1350
        %v1355 = vmul.u32 %v1349, %v1351
        %v1356 = vshll.u32 %v1353, 16
        %v1357 = vshrl.u32 %v1353, 16
        %v1358 = vshll.u32 %v1354, 16
        %v1359 = vshrl.u32 %v1354, 16
        %vm1360 = vc.u32 %v1352, %v1356
        %v1361 = vsel %vm1360, 1, 0
        %v1362 = vadd.s32 %v1352, %v1356
        %v1363 = vadd.s32 %v1355, %v1361
        %vm1364 = vc.u32 %v1362, %v1358
        %v1365 = vsel %vm1364, 1, 0
        %v1366 = vadd.s32 %v1362, %v1358
        %v1367 = vadd.s32 %v1363, %v1365
        %v1368 = vadd.s32 %v1367, %v1357
        %v1369 = vadd.s32 %v1368, %v1359
        %v1370 = vmul.u32 %v1325, %v1316
        %v1371 = vadd.s32 %v1347, %v1366
        %vm1372 = vc.u32 %v1347, %v1366
        %v1373 = vadd.s32 %v1369, 1
        %v1374 = vsel %vm1372, %v1373, %v1369
        %v1375 = vadd.s32 %v1370, %v1374
        %v1376 = vadd.s32 %v1375, 536870912
        %v1377 = vshrl.u32 %v1376, 30
        %v1378 = vshll.u32 %v1377, 30
        %v1379 = vsub.s32 %v1375, %v1378
        %vm1380 = vcmp.lt.s32.totalorder %v1379, 0
        %v1381 = vsub.s32 0, %v1379
        %v1382 = vsel %vm1380, %v1381, %v1379
        %v1383 = vclz %v1382
        %v1384 = vsub.s32 %v1383, 2
        %vm1385 = vcmp.gt.s32.totalorder 0, %v1384
        %v1386 = vsel %vm1385, 0, %v1384
        %v1387 = vsub.s32 32, %v1386
        %v1388 = vshll.u32 %v1379, %v1386
        %v1389 = vshrl.u32 %v1371, %v1387
        %v1390 = vor.u32 %v1388, %v1389
        %v1391 = vsub.s32 4294967266, %v1386
        %v1392 = vadd.s32 %v1391, 127
        %v1393 = vshll.u32 %v1392, 23
        %v1394 = vor.u32 4788187, %v1393
        %v1395 = vand.u32 2147483647, %v1394
        %v1397 = vcvt.s32.f32 %v1390
        %v1398 = vmul.f32 %v1397, %v1395
        %v1399 = vxor.u32 %v1398, 2147483648
        %v1400 = vsel %vm1279, %v1399, %v1398
        %v1401 = vsub.s32 4, %v1377
        %v1402 = vsel %vm1279, %v1401, %v1377
        %v1403 = vsel %vm1278, %v601, %v1400
        %v1404 = vsel %vm1278, 0, %v1402
        %v1405 = vmul.f32 %v1403, %v1403
        %v1406 = vmul.f32 %v1405, -0.001358992
        %v1407 = vadd.f32 %v1406, 0.041655596
        %v1408 = vmul.f32 %v1405, %v1407
        %v1409 = vadd.f32 %v1408, -0.4999988
        %v1410 = vmul.f32 %v1405, %v1409
        %v1411 = vadd.f32 1.0, %v1410
        %v1412 = vmul.f32 %v1403, %v1403
        %v1413 = vmul.f32 %v1412, -0.00019511016
        %v1414 = vadd.f32 %v1413, 0.008332121
        %v1415 = vmul.f32 %v1412, %v1414
        %v1416 = vadd.f32 %v1415, -0.16666654
        %v1417 = vmul.f32 %v1412, %v1416
        %v1418 = vadd.f32 %v1417, 1.0
        %v1419 = vmul.f32 %v1418, %v1403
        %vm1420 = vweird.f32 %v601
        %v1421 = vand.u32 %v1404, 3
        %vm1422 = vcmp.lt.s32.totalorder %v1421, 2
        %vm1423 = vcmp.eq.s32.totalorder %v1421, 0
        %v1424 = vxor.u32 %v1419, 2147483648
        %v1425 = vsel %vm1423, %v1411, %v1424
        %vm1426 = vcmp.eq.s32.totalorder %v1421, 2
        %v1427 = vxor.u32 %v1411, 2147483648
        %v1428 = vsel %vm1426, %v1427, %v1419
        %v1429 = vsel %vm1422, %v1425, %v1428
        %v1430 = vsel %vm1420, nan, %v1429
        %v1431 = vand.u32 2147483647, %v602
        %vm1432 = vcmp.le.f32.partialorder %v1431, 0.7853982
        %vm1433 = vcmp.lt.s32.totalorder %v602, 0
        %v1434 = vand.u32 %v602, 2139095040
        %v1435 = vshrl.u32 %v1434, 23
        %v1436 = vsub.s32 %v1435, 127
        %v1437 = vand.u32 2147483647, %v602
        %v1438 = vand.u32 %v1437, 8388607
        %v1439 = vor.u32 %v1438, 8388608
        %v1440 = vsub.s32 0, %v1439
        %v1441 = vadd.s32 %v1436, 1
        %vm1442 = vcmp.gt.s32.totalorder %v1441, 0
        %v1443 = vsel %vm1442, %v1441, 0
        %v1444 = vshrl.u32 %v1443, 5
        %v1445 = vand.u32 %v1443, 31
        %v1446 = vsub.s32 32, %v1445
        %v1447 = vshrl.u32 683565275, %v1446
        %v1448 = vshll.u32 683565275, %v1445
        %v1449 = vshrl.u32 2475754826, %v1446
        %v1450 = vor.u32 %v1448, %v1449
        %v1451 = vshll.u32 2475754826, %v1445
        %v1452 = vshrl.u32 2131351028, %v1446
        %v1453 = vor.u32 %v1451, %v1452
        %v1454 = vshll.u32 2131351028, %v1445
        %v1455 = vshrl.u32 2102212464, %v1446
        %v1456 = vor.u32 %v1454, %v1455
        %v1457 = vshll.u32 2102212464, %v1445
        %v1458 = vshrl.u32 920167782, %v1446
        %v1459 = vor.u32 %v1457, %v1458
        %v1460 = vshll.u32 920167782, %v1445
        %v1461 = vshrl.u32 1326507024, %v1446
        %v1462 = vor.u32 %v1460, %v1461
        %vm1463 = vcmp.lt.s32.totalorder %v1444, 1
        %vm1464 = vcmp.lt.s32.totalorder %v1444, 2
        %vm1465 = vcmp.lt.s32.totalorder %v1444, 3
        %vm1466 = vcmp.lt.s32.totalorder %v1444, 4
        %v1467 = vsel %vm1463, %v1447, %v1450
        %v1468 = vsel %vm1466, %v1456, 2102212464
        %v1469 = vsel %vm1465, %v1453, %v1468
        %v1470 = vsel %vm1464, %v1467, %v1469
        %v1471 = vsel %vm1463, %v1450, %v1453
        %v1472 = vsel %vm1466, %v1459, 920167782
        %v1473 = vsel %vm1465, %v1456, %v1472
        %v1474 = vsel %vm1464, %v1471, %v1473
        %v1475 = vsel %vm1463, %v1453, %v1456
        %v1476 = vsel %vm1466, %v1462, 1326507024
        %v1477 = vsel %vm1465, %v1459, %v1476
        %v1478 = vsel %vm1464, %v1475, %v1477
        %v1479 = vshll.u32 %v1439, 8
        %v1480 = vand.u32 %v1479, 65535
        %v1481 = vshrl.u32 %v1479, 16
        %v1482 = vand.u32 %v1478, 65535
        %v1483 = vshrl.u32 %v1478, 16
        %v1484 = vmul.u32 %v1480, %v1482
        %v1485 = vmul.u32 %v1480, %v1483
        %v1486 = vmul.u32 %v1481, %v1482
        %v1487 = vmul.u32 %v1481, %v1483
        %v1488 = vshll.u32 %v1485, 16
        %v1489 = vshrl.u32 %v1485, 16
        %v1490 = vshll.u32 %v1486, 16
        %v1491 = vshrl.u32 %v1486, 16
        %vm1492 = vc.u32 %v1484, %v1488
        %v1493 = vsel %vm1492, 1, 0
        %v1494 = vadd.s32 %v1484, %v1488
        %v1495 = vadd.s32 %v1487, %v1493
        %vm1496 = vc.u32 %v1494, %v1490
        %v1497 = vsel %vm1496, 1, 0
        %v1498 = vadd.s32 %v1494, %v1490
        %v1499 = vadd.s32 %v1495, %v1497
        %v1500 = vadd.s32 %v1499, %v1489
        %v1501 = vadd.s32 %v1500, %v1491
        %v1502 = vand.u32 %v1479, 65535
        %v1503 = vshrl.u32 %v1479, 16
        %v1504 = vand.u32 %v1474, 65535
        %v1505 = vshrl.u32 %v1474, 16
        %v1506 = vmul.u32 %v1502, %v1504
        %v1507 = vmul.u32 %v1502, %v1505
        %v1508 = vmul.u32 %v1503, %v1504
        %v1509 = vmul.u32 %v1503, %v1505
        %v1510 = vshll.u32 %v1507, 16
        %v1511 = vshrl.u32 %v1507, 16
        %v1512 = vshll.u32 %v1508, 16
        %v1513 = vshrl.u32 %v1508, 16
        %vm1514 = vc.u32 %v1506, %v1510
        %v1515 = vsel %vm1514, 1, 0
        %v1516 = vadd.s32 %v1506, %v1510
        %v1517 = vadd.s32 %v1509, %v1515
        %vm1518 = vc.u32 %v1516, %v1512
        %v1519 = vsel %vm1518, 1, 0
        %v1520 = vadd.s32 %v1516, %v1512
        %v1521 = vadd.s32 %v1517, %v1519
        %v1522 = vadd.s32 %v1521, %v1511
        %v1523 = vadd.s32 %v1522, %v1513
        %v1524 = vmul.u32 %v1479, %v1470
        %v1525 = vadd.s32 %v1501, %v1520
        %vm1526 = vc.u32 %v1501, %v1520
        %v1527 = vadd.s32 %v1523, 1
        %v1528 = vsel %vm1526, %v1527, %v1523
        %v1529 = vadd.s32 %v1524, %v1528
        %v1530 = vadd.s32 %v1529, 536870912
        %v1531 = vshrl.u32 %v1530, 30
        %v1532 = vshll.u32 %v1531, 30
        %v1533 = vsub.s32 %v1529, %v1532
        %vm1534 = vcmp.lt.s32.totalorder %v1533, 0
        %v1535 = vsub.s32 0, %v1533
        %v1536 = vsel %vm1534, %v1535, %v1533
        %v1537 = vclz %v1536
        %v1538 = vsub.s32 %v1537, 2
        %vm1539 = vcmp.gt.s32.totalorder 0, %v1538
        %v1540 = vsel %vm1539, 0, %v1538
        %v1541 = vsub.s32 32, %v1540
        %v1542 = vshll.u32 %v1533, %v1540
        %v1543 = vshrl.u32 %v1525, %v1541
        %v1544 = vor.u32 %v1542, %v1543
        %v1545 = vsub.s32 4294967266, %v1540
        %v1546 = vadd.s32 %v1545, 127
        %v1547 = vshll.u32 %v1546, 23
        %v1548 = vor.u32 4788187, %v1547
        %v1549 = vand.u32 2147483647, %v1548
        %v1551 = vcvt.s32.f32 %v1544
        %v1552 = vmul.f32 %v1551, %v1549
        %v1553 = vxor.u32 %v1552, 2147483648
        %v1554 = vsel %vm1433, %v1553, %v1552
        %v1555 = vsub.s32 4, %v1531
        %v1556 = vsel %vm1433, %v1555, %v1531
        %v1557 = vsel %vm1432, %v602, %v1554
        %v1558 = vsel %vm1432, 0, %v1556
        %v1559 = vmul.f32 %v1557, %v1557
        %v1560 = vmul.f32 %v1559, -0.001358992
        %v1561 = vadd.f32 %v1560, 0.041655596
        %v1562 = vmul.f32 %v1559, %v1561
        %v1563 = vadd.f32 %v1562, -0.4999988
        %v1564 = vmul.f32 %v1559, %v1563
        %v1565 = vadd.f32 1.0, %v1564
        %v1566 = vmul.f32 %v1557, %v1557
        %v1567 = vmul.f32 %v1566, -0.00019511016
        %v1568 = vadd.f32 %v1567, 0.008332121
        %v1569 = vmul.f32 %v1566, %v1568
        %v1570 = vadd.f32 %v1569, -0.16666654
        %v1571 = vmul.f32 %v1566, %v1570
        %v1572 = vadd.f32 %v1571, 1.0
        %v1573 = vmul.f32 %v1572, %v1557
        %vm1574 = vweird.f32 %v602
        %v1575 = vand.u32 %v1558, 3
        %vm1576 = vcmp.lt.s32.totalorder %v1575, 2
        %vm1577 = vcmp.eq.s32.totalorder %v1575, 0
        %v1578 = vxor.u32 %v1573, 2147483648
        %v1579 = vsel %vm1577, %v1565, %v1578
        %vm1580 = vcmp.eq.s32.totalorder %v1575, 2
        %v1581 = vxor.u32 %v1565, 2147483648
        %v1582 = vsel %vm1580, %v1581, %v1573
        %v1583 = vsel %vm1576, %v1579, %v1582
        %v1584 = vsel %vm1574, nan, %v1583
        %v1585 = vand.u32 2147483647, %v603
        %vm1586 = vcmp.le.f32.partialorder %v1585, 0.7853982
        %vm1587 = vcmp.lt.s32.totalorder %v603, 0
        %v1588 = vand.u32 %v603, 2139095040
        %v1589 = vshrl.u32 %v1588, 23
        %v1590 = vsub.s32 %v1589, 127
        %v1591 = vand.u32 2147483647, %v603
        %v1592 = vand.u32 %v1591, 8388607
        %v1593 = vor.u32 %v1592, 8388608
        %v1594 = vsub.s32 0, %v1593
        %v1595 = vadd.s32 %v1590, 1
        %vm1596 = vcmp.gt.s32.totalorder %v1595, 0
        %v1597 = vsel %vm1596, %v1595, 0
        %v1598 = vshrl.u32 %v1597, 5
        %v1599 = vand.u32 %v1597, 31
        %v1600 = vsub.s32 32, %v1599
        %v1601 = vshrl.u32 683565275, %v1600
        %v1602 = vshll.u32 683565275, %v1599
        %v1603 = vshrl.u32 2475754826, %v1600
        %v1604 = vor.u32 %v1602, %v1603
        %v1605 = vshll.u32 2475754826, %v1599
        %v1606 = vshrl.u32 2131351028, %v1600
        %v1607 = vor.u32 %v1605, %v1606
        %v1608 = vshll.u32 2131351028, %v1599
        %v1609 = vshrl.u32 2102212464, %v1600
        %v1610 = vor.u32 %v1608, %v1609
        %v1611 = vshll.u32 2102212464, %v1599
        %v1612 = vshrl.u32 920167782, %v1600
        %v1613 = vor.u32 %v1611, %v1612
        %v1614 = vshll.u32 920167782, %v1599
        %v1615 = vshrl.u32 1326507024, %v1600
        %v1616 = vor.u32 %v1614, %v1615
        %vm1617 = vcmp.lt.s32.totalorder %v1598, 1
        %vm1618 = vcmp.lt.s32.totalorder %v1598, 2
        %vm1619 = vcmp.lt.s32.totalorder %v1598, 3
        %vm1620 = vcmp.lt.s32.totalorder %v1598, 4
        %v1621 = vsel %vm1617, %v1601, %v1604
        %v1622 = vsel %vm1620, %v1610, 2102212464
        %v1623 = vsel %vm1619, %v1607, %v1622
        %v1624 = vsel %vm1618, %v1621, %v1623
        %v1625 = vsel %vm1617, %v1604, %v1607
        %v1626 = vsel %vm1620, %v1613, 920167782
        %v1627 = vsel %vm1619, %v1610, %v1626
        %v1628 = vsel %vm1618, %v1625, %v1627
        %v1629 = vsel %vm1617, %v1607, %v1610
        %v1630 = vsel %vm1620, %v1616, 1326507024
        %v1631 = vsel %vm1619, %v1613, %v1630
        %v1632 = vsel %vm1618, %v1629, %v1631
        %v1633 = vshll.u32 %v1593, 8
        %v1634 = vand.u32 %v1633, 65535
        %v1635 = vshrl.u32 %v1633, 16
        %v1636 = vand.u32 %v1632, 65535
        %v1637 = vshrl.u32 %v1632, 16
        %v1638 = vmul.u32 %v1634, %v1636
        %v1639 = vmul.u32 %v1634, %v1637
        %v1640 = vmul.u32 %v1635, %v1636
        %v1641 = vmul.u32 %v1635, %v1637
        %v1642 = vshll.u32 %v1639, 16
        %v1643 = vshrl.u32 %v1639, 16
        %v1644 = vshll.u32 %v1640, 16
        %v1645 = vshrl.u32 %v1640, 16
        %vm1646 = vc.u32 %v1638, %v1642
        %v1647 = vsel %vm1646, 1, 0
        %v1648 = vadd.s32 %v1638, %v1642
        %v1649 = vadd.s32 %v1641, %v1647
        %vm1650 = vc.u32 %v1648, %v1644
        %v1651 = vsel %vm1650, 1, 0
        %v1652 = vadd.s32 %v1648, %v1644
        %v1653 = vadd.s32 %v1649, %v1651
        %v1654 = vadd.s32 %v1653, %v1643
        %v1655 = vadd.s32 %v1654, %v1645
        %v1656 = vand.u32 %v1633, 65535
        %v1657 = vshrl.u32 %v1633, 16
        %v1658 = vand.u32 %v1628, 65535
        %v1659 = vshrl.u32 %v1628, 16
        %v1660 = vmul.u32 %v1656, %v1658
        %v1661 = vmul.u32 %v1656, %v1659
        %v1662 = vmul.u32 %v1657, %v1658
        %v1663 = vmul.u32 %v1657, %v1659
        %v1664 = vshll.u32 %v1661, 16
        %v1665 = vshrl.u32 %v1661, 16
        %v1666 = vshll.u32 %v1662, 16
        %v1667 = vshrl.u32 %v1662, 16
        %vm1668 = vc.u32 %v1660, %v1664
        %v1669 = vsel %vm1668, 1, 0
        %v1670 = vadd.s32 %v1660, %v1664
        %v1671 = vadd.s32 %v1663, %v1669
        %vm1672 = vc.u32 %v1670, %v1666
        %v1673 = vsel %vm1672, 1, 0
        %v1674 = vadd.s32 %v1670, %v1666
        %v1675 = vadd.s32 %v1671, %v1673
        %v1676 = vadd.s32 %v1675, %v1665
        %v1677 = vadd.s32 %v1676, %v1667
        %v1678 = vmul.u32 %v1633, %v1624
        %v1679 = vadd.s32 %v1655, %v1674
        %vm1680 = vc.u32 %v1655, %v1674
        %v1681 = vadd.s32 %v1677, 1
        %v1682 = vsel %vm1680, %v1681, %v1677
        %v1683 = vadd.s32 %v1678, %v1682
        %v1684 = vadd.s32 %v1683, 536870912
        %v1685 = vshrl.u32 %v1684, 30
        %v1686 = vshll.u32 %v1685, 30
        %v1687 = vsub.s32 %v1683, %v1686
        %vm1688 = vcmp.lt.s32.totalorder %v1687, 0
        %v1689 = vsub.s32 0, %v1687
        %v1690 = vsel %vm1688, %v1689, %v1687
        %v1691 = vclz %v1690
        %v1692 = vsub.s32 %v1691, 2
        %vm1693 = vcmp.gt.s32.totalorder 0, %v1692
        %v1694 = vsel %vm1693, 0, %v1692
        %v1695 = vsub.s32 32, %v1694
        %v1696 = vshll.u32 %v1687, %v1694
        %v1697 = vshrl.u32 %v1679, %v1695
        %v1698 = vor.u32 %v1696, %v1697
        %v1699 = vsub.s32 4294967266, %v1694
        %v1700 = vadd.s32 %v1699, 127
        %v1701 = vshll.u32 %v1700, 23
        %v1702 = vor.u32 4788187, %v1701
        %v1703 = vand.u32 2147483647, %v1702
        %v1705 = vcvt.s32.f32 %v1698
        %v1706 = vmul.f32 %v1705, %v1703
        %v1707 = vxor.u32 %v1706, 2147483648
        %v1708 = vsel %vm1587, %v1707, %v1706
        %v1709 = vsub.s32 4, %v1685
        %v1710 = vsel %vm1587, %v1709, %v1685
        %v1711 = vsel %vm1586, %v603, %v1708
        %v1712 = vsel %vm1586, 0, %v1710
        %v1713 = vmul.f32 %v1711, %v1711
        %v1714 = vmul.f32 %v1713, -0.001358992
        %v1715 = vadd.f32 %v1714, 0.041655596
        %v1716 = vmul.f32 %v1713, %v1715
        %v1717 = vadd.f32 %v1716, -0.4999988
        %v1718 = vmul.f32 %v1713, %v1717
        %v1719 = vadd.f32 1.0, %v1718
        %v1720 = vmul.f32 %v1711, %v1711
        %v1721 = vmul.f32 %v1720, -0.00019511016
        %v1722 = vadd.f32 %v1721, 0.008332121
        %v1723 = vmul.f32 %v1720, %v1722
        %v1724 = vadd.f32 %v1723, -0.16666654
        %v1725 = vmul.f32 %v1720, %v1724
        %v1726 = vadd.f32 %v1725, 1.0
        %v1727 = vmul.f32 %v1726, %v1711
        %vm1728 = vweird.f32 %v603
        %v1729 = vand.u32 %v1712, 3
        %vm1730 = vcmp.lt.s32.totalorder %v1729, 2
        %vm1731 = vcmp.eq.s32.totalorder %v1729, 0
        %v1732 = vxor.u32 %v1727, 2147483648
        %v1733 = vsel %vm1731, %v1719, %v1732
        %vm1734 = vcmp.eq.s32.totalorder %v1729, 2
        %v1735 = vxor.u32 %v1719, 2147483648
        %v1736 = vsel %vm1734, %v1735, %v1727
        %v1737 = vsel %vm1730, %v1733, %v1736
        %v1738 = vsel %vm1728, nan, %v1737
        %v1739 = vand.u32 2147483647, %v604
        %vm1740 = vcmp.le.f32.partialorder %v1739, 0.7853982
        %vm1741 = vcmp.lt.s32.totalorder %v604, 0
        %v1742 = vand.u32 %v604, 2139095040
        %v1743 = vshrl.u32 %v1742, 23
        %v1744 = vsub.s32 %v1743, 127
        %v1745 = vand.u32 2147483647, %v604
        %v1746 = vand.u32 %v1745, 8388607
        %v1747 = vor.u32 %v1746, 8388608
        %v1748 = vsub.s32 0, %v1747
        %v1749 = vadd.s32 %v1744, 1
        %vm1750 = vcmp.gt.s32.totalorder %v1749, 0
        %v1751 = vsel %vm1750, %v1749, 0
        %v1752 = vshrl.u32 %v1751, 5
        %v1753 = vand.u32 %v1751, 31
        %v1754 = vsub.s32 32, %v1753
        %v1755 = vshrl.u32 683565275, %v1754
        %v1756 = vshll.u32 683565275, %v1753
        %v1757 = vshrl.u32 2475754826, %v1754
        %v1758 = vor.u32 %v1756, %v1757
        %v1759 = vshll.u32 2475754826, %v1753
        %v1760 = vshrl.u32 2131351028, %v1754
        %v1761 = vor.u32 %v1759, %v1760
        %v1762 = vshll.u32 2131351028, %v1753
        %v1763 = vshrl.u32 2102212464, %v1754
        %v1764 = vor.u32 %v1762, %v1763
        %v1765 = vshll.u32 2102212464, %v1753
        %v1766 = vshrl.u32 920167782, %v1754
        %v1767 = vor.u32 %v1765, %v1766
        %v1768 = vshll.u32 920167782, %v1753
        %v1769 = vshrl.u32 1326507024, %v1754
        %v1770 = vor.u32 %v1768, %v1769
        %vm1771 = vcmp.lt.s32.totalorder %v1752, 1
        %vm1772 = vcmp.lt.s32.totalorder %v1752, 2
        %vm1773 = vcmp.lt.s32.totalorder %v1752, 3
        %vm1774 = vcmp.lt.s32.totalorder %v1752, 4
        %v1775 = vsel %vm1771, %v1755, %v1758
        %v1776 = vsel %vm1774, %v1764, 2102212464
        %v1777 = vsel %vm1773, %v1761, %v1776
        %v1778 = vsel %vm1772, %v1775, %v1777
        %v1779 = vsel %vm1771, %v1758, %v1761
        %v1780 = vsel %vm1774, %v1767, 920167782
        %v1781 = vsel %vm1773, %v1764, %v1780
        %v1782 = vsel %vm1772, %v1779, %v1781
        %v1783 = vsel %vm1771, %v1761, %v1764
        %v1784 = vsel %vm1774, %v1770, 1326507024
        %v1785 = vsel %vm1773, %v1767, %v1784
        %v1786 = vsel %vm1772, %v1783, %v1785
        %v1787 = vshll.u32 %v1747, 8
        %v1788 = vand.u32 %v1787, 65535
        %v1789 = vshrl.u32 %v1787, 16
        %v1790 = vand.u32 %v1786, 65535
        %v1791 = vshrl.u32 %v1786, 16
        %v1792 = vmul.u32 %v1788, %v1790
        %v1793 = vmul.u32 %v1788, %v1791
        %v1794 = vmul.u32 %v1789, %v1790
        %v1795 = vmul.u32 %v1789, %v1791
        %v1796 = vshll.u32 %v1793, 16
        %v1797 = vshrl.u32 %v1793, 16
        %v1798 = vshll.u32 %v1794, 16
        %v1799 = vshrl.u32 %v1794, 16
        %vm1800 = vc.u32 %v1792, %v1796
        %v1801 = vsel %vm1800, 1, 0
        %v1802 = vadd.s32 %v1792, %v1796
        %v1803 = vadd.s32 %v1795, %v1801
        %vm1804 = vc.u32 %v1802, %v1798
        %v1805 = vsel %vm1804, 1, 0
        %v1806 = vadd.s32 %v1802, %v1798
        %v1807 = vadd.s32 %v1803, %v1805
        %v1808 = vadd.s32 %v1807, %v1797
        %v1809 = vadd.s32 %v1808, %v1799
        %v1810 = vand.u32 %v1787, 65535
        %v1811 = vshrl.u32 %v1787, 16
        %v1812 = vand.u32 %v1782, 65535
        %v1813 = vshrl.u32 %v1782, 16
        %v1814 = vmul.u32 %v1810, %v1812
        %v1815 = vmul.u32 %v1810, %v1813
        %v1816 = vmul.u32 %v1811, %v1812
        %v1817 = vmul.u32 %v1811, %v1813
        %v1818 = vshll.u32 %v1815, 16
        %v1819 = vshrl.u32 %v1815, 16
        %v1820 = vshll.u32 %v1816, 16
        %v1821 = vshrl.u32 %v1816, 16
        %vm1822 = vc.u32 %v1814, %v1818
        %v1823 = vsel %vm1822, 1, 0
        %v1824 = vadd.s32 %v1814, %v1818
        %v1825 = vadd.s32 %v1817, %v1823
        %vm1826 = vc.u32 %v1824, %v1820
        %v1827 = vsel %vm1826, 1, 0
        %v1828 = vadd.s32 %v1824, %v1820
        %v1829 = vadd.s32 %v1825, %v1827
        %v1830 = vadd.s32 %v1829, %v1819
        %v1831 = vadd.s32 %v1830, %v1821
        %v1832 = vmul.u32 %v1787, %v1778
        %v1833 = vadd.s32 %v1809, %v1828
        %vm1834 = vc.u32 %v1809, %v1828
        %v1835 = vadd.s32 %v1831, 1
        %v1836 = vsel %vm1834, %v1835, %v1831
        %v1837 = vadd.s32 %v1832, %v1836
        %v1838 = vadd.s32 %v1837, 536870912
        %v1839 = vshrl.u32 %v1838, 30
        %v1840 = vshll.u32 %v1839, 30
        %v1841 = vsub.s32 %v1837, %v1840
        %vm1842 = vcmp.lt.s32.totalorder %v1841, 0
        %v1843 = vsub.s32 0, %v1841
        %v1844 = vsel %vm1842, %v1843, %v1841
        %v1845 = vclz %v1844
        %v1846 = vsub.s32 %v1845, 2
        %vm1847 = vcmp.gt.s32.totalorder 0, %v1846
        %v1848 = vsel %vm1847, 0, %v1846
        %v1849 = vsub.s32 32, %v1848
        %v1850 = vshll.u32 %v1841, %v1848
        %v1851 = vshrl.u32 %v1833, %v1849
        %v1852 = vor.u32 %v1850, %v1851
        %v1853 = vsub.s32 4294967266, %v1848
        %v1854 = vadd.s32 %v1853, 127
        %v1855 = vshll.u32 %v1854, 23
        %v1856 = vor.u32 4788187, %v1855
        %v1857 = vand.u32 2147483647, %v1856
        %v1859 = vcvt.s32.f32 %v1852
        %v1860 = vmul.f32 %v1859, %v1857
        %v1861 = vxor.u32 %v1860, 2147483648
        %v1862 = vsel %vm1741, %v1861, %v1860
        %v1863 = vsub.s32 4, %v1839
        %v1864 = vsel %vm1741, %v1863, %v1839
        %v1865 = vsel %vm1740, %v604, %v1862
        %v1866 = vsel %vm1740, 0, %v1864
        %v1867 = vmul.f32 %v1865, %v1865
        %v1868 = vmul.f32 %v1867, -0.001358992
        %v1869 = vadd.f32 %v1868, 0.041655596
        %v1870 = vmul.f32 %v1867, %v1869
        %v1871 = vadd.f32 %v1870, -0.4999988
        %v1872 = vmul.f32 %v1867, %v1871
        %v1873 = vadd.f32 1.0, %v1872
        %v1874 = vmul.f32 %v1865, %v1865
        %v1875 = vmul.f32 %v1874, -0.00019511016
        %v1876 = vadd.f32 %v1875, 0.008332121
        %v1877 = vmul.f32 %v1874, %v1876
        %v1878 = vadd.f32 %v1877, -0.16666654
        %v1879 = vmul.f32 %v1874, %v1878
        %v1880 = vadd.f32 %v1879, 1.0
        %v1881 = vmul.f32 %v1880, %v1865
        %vm1882 = vweird.f32 %v604
        %v1883 = vand.u32 %v1866, 3
        %vm1884 = vcmp.lt.s32.totalorder %v1883, 2
        %vm1885 = vcmp.eq.s32.totalorder %v1883, 0
        %v1886 = vxor.u32 %v1881, 2147483648
        %v1887 = vsel %vm1885, %v1873, %v1886
        %vm1888 = vcmp.eq.s32.totalorder %v1883, 2
        %v1889 = vxor.u32 %v1873, 2147483648
        %v1890 = vsel %vm1888, %v1889, %v1881
        %v1891 = vsel %vm1884, %v1887, %v1890
        %v1892 = vsel %vm1882, nan, %v1891
        %v1893 = vand.u32 2147483647, %v605
        %vm1894 = vcmp.le.f32.partialorder %v1893, 0.7853982
        %vm1895 = vcmp.lt.s32.totalorder %v605, 0
        %v1896 = vand.u32 %v605, 2139095040
        %v1897 = vshrl.u32 %v1896, 23
        %v1898 = vsub.s32 %v1897, 127
        %v1899 = vand.u32 2147483647, %v605
        %v1900 = vand.u32 %v1899, 8388607
        %v1901 = vor.u32 %v1900, 8388608
        %v1902 = vsub.s32 0, %v1901
        %v1903 = vadd.s32 %v1898, 1
        %vm1904 = vcmp.gt.s32.totalorder %v1903, 0
        %v1905 = vsel %vm1904, %v1903, 0
        %v1906 = vshrl.u32 %v1905, 5
        %v1907 = vand.u32 %v1905, 31
        %v1908 = vsub.s32 32, %v1907
        %v1909 = vshrl.u32 683565275, %v1908
        %v1910 = vshll.u32 683565275, %v1907
        %v1911 = vshrl.u32 2475754826, %v1908
        %v1912 = vor.u32 %v1910, %v1911
        %v1913 = vshll.u32 2475754826, %v1907
        %v1914 = vshrl.u32 2131351028, %v1908
        %v1915 = vor.u32 %v1913, %v1914
        %v1916 = vshll.u32 2131351028, %v1907
        %v1917 = vshrl.u32 2102212464, %v1908
        %v1918 = vor.u32 %v1916, %v1917
        %v1919 = vshll.u32 2102212464, %v1907
        %v1920 = vshrl.u32 920167782, %v1908
        %v1921 = vor.u32 %v1919, %v1920
        %v1922 = vshll.u32 920167782, %v1907
        %v1923 = vshrl.u32 1326507024, %v1908
        %v1924 = vor.u32 %v1922, %v1923
        %vm1925 = vcmp.lt.s32.totalorder %v1906, 1
        %vm1926 = vcmp.lt.s32.totalorder %v1906, 2
        %vm1927 = vcmp.lt.s32.totalorder %v1906, 3
        %vm1928 = vcmp.lt.s32.totalorder %v1906, 4
        %v1929 = vsel %vm1925, %v1909, %v1912
        %v1930 = vsel %vm1928, %v1918, 2102212464
        %v1931 = vsel %vm1927, %v1915, %v1930
        %v1932 = vsel %vm1926, %v1929, %v1931
        %v1933 = vsel %vm1925, %v1912, %v1915
        %v1934 = vsel %vm1928, %v1921, 920167782
        %v1935 = vsel %vm1927, %v1918, %v1934
        %v1936 = vsel %vm1926, %v1933, %v1935
        %v1937 = vsel %vm1925, %v1915, %v1918
        %v1938 = vsel %vm1928, %v1924, 1326507024
        %v1939 = vsel %vm1927, %v1921, %v1938
        %v1940 = vsel %vm1926, %v1937, %v1939
        %v1941 = vshll.u32 %v1901, 8
        %v1942 = vand.u32 %v1941, 65535
        %v1943 = vshrl.u32 %v1941, 16
        %v1944 = vand.u32 %v1940, 65535
        %v1945 = vshrl.u32 %v1940, 16
        %v1946 = vmul.u32 %v1942, %v1944
        %v1947 = vmul.u32 %v1942, %v1945
        %v1948 = vmul.u32 %v1943, %v1944
        %v1949 = vmul.u32 %v1943, %v1945
        %v1950 = vshll.u32 %v1947, 16
        %v1951 = vshrl.u32 %v1947, 16
        %v1952 = vshll.u32 %v1948, 16
        %v1953 = vshrl.u32 %v1948, 16
        %vm1954 = vc.u32 %v1946, %v1950
        %v1955 = vsel %vm1954, 1, 0
        %v1956 = vadd.s32 %v1946, %v1950
        %v1957 = vadd.s32 %v1949, %v1955
        %vm1958 = vc.u32 %v1956, %v1952
        %v1959 = vsel %vm1958, 1, 0
        %v1960 = vadd.s32 %v1956, %v1952
        %v1961 = vadd.s32 %v1957, %v1959
        %v1962 = vadd.s32 %v1961, %v1951
        %v1963 = vadd.s32 %v1962, %v1953
        %v1964 = vand.u32 %v1941, 65535
        %v1965 = vshrl.u32 %v1941, 16
        %v1966 = vand.u32 %v1936, 65535
        %v1967 = vshrl.u32 %v1936, 16
        %v1968 = vmul.u32 %v1964, %v1966
        %v1969 = vmul.u32 %v1964, %v1967
        %v1970 = vmul.u32 %v1965, %v1966
        %v1971 = vmul.u32 %v1965, %v1967
        %v1972 = vshll.u32 %v1969, 16
        %v1973 = vshrl.u32 %v1969, 16
        %v1974 = vshll.u32 %v1970, 16
        %v1975 = vshrl.u32 %v1970, 16
        %vm1976 = vc.u32 %v1968, %v1972
        %v1977 = vsel %vm1976, 1, 0
        %v1978 = vadd.s32 %v1968, %v1972
        %v1979 = vadd.s32 %v1971, %v1977
        %vm1980 = vc.u32 %v1978, %v1974
        %v1981 = vsel %vm1980, 1, 0
        %v1982 = vadd.s32 %v1978, %v1974
        %v1983 = vadd.s32 %v1979, %v1981
        %v1984 = vadd.s32 %v1983, %v1973
        %v1985 = vadd.s32 %v1984, %v1975
        %v1986 = vmul.u32 %v1941, %v1932
        %v1987 = vadd.s32 %v1963, %v1982
        %vm1988 = vc.u32 %v1963, %v1982
        %v1989 = vadd.s32 %v1985, 1
        %v1990 = vsel %vm1988, %v1989, %v1985
        %v1991 = vadd.s32 %v1986, %v1990
        %v1992 = vadd.s32 %v1991, 536870912
        %v1993 = vshrl.u32 %v1992, 30
        %v1994 = vshll.u32 %v1993, 30
        %v1995 = vsub.s32 %v1991, %v1994
        %vm1996 = vcmp.lt.s32.totalorder %v1995, 0
        %v1997 = vsub.s32 0, %v1995
        %v1998 = vsel %vm1996, %v1997, %v1995
        %v1999 = vclz %v1998
        %v2000 = vsub.s32 %v1999, 2
        %vm2001 = vcmp.gt.s32.totalorder 0, %v2000
        %v2002 = vsel %vm2001, 0, %v2000
        %v2003 = vsub.s32 32, %v2002
        %v2004 = vshll.u32 %v1995, %v2002
        %v2005 = vshrl.u32 %v1987, %v2003
        %v2006 = vor.u32 %v2004, %v2005
        %v2007 = vsub.s32 4294967266, %v2002
        %v2008 = vadd.s32 %v2007, 127
        %v2009 = vshll.u32 %v2008, 23
        %v2010 = vor.u32 4788187, %v2009
        %v2011 = vand.u32 2147483647, %v2010
        %v2013 = vcvt.s32.f32 %v2006
        %v2014 = vmul.f32 %v2013, %v2011
        %v2015 = vxor.u32 %v2014, 2147483648
        %v2016 = vsel %vm1895, %v2015, %v2014
        %v2017 = vsub.s32 4, %v1993
        %v2018 = vsel %vm1895, %v2017, %v1993
        %v2019 = vsel %vm1894, %v605, %v2016
        %v2020 = vsel %vm1894, 0, %v2018
        %v2021 = vmul.f32 %v2019, %v2019
        %v2022 = vmul.f32 %v2021, -0.001358992
        %v2023 = vadd.f32 %v2022, 0.041655596
        %v2024 = vmul.f32 %v2021, %v2023
        %v2025 = vadd.f32 %v2024, -0.4999988
        %v2026 = vmul.f32 %v2021, %v2025
        %v2027 = vadd.f32 1.0, %v2026
        %v2028 = vmul.f32 %v2019, %v2019
        %v2029 = vmul.f32 %v2028, -0.00019511016
        %v2030 = vadd.f32 %v2029, 0.008332121
        %v2031 = vmul.f32 %v2028, %v2030
        %v2032 = vadd.f32 %v2031, -0.16666654
        %v2033 = vmul.f32 %v2028, %v2032
        %v2034 = vadd.f32 %v2033, 1.0
        %v2035 = vmul.f32 %v2034, %v2019
        %vm2036 = vweird.f32 %v605
        %v2037 = vand.u32 %v2020, 3
        %vm2038 = vcmp.lt.s32.totalorder %v2037, 2
        %vm2039 = vcmp.eq.s32.totalorder %v2037, 0
        %v2040 = vxor.u32 %v2035, 2147483648
        %v2041 = vsel %vm2039, %v2027, %v2040
        %vm2042 = vcmp.eq.s32.totalorder %v2037, 2
        %v2043 = vxor.u32 %v2027, 2147483648
        %v2044 = vsel %vm2042, %v2043, %v2035
        %v2045 = vsel %vm2038, %v2041, %v2044
        %v2046 = vsel %vm2036, nan, %v2045
        %v2047 = vand.u32 2147483647, %v606
        %vm2048 = vcmp.le.f32.partialorder %v2047, 0.7853982
        %vm2049 = vcmp.lt.s32.totalorder %v606, 0
        %v2050 = vand.u32 %v606, 2139095040
        %v2051 = vshrl.u32 %v2050, 23
        %v2052 = vsub.s32 %v2051, 127
        %v2053 = vand.u32 2147483647, %v606
        %v2054 = vand.u32 %v2053, 8388607
        %v2055 = vor.u32 %v2054, 8388608
        %v2056 = vsub.s32 0, %v2055
        %v2057 = vadd.s32 %v2052, 1
        %vm2058 = vcmp.gt.s32.totalorder %v2057, 0
        %v2059 = vsel %vm2058, %v2057, 0
        %v2060 = vshrl.u32 %v2059, 5
        %v2061 = vand.u32 %v2059, 31
        %v2062 = vsub.s32 32, %v2061
        %v2063 = vshrl.u32 683565275, %v2062
        %v2064 = vshll.u32 683565275, %v2061
        %v2065 = vshrl.u32 2475754826, %v2062
        %v2066 = vor.u32 %v2064, %v2065
        %v2067 = vshll.u32 2475754826, %v2061
        %v2068 = vshrl.u32 2131351028, %v2062
        %v2069 = vor.u32 %v2067, %v2068
        %v2070 = vshll.u32 2131351028, %v2061
        %v2071 = vshrl.u32 2102212464, %v2062
        %v2072 = vor.u32 %v2070, %v2071
        %v2073 = vshll.u32 2102212464, %v2061
        %v2074 = vshrl.u32 920167782, %v2062
        %v2075 = vor.u32 %v2073, %v2074
        %v2076 = vshll.u32 920167782, %v2061
        %v2077 = vshrl.u32 1326507024, %v2062
        %v2078 = vor.u32 %v2076, %v2077
        %vm2079 = vcmp.lt.s32.totalorder %v2060, 1
        %vm2080 = vcmp.lt.s32.totalorder %v2060, 2
        %vm2081 = vcmp.lt.s32.totalorder %v2060, 3
        %vm2082 = vcmp.lt.s32.totalorder %v2060, 4
        %v2083 = vsel %vm2079, %v2063, %v2066
        %v2084 = vsel %vm2082, %v2072, 2102212464
        %v2085 = vsel %vm2081, %v2069, %v2084
        %v2086 = vsel %vm2080, %v2083, %v2085
        %v2087 = vsel %vm2079, %v2066, %v2069
        %v2088 = vsel %vm2082, %v2075, 920167782
        %v2089 = vsel %vm2081, %v2072, %v2088
        %v2090 = vsel %vm2080, %v2087, %v2089
        %v2091 = vsel %vm2079, %v2069, %v2072
        %v2092 = vsel %vm2082, %v2078, 1326507024
        %v2093 = vsel %vm2081, %v2075, %v2092
        %v2094 = vsel %vm2080, %v2091, %v2093
        %v2095 = vshll.u32 %v2055, 8
        %v2096 = vand.u32 %v2095, 65535
        %v2097 = vshrl.u32 %v2095, 16
        %v2098 = vand.u32 %v2094, 65535
        %v2099 = vshrl.u32 %v2094, 16
        %v2100 = vmul.u32 %v2096, %v2098
        %v2101 = vmul.u32 %v2096, %v2099
        %v2102 = vmul.u32 %v2097, %v2098
        %v2103 = vmul.u32 %v2097, %v2099
        %v2104 = vshll.u32 %v2101, 16
        %v2105 = vshrl.u32 %v2101, 16
        %v2106 = vshll.u32 %v2102, 16
        %v2107 = vshrl.u32 %v2102, 16
        %vm2108 = vc.u32 %v2100, %v2104
        %v2109 = vsel %vm2108, 1, 0
        %v2110 = vadd.s32 %v2100, %v2104
        %v2111 = vadd.s32 %v2103, %v2109
        %vm2112 = vc.u32 %v2110, %v2106
        %v2113 = vsel %vm2112, 1, 0
        %v2114 = vadd.s32 %v2110, %v2106
        %v2115 = vadd.s32 %v2111, %v2113
        %v2116 = vadd.s32 %v2115, %v2105
        %v2117 = vadd.s32 %v2116, %v2107
        %v2118 = vand.u32 %v2095, 65535
        %v2119 = vshrl.u32 %v2095, 16
        %v2120 = vand.u32 %v2090, 65535
        %v2121 = vshrl.u32 %v2090, 16
        %v2122 = vmul.u32 %v2118, %v2120
        %v2123 = vmul.u32 %v2118, %v2121
        %v2124 = vmul.u32 %v2119, %v2120
        %v2125 = vmul.u32 %v2119, %v2121
        %v2126 = vshll.u32 %v2123, 16
        %v2127 = vshrl.u32 %v2123, 16
        %v2128 = vshll.u32 %v2124, 16
        %v2129 = vshrl.u32 %v2124, 16
        %vm2130 = vc.u32 %v2122, %v2126
        %v2131 = vsel %vm2130, 1, 0
        %v2132 = vadd.s32 %v2122, %v2126
        %v2133 = vadd.s32 %v2125, %v2131
        %vm2134 = vc.u32 %v2132, %v2128
        %v2135 = vsel %vm2134, 1, 0
        %v2136 = vadd.s32 %v2132, %v2128
        %v2137 = vadd.s32 %v2133, %v2135
        %v2138 = vadd.s32 %v2137, %v2127
        %v2139 = vadd.s32 %v2138, %v2129
        %v2140 = vmul.u32 %v2095, %v2086
        %v2141 = vadd.s32 %v2117, %v2136
        %vm2142 = vc.u32 %v2117, %v2136
        %v2143 = vadd.s32 %v2139, 1
        %v2144 = vsel %vm2142, %v2143, %v2139
        %v2145 = vadd.s32 %v2140, %v2144
        %v2146 = vadd.s32 %v2145, 536870912
        %v2147 = vshrl.u32 %v2146, 30
        %v2148 = vshll.u32 %v2147, 30
        %v2149 = vsub.s32 %v2145, %v2148
        %vm2150 = vcmp.lt.s32.totalorder %v2149, 0
        %v2151 = vsub.s32 0, %v2149
        %v2152 = vsel %vm2150, %v2151, %v2149
        %v2153 = vclz %v2152
        %v2154 = vsub.s32 %v2153, 2
        %vm2155 = vcmp.gt.s32.totalorder 0, %v2154
        %v2156 = vsel %vm2155, 0, %v2154
        %v2157 = vsub.s32 32, %v2156
        %v2158 = vshll.u32 %v2149, %v2156
        %v2159 = vshrl.u32 %v2141, %v2157
        %v2160 = vor.u32 %v2158, %v2159
        %v2161 = vsub.s32 4294967266, %v2156
        %v2162 = vadd.s32 %v2161, 127
        %v2163 = vshll.u32 %v2162, 23
        %v2164 = vor.u32 4788187, %v2163
        %v2165 = vand.u32 2147483647, %v2164
        %v2167 = vcvt.s32.f32 %v2160
        %v2168 = vmul.f32 %v2167, %v2165
        %v2169 = vxor.u32 %v2168, 2147483648
        %v2170 = vsel %vm2049, %v2169, %v2168
        %v2171 = vsub.s32 4, %v2147
        %v2172 = vsel %vm2049, %v2171, %v2147
        %v2173 = vsel %vm2048, %v606, %v2170
        %v2174 = vsel %vm2048, 0, %v2172
        %v2175 = vmul.f32 %v2173, %v2173
        %v2176 = vmul.f32 %v2175, -0.001358992
        %v2177 = vadd.f32 %v2176, 0.041655596
        %v2178 = vmul.f32 %v2175, %v2177
        %v2179 = vadd.f32 %v2178, -0.4999988
        %v2180 = vmul.f32 %v2175, %v2179
        %v2181 = vadd.f32 1.0, %v2180
        %v2182 = vmul.f32 %v2173, %v2173
        %v2183 = vmul.f32 %v2182, -0.00019511016
        %v2184 = vadd.f32 %v2183, 0.008332121
        %v2185 = vmul.f32 %v2182, %v2184
        %v2186 = vadd.f32 %v2185, -0.16666654
        %v2187 = vmul.f32 %v2182, %v2186
        %v2188 = vadd.f32 %v2187, 1.0
        %v2189 = vmul.f32 %v2188, %v2173
        %vm2190 = vweird.f32 %v606
        %v2191 = vand.u32 %v2174, 3
        %vm2192 = vcmp.lt.s32.totalorder %v2191, 2
        %vm2193 = vcmp.eq.s32.totalorder %v2191, 0
        %v2194 = vxor.u32 %v2189, 2147483648
        %v2195 = vsel %vm2193, %v2181, %v2194
        %vm2196 = vcmp.eq.s32.totalorder %v2191, 2
        %v2197 = vxor.u32 %v2181, 2147483648
        %v2198 = vsel %vm2196, %v2197, %v2189
        %v2199 = vsel %vm2192, %v2195, %v2198
        %v2200 = vsel %vm2190, nan, %v2199
        %v2201 = vand.u32 2147483647, %v607
        %vm2202 = vcmp.le.f32.partialorder %v2201, 0.7853982
        %vm2203 = vcmp.lt.s32.totalorder %v607, 0
        %v2204 = vand.u32 %v607, 2139095040
        %v2205 = vshrl.u32 %v2204, 23
        %v2206 = vsub.s32 %v2205, 127
        %v2207 = vand.u32 2147483647, %v607
        %v2208 = vand.u32 %v2207, 8388607
        %v2209 = vor.u32 %v2208, 8388608
        %v2210 = vsub.s32 0, %v2209
        %v2211 = vadd.s32 %v2206, 1
        %vm2212 = vcmp.gt.s32.totalorder %v2211, 0
        %v2213 = vsel %vm2212, %v2211, 0
        %v2214 = vshrl.u32 %v2213, 5
        %v2215 = vand.u32 %v2213, 31
        %v2216 = vsub.s32 32, %v2215
        %v2217 = vshrl.u32 683565275, %v2216
        %v2218 = vshll.u32 683565275, %v2215
        %v2219 = vshrl.u32 2475754826, %v2216
        %v2220 = vor.u32 %v2218, %v2219
        %v2221 = vshll.u32 2475754826, %v2215
        %v2222 = vshrl.u32 2131351028, %v2216
        %v2223 = vor.u32 %v2221, %v2222
        %v2224 = vshll.u32 2131351028, %v2215
        %v2225 = vshrl.u32 2102212464, %v2216
        %v2226 = vor.u32 %v2224, %v2225
        %v2227 = vshll.u32 2102212464, %v2215
        %v2228 = vshrl.u32 920167782, %v2216
        %v2229 = vor.u32 %v2227, %v2228
        %v2230 = vshll.u32 920167782, %v2215
        %v2231 = vshrl.u32 1326507024, %v2216
        %v2232 = vor.u32 %v2230, %v2231
        %vm2233 = vcmp.lt.s32.totalorder %v2214, 1
        %vm2234 = vcmp.lt.s32.totalorder %v2214, 2
        %vm2235 = vcmp.lt.s32.totalorder %v2214, 3
        %vm2236 = vcmp.lt.s32.totalorder %v2214, 4
        %v2237 = vsel %vm2233, %v2217, %v2220
        %v2238 = vsel %vm2236, %v2226, 2102212464
        %v2239 = vsel %vm2235, %v2223, %v2238
        %v2240 = vsel %vm2234, %v2237, %v2239
        %v2241 = vsel %vm2233, %v2220, %v2223
        %v2242 = vsel %vm2236, %v2229, 920167782
        %v2243 = vsel %vm2235, %v2226, %v2242
        %v2244 = vsel %vm2234, %v2241, %v2243
        %v2245 = vsel %vm2233, %v2223, %v2226
        %v2246 = vsel %vm2236, %v2232, 1326507024
        %v2247 = vsel %vm2235, %v2229, %v2246
        %v2248 = vsel %vm2234, %v2245, %v2247
        %v2249 = vshll.u32 %v2209, 8
        %v2250 = vand.u32 %v2249, 65535
        %v2251 = vshrl.u32 %v2249, 16
        %v2252 = vand.u32 %v2248, 65535
        %v2253 = vshrl.u32 %v2248, 16
        %v2254 = vmul.u32 %v2250, %v2252
        %v2255 = vmul.u32 %v2250, %v2253
        %v2256 = vmul.u32 %v2251, %v2252
        %v2257 = vmul.u32 %v2251, %v2253
        %v2258 = vshll.u32 %v2255, 16
        %v2259 = vshrl.u32 %v2255, 16
        %v2260 = vshll.u32 %v2256, 16
        %v2261 = vshrl.u32 %v2256, 16
        %vm2262 = vc.u32 %v2254, %v2258
        %v2263 = vsel %vm2262, 1, 0
        %v2264 = vadd.s32 %v2254, %v2258
        %v2265 = vadd.s32 %v2257, %v2263
        %vm2266 = vc.u32 %v2264, %v2260
        %v2267 = vsel %vm2266, 1, 0
        %v2268 = vadd.s32 %v2264, %v2260
        %v2269 = vadd.s32 %v2265, %v2267
        %v2270 = vadd.s32 %v2269, %v2259
        %v2271 = vadd.s32 %v2270, %v2261
        %v2272 = vand.u32 %v2249, 65535
        %v2273 = vshrl.u32 %v2249, 16
        %v2274 = vand.u32 %v2244, 65535
        %v2275 = vshrl.u32 %v2244, 16
        %v2276 = vmul.u32 %v2272, %v2274
        %v2277 = vmul.u32 %v2272, %v2275
        %v2278 = vmul.u32 %v2273, %v2274
        %v2279 = vmul.u32 %v2273, %v2275
        %v2280 = vshll.u32 %v2277, 16
        %v2281 = vshrl.u32 %v2277, 16
        %v2282 = vshll.u32 %v2278, 16
        %v2283 = vshrl.u32 %v2278, 16
        %vm2284 = vc.u32 %v2276, %v2280
        %v2285 = vsel %vm2284, 1, 0
        %v2286 = vadd.s32 %v2276, %v2280
        %v2287 = vadd.s32 %v2279, %v2285
        %vm2288 = vc.u32 %v2286, %v2282
        %v2289 = vsel %vm2288, 1, 0
        %v2290 = vadd.s32 %v2286, %v2282
        %v2291 = vadd.s32 %v2287, %v2289
        %v2292 = vadd.s32 %v2291, %v2281
        %v2293 = vadd.s32 %v2292, %v2283
        %v2294 = vmul.u32 %v2249, %v2240
        %v2295 = vadd.s32 %v2271, %v2290
        %vm2296 = vc.u32 %v2271, %v2290
        %v2297 = vadd.s32 %v2293, 1
        %v2298 = vsel %vm2296, %v2297, %v2293
        %v2299 = vadd.s32 %v2294, %v2298
        %v2300 = vadd.s32 %v2299, 536870912
        %v2301 = vshrl.u32 %v2300, 30
        %v2302 = vshll.u32 %v2301, 30
        %v2303 = vsub.s32 %v2299, %v2302
        %vm2304 = vcmp.lt.s32.totalorder %v2303, 0
        %v2305 = vsub.s32 0, %v2303
        %v2306 = vsel %vm2304, %v2305, %v2303
        %v2307 = vclz %v2306
        %v2308 = vsub.s32 %v2307, 2
        %vm2309 = vcmp.gt.s32.totalorder 0, %v2308
        %v2310 = vsel %vm2309, 0, %v2308
        %v2311 = vsub.s32 32, %v2310
        %v2312 = vshll.u32 %v2303, %v2310
        %v2313 = vshrl.u32 %v2295, %v2311
        %v2314 = vor.u32 %v2312, %v2313
        %v2315 = vsub.s32 4294967266, %v2310
        %v2316 = vadd.s32 %v2315, 127
        %v2317 = vshll.u32 %v2316, 23
        %v2318 = vor.u32 4788187, %v2317
        %v2319 = vand.u32 2147483647, %v2318
        %v2321 = vcvt.s32.f32 %v2314
        %v2322 = vmul.f32 %v2321, %v2319
        %v2323 = vxor.u32 %v2322, 2147483648
        %v2324 = vsel %vm2203, %v2323, %v2322
        %v2325 = vsub.s32 4, %v2301
        %v2326 = vsel %vm2203, %v2325, %v2301
        %v2327 = vsel %vm2202, %v607, %v2324
        %v2328 = vsel %vm2202, 0, %v2326
        %v2329 = vmul.f32 %v2327, %v2327
        %v2330 = vmul.f32 %v2329, -0.001358992
        %v2331 = vadd.f32 %v2330, 0.041655596
        %v2332 = vmul.f32 %v2329, %v2331
        %v2333 = vadd.f32 %v2332, -0.4999988
        %v2334 = vmul.f32 %v2329, %v2333
        %v2335 = vadd.f32 1.0, %v2334
        %v2336 = vmul.f32 %v2327, %v2327
        %v2337 = vmul.f32 %v2336, -0.00019511016
        %v2338 = vadd.f32 %v2337, 0.008332121
        %v2339 = vmul.f32 %v2336, %v2338
        %v2340 = vadd.f32 %v2339, -0.16666654
        %v2341 = vmul.f32 %v2336, %v2340
        %v2342 = vadd.f32 %v2341, 1.0
        %v2343 = vmul.f32 %v2342, %v2327
        %vm2344 = vweird.f32 %v607
        %v2345 = vand.u32 %v2328, 3
        %vm2346 = vcmp.lt.s32.totalorder %v2345, 2
        %vm2347 = vcmp.eq.s32.totalorder %v2345, 0
        %v2348 = vxor.u32 %v2343, 2147483648
        %v2349 = vsel %vm2347, %v2335, %v2348
        %vm2350 = vcmp.eq.s32.totalorder %v2345, 2
        %v2351 = vxor.u32 %v2335, 2147483648
        %v2352 = vsel %vm2350, %v2351, %v2343
        %v2353 = vsel %vm2346, %v2349, %v2352
        %v2354 = vsel %vm2344, nan, %v2353
        %v2355 = vand.u32 2147483647, %v608
        %vm2356 = vcmp.le.f32.partialorder %v2355, 0.7853982
        %vm2357 = vcmp.lt.s32.totalorder %v608, 0
        %v2358 = vand.u32 %v608, 2139095040
        %v2359 = vshrl.u32 %v2358, 23
        %v2360 = vsub.s32 %v2359, 127
        %v2361 = vand.u32 2147483647, %v608
        %v2362 = vand.u32 %v2361, 8388607
        %v2363 = vor.u32 %v2362, 8388608
        %v2364 = vsub.s32 0, %v2363
        %v2365 = vadd.s32 %v2360, 1
        %vm2366 = vcmp.gt.s32.totalorder %v2365, 0
        %v2367 = vsel %vm2366, %v2365, 0
        %v2368 = vshrl.u32 %v2367, 5
        %v2369 = vand.u32 %v2367, 31
        %v2370 = vsub.s32 32, %v2369
        %v2371 = vshrl.u32 683565275, %v2370
        %v2372 = vshll.u32 683565275, %v2369
        %v2373 = vshrl.u32 2475754826, %v2370
        %v2374 = vor.u32 %v2372, %v2373
        %v2375 = vshll.u32 2475754826, %v2369
        %v2376 = vshrl.u32 2131351028, %v2370
        %v2377 = vor.u32 %v2375, %v2376
        %v2378 = vshll.u32 2131351028, %v2369
        %v2379 = vshrl.u32 2102212464, %v2370
        %v2380 = vor.u32 %v2378, %v2379
        %v2381 = vshll.u32 2102212464, %v2369
        %v2382 = vshrl.u32 920167782, %v2370
        %v2383 = vor.u32 %v2381, %v2382
        %v2384 = vshll.u32 920167782, %v2369
        %v2385 = vshrl.u32 1326507024, %v2370
        %v2386 = vor.u32 %v2384, %v2385
        %vm2387 = vcmp.lt.s32.totalorder %v2368, 1
        %vm2388 = vcmp.lt.s32.totalorder %v2368, 2
        %vm2389 = vcmp.lt.s32.totalorder %v2368, 3
        %vm2390 = vcmp.lt.s32.totalorder %v2368, 4
        %v2391 = vsel %vm2387, %v2371, %v2374
        %v2392 = vsel %vm2390, %v2380, 2102212464
        %v2393 = vsel %vm2389, %v2377, %v2392
        %v2394 = vsel %vm2388, %v2391, %v2393
        %v2395 = vsel %vm2387, %v2374, %v2377
        %v2396 = vsel %vm2390, %v2383, 920167782
        %v2397 = vsel %vm2389, %v2380, %v2396
        %v2398 = vsel %vm2388, %v2395, %v2397
        %v2399 = vsel %vm2387, %v2377, %v2380
        %v2400 = vsel %vm2390, %v2386, 1326507024
        %v2401 = vsel %vm2389, %v2383, %v2400
        %v2402 = vsel %vm2388, %v2399, %v2401
        %v2403 = vshll.u32 %v2363, 8
        %v2404 = vand.u32 %v2403, 65535
        %v2405 = vshrl.u32 %v2403, 16
        %v2406 = vand.u32 %v2402, 65535
        %v2407 = vshrl.u32 %v2402, 16
        %v2408 = vmul.u32 %v2404, %v2406
        %v2409 = vmul.u32 %v2404, %v2407
        %v2410 = vmul.u32 %v2405, %v2406
        %v2411 = vmul.u32 %v2405, %v2407
        %v2412 = vshll.u32 %v2409, 16
        %v2413 = vshrl.u32 %v2409, 16
        %v2414 = vshll.u32 %v2410, 16
        %v2415 = vshrl.u32 %v2410, 16
        %vm2416 = vc.u32 %v2408, %v2412
        %v2417 = vsel %vm2416, 1, 0
        %v2418 = vadd.s32 %v2408, %v2412
        %v2419 = vadd.s32 %v2411, %v2417
        %vm2420 = vc.u32 %v2418, %v2414
        %v2421 = vsel %vm2420, 1, 0
        %v2422 = vadd.s32 %v2418, %v2414
        %v2423 = vadd.s32 %v2419, %v2421
        %v2424 = vadd.s32 %v2423, %v2413
        %v2425 = vadd.s32 %v2424, %v2415
        %v2426 = vand.u32 %v2403, 65535
        %v2427 = vshrl.u32 %v2403, 16
        %v2428 = vand.u32 %v2398, 65535
        %v2429 = vshrl.u32 %v2398, 16
        %v2430 = vmul.u32 %v2426, %v2428
        %v2431 = vmul.u32 %v2426, %v2429
        %v2432 = vmul.u32 %v2427, %v2428
        %v2433 = vmul.u32 %v2427, %v2429
        %v2434 = vshll.u32 %v2431, 16
        %v2435 = vshrl.u32 %v2431, 16
        %v2436 = vshll.u32 %v2432, 16
        %v2437 = vshrl.u32 %v2432, 16
        %vm2438 = vc.u32 %v2430, %v2434
        %v2439 = vsel %vm2438, 1, 0
        %v2440 = vadd.s32 %v2430, %v2434
        %v2441 = vadd.s32 %v2433, %v2439
        %vm2442 = vc.u32 %v2440, %v2436
        %v2443 = vsel %vm2442, 1, 0
        %v2444 = vadd.s32 %v2440, %v2436
        %v2445 = vadd.s32 %v2441, %v2443
        %v2446 = vadd.s32 %v2445, %v2435
        %v2447 = vadd.s32 %v2446, %v2437
        %v2448 = vmul.u32 %v2403, %v2394
        %v2449 = vadd.s32 %v2425, %v2444
        %vm2450 = vc.u32 %v2425, %v2444
        %v2451 = vadd.s32 %v2447, 1
        %v2452 = vsel %vm2450, %v2451, %v2447
        %v2453 = vadd.s32 %v2448, %v2452
        %v2454 = vadd.s32 %v2453, 536870912
        %v2455 = vshrl.u32 %v2454, 30
        %v2456 = vshll.u32 %v2455, 30
        %v2457 = vsub.s32 %v2453, %v2456
        %vm2458 = vcmp.lt.s32.totalorder %v2457, 0
        %v2459 = vsub.s32 0, %v2457
        %v2460 = vsel %vm2458, %v2459, %v2457
        %v2461 = vclz %v2460
        %v2462 = vsub.s32 %v2461, 2
        %vm2463 = vcmp.gt.s32.totalorder 0, %v2462
        %v2464 = vsel %vm2463, 0, %v2462
        %v2465 = vsub.s32 32, %v2464
        %v2466 = vshll.u32 %v2457, %v2464
        %v2467 = vshrl.u32 %v2449, %v2465
        %v2468 = vor.u32 %v2466, %v2467
        %v2469 = vsub.s32 4294967266, %v2464
        %v2470 = vadd.s32 %v2469, 127
        %v2471 = vshll.u32 %v2470, 23
        %v2472 = vor.u32 4788187, %v2471
        %v2473 = vand.u32 2147483647, %v2472
        %v2475 = vcvt.s32.f32 %v2468
        %v2476 = vmul.f32 %v2475, %v2473
        %v2477 = vxor.u32 %v2476, 2147483648
        %v2478 = vsel %vm2357, %v2477, %v2476
        %v2479 = vsub.s32 4, %v2455
        %v2480 = vsel %vm2357, %v2479, %v2455
        %v2481 = vsel %vm2356, %v608, %v2478
        %v2482 = vsel %vm2356, 0, %v2480
        %v2483 = vmul.f32 %v2481, %v2481
        %v2484 = vmul.f32 %v2483, -0.001358992
        %v2485 = vadd.f32 %v2484, 0.041655596
        %v2486 = vmul.f32 %v2483, %v2485
        %v2487 = vadd.f32 %v2486, -0.4999988
        %v2488 = vmul.f32 %v2483, %v2487
        %v2489 = vadd.f32 1.0, %v2488
        %v2490 = vmul.f32 %v2481, %v2481
        %v2491 = vmul.f32 %v2490, -0.00019511016
        %v2492 = vadd.f32 %v2491, 0.008332121
        %v2493 = vmul.f32 %v2490, %v2492
        %v2494 = vadd.f32 %v2493, -0.16666654
        %v2495 = vmul.f32 %v2490, %v2494
        %v2496 = vadd.f32 %v2495, 1.0
        %v2497 = vmul.f32 %v2496, %v2481
        %vm2498 = vweird.f32 %v608
        %v2499 = vand.u32 %v2482, 3
        %vm2500 = vcmp.lt.s32.totalorder %v2499, 2
        %vm2501 = vcmp.eq.s32.totalorder %v2499, 0
        %v2502 = vxor.u32 %v2497, 2147483648
        %v2503 = vsel %vm2501, %v2489, %v2502
        %vm2504 = vcmp.eq.s32.totalorder %v2499, 2
        %v2505 = vxor.u32 %v2489, 2147483648
        %v2506 = vsel %vm2504, %v2505, %v2497
        %v2507 = vsel %vm2500, %v2503, %v2506
        %v2508 = vsel %vm2498, nan, %v2507
        %v2509 = vand.u32 2147483647, %v609
        %vm2510 = vcmp.le.f32.partialorder %v2509, 0.7853982
        %vm2511 = vcmp.lt.s32.totalorder %v609, 0
        %v2512 = vand.u32 %v609, 2139095040
        %v2513 = vshrl.u32 %v2512, 23
        %v2514 = vsub.s32 %v2513, 127
        %v2515 = vand.u32 2147483647, %v609
        %v2516 = vand.u32 %v2515, 8388607
        %v2517 = vor.u32 %v2516, 8388608
        %v2518 = vsub.s32 0, %v2517
        %v2519 = vadd.s32 %v2514, 1
        %vm2520 = vcmp.gt.s32.totalorder %v2519, 0
        %v2521 = vsel %vm2520, %v2519, 0
        %v2522 = vshrl.u32 %v2521, 5
        %v2523 = vand.u32 %v2521, 31
        %v2524 = vsub.s32 32, %v2523
        %v2525 = vshrl.u32 683565275, %v2524
        %v2526 = vshll.u32 683565275, %v2523
        %v2527 = vshrl.u32 2475754826, %v2524
        %v2528 = vor.u32 %v2526, %v2527
        %v2529 = vshll.u32 2475754826, %v2523
        %v2530 = vshrl.u32 2131351028, %v2524
        %v2531 = vor.u32 %v2529, %v2530
        %v2532 = vshll.u32 2131351028, %v2523
        %v2533 = vshrl.u32 2102212464, %v2524
        %v2534 = vor.u32 %v2532, %v2533
        %v2535 = vshll.u32 2102212464, %v2523
        %v2536 = vshrl.u32 920167782, %v2524
        %v2537 = vor.u32 %v2535, %v2536
        %v2538 = vshll.u32 920167782, %v2523
        %v2539 = vshrl.u32 1326507024, %v2524
        %v2540 = vor.u32 %v2538, %v2539
        %vm2541 = vcmp.lt.s32.totalorder %v2522, 1
        %vm2542 = vcmp.lt.s32.totalorder %v2522, 2
        %vm2543 = vcmp.lt.s32.totalorder %v2522, 3
        %vm2544 = vcmp.lt.s32.totalorder %v2522, 4
        %v2545 = vsel %vm2541, %v2525, %v2528
        %v2546 = vsel %vm2544, %v2534, 2102212464
        %v2547 = vsel %vm2543, %v2531, %v2546
        %v2548 = vsel %vm2542, %v2545, %v2547
        %v2549 = vsel %vm2541, %v2528, %v2531
        %v2550 = vsel %vm2544, %v2537, 920167782
        %v2551 = vsel %vm2543, %v2534, %v2550
        %v2552 = vsel %vm2542, %v2549, %v2551
        %v2553 = vsel %vm2541, %v2531, %v2534
        %v2554 = vsel %vm2544, %v2540, 1326507024
        %v2555 = vsel %vm2543, %v2537, %v2554
        %v2556 = vsel %vm2542, %v2553, %v2555
        %v2557 = vshll.u32 %v2517, 8
        %v2558 = vand.u32 %v2557, 65535
        %v2559 = vshrl.u32 %v2557, 16
        %v2560 = vand.u32 %v2556, 65535
        %v2561 = vshrl.u32 %v2556, 16
        %v2562 = vmul.u32 %v2558, %v2560
        %v2563 = vmul.u32 %v2558, %v2561
        %v2564 = vmul.u32 %v2559, %v2560
        %v2565 = vmul.u32 %v2559, %v2561
        %v2566 = vshll.u32 %v2563, 16
        %v2567 = vshrl.u32 %v2563, 16
        %v2568 = vshll.u32 %v2564, 16
        %v2569 = vshrl.u32 %v2564, 16
        %vm2570 = vc.u32 %v2562, %v2566
        %v2571 = vsel %vm2570, 1, 0
        %v2572 = vadd.s32 %v2562, %v2566
        %v2573 = vadd.s32 %v2565, %v2571
        %vm2574 = vc.u32 %v2572, %v2568
        %v2575 = vsel %vm2574, 1, 0
        %v2576 = vadd.s32 %v2572, %v2568
        %v2577 = vadd.s32 %v2573, %v2575
        %v2578 = vadd.s32 %v2577, %v2567
        %v2579 = vadd.s32 %v2578, %v2569
        %v2580 = vand.u32 %v2557, 65535
        %v2581 = vshrl.u32 %v2557, 16
        %v2582 = vand.u32 %v2552, 65535
        %v2583 = vshrl.u32 %v2552, 16
        %v2584 = vmul.u32 %v2580, %v2582
        %v2585 = vmul.u32 %v2580, %v2583
        %v2586 = vmul.u32 %v2581, %v2582
        %v2587 = vmul.u32 %v2581, %v2583
        %v2588 = vshll.u32 %v2585, 16
        %v2589 = vshrl.u32 %v2585, 16
        %v2590 = vshll.u32 %v2586, 16
        %v2591 = vshrl.u32 %v2586, 16
        %vm2592 = vc.u32 %v2584, %v2588
        %v2593 = vsel %vm2592, 1, 0
        %v2594 = vadd.s32 %v2584, %v2588
        %v2595 = vadd.s32 %v2587, %v2593
        %vm2596 = vc.u32 %v2594, %v2590
        %v2597 = vsel %vm2596, 1, 0
        %v2598 = vadd.s32 %v2594, %v2590
        %v2599 = vadd.s32 %v2595, %v2597
        %v2600 = vadd.s32 %v2599, %v2589
        %v2601 = vadd.s32 %v2600, %v2591
        %v2602 = vmul.u32 %v2557, %v2548
        %v2603 = vadd.s32 %v2579, %v2598
        %vm2604 = vc.u32 %v2579, %v2598
        %v2605 = vadd.s32 %v2601, 1
        %v2606 = vsel %vm2604, %v2605, %v2601
        %v2607 = vadd.s32 %v2602, %v2606
        %v2608 = vadd.s32 %v2607, 536870912
        %v2609 = vshrl.u32 %v2608, 30
        %v2610 = vshll.u32 %v2609, 30
        %v2611 = vsub.s32 %v2607, %v2610
        %vm2612 = vcmp.lt.s32.totalorder %v2611, 0
        %v2613 = vsub.s32 0, %v2611
        %v2614 = vsel %vm2612, %v2613, %v2611
        %v2615 = vclz %v2614
        %v2616 = vsub.s32 %v2615, 2
        %vm2617 = vcmp.gt.s32.totalorder 0, %v2616
        %v2618 = vsel %vm2617, 0, %v2616
        %v2619 = vsub.s32 32, %v2618
        %v2620 = vshll.u32 %v2611, %v2618
        %v2621 = vshrl.u32 %v2603, %v2619
        %v2622 = vor.u32 %v2620, %v2621
        %v2623 = vsub.s32 4294967266, %v2618
        %v2624 = vadd.s32 %v2623, 127
        %v2625 = vshll.u32 %v2624, 23
        %v2626 = vor.u32 4788187, %v2625
        %v2627 = vand.u32 2147483647, %v2626
        %v2629 = vcvt.s32.f32 %v2622
        %v2630 = vmul.f32 %v2629, %v2627
        %v2631 = vxor.u32 %v2630, 2147483648
        %v2632 = vsel %vm2511, %v2631, %v2630
        %v2633 = vsub.s32 4, %v2609
        %v2634 = vsel %vm2511, %v2633, %v2609
        %v2635 = vsel %vm2510, %v609, %v2632
        %v2636 = vsel %vm2510, 0, %v2634
        %v2637 = vmul.f32 %v2635, %v2635
        %v2638 = vmul.f32 %v2637, -0.001358992
        %v2639 = vadd.f32 %v2638, 0.041655596
        %v2640 = vmul.f32 %v2637, %v2639
        %v2641 = vadd.f32 %v2640, -0.4999988
        %v2642 = vmul.f32 %v2637, %v2641
        %v2643 = vadd.f32 1.0, %v2642
        %v2644 = vmul.f32 %v2635, %v2635
        %v2645 = vmul.f32 %v2644, -0.00019511016
        %v2646 = vadd.f32 %v2645, 0.008332121
        %v2647 = vmul.f32 %v2644, %v2646
        %v2648 = vadd.f32 %v2647, -0.16666654
        %v2649 = vmul.f32 %v2644, %v2648
        %v2650 = vadd.f32 %v2649, 1.0
        %v2651 = vmul.f32 %v2650, %v2635
        %vm2652 = vweird.f32 %v609
        %v2653 = vand.u32 %v2636, 3
        %vm2654 = vcmp.lt.s32.totalorder %v2653, 2
        %vm2655 = vcmp.eq.s32.totalorder %v2653, 0
        %v2656 = vxor.u32 %v2651, 2147483648
        %v2657 = vsel %vm2655, %v2643, %v2656
        %vm2658 = vcmp.eq.s32.totalorder %v2653, 2
        %v2659 = vxor.u32 %v2643, 2147483648
        %v2660 = vsel %vm2658, %v2659, %v2651
        %v2661 = vsel %vm2654, %v2657, %v2660
        %v2662 = vsel %vm2652, nan, %v2661
        %v2663 = vand.u32 2147483647, %v610
        %vm2664 = vcmp.le.f32.partialorder %v2663, 0.7853982
        %vm2665 = vcmp.lt.s32.totalorder %v610, 0
        %v2666 = vand.u32 %v610, 2139095040
        %v2667 = vshrl.u32 %v2666, 23
        %v2668 = vsub.s32 %v2667, 127
        %v2669 = vand.u32 2147483647, %v610
        %v2670 = vand.u32 %v2669, 8388607
        %v2671 = vor.u32 %v2670, 8388608
        %v2672 = vsub.s32 0, %v2671
        %v2673 = vadd.s32 %v2668, 1
        %vm2674 = vcmp.gt.s32.totalorder %v2673, 0
        %v2675 = vsel %vm2674, %v2673, 0
        %v2676 = vshrl.u32 %v2675, 5
        %v2677 = vand.u32 %v2675, 31
        %v2678 = vsub.s32 32, %v2677
        %v2679 = vshrl.u32 683565275, %v2678
        %v2680 = vshll.u32 683565275, %v2677
        %v2681 = vshrl.u32 2475754826, %v2678
        %v2682 = vor.u32 %v2680, %v2681
        %v2683 = vshll.u32 2475754826, %v2677
        %v2684 = vshrl.u32 2131351028, %v2678
        %v2685 = vor.u32 %v2683, %v2684
        %v2686 = vshll.u32 2131351028, %v2677
        %v2687 = vshrl.u32 2102212464, %v2678
        %v2688 = vor.u32 %v2686, %v2687
        %v2689 = vshll.u32 2102212464, %v2677
        %v2690 = vshrl.u32 920167782, %v2678
        %v2691 = vor.u32 %v2689, %v2690
        %v2692 = vshll.u32 920167782, %v2677
        %v2693 = vshrl.u32 1326507024, %v2678
        %v2694 = vor.u32 %v2692, %v2693
        %vm2695 = vcmp.lt.s32.totalorder %v2676, 1
        %vm2696 = vcmp.lt.s32.totalorder %v2676, 2
        %vm2697 = vcmp.lt.s32.totalorder %v2676, 3
        %vm2698 = vcmp.lt.s32.totalorder %v2676, 4
        %v2699 = vsel %vm2695, %v2679, %v2682
        %v2700 = vsel %vm2698, %v2688, 2102212464
        %v2701 = vsel %vm2697, %v2685, %v2700
        %v2702 = vsel %vm2696, %v2699, %v2701
        %v2703 = vsel %vm2695, %v2682, %v2685
        %v2704 = vsel %vm2698, %v2691, 920167782
        %v2705 = vsel %vm2697, %v2688, %v2704
        %v2706 = vsel %vm2696, %v2703, %v2705
        %v2707 = vsel %vm2695, %v2685, %v2688
        %v2708 = vsel %vm2698, %v2694, 1326507024
        %v2709 = vsel %vm2697, %v2691, %v2708
        %v2710 = vsel %vm2696, %v2707, %v2709
        %v2711 = vshll.u32 %v2671, 8
        %v2712 = vand.u32 %v2711, 65535
        %v2713 = vshrl.u32 %v2711, 16
        %v2714 = vand.u32 %v2710, 65535
        %v2715 = vshrl.u32 %v2710, 16
        %v2716 = vmul.u32 %v2712, %v2714
        %v2717 = vmul.u32 %v2712, %v2715
        %v2718 = vmul.u32 %v2713, %v2714
        %v2719 = vmul.u32 %v2713, %v2715
        %v2720 = vshll.u32 %v2717, 16
        %v2721 = vshrl.u32 %v2717, 16
        %v2722 = vshll.u32 %v2718, 16
        %v2723 = vshrl.u32 %v2718, 16
        %vm2724 = vc.u32 %v2716, %v2720
        %v2725 = vsel %vm2724, 1, 0
        %v2726 = vadd.s32 %v2716, %v2720
        %v2727 = vadd.s32 %v2719, %v2725
        %vm2728 = vc.u32 %v2726, %v2722
        %v2729 = vsel %vm2728, 1, 0
        %v2730 = vadd.s32 %v2726, %v2722
        %v2731 = vadd.s32 %v2727, %v2729
        %v2732 = vadd.s32 %v2731, %v2721
        %v2733 = vadd.s32 %v2732, %v2723
        %v2734 = vand.u32 %v2711, 65535
        %v2735 = vshrl.u32 %v2711, 16
        %v2736 = vand.u32 %v2706, 65535
        %v2737 = vshrl.u32 %v2706, 16
        %v2738 = vmul.u32 %v2734, %v2736
        %v2739 = vmul.u32 %v2734, %v2737
        %v2740 = vmul.u32 %v2735, %v2736
        %v2741 = vmul.u32 %v2735, %v2737
        %v2742 = vshll.u32 %v2739, 16
        %v2743 = vshrl.u32 %v2739, 16
        %v2744 = vshll.u32 %v2740, 16
        %v2745 = vshrl.u32 %v2740, 16
        %vm2746 = vc.u32 %v2738, %v2742
        %v2747 = vsel %vm2746, 1, 0
        %v2748 = vadd.s32 %v2738, %v2742
        %v2749 = vadd.s32 %v2741, %v2747
        %vm2750 = vc.u32 %v2748, %v2744
        %v2751 = vsel %vm2750, 1, 0
        %v2752 = vadd.s32 %v2748, %v2744
        %v2753 = vadd.s32 %v2749, %v2751
        %v2754 = vadd.s32 %v2753, %v2743
        %v2755 = vadd.s32 %v2754, %v2745
        %v2756 = vmul.u32 %v2711, %v2702
        %v2757 = vadd.s32 %v2733, %v2752
        %vm2758 = vc.u32 %v2733, %v2752
        %v2759 = vadd.s32 %v2755, 1
        %v2760 = vsel %vm2758, %v2759, %v2755
        %v2761 = vadd.s32 %v2756, %v2760
        %v2762 = vadd.s32 %v2761, 536870912
        %v2763 = vshrl.u32 %v2762, 30
        %v2764 = vshll.u32 %v2763, 30
        %v2765 = vsub.s32 %v2761, %v2764
        %vm2766 = vcmp.lt.s32.totalorder %v2765, 0
        %v2767 = vsub.s32 0, %v2765
        %v2768 = vsel %vm2766, %v2767, %v2765
        %v2769 = vclz %v2768
        %v2770 = vsub.s32 %v2769, 2
        %vm2771 = vcmp.gt.s32.totalorder 0, %v2770
        %v2772 = vsel %vm2771, 0, %v2770
        %v2773 = vsub.s32 32, %v2772
        %v2774 = vshll.u32 %v2765, %v2772
        %v2775 = vshrl.u32 %v2757, %v2773
        %v2776 = vor.u32 %v2774, %v2775
        %v2777 = vsub.s32 4294967266, %v2772
        %v2778 = vadd.s32 %v2777, 127
        %v2779 = vshll.u32 %v2778, 23
        %v2780 = vor.u32 4788187, %v2779
        %v2781 = vand.u32 2147483647, %v2780
        %v2783 = vcvt.s32.f32 %v2776
        %v2784 = vmul.f32 %v2783, %v2781
        %v2785 = vxor.u32 %v2784, 2147483648
        %v2786 = vsel %vm2665, %v2785, %v2784
        %v2787 = vsub.s32 4, %v2763
        %v2788 = vsel %vm2665, %v2787, %v2763
        %v2789 = vsel %vm2664, %v610, %v2786
        %v2790 = vsel %vm2664, 0, %v2788
        %v2791 = vmul.f32 %v2789, %v2789
        %v2792 = vmul.f32 %v2791, -0.001358992
        %v2793 = vadd.f32 %v2792, 0.041655596
        %v2794 = vmul.f32 %v2791, %v2793
        %v2795 = vadd.f32 %v2794, -0.4999988
        %v2796 = vmul.f32 %v2791, %v2795
        %v2797 = vadd.f32 1.0, %v2796
        %v2798 = vmul.f32 %v2789, %v2789
        %v2799 = vmul.f32 %v2798, -0.00019511016
        %v2800 = vadd.f32 %v2799, 0.008332121
        %v2801 = vmul.f32 %v2798, %v2800
        %v2802 = vadd.f32 %v2801, -0.16666654
        %v2803 = vmul.f32 %v2798, %v2802
        %v2804 = vadd.f32 %v2803, 1.0
        %v2805 = vmul.f32 %v2804, %v2789
        %vm2806 = vweird.f32 %v610
        %v2807 = vand.u32 %v2790, 3
        %vm2808 = vcmp.lt.s32.totalorder %v2807, 2
        %vm2809 = vcmp.eq.s32.totalorder %v2807, 0
        %v2810 = vxor.u32 %v2805, 2147483648
        %v2811 = vsel %vm2809, %v2797, %v2810
        %vm2812 = vcmp.eq.s32.totalorder %v2807, 2
        %v2813 = vxor.u32 %v2797, 2147483648
        %v2814 = vsel %vm2812, %v2813, %v2805
        %v2815 = vsel %vm2808, %v2811, %v2814
        %v2816 = vsel %vm2806, nan, %v2815
        %v2817 = vand.u32 2147483647, %v611
        %vm2818 = vcmp.le.f32.partialorder %v2817, 0.7853982
        %vm2819 = vcmp.lt.s32.totalorder %v611, 0
        %v2820 = vand.u32 %v611, 2139095040
        %v2821 = vshrl.u32 %v2820, 23
        %v2822 = vsub.s32 %v2821, 127
        %v2823 = vand.u32 2147483647, %v611
        %v2824 = vand.u32 %v2823, 8388607
        %v2825 = vor.u32 %v2824, 8388608
        %v2826 = vsub.s32 0, %v2825
        %v2827 = vadd.s32 %v2822, 1
        %vm2828 = vcmp.gt.s32.totalorder %v2827, 0
        %v2829 = vsel %vm2828, %v2827, 0
        %v2830 = vshrl.u32 %v2829, 5
        %v2831 = vand.u32 %v2829, 31
        %v2832 = vsub.s32 32, %v2831
        %v2833 = vshrl.u32 683565275, %v2832
        %v2834 = vshll.u32 683565275, %v2831
        %v2835 = vshrl.u32 2475754826, %v2832
        %v2836 = vor.u32 %v2834, %v2835
        %v2837 = vshll.u32 2475754826, %v2831
        %v2838 = vshrl.u32 2131351028, %v2832
        %v2839 = vor.u32 %v2837, %v2838
        %v2840 = vshll.u32 2131351028, %v2831
        %v2841 = vshrl.u32 2102212464, %v2832
        %v2842 = vor.u32 %v2840, %v2841
        %v2843 = vshll.u32 2102212464, %v2831
        %v2844 = vshrl.u32 920167782, %v2832
        %v2845 = vor.u32 %v2843, %v2844
        %v2846 = vshll.u32 920167782, %v2831
        %v2847 = vshrl.u32 1326507024, %v2832
        %v2848 = vor.u32 %v2846, %v2847
        %vm2849 = vcmp.lt.s32.totalorder %v2830, 1
        %vm2850 = vcmp.lt.s32.totalorder %v2830, 2
        %vm2851 = vcmp.lt.s32.totalorder %v2830, 3
        %vm2852 = vcmp.lt.s32.totalorder %v2830, 4
        %v2853 = vsel %vm2849, %v2833, %v2836
        %v2854 = vsel %vm2852, %v2842, 2102212464
        %v2855 = vsel %vm2851, %v2839, %v2854
        %v2856 = vsel %vm2850, %v2853, %v2855
        %v2857 = vsel %vm2849, %v2836, %v2839
        %v2858 = vsel %vm2852, %v2845, 920167782
        %v2859 = vsel %vm2851, %v2842, %v2858
        %v2860 = vsel %vm2850, %v2857, %v2859
        %v2861 = vsel %vm2849, %v2839, %v2842
        %v2862 = vsel %vm2852, %v2848, 1326507024
        %v2863 = vsel %vm2851, %v2845, %v2862
        %v2864 = vsel %vm2850, %v2861, %v2863
        %v2865 = vshll.u32 %v2825, 8
        %v2866 = vand.u32 %v2865, 65535
        %v2867 = vshrl.u32 %v2865, 16
        %v2868 = vand.u32 %v2864, 65535
        %v2869 = vshrl.u32 %v2864, 16
        %v2870 = vmul.u32 %v2866, %v2868
        %v2871 = vmul.u32 %v2866, %v2869
        %v2872 = vmul.u32 %v2867, %v2868
        %v2873 = vmul.u32 %v2867, %v2869
        %v2874 = vshll.u32 %v2871, 16
        %v2875 = vshrl.u32 %v2871, 16
        %v2876 = vshll.u32 %v2872, 16
        %v2877 = vshrl.u32 %v2872, 16
        %vm2878 = vc.u32 %v2870, %v2874
        %v2879 = vsel %vm2878, 1, 0
        %v2880 = vadd.s32 %v2870, %v2874
        %v2881 = vadd.s32 %v2873, %v2879
        %vm2882 = vc.u32 %v2880, %v2876
        %v2883 = vsel %vm2882, 1, 0
        %v2884 = vadd.s32 %v2880, %v2876
        %v2885 = vadd.s32 %v2881, %v2883
        %v2886 = vadd.s32 %v2885, %v2875
        %v2887 = vadd.s32 %v2886, %v2877
        %v2888 = vand.u32 %v2865, 65535
        %v2889 = vshrl.u32 %v2865, 16
        %v2890 = vand.u32 %v2860, 65535
        %v2891 = vshrl.u32 %v2860, 16
        %v2892 = vmul.u32 %v2888, %v2890
        %v2893 = vmul.u32 %v2888, %v2891
        %v2894 = vmul.u32 %v2889, %v2890
        %v2895 = vmul.u32 %v2889, %v2891
        %v2896 = vshll.u32 %v2893, 16
        %v2897 = vshrl.u32 %v2893, 16
        %v2898 = vshll.u32 %v2894, 16
        %v2899 = vshrl.u32 %v2894, 16
        %vm2900 = vc.u32 %v2892, %v2896
        %v2901 = vsel %vm2900, 1, 0
        %v2902 = vadd.s32 %v2892, %v2896
        %v2903 = vadd.s32 %v2895, %v2901
        %vm2904 = vc.u32 %v2902, %v2898
        %v2905 = vsel %vm2904, 1, 0
        %v2906 = vadd.s32 %v2902, %v2898
        %v2907 = vadd.s32 %v2903, %v2905
        %v2908 = vadd.s32 %v2907, %v2897
        %v2909 = vadd.s32 %v2908, %v2899
        %v2910 = vmul.u32 %v2865, %v2856
        %v2911 = vadd.s32 %v2887, %v2906
        %vm2912 = vc.u32 %v2887, %v2906
        %v2913 = vadd.s32 %v2909, 1
        %v2914 = vsel %vm2912, %v2913, %v2909
        %v2915 = vadd.s32 %v2910, %v2914
        %v2916 = vadd.s32 %v2915, 536870912
        %v2917 = vshrl.u32 %v2916, 30
        %v2918 = vshll.u32 %v2917, 30
        %v2919 = vsub.s32 %v2915, %v2918
        %vm2920 = vcmp.lt.s32.totalorder %v2919, 0
        %v2921 = vsub.s32 0, %v2919
        %v2922 = vsel %vm2920, %v2921, %v2919
        %v2923 = vclz %v2922
        %v2924 = vsub.s32 %v2923, 2
        %vm2925 = vcmp.gt.s32.totalorder 0, %v2924
        %v2926 = vsel %vm2925, 0, %v2924
        %v2927 = vsub.s32 32, %v2926
        %v2928 = vshll.u32 %v2919, %v2926
        %v2929 = vshrl.u32 %v2911, %v2927
        %v2930 = vor.u32 %v2928, %v2929
        %v2931 = vsub.s32 4294967266, %v2926
        %v2932 = vadd.s32 %v2931, 127
        %v2933 = vshll.u32 %v2932, 23
        %v2934 = vor.u32 4788187, %v2933
        %v2935 = vand.u32 2147483647, %v2934
        %v2937 = vcvt.s32.f32 %v2930
        %v2938 = vmul.f32 %v2937, %v2935
        %v2939 = vxor.u32 %v2938, 2147483648
        %v2940 = vsel %vm2819, %v2939, %v2938
        %v2941 = vsub.s32 4, %v2917
        %v2942 = vsel %vm2819, %v2941, %v2917
        %v2943 = vsel %vm2818, %v611, %v2940
        %v2944 = vsel %vm2818, 0, %v2942
        %v2945 = vmul.f32 %v2943, %v2943
        %v2946 = vmul.f32 %v2945, -0.001358992
        %v2947 = vadd.f32 %v2946, 0.041655596
        %v2948 = vmul.f32 %v2945, %v2947
        %v2949 = vadd.f32 %v2948, -0.4999988
        %v2950 = vmul.f32 %v2945, %v2949
        %v2951 = vadd.f32 1.0, %v2950
        %v2952 = vmul.f32 %v2943, %v2943
        %v2953 = vmul.f32 %v2952, -0.00019511016
        %v2954 = vadd.f32 %v2953, 0.008332121
        %v2955 = vmul.f32 %v2952, %v2954
        %v2956 = vadd.f32 %v2955, -0.16666654
        %v2957 = vmul.f32 %v2952, %v2956
        %v2958 = vadd.f32 %v2957, 1.0
        %v2959 = vmul.f32 %v2958, %v2943
        %vm2960 = vweird.f32 %v611
        %v2961 = vand.u32 %v2944, 3
        %vm2962 = vcmp.lt.s32.totalorder %v2961, 2
        %vm2963 = vcmp.eq.s32.totalorder %v2961, 0
        %v2964 = vxor.u32 %v2959, 2147483648
        %v2965 = vsel %vm2963, %v2951, %v2964
        %vm2966 = vcmp.eq.s32.totalorder %v2961, 2
        %v2967 = vxor.u32 %v2951, 2147483648
        %v2968 = vsel %vm2966, %v2967, %v2959
        %v2969 = vsel %vm2962, %v2965, %v2968
        %v2970 = vsel %vm2960, nan, %v2969
        %v2971 = vand.u32 2147483647, %v612
        %vm2972 = vcmp.le.f32.partialorder %v2971, 0.7853982
        %vm2973 = vcmp.lt.s32.totalorder %v612, 0
        %v2974 = vand.u32 %v612, 2139095040
        %v2975 = vshrl.u32 %v2974, 23
        %v2976 = vsub.s32 %v2975, 127
        %v2977 = vand.u32 2147483647, %v612
        %v2978 = vand.u32 %v2977, 8388607
        %v2979 = vor.u32 %v2978, 8388608
        %v2980 = vsub.s32 0, %v2979
        %v2981 = vadd.s32 %v2976, 1
        %vm2982 = vcmp.gt.s32.totalorder %v2981, 0
        %v2983 = vsel %vm2982, %v2981, 0
        %v2984 = vshrl.u32 %v2983, 5
        %v2985 = vand.u32 %v2983, 31
        %v2986 = vsub.s32 32, %v2985
        %v2987 = vshrl.u32 683565275, %v2986
        %v2988 = vshll.u32 683565275, %v2985
        %v2989 = vshrl.u32 2475754826, %v2986
        %v2990 = vor.u32 %v2988, %v2989
        %v2991 = vshll.u32 2475754826, %v2985
        %v2992 = vshrl.u32 2131351028, %v2986
        %v2993 = vor.u32 %v2991, %v2992
        %v2994 = vshll.u32 2131351028, %v2985
        %v2995 = vshrl.u32 2102212464, %v2986
        %v2996 = vor.u32 %v2994, %v2995
        %v2997 = vshll.u32 2102212464, %v2985
        %v2998 = vshrl.u32 920167782, %v2986
        %v2999 = vor.u32 %v2997, %v2998
        %v3000 = vshll.u32 920167782, %v2985
        %v3001 = vshrl.u32 1326507024, %v2986
        %v3002 = vor.u32 %v3000, %v3001
        %vm3003 = vcmp.lt.s32.totalorder %v2984, 1
        %vm3004 = vcmp.lt.s32.totalorder %v2984, 2
        %vm3005 = vcmp.lt.s32.totalorder %v2984, 3
        %vm3006 = vcmp.lt.s32.totalorder %v2984, 4
        %v3007 = vsel %vm3003, %v2987, %v2990
        %v3008 = vsel %vm3006, %v2996, 2102212464
        %v3009 = vsel %vm3005, %v2993, %v3008
        %v3010 = vsel %vm3004, %v3007, %v3009
        %v3011 = vsel %vm3003, %v2990, %v2993
        %v3012 = vsel %vm3006, %v2999, 920167782
        %v3013 = vsel %vm3005, %v2996, %v3012
        %v3014 = vsel %vm3004, %v3011, %v3013
        %v3015 = vsel %vm3003, %v2993, %v2996
        %v3016 = vsel %vm3006, %v3002, 1326507024
        %v3017 = vsel %vm3005, %v2999, %v3016
        %v3018 = vsel %vm3004, %v3015, %v3017
        %v3019 = vshll.u32 %v2979, 8
        %v3020 = vand.u32 %v3019, 65535
        %v3021 = vshrl.u32 %v3019, 16
        %v3022 = vand.u32 %v3018, 65535
        %v3023 = vshrl.u32 %v3018, 16
        %v3024 = vmul.u32 %v3020, %v3022
        %v3025 = vmul.u32 %v3020, %v3023
        %v3026 = vmul.u32 %v3021, %v3022
        %v3027 = vmul.u32 %v3021, %v3023
        %v3028 = vshll.u32 %v3025, 16
        %v3029 = vshrl.u32 %v3025, 16
        %v3030 = vshll.u32 %v3026, 16
        %v3031 = vshrl.u32 %v3026, 16
        %vm3032 = vc.u32 %v3024, %v3028
        %v3033 = vsel %vm3032, 1, 0
        %v3034 = vadd.s32 %v3024, %v3028
        %v3035 = vadd.s32 %v3027, %v3033
        %vm3036 = vc.u32 %v3034, %v3030
        %v3037 = vsel %vm3036, 1, 0
        %v3038 = vadd.s32 %v3034, %v3030
        %v3039 = vadd.s32 %v3035, %v3037
        %v3040 = vadd.s32 %v3039, %v3029
        %v3041 = vadd.s32 %v3040, %v3031
        %v3042 = vand.u32 %v3019, 65535
        %v3043 = vshrl.u32 %v3019, 16
        %v3044 = vand.u32 %v3014, 65535
        %v3045 = vshrl.u32 %v3014, 16
        %v3046 = vmul.u32 %v3042, %v3044
        %v3047 = vmul.u32 %v3042, %v3045
        %v3048 = vmul.u32 %v3043, %v3044
        %v3049 = vmul.u32 %v3043, %v3045
        %v3050 = vshll.u32 %v3047, 16
        %v3051 = vshrl.u32 %v3047, 16
        %v3052 = vshll.u32 %v3048, 16
        %v3053 = vshrl.u32 %v3048, 16
        %vm3054 = vc.u32 %v3046, %v3050
        %v3055 = vsel %vm3054, 1, 0
        %v3056 = vadd.s32 %v3046, %v3050
        %v3057 = vadd.s32 %v3049, %v3055
        %vm3058 = vc.u32 %v3056, %v3052
        %v3059 = vsel %vm3058, 1, 0
        %v3060 = vadd.s32 %v3056, %v3052
        %v3061 = vadd.s32 %v3057, %v3059
        %v3062 = vadd.s32 %v3061, %v3051
        %v3063 = vadd.s32 %v3062, %v3053
        %v3064 = vmul.u32 %v3019, %v3010
        %v3065 = vadd.s32 %v3041, %v3060
        %vm3066 = vc.u32 %v3041, %v3060
        %v3067 = vadd.s32 %v3063, 1
        %v3068 = vsel %vm3066, %v3067, %v3063
        %v3069 = vadd.s32 %v3064, %v3068
        %v3070 = vadd.s32 %v3069, 536870912
        %v3071 = vshrl.u32 %v3070, 30
        %v3072 = vshll.u32 %v3071, 30
        %v3073 = vsub.s32 %v3069, %v3072
        %vm3074 = vcmp.lt.s32.totalorder %v3073, 0
        %v3075 = vsub.s32 0, %v3073
        %v3076 = vsel %vm3074, %v3075, %v3073
        %v3077 = vclz %v3076
        %v3078 = vsub.s32 %v3077, 2
        %vm3079 = vcmp.gt.s32.totalorder 0, %v3078
        %v3080 = vsel %vm3079, 0, %v3078
        %v3081 = vsub.s32 32, %v3080
        %v3082 = vshll.u32 %v3073, %v3080
        %v3083 = vshrl.u32 %v3065, %v3081
        %v3084 = vor.u32 %v3082, %v3083
        %v3085 = vsub.s32 4294967266, %v3080
        %v3086 = vadd.s32 %v3085, 127
        %v3087 = vshll.u32 %v3086, 23
        %v3088 = vor.u32 4788187, %v3087
        %v3089 = vand.u32 2147483647, %v3088
        %v3091 = vcvt.s32.f32 %v3084
        %v3092 = vmul.f32 %v3091, %v3089
        %v3093 = vxor.u32 %v3092, 2147483648
        %v3094 = vsel %vm2973, %v3093, %v3092
        %v3095 = vsub.s32 4, %v3071
        %v3096 = vsel %vm2973, %v3095, %v3071
        %v3097 = vsel %vm2972, %v612, %v3094
        %v3098 = vsel %vm2972, 0, %v3096
        %v3099 = vmul.f32 %v3097, %v3097
        %v3100 = vmul.f32 %v3099, -0.001358992
        %v3101 = vadd.f32 %v3100, 0.041655596
        %v3102 = vmul.f32 %v3099, %v3101
        %v3103 = vadd.f32 %v3102, -0.4999988
        %v3104 = vmul.f32 %v3099, %v3103
        %v3105 = vadd.f32 1.0, %v3104
        %v3106 = vmul.f32 %v3097, %v3097
        %v3107 = vmul.f32 %v3106, -0.00019511016
        %v3108 = vadd.f32 %v3107, 0.008332121
        %v3109 = vmul.f32 %v3106, %v3108
        %v3110 = vadd.f32 %v3109, -0.16666654
        %v3111 = vmul.f32 %v3106, %v3110
        %v3112 = vadd.f32 %v3111, 1.0
        %v3113 = vmul.f32 %v3112, %v3097
        %vm3114 = vweird.f32 %v612
        %v3115 = vand.u32 %v3098, 3
        %vm3116 = vcmp.lt.s32.totalorder %v3115, 2
        %vm3117 = vcmp.eq.s32.totalorder %v3115, 0
        %v3118 = vxor.u32 %v3113, 2147483648
        %v3119 = vsel %vm3117, %v3105, %v3118
        %vm3120 = vcmp.eq.s32.totalorder %v3115, 2
        %v3121 = vxor.u32 %v3105, 2147483648
        %v3122 = vsel %vm3120, %v3121, %v3113
        %v3123 = vsel %vm3116, %v3119, %v3122
        %v3124 = vsel %vm3114, nan, %v3123
        %v3125 = vand.u32 2147483647, %v613
        %vm3126 = vcmp.le.f32.partialorder %v3125, 0.7853982
        %vm3127 = vcmp.lt.s32.totalorder %v613, 0
        %v3128 = vand.u32 %v613, 2139095040
        %v3129 = vshrl.u32 %v3128, 23
        %v3130 = vsub.s32 %v3129, 127
        %v3131 = vand.u32 2147483647, %v613
        %v3132 = vand.u32 %v3131, 8388607
        %v3133 = vor.u32 %v3132, 8388608
        %v3134 = vsub.s32 0, %v3133
        %v3135 = vadd.s32 %v3130, 1
        %vm3136 = vcmp.gt.s32.totalorder %v3135, 0
        %v3137 = vsel %vm3136, %v3135, 0
        %v3138 = vshrl.u32 %v3137, 5
        %v3139 = vand.u32 %v3137, 31
        %v3140 = vsub.s32 32, %v3139
        %v3141 = vshrl.u32 683565275, %v3140
        %v3142 = vshll.u32 683565275, %v3139
        %v3143 = vshrl.u32 2475754826, %v3140
        %v3144 = vor.u32 %v3142, %v3143
        %v3145 = vshll.u32 2475754826, %v3139
        %v3146 = vshrl.u32 2131351028, %v3140
        %v3147 = vor.u32 %v3145, %v3146
        %v3148 = vshll.u32 2131351028, %v3139
        %v3149 = vshrl.u32 2102212464, %v3140
        %v3150 = vor.u32 %v3148, %v3149
        %v3151 = vshll.u32 2102212464, %v3139
        %v3152 = vshrl.u32 920167782, %v3140
        %v3153 = vor.u32 %v3151, %v3152
        %v3154 = vshll.u32 920167782, %v3139
        %v3155 = vshrl.u32 1326507024, %v3140
        %v3156 = vor.u32 %v3154, %v3155
        %vm3157 = vcmp.lt.s32.totalorder %v3138, 1
        %vm3158 = vcmp.lt.s32.totalorder %v3138, 2
        %vm3159 = vcmp.lt.s32.totalorder %v3138, 3
        %vm3160 = vcmp.lt.s32.totalorder %v3138, 4
        %v3161 = vsel %vm3157, %v3141, %v3144
        %v3162 = vsel %vm3160, %v3150, 2102212464
        %v3163 = vsel %vm3159, %v3147, %v3162
        %v3164 = vsel %vm3158, %v3161, %v3163
        %v3165 = vsel %vm3157, %v3144, %v3147
        %v3166 = vsel %vm3160, %v3153, 920167782
        %v3167 = vsel %vm3159, %v3150, %v3166
        %v3168 = vsel %vm3158, %v3165, %v3167
        %v3169 = vsel %vm3157, %v3147, %v3150
        %v3170 = vsel %vm3160, %v3156, 1326507024
        %v3171 = vsel %vm3159, %v3153, %v3170
        %v3172 = vsel %vm3158, %v3169, %v3171
        %v3173 = vshll.u32 %v3133, 8
        %v3174 = vand.u32 %v3173, 65535
        %v3175 = vshrl.u32 %v3173, 16
        %v3176 = vand.u32 %v3172, 65535
        %v3177 = vshrl.u32 %v3172, 16
        %v3178 = vmul.u32 %v3174, %v3176
        %v3179 = vmul.u32 %v3174, %v3177
        %v3180 = vmul.u32 %v3175, %v3176
        %v3181 = vmul.u32 %v3175, %v3177
        %v3182 = vshll.u32 %v3179, 16
        %v3183 = vshrl.u32 %v3179, 16
        %v3184 = vshll.u32 %v3180, 16
        %v3185 = vshrl.u32 %v3180, 16
        %vm3186 = vc.u32 %v3178, %v3182
        %v3187 = vsel %vm3186, 1, 0
        %v3188 = vadd.s32 %v3178, %v3182
        %v3189 = vadd.s32 %v3181, %v3187
        %vm3190 = vc.u32 %v3188, %v3184
        %v3191 = vsel %vm3190, 1, 0
        %v3192 = vadd.s32 %v3188, %v3184
        %v3193 = vadd.s32 %v3189, %v3191
        %v3194 = vadd.s32 %v3193, %v3183
        %v3195 = vadd.s32 %v3194, %v3185
        %v3196 = vand.u32 %v3173, 65535
        %v3197 = vshrl.u32 %v3173, 16
        %v3198 = vand.u32 %v3168, 65535
        %v3199 = vshrl.u32 %v3168, 16
        %v3200 = vmul.u32 %v3196, %v3198
        %v3201 = vmul.u32 %v3196, %v3199
        %v3202 = vmul.u32 %v3197, %v3198
        %v3203 = vmul.u32 %v3197, %v3199
        %v3204 = vshll.u32 %v3201, 16
        %v3205 = vshrl.u32 %v3201, 16
        %v3206 = vshll.u32 %v3202, 16
        %v3207 = vshrl.u32 %v3202, 16
        %vm3208 = vc.u32 %v3200, %v3204
        %v3209 = vsel %vm3208, 1, 0
        %v3210 = vadd.s32 %v3200, %v3204
        %v3211 = vadd.s32 %v3203, %v3209
        %vm3212 = vc.u32 %v3210, %v3206
        %v3213 = vsel %vm3212, 1, 0
        %v3214 = vadd.s32 %v3210, %v3206
        %v3215 = vadd.s32 %v3211, %v3213
        %v3216 = vadd.s32 %v3215, %v3205
        %v3217 = vadd.s32 %v3216, %v3207
        %v3218 = vmul.u32 %v3173, %v3164
        %v3219 = vadd.s32 %v3195, %v3214
        %vm3220 = vc.u32 %v3195, %v3214
        %v3221 = vadd.s32 %v3217, 1
        %v3222 = vsel %vm3220, %v3221, %v3217
        %v3223 = vadd.s32 %v3218, %v3222
        %v3224 = vadd.s32 %v3223, 536870912
        %v3225 = vshrl.u32 %v3224, 30
        %v3226 = vshll.u32 %v3225, 30
        %v3227 = vsub.s32 %v3223, %v3226
        %vm3228 = vcmp.lt.s32.totalorder %v3227, 0
        %v3229 = vsub.s32 0, %v3227
        %v3230 = vsel %vm3228, %v3229, %v3227
        %v3231 = vclz %v3230
        %v3232 = vsub.s32 %v3231, 2
        %vm3233 = vcmp.gt.s32.totalorder 0, %v3232
        %v3234 = vsel %vm3233, 0, %v3232
        %v3235 = vsub.s32 32, %v3234
        %v3236 = vshll.u32 %v3227, %v3234
        %v3237 = vshrl.u32 %v3219, %v3235
        %v3238 = vor.u32 %v3236, %v3237
        %v3239 = vsub.s32 4294967266, %v3234
        %v3240 = vadd.s32 %v3239, 127
        %v3241 = vshll.u32 %v3240, 23
        %v3242 = vor.u32 4788187, %v3241
        %v3243 = vand.u32 2147483647, %v3242
        %v3245 = vcvt.s32.f32 %v3238
        %v3246 = vmul.f32 %v3245, %v3243
        %v3247 = vxor.u32 %v3246, 2147483648
        %v3248 = vsel %vm3127, %v3247, %v3246
        %v3249 = vsub.s32 4, %v3225
        %v3250 = vsel %vm3127, %v3249, %v3225
        %v3251 = vsel %vm3126, %v613, %v3248
        %v3252 = vsel %vm3126, 0, %v3250
        %v3253 = vmul.f32 %v3251, %v3251
        %v3254 = vmul.f32 %v3253, -0.001358992
        %v3255 = vadd.f32 %v3254, 0.041655596
        %v3256 = vmul.f32 %v3253, %v3255
        %v3257 = vadd.f32 %v3256, -0.4999988
        %v3258 = vmul.f32 %v3253, %v3257
        %v3259 = vadd.f32 1.0, %v3258
        %v3260 = vmul.f32 %v3251, %v3251
        %v3261 = vmul.f32 %v3260, -0.00019511016
        %v3262 = vadd.f32 %v3261, 0.008332121
        %v3263 = vmul.f32 %v3260, %v3262
        %v3264 = vadd.f32 %v3263, -0.16666654
        %v3265 = vmul.f32 %v3260, %v3264
        %v3266 = vadd.f32 %v3265, 1.0
        %v3267 = vmul.f32 %v3266, %v3251
        %vm3268 = vweird.f32 %v613
        %v3269 = vand.u32 %v3252, 3
        %vm3270 = vcmp.lt.s32.totalorder %v3269, 2
        %vm3271 = vcmp.eq.s32.totalorder %v3269, 0
        %v3272 = vxor.u32 %v3267, 2147483648
        %v3273 = vsel %vm3271, %v3259, %v3272
        %vm3274 = vcmp.eq.s32.totalorder %v3269, 2
        %v3275 = vxor.u32 %v3259, 2147483648
        %v3276 = vsel %vm3274, %v3275, %v3267
        %v3277 = vsel %vm3270, %v3273, %v3276
        %v3278 = vsel %vm3268, nan, %v3277
        %v3279 = vand.u32 2147483647, %v614
        %vm3280 = vcmp.le.f32.partialorder %v3279, 0.7853982
        %vm3281 = vcmp.lt.s32.totalorder %v614, 0
        %v3282 = vand.u32 %v614, 2139095040
        %v3283 = vshrl.u32 %v3282, 23
        %v3284 = vsub.s32 %v3283, 127
        %v3285 = vand.u32 2147483647, %v614
        %v3286 = vand.u32 %v3285, 8388607
        %v3287 = vor.u32 %v3286, 8388608
        %v3288 = vsub.s32 0, %v3287
        %v3289 = vadd.s32 %v3284, 1
        %vm3290 = vcmp.gt.s32.totalorder %v3289, 0
        %v3291 = vsel %vm3290, %v3289, 0
        %v3292 = vshrl.u32 %v3291, 5
        %v3293 = vand.u32 %v3291, 31
        %v3294 = vsub.s32 32, %v3293
        %v3295 = vshrl.u32 683565275, %v3294
        %v3296 = vshll.u32 683565275, %v3293
        %v3297 = vshrl.u32 2475754826, %v3294
        %v3298 = vor.u32 %v3296, %v3297
        %v3299 = vshll.u32 2475754826, %v3293
        %v3300 = vshrl.u32 2131351028, %v3294
        %v3301 = vor.u32 %v3299, %v3300
        %v3302 = vshll.u32 2131351028, %v3293
        %v3303 = vshrl.u32 2102212464, %v3294
        %v3304 = vor.u32 %v3302, %v3303
        %v3305 = vshll.u32 2102212464, %v3293
        %v3306 = vshrl.u32 920167782, %v3294
        %v3307 = vor.u32 %v3305, %v3306
        %v3308 = vshll.u32 920167782, %v3293
        %v3309 = vshrl.u32 1326507024, %v3294
        %v3310 = vor.u32 %v3308, %v3309
        %vm3311 = vcmp.lt.s32.totalorder %v3292, 1
        %vm3312 = vcmp.lt.s32.totalorder %v3292, 2
        %vm3313 = vcmp.lt.s32.totalorder %v3292, 3
        %vm3314 = vcmp.lt.s32.totalorder %v3292, 4
        %v3315 = vsel %vm3311, %v3295, %v3298
        %v3316 = vsel %vm3314, %v3304, 2102212464
        %v3317 = vsel %vm3313, %v3301, %v3316
        %v3318 = vsel %vm3312, %v3315, %v3317
        %v3319 = vsel %vm3311, %v3298, %v3301
        %v3320 = vsel %vm3314, %v3307, 920167782
        %v3321 = vsel %vm3313, %v3304, %v3320
        %v3322 = vsel %vm3312, %v3319, %v3321
        %v3323 = vsel %vm3311, %v3301, %v3304
        %v3324 = vsel %vm3314, %v3310, 1326507024
        %v3325 = vsel %vm3313, %v3307, %v3324
        %v3326 = vsel %vm3312, %v3323, %v3325
        %v3327 = vshll.u32 %v3287, 8
        %v3328 = vand.u32 %v3327, 65535
        %v3329 = vshrl.u32 %v3327, 16
        %v3330 = vand.u32 %v3326, 65535
        %v3331 = vshrl.u32 %v3326, 16
        %v3332 = vmul.u32 %v3328, %v3330
        %v3333 = vmul.u32 %v3328, %v3331
        %v3334 = vmul.u32 %v3329, %v3330
        %v3335 = vmul.u32 %v3329, %v3331
        %v3336 = vshll.u32 %v3333, 16
        %v3337 = vshrl.u32 %v3333, 16
        %v3338 = vshll.u32 %v3334, 16
        %v3339 = vshrl.u32 %v3334, 16
        %vm3340 = vc.u32 %v3332, %v3336
        %v3341 = vsel %vm3340, 1, 0
        %v3342 = vadd.s32 %v3332, %v3336
        %v3343 = vadd.s32 %v3335, %v3341
        %vm3344 = vc.u32 %v3342, %v3338
        %v3345 = vsel %vm3344, 1, 0
        %v3346 = vadd.s32 %v3342, %v3338
        %v3347 = vadd.s32 %v3343, %v3345
        %v3348 = vadd.s32 %v3347, %v3337
        %v3349 = vadd.s32 %v3348, %v3339
        %v3350 = vand.u32 %v3327, 65535
        %v3351 = vshrl.u32 %v3327, 16
        %v3352 = vand.u32 %v3322, 65535
        %v3353 = vshrl.u32 %v3322, 16
        %v3354 = vmul.u32 %v3350, %v3352
        %v3355 = vmul.u32 %v3350, %v3353
        %v3356 = vmul.u32 %v3351, %v3352
        %v3357 = vmul.u32 %v3351, %v3353
        %v3358 = vshll.u32 %v3355, 16
        %v3359 = vshrl.u32 %v3355, 16
        %v3360 = vshll.u32 %v3356, 16
        %v3361 = vshrl.u32 %v3356, 16
        %vm3362 = vc.u32 %v3354, %v3358
        %v3363 = vsel %vm3362, 1, 0
        %v3364 = vadd.s32 %v3354, %v3358
        %v3365 = vadd.s32 %v3357, %v3363
        %vm3366 = vc.u32 %v3364, %v3360
        %v3367 = vsel %vm3366, 1, 0
        %v3368 = vadd.s32 %v3364, %v3360
        %v3369 = vadd.s32 %v3365, %v3367
        %v3370 = vadd.s32 %v3369, %v3359
        %v3371 = vadd.s32 %v3370, %v3361
        %v3372 = vmul.u32 %v3327, %v3318
        %v3373 = vadd.s32 %v3349, %v3368
        %vm3374 = vc.u32 %v3349, %v3368
        %v3375 = vadd.s32 %v3371, 1
        %v3376 = vsel %vm3374, %v3375, %v3371
        %v3377 = vadd.s32 %v3372, %v3376
        %v3378 = vadd.s32 %v3377, 536870912
        %v3379 = vshrl.u32 %v3378, 30
        %v3380 = vshll.u32 %v3379, 30
        %v3381 = vsub.s32 %v3377, %v3380
        %vm3382 = vcmp.lt.s32.totalorder %v3381, 0
        %v3383 = vsub.s32 0, %v3381
        %v3384 = vsel %vm3382, %v3383, %v3381
        %v3385 = vclz %v3384
        %v3386 = vsub.s32 %v3385, 2
        %vm3387 = vcmp.gt.s32.totalorder 0, %v3386
        %v3388 = vsel %vm3387, 0, %v3386
        %v3389 = vsub.s32 32, %v3388
        %v3390 = vshll.u32 %v3381, %v3388
        %v3391 = vshrl.u32 %v3373, %v3389
        %v3392 = vor.u32 %v3390, %v3391
        %v3393 = vsub.s32 4294967266, %v3388
        %v3394 = vadd.s32 %v3393, 127
        %v3395 = vshll.u32 %v3394, 23
        %v3396 = vor.u32 4788187, %v3395
        %v3397 = vand.u32 2147483647, %v3396
        %v3399 = vcvt.s32.f32 %v3392
        %v3400 = vmul.f32 %v3399, %v3397
        %v3401 = vxor.u32 %v3400, 2147483648
        %v3402 = vsel %vm3281, %v3401, %v3400
        %v3403 = vsub.s32 4, %v3379
        %v3404 = vsel %vm3281, %v3403, %v3379
        %v3405 = vsel %vm3280, %v614, %v3402
        %v3406 = vsel %vm3280, 0, %v3404
        %v3407 = vmul.f32 %v3405, %v3405
        %v3408 = vmul.f32 %v3407, -0.001358992
        %v3409 = vadd.f32 %v3408, 0.041655596
        %v3410 = vmul.f32 %v3407, %v3409
        %v3411 = vadd.f32 %v3410, -0.4999988
        %v3412 = vmul.f32 %v3407, %v3411
        %v3413 = vadd.f32 1.0, %v3412
        %v3414 = vmul.f32 %v3405, %v3405
        %v3415 = vmul.f32 %v3414, -0.00019511016
        %v3416 = vadd.f32 %v3415, 0.008332121
        %v3417 = vmul.f32 %v3414, %v3416
        %v3418 = vadd.f32 %v3417, -0.16666654
        %v3419 = vmul.f32 %v3414, %v3418
        %v3420 = vadd.f32 %v3419, 1.0
        %v3421 = vmul.f32 %v3420, %v3405
        %vm3422 = vweird.f32 %v614
        %v3423 = vand.u32 %v3406, 3
        %vm3424 = vcmp.lt.s32.totalorder %v3423, 2
        %vm3425 = vcmp.eq.s32.totalorder %v3423, 0
        %v3426 = vxor.u32 %v3421, 2147483648
        %v3427 = vsel %vm3425, %v3413, %v3426
        %vm3428 = vcmp.eq.s32.totalorder %v3423, 2
        %v3429 = vxor.u32 %v3413, 2147483648
        %v3430 = vsel %vm3428, %v3429, %v3421
        %v3431 = vsel %vm3424, %v3427, %v3430
        %v3432 = vsel %vm3422, nan, %v3431
        %v3433 = vand.u32 2147483647, %v615
        %vm3434 = vcmp.le.f32.partialorder %v3433, 0.7853982
        %vm3435 = vcmp.lt.s32.totalorder %v615, 0
        %v3436 = vand.u32 %v615, 2139095040
        %v3437 = vshrl.u32 %v3436, 23
        %v3438 = vsub.s32 %v3437, 127
        %v3439 = vand.u32 2147483647, %v615
        %v3440 = vand.u32 %v3439, 8388607
        %v3441 = vor.u32 %v3440, 8388608
        %v3442 = vsub.s32 0, %v3441
        %v3443 = vadd.s32 %v3438, 1
        %vm3444 = vcmp.gt.s32.totalorder %v3443, 0
        %v3445 = vsel %vm3444, %v3443, 0
        %v3446 = vshrl.u32 %v3445, 5
        %v3447 = vand.u32 %v3445, 31
        %v3448 = vsub.s32 32, %v3447
        %v3449 = vshrl.u32 683565275, %v3448
        %v3450 = vshll.u32 683565275, %v3447
        %v3451 = vshrl.u32 2475754826, %v3448
        %v3452 = vor.u32 %v3450, %v3451
        %v3453 = vshll.u32 2475754826, %v3447
        %v3454 = vshrl.u32 2131351028, %v3448
        %v3455 = vor.u32 %v3453, %v3454
        %v3456 = vshll.u32 2131351028, %v3447
        %v3457 = vshrl.u32 2102212464, %v3448
        %v3458 = vor.u32 %v3456, %v3457
        %v3459 = vshll.u32 2102212464, %v3447
        %v3460 = vshrl.u32 920167782, %v3448
        %v3461 = vor.u32 %v3459, %v3460
        %v3462 = vshll.u32 920167782, %v3447
        %v3463 = vshrl.u32 1326507024, %v3448
        %v3464 = vor.u32 %v3462, %v3463
        %vm3465 = vcmp.lt.s32.totalorder %v3446, 1
        %vm3466 = vcmp.lt.s32.totalorder %v3446, 2
        %vm3467 = vcmp.lt.s32.totalorder %v3446, 3
        %vm3468 = vcmp.lt.s32.totalorder %v3446, 4
        %v3469 = vsel %vm3465, %v3449, %v3452
        %v3470 = vsel %vm3468, %v3458, 2102212464
        %v3471 = vsel %vm3467, %v3455, %v3470
        %v3472 = vsel %vm3466, %v3469, %v3471
        %v3473 = vsel %vm3465, %v3452, %v3455
        %v3474 = vsel %vm3468, %v3461, 920167782
        %v3475 = vsel %vm3467, %v3458, %v3474
        %v3476 = vsel %vm3466, %v3473, %v3475
        %v3477 = vsel %vm3465, %v3455, %v3458
        %v3478 = vsel %vm3468, %v3464, 1326507024
        %v3479 = vsel %vm3467, %v3461, %v3478
        %v3480 = vsel %vm3466, %v3477, %v3479
        %v3481 = vshll.u32 %v3441, 8
        %v3482 = vand.u32 %v3481, 65535
        %v3483 = vshrl.u32 %v3481, 16
        %v3484 = vand.u32 %v3480, 65535
        %v3485 = vshrl.u32 %v3480, 16
        %v3486 = vmul.u32 %v3482, %v3484
        %v3487 = vmul.u32 %v3482, %v3485
        %v3488 = vmul.u32 %v3483, %v3484
        %v3489 = vmul.u32 %v3483, %v3485
        %v3490 = vshll.u32 %v3487, 16
        %v3491 = vshrl.u32 %v3487, 16
        %v3492 = vshll.u32 %v3488, 16
        %v3493 = vshrl.u32 %v3488, 16
        %vm3494 = vc.u32 %v3486, %v3490
        %v3495 = vsel %vm3494, 1, 0
        %v3496 = vadd.s32 %v3486, %v3490
        %v3497 = vadd.s32 %v3489, %v3495
        %vm3498 = vc.u32 %v3496, %v3492
        %v3499 = vsel %vm3498, 1, 0
        %v3500 = vadd.s32 %v3496, %v3492
        %v3501 = vadd.s32 %v3497, %v3499
        %v3502 = vadd.s32 %v3501, %v3491
        %v3503 = vadd.s32 %v3502, %v3493
        %v3504 = vand.u32 %v3481, 65535
        %v3505 = vshrl.u32 %v3481, 16
        %v3506 = vand.u32 %v3476, 65535
        %v3507 = vshrl.u32 %v3476, 16
        %v3508 = vmul.u32 %v3504, %v3506
        %v3509 = vmul.u32 %v3504, %v3507
        %v3510 = vmul.u32 %v3505, %v3506
        %v3511 = vmul.u32 %v3505, %v3507
        %v3512 = vshll.u32 %v3509, 16
        %v3513 = vshrl.u32 %v3509, 16
        %v3514 = vshll.u32 %v3510, 16
        %v3515 = vshrl.u32 %v3510, 16
        %vm3516 = vc.u32 %v3508, %v3512
        %v3517 = vsel %vm3516, 1, 0
        %v3518 = vadd.s32 %v3508, %v3512
        %v3519 = vadd.s32 %v3511, %v3517
        %vm3520 = vc.u32 %v3518, %v3514
        %v3521 = vsel %vm3520, 1, 0
        %v3522 = vadd.s32 %v3518, %v3514
        %v3523 = vadd.s32 %v3519, %v3521
        %v3524 = vadd.s32 %v3523, %v3513
        %v3525 = vadd.s32 %v3524, %v3515
        %v3526 = vmul.u32 %v3481, %v3472
        %v3527 = vadd.s32 %v3503, %v3522
        %vm3528 = vc.u32 %v3503, %v3522
        %v3529 = vadd.s32 %v3525, 1
        %v3530 = vsel %vm3528, %v3529, %v3525
        %v3531 = vadd.s32 %v3526, %v3530
        %v3532 = vadd.s32 %v3531, 536870912
        %v3533 = vshrl.u32 %v3532, 30
        %v3534 = vshll.u32 %v3533, 30
        %v3535 = vsub.s32 %v3531, %v3534
        %vm3536 = vcmp.lt.s32.totalorder %v3535, 0
        %v3537 = vsub.s32 0, %v3535
        %v3538 = vsel %vm3536, %v3537, %v3535
        %v3539 = vclz %v3538
        %v3540 = vsub.s32 %v3539, 2
        %vm3541 = vcmp.gt.s32.totalorder 0, %v3540
        %v3542 = vsel %vm3541, 0, %v3540
        %v3543 = vsub.s32 32, %v3542
        %v3544 = vshll.u32 %v3535, %v3542
        %v3545 = vshrl.u32 %v3527, %v3543
        %v3546 = vor.u32 %v3544, %v3545
        %v3547 = vsub.s32 4294967266, %v3542
        %v3548 = vadd.s32 %v3547, 127
        %v3549 = vshll.u32 %v3548, 23
        %v3550 = vor.u32 4788187, %v3549
        %v3551 = vand.u32 2147483647, %v3550
        %v3553 = vcvt.s32.f32 %v3546
        %v3554 = vmul.f32 %v3553, %v3551
        %v3555 = vxor.u32 %v3554, 2147483648
        %v3556 = vsel %vm3435, %v3555, %v3554
        %v3557 = vsub.s32 4, %v3533
        %v3558 = vsel %vm3435, %v3557, %v3533
        %v3559 = vsel %vm3434, %v615, %v3556
        %v3560 = vsel %vm3434, 0, %v3558
        %v3561 = vmul.f32 %v3559, %v3559
        %v3562 = vmul.f32 %v3561, -0.001358992
        %v3563 = vadd.f32 %v3562, 0.041655596
        %v3564 = vmul.f32 %v3561, %v3563
        %v3565 = vadd.f32 %v3564, -0.4999988
        %v3566 = vmul.f32 %v3561, %v3565
        %v3567 = vadd.f32 1.0, %v3566
        %v3568 = vmul.f32 %v3559, %v3559
        %v3569 = vmul.f32 %v3568, -0.00019511016
        %v3570 = vadd.f32 %v3569, 0.008332121
        %v3571 = vmul.f32 %v3568, %v3570
        %v3572 = vadd.f32 %v3571, -0.16666654
        %v3573 = vmul.f32 %v3568, %v3572
        %v3574 = vadd.f32 %v3573, 1.0
        %v3575 = vmul.f32 %v3574, %v3559
        %vm3576 = vweird.f32 %v615
        %v3577 = vand.u32 %v3560, 3
        %vm3578 = vcmp.lt.s32.totalorder %v3577, 2
        %vm3579 = vcmp.eq.s32.totalorder %v3577, 0
        %v3580 = vxor.u32 %v3575, 2147483648
        %v3581 = vsel %vm3579, %v3567, %v3580
        %vm3582 = vcmp.eq.s32.totalorder %v3577, 2
        %v3583 = vxor.u32 %v3567, 2147483648
        %v3584 = vsel %vm3582, %v3583, %v3575
        %v3585 = vsel %vm3578, %v3581, %v3584
        %v3586 = vsel %vm3576, nan, %v3585
        %v3587 = vand.u32 2147483647, %v616
        %vm3588 = vcmp.le.f32.partialorder %v3587, 0.7853982
        %vm3589 = vcmp.lt.s32.totalorder %v616, 0
        %v3590 = vand.u32 %v616, 2139095040
        %v3591 = vshrl.u32 %v3590, 23
        %v3592 = vsub.s32 %v3591, 127
        %v3593 = vand.u32 2147483647, %v616
        %v3594 = vand.u32 %v3593, 8388607
        %v3595 = vor.u32 %v3594, 8388608
        %v3596 = vsub.s32 0, %v3595
        %v3597 = vadd.s32 %v3592, 1
        %vm3598 = vcmp.gt.s32.totalorder %v3597, 0
        %v3599 = vsel %vm3598, %v3597, 0
        %v3600 = vshrl.u32 %v3599, 5
        %v3601 = vand.u32 %v3599, 31
        %v3602 = vsub.s32 32, %v3601
        %v3603 = vshrl.u32 683565275, %v3602
        %v3604 = vshll.u32 683565275, %v3601
        %v3605 = vshrl.u32 2475754826, %v3602
        %v3606 = vor.u32 %v3604, %v3605
        %v3607 = vshll.u32 2475754826, %v3601
        %v3608 = vshrl.u32 2131351028, %v3602
        %v3609 = vor.u32 %v3607, %v3608
        %v3610 = vshll.u32 2131351028, %v3601
        %v3611 = vshrl.u32 2102212464, %v3602
        %v3612 = vor.u32 %v3610, %v3611
        %v3613 = vshll.u32 2102212464, %v3601
        %v3614 = vshrl.u32 920167782, %v3602
        %v3615 = vor.u32 %v3613, %v3614
        %v3616 = vshll.u32 920167782, %v3601
        %v3617 = vshrl.u32 1326507024, %v3602
        %v3618 = vor.u32 %v3616, %v3617
        %vm3619 = vcmp.lt.s32.totalorder %v3600, 1
        %vm3620 = vcmp.lt.s32.totalorder %v3600, 2
        %vm3621 = vcmp.lt.s32.totalorder %v3600, 3
        %vm3622 = vcmp.lt.s32.totalorder %v3600, 4
        %v3623 = vsel %vm3619, %v3603, %v3606
        %v3624 = vsel %vm3622, %v3612, 2102212464
        %v3625 = vsel %vm3621, %v3609, %v3624
        %v3626 = vsel %vm3620, %v3623, %v3625
        %v3627 = vsel %vm3619, %v3606, %v3609
        %v3628 = vsel %vm3622, %v3615, 920167782
        %v3629 = vsel %vm3621, %v3612, %v3628
        %v3630 = vsel %vm3620, %v3627, %v3629
        %v3631 = vsel %vm3619, %v3609, %v3612
        %v3632 = vsel %vm3622, %v3618, 1326507024
        %v3633 = vsel %vm3621, %v3615, %v3632
        %v3634 = vsel %vm3620, %v3631, %v3633
        %v3635 = vshll.u32 %v3595, 8
        %v3636 = vand.u32 %v3635, 65535
        %v3637 = vshrl.u32 %v3635, 16
        %v3638 = vand.u32 %v3634, 65535
        %v3639 = vshrl.u32 %v3634, 16
        %v3640 = vmul.u32 %v3636, %v3638
        %v3641 = vmul.u32 %v3636, %v3639
        %v3642 = vmul.u32 %v3637, %v3638
        %v3643 = vmul.u32 %v3637, %v3639
        %v3644 = vshll.u32 %v3641, 16
        %v3645 = vshrl.u32 %v3641, 16
        %v3646 = vshll.u32 %v3642, 16
        %v3647 = vshrl.u32 %v3642, 16
        %vm3648 = vc.u32 %v3640, %v3644
        %v3649 = vsel %vm3648, 1, 0
        %v3650 = vadd.s32 %v3640, %v3644
        %v3651 = vadd.s32 %v3643, %v3649
        %vm3652 = vc.u32 %v3650, %v3646
        %v3653 = vsel %vm3652, 1, 0
        %v3654 = vadd.s32 %v3650, %v3646
        %v3655 = vadd.s32 %v3651, %v3653
        %v3656 = vadd.s32 %v3655, %v3645
        %v3657 = vadd.s32 %v3656, %v3647
        %v3658 = vand.u32 %v3635, 65535
        %v3659 = vshrl.u32 %v3635, 16
        %v3660 = vand.u32 %v3630, 65535
        %v3661 = vshrl.u32 %v3630, 16
        %v3662 = vmul.u32 %v3658, %v3660
        %v3663 = vmul.u32 %v3658, %v3661
        %v3664 = vmul.u32 %v3659, %v3660
        %v3665 = vmul.u32 %v3659, %v3661
        %v3666 = vshll.u32 %v3663, 16
        %v3667 = vshrl.u32 %v3663, 16
        %v3668 = vshll.u32 %v3664, 16
        %v3669 = vshrl.u32 %v3664, 16
        %vm3670 = vc.u32 %v3662, %v3666
        %v3671 = vsel %vm3670, 1, 0
        %v3672 = vadd.s32 %v3662, %v3666
        %v3673 = vadd.s32 %v3665, %v3671
        %vm3674 = vc.u32 %v3672, %v3668
        %v3675 = vsel %vm3674, 1, 0
        %v3676 = vadd.s32 %v3672, %v3668
        %v3677 = vadd.s32 %v3673, %v3675
        %v3678 = vadd.s32 %v3677, %v3667
        %v3679 = vadd.s32 %v3678, %v3669
        %v3680 = vmul.u32 %v3635, %v3626
        %v3681 = vadd.s32 %v3657, %v3676
        %vm3682 = vc.u32 %v3657, %v3676
        %v3683 = vadd.s32 %v3679, 1
        %v3684 = vsel %vm3682, %v3683, %v3679
        %v3685 = vadd.s32 %v3680, %v3684
        %v3686 = vadd.s32 %v3685, 536870912
        %v3687 = vshrl.u32 %v3686, 30
        %v3688 = vshll.u32 %v3687, 30
        %v3689 = vsub.s32 %v3685, %v3688
        %vm3690 = vcmp.lt.s32.totalorder %v3689, 0
        %v3691 = vsub.s32 0, %v3689
        %v3692 = vsel %vm3690, %v3691, %v3689
        %v3693 = vclz %v3692
        %v3694 = vsub.s32 %v3693, 2
        %vm3695 = vcmp.gt.s32.totalorder 0, %v3694
        %v3696 = vsel %vm3695, 0, %v3694
        %v3697 = vsub.s32 32, %v3696
        %v3698 = vshll.u32 %v3689, %v3696
        %v3699 = vshrl.u32 %v3681, %v3697
        %v3700 = vor.u32 %v3698, %v3699
        %v3701 = vsub.s32 4294967266, %v3696
        %v3702 = vadd.s32 %v3701, 127
        %v3703 = vshll.u32 %v3702, 23
        %v3704 = vor.u32 4788187, %v3703
        %v3705 = vand.u32 2147483647, %v3704
        %v3707 = vcvt.s32.f32 %v3700
        %v3708 = vmul.f32 %v3707, %v3705
        %v3709 = vxor.u32 %v3708, 2147483648
        %v3710 = vsel %vm3589, %v3709, %v3708
        %v3711 = vsub.s32 4, %v3687
        %v3712 = vsel %vm3589, %v3711, %v3687
        %v3713 = vsel %vm3588, %v616, %v3710
        %v3714 = vsel %vm3588, 0, %v3712
        %v3715 = vmul.f32 %v3713, %v3713
        %v3716 = vmul.f32 %v3715, -0.001358992
        %v3717 = vadd.f32 %v3716, 0.041655596
        %v3718 = vmul.f32 %v3715, %v3717
        %v3719 = vadd.f32 %v3718, -0.4999988
        %v3720 = vmul.f32 %v3715, %v3719
        %v3721 = vadd.f32 1.0, %v3720
        %v3722 = vmul.f32 %v3713, %v3713
        %v3723 = vmul.f32 %v3722, -0.00019511016
        %v3724 = vadd.f32 %v3723, 0.008332121
        %v3725 = vmul.f32 %v3722, %v3724
        %v3726 = vadd.f32 %v3725, -0.16666654
        %v3727 = vmul.f32 %v3722, %v3726
        %v3728 = vadd.f32 %v3727, 1.0
        %v3729 = vmul.f32 %v3728, %v3713
        %vm3730 = vweird.f32 %v616
        %v3731 = vand.u32 %v3714, 3
        %vm3732 = vcmp.lt.s32.totalorder %v3731, 2
        %vm3733 = vcmp.eq.s32.totalorder %v3731, 0
        %v3734 = vxor.u32 %v3729, 2147483648
        %v3735 = vsel %vm3733, %v3721, %v3734
        %vm3736 = vcmp.eq.s32.totalorder %v3731, 2
        %v3737 = vxor.u32 %v3721, 2147483648
        %v3738 = vsel %vm3736, %v3737, %v3729
        %v3739 = vsel %vm3732, %v3735, %v3738
        %v3740 = vsel %vm3730, nan, %v3739
        %v3741 = vand.u32 2147483647, %v617
        %vm3742 = vcmp.le.f32.partialorder %v3741, 0.7853982
        %vm3743 = vcmp.lt.s32.totalorder %v617, 0
        %v3744 = vand.u32 %v617, 2139095040
        %v3745 = vshrl.u32 %v3744, 23
        %v3746 = vsub.s32 %v3745, 127
        %v3747 = vand.u32 2147483647, %v617
        %v3748 = vand.u32 %v3747, 8388607
        %v3749 = vor.u32 %v3748, 8388608
        %v3750 = vsub.s32 0, %v3749
        %v3751 = vadd.s32 %v3746, 1
        %vm3752 = vcmp.gt.s32.totalorder %v3751, 0
        %v3753 = vsel %vm3752, %v3751, 0
        %v3754 = vshrl.u32 %v3753, 5
        %v3755 = vand.u32 %v3753, 31
        %v3756 = vsub.s32 32, %v3755
        %v3757 = vshrl.u32 683565275, %v3756
        %v3758 = vshll.u32 683565275, %v3755
        %v3759 = vshrl.u32 2475754826, %v3756
        %v3760 = vor.u32 %v3758, %v3759
        %v3761 = vshll.u32 2475754826, %v3755
        %v3762 = vshrl.u32 2131351028, %v3756
        %v3763 = vor.u32 %v3761, %v3762
        %v3764 = vshll.u32 2131351028, %v3755
        %v3765 = vshrl.u32 2102212464, %v3756
        %v3766 = vor.u32 %v3764, %v3765
        %v3767 = vshll.u32 2102212464, %v3755
        %v3768 = vshrl.u32 920167782, %v3756
        %v3769 = vor.u32 %v3767, %v3768
        %v3770 = vshll.u32 920167782, %v3755
        %v3771 = vshrl.u32 1326507024, %v3756
        %v3772 = vor.u32 %v3770, %v3771
        %vm3773 = vcmp.lt.s32.totalorder %v3754, 1
        %vm3774 = vcmp.lt.s32.totalorder %v3754, 2
        %vm3775 = vcmp.lt.s32.totalorder %v3754, 3
        %vm3776 = vcmp.lt.s32.totalorder %v3754, 4
        %v3777 = vsel %vm3773, %v3757, %v3760
        %v3778 = vsel %vm3776, %v3766, 2102212464
        %v3779 = vsel %vm3775, %v3763, %v3778
        %v3780 = vsel %vm3774, %v3777, %v3779
        %v3781 = vsel %vm3773, %v3760, %v3763
        %v3782 = vsel %vm3776, %v3769, 920167782
        %v3783 = vsel %vm3775, %v3766, %v3782
        %v3784 = vsel %vm3774, %v3781, %v3783
        %v3785 = vsel %vm3773, %v3763, %v3766
        %v3786 = vsel %vm3776, %v3772, 1326507024
        %v3787 = vsel %vm3775, %v3769, %v3786
        %v3788 = vsel %vm3774, %v3785, %v3787
        %v3789 = vshll.u32 %v3749, 8
        %v3790 = vand.u32 %v3789, 65535
        %v3791 = vshrl.u32 %v3789, 16
        %v3792 = vand.u32 %v3788, 65535
        %v3793 = vshrl.u32 %v3788, 16
        %v3794 = vmul.u32 %v3790, %v3792
        %v3795 = vmul.u32 %v3790, %v3793
        %v3796 = vmul.u32 %v3791, %v3792
        %v3797 = vmul.u32 %v3791, %v3793
        %v3798 = vshll.u32 %v3795, 16
        %v3799 = vshrl.u32 %v3795, 16
        %v3800 = vshll.u32 %v3796, 16
        %v3801 = vshrl.u32 %v3796, 16
        %vm3802 = vc.u32 %v3794, %v3798
        %v3803 = vsel %vm3802, 1, 0
        %v3804 = vadd.s32 %v3794, %v3798
        %v3805 = vadd.s32 %v3797, %v3803
        %vm3806 = vc.u32 %v3804, %v3800
        %v3807 = vsel %vm3806, 1, 0
        %v3808 = vadd.s32 %v3804, %v3800
        %v3809 = vadd.s32 %v3805, %v3807
        %v3810 = vadd.s32 %v3809, %v3799
        %v3811 = vadd.s32 %v3810, %v3801
        %v3812 = vand.u32 %v3789, 65535
        %v3813 = vshrl.u32 %v3789, 16
        %v3814 = vand.u32 %v3784, 65535
        %v3815 = vshrl.u32 %v3784, 16
        %v3816 = vmul.u32 %v3812, %v3814
        %v3817 = vmul.u32 %v3812, %v3815
        %v3818 = vmul.u32 %v3813, %v3814
        %v3819 = vmul.u32 %v3813, %v3815
        %v3820 = vshll.u32 %v3817, 16
        %v3821 = vshrl.u32 %v3817, 16
        %v3822 = vshll.u32 %v3818, 16
        %v3823 = vshrl.u32 %v3818, 16
        %vm3824 = vc.u32 %v3816, %v3820
        %v3825 = vsel %vm3824, 1, 0
        %v3826 = vadd.s32 %v3816, %v3820
        %v3827 = vadd.s32 %v3819, %v3825
        %vm3828 = vc.u32 %v3826, %v3822
        %v3829 = vsel %vm3828, 1, 0
        %v3830 = vadd.s32 %v3826, %v3822
        %v3831 = vadd.s32 %v3827, %v3829
        %v3832 = vadd.s32 %v3831, %v3821
        %v3833 = vadd.s32 %v3832, %v3823
        %v3834 = vmul.u32 %v3789, %v3780
        %v3835 = vadd.s32 %v3811, %v3830
        %vm3836 = vc.u32 %v3811, %v3830
        %v3837 = vadd.s32 %v3833, 1
        %v3838 = vsel %vm3836, %v3837, %v3833
        %v3839 = vadd.s32 %v3834, %v3838
        %v3840 = vadd.s32 %v3839, 536870912
        %v3841 = vshrl.u32 %v3840, 30
        %v3842 = vshll.u32 %v3841, 30
        %v3843 = vsub.s32 %v3839, %v3842
        %vm3844 = vcmp.lt.s32.totalorder %v3843, 0
        %v3845 = vsub.s32 0, %v3843
        %v3846 = vsel %vm3844, %v3845, %v3843
        %v3847 = vclz %v3846
        %v3848 = vsub.s32 %v3847, 2
        %vm3849 = vcmp.gt.s32.totalorder 0, %v3848
        %v3850 = vsel %vm3849, 0, %v3848
        %v3851 = vsub.s32 32, %v3850
        %v3852 = vshll.u32 %v3843, %v3850
        %v3853 = vshrl.u32 %v3835, %v3851
        %v3854 = vor.u32 %v3852, %v3853
        %v3855 = vsub.s32 4294967266, %v3850
        %v3856 = vadd.s32 %v3855, 127
        %v3857 = vshll.u32 %v3856, 23
        %v3858 = vor.u32 4788187, %v3857
        %v3859 = vand.u32 2147483647, %v3858
        %v3861 = vcvt.s32.f32 %v3854
        %v3862 = vmul.f32 %v3861, %v3859
        %v3863 = vxor.u32 %v3862, 2147483648
        %v3864 = vsel %vm3743, %v3863, %v3862
        %v3865 = vsub.s32 4, %v3841
        %v3866 = vsel %vm3743, %v3865, %v3841
        %v3867 = vsel %vm3742, %v617, %v3864
        %v3868 = vsel %vm3742, 0, %v3866
        %v3869 = vmul.f32 %v3867, %v3867
        %v3870 = vmul.f32 %v3869, -0.001358992
        %v3871 = vadd.f32 %v3870, 0.041655596
        %v3872 = vmul.f32 %v3869, %v3871
        %v3873 = vadd.f32 %v3872, -0.4999988
        %v3874 = vmul.f32 %v3869, %v3873
        %v3875 = vadd.f32 1.0, %v3874
        %v3876 = vmul.f32 %v3867, %v3867
        %v3877 = vmul.f32 %v3876, -0.00019511016
        %v3878 = vadd.f32 %v3877, 0.008332121
        %v3879 = vmul.f32 %v3876, %v3878
        %v3880 = vadd.f32 %v3879, -0.16666654
        %v3881 = vmul.f32 %v3876, %v3880
        %v3882 = vadd.f32 %v3881, 1.0
        %v3883 = vmul.f32 %v3882, %v3867
        %vm3884 = vweird.f32 %v617
        %v3885 = vand.u32 %v3868, 3
        %vm3886 = vcmp.lt.s32.totalorder %v3885, 2
        %vm3887 = vcmp.eq.s32.totalorder %v3885, 0
        %v3888 = vxor.u32 %v3883, 2147483648
        %v3889 = vsel %vm3887, %v3875, %v3888
        %vm3890 = vcmp.eq.s32.totalorder %v3885, 2
        %v3891 = vxor.u32 %v3875, 2147483648
        %v3892 = vsel %vm3890, %v3891, %v3883
        %v3893 = vsel %vm3886, %v3889, %v3892
        %v3894 = vsel %vm3884, nan, %v3893
        %v3895 = vand.u32 2147483647, %v618
        %vm3896 = vcmp.le.f32.partialorder %v3895, 0.7853982
        %vm3897 = vcmp.lt.s32.totalorder %v618, 0
        %v3898 = vand.u32 %v618, 2139095040
        %v3899 = vshrl.u32 %v3898, 23
        %v3900 = vsub.s32 %v3899, 127
        %v3901 = vand.u32 2147483647, %v618
        %v3902 = vand.u32 %v3901, 8388607
        %v3903 = vor.u32 %v3902, 8388608
        %v3904 = vsub.s32 0, %v3903
        %v3905 = vadd.s32 %v3900, 1
        %vm3906 = vcmp.gt.s32.totalorder %v3905, 0
        %v3907 = vsel %vm3906, %v3905, 0
        %v3908 = vshrl.u32 %v3907, 5
        %v3909 = vand.u32 %v3907, 31
        %v3910 = vsub.s32 32, %v3909
        %v3911 = vshrl.u32 683565275, %v3910
        %v3912 = vshll.u32 683565275, %v3909
        %v3913 = vshrl.u32 2475754826, %v3910
        %v3914 = vor.u32 %v3912, %v3913
        %v3915 = vshll.u32 2475754826, %v3909
        %v3916 = vshrl.u32 2131351028, %v3910
        %v3917 = vor.u32 %v3915, %v3916
        %v3918 = vshll.u32 2131351028, %v3909
        %v3919 = vshrl.u32 2102212464, %v3910
        %v3920 = vor.u32 %v3918, %v3919
        %v3921 = vshll.u32 2102212464, %v3909
        %v3922 = vshrl.u32 920167782, %v3910
        %v3923 = vor.u32 %v3921, %v3922
        %v3924 = vshll.u32 920167782, %v3909
        %v3925 = vshrl.u32 1326507024, %v3910
        %v3926 = vor.u32 %v3924, %v3925
        %vm3927 = vcmp.lt.s32.totalorder %v3908, 1
        %vm3928 = vcmp.lt.s32.totalorder %v3908, 2
        %vm3929 = vcmp.lt.s32.totalorder %v3908, 3
        %vm3930 = vcmp.lt.s32.totalorder %v3908, 4
        %v3931 = vsel %vm3927, %v3911, %v3914
        %v3932 = vsel %vm3930, %v3920, 2102212464
        %v3933 = vsel %vm3929, %v3917, %v3932
        %v3934 = vsel %vm3928, %v3931, %v3933
        %v3935 = vsel %vm3927, %v3914, %v3917
        %v3936 = vsel %vm3930, %v3923, 920167782
        %v3937 = vsel %vm3929, %v3920, %v3936
        %v3938 = vsel %vm3928, %v3935, %v3937
        %v3939 = vsel %vm3927, %v3917, %v3920
        %v3940 = vsel %vm3930, %v3926, 1326507024
        %v3941 = vsel %vm3929, %v3923, %v3940
        %v3942 = vsel %vm3928, %v3939, %v3941
        %v3943 = vshll.u32 %v3903, 8
        %v3944 = vand.u32 %v3943, 65535
        %v3945 = vshrl.u32 %v3943, 16
        %v3946 = vand.u32 %v3942, 65535
        %v3947 = vshrl.u32 %v3942, 16
        %v3948 = vmul.u32 %v3944, %v3946
        %v3949 = vmul.u32 %v3944, %v3947
        %v3950 = vmul.u32 %v3945, %v3946
        %v3951 = vmul.u32 %v3945, %v3947
        %v3952 = vshll.u32 %v3949, 16
        %v3953 = vshrl.u32 %v3949, 16
        %v3954 = vshll.u32 %v3950, 16
        %v3955 = vshrl.u32 %v3950, 16
        %vm3956 = vc.u32 %v3948, %v3952
        %v3957 = vsel %vm3956, 1, 0
        %v3958 = vadd.s32 %v3948, %v3952
        %v3959 = vadd.s32 %v3951, %v3957
        %vm3960 = vc.u32 %v3958, %v3954
        %v3961 = vsel %vm3960, 1, 0
        %v3962 = vadd.s32 %v3958, %v3954
        %v3963 = vadd.s32 %v3959, %v3961
        %v3964 = vadd.s32 %v3963, %v3953
        %v3965 = vadd.s32 %v3964, %v3955
        %v3966 = vand.u32 %v3943, 65535
        %v3967 = vshrl.u32 %v3943, 16
        %v3968 = vand.u32 %v3938, 65535
        %v3969 = vshrl.u32 %v3938, 16
        %v3970 = vmul.u32 %v3966, %v3968
        %v3971 = vmul.u32 %v3966, %v3969
        %v3972 = vmul.u32 %v3967, %v3968
        %v3973 = vmul.u32 %v3967, %v3969
        %v3974 = vshll.u32 %v3971, 16
        %v3975 = vshrl.u32 %v3971, 16
        %v3976 = vshll.u32 %v3972, 16
        %v3977 = vshrl.u32 %v3972, 16
        %vm3978 = vc.u32 %v3970, %v3974
        %v3979 = vsel %vm3978, 1, 0
        %v3980 = vadd.s32 %v3970, %v3974
        %v3981 = vadd.s32 %v3973, %v3979
        %vm3982 = vc.u32 %v3980, %v3976
        %v3983 = vsel %vm3982, 1, 0
        %v3984 = vadd.s32 %v3980, %v3976
        %v3985 = vadd.s32 %v3981, %v3983
        %v3986 = vadd.s32 %v3985, %v3975
        %v3987 = vadd.s32 %v3986, %v3977
        %v3988 = vmul.u32 %v3943, %v3934
        %v3989 = vadd.s32 %v3965, %v3984
        %vm3990 = vc.u32 %v3965, %v3984
        %v3991 = vadd.s32 %v3987, 1
        %v3992 = vsel %vm3990, %v3991, %v3987
        %v3993 = vadd.s32 %v3988, %v3992
        %v3994 = vadd.s32 %v3993, 536870912
        %v3995 = vshrl.u32 %v3994, 30
        %v3996 = vshll.u32 %v3995, 30
        %v3997 = vsub.s32 %v3993, %v3996
        %vm3998 = vcmp.lt.s32.totalorder %v3997, 0
        %v3999 = vsub.s32 0, %v3997
        %v4000 = vsel %vm3998, %v3999, %v3997
        %v4001 = vclz %v4000
        %v4002 = vsub.s32 %v4001, 2
        %vm4003 = vcmp.gt.s32.totalorder 0, %v4002
        %v4004 = vsel %vm4003, 0, %v4002
        %v4005 = vsub.s32 32, %v4004
        %v4006 = vshll.u32 %v3997, %v4004
        %v4007 = vshrl.u32 %v3989, %v4005
        %v4008 = vor.u32 %v4006, %v4007
        %v4009 = vsub.s32 4294967266, %v4004
        %v4010 = vadd.s32 %v4009, 127
        %v4011 = vshll.u32 %v4010, 23
        %v4012 = vor.u32 4788187, %v4011
        %v4013 = vand.u32 2147483647, %v4012
        %v4015 = vcvt.s32.f32 %v4008
        %v4016 = vmul.f32 %v4015, %v4013
        %v4017 = vxor.u32 %v4016, 2147483648
        %v4018 = vsel %vm3897, %v4017, %v4016
        %v4019 = vsub.s32 4, %v3995
        %v4020 = vsel %vm3897, %v4019, %v3995
        %v4021 = vsel %vm3896, %v618, %v4018
        %v4022 = vsel %vm3896, 0, %v4020
        %v4023 = vmul.f32 %v4021, %v4021
        %v4024 = vmul.f32 %v4023, -0.001358992
        %v4025 = vadd.f32 %v4024, 0.041655596
        %v4026 = vmul.f32 %v4023, %v4025
        %v4027 = vadd.f32 %v4026, -0.4999988
        %v4028 = vmul.f32 %v4023, %v4027
        %v4029 = vadd.f32 1.0, %v4028
        %v4030 = vmul.f32 %v4021, %v4021
        %v4031 = vmul.f32 %v4030, -0.00019511016
        %v4032 = vadd.f32 %v4031, 0.008332121
        %v4033 = vmul.f32 %v4030, %v4032
        %v4034 = vadd.f32 %v4033, -0.16666654
        %v4035 = vmul.f32 %v4030, %v4034
        %v4036 = vadd.f32 %v4035, 1.0
        %v4037 = vmul.f32 %v4036, %v4021
        %vm4038 = vweird.f32 %v618
        %v4039 = vand.u32 %v4022, 3
        %vm4040 = vcmp.lt.s32.totalorder %v4039, 2
        %vm4041 = vcmp.eq.s32.totalorder %v4039, 0
        %v4042 = vxor.u32 %v4037, 2147483648
        %v4043 = vsel %vm4041, %v4029, %v4042
        %vm4044 = vcmp.eq.s32.totalorder %v4039, 2
        %v4045 = vxor.u32 %v4029, 2147483648
        %v4046 = vsel %vm4044, %v4045, %v4037
        %v4047 = vsel %vm4040, %v4043, %v4046
        %v4048 = vsel %vm4038, nan, %v4047
        %v4049 = vand.u32 2147483647, %v619
        %vm4050 = vcmp.le.f32.partialorder %v4049, 0.7853982
        %vm4051 = vcmp.lt.s32.totalorder %v619, 0
        %v4052 = vand.u32 %v619, 2139095040
        %v4053 = vshrl.u32 %v4052, 23
        %v4054 = vsub.s32 %v4053, 127
        %v4055 = vand.u32 2147483647, %v619
        %v4056 = vand.u32 %v4055, 8388607
        %v4057 = vor.u32 %v4056, 8388608
        %v4058 = vsub.s32 0, %v4057
        %v4059 = vadd.s32 %v4054, 1
        %vm4060 = vcmp.gt.s32.totalorder %v4059, 0
        %v4061 = vsel %vm4060, %v4059, 0
        %v4062 = vshrl.u32 %v4061, 5
        %v4063 = vand.u32 %v4061, 31
        %v4064 = vsub.s32 32, %v4063
        %v4065 = vshrl.u32 683565275, %v4064
        %v4066 = vshll.u32 683565275, %v4063
        %v4067 = vshrl.u32 2475754826, %v4064
        %v4068 = vor.u32 %v4066, %v4067
        %v4069 = vshll.u32 2475754826, %v4063
        %v4070 = vshrl.u32 2131351028, %v4064
        %v4071 = vor.u32 %v4069, %v4070
        %v4072 = vshll.u32 2131351028, %v4063
        %v4073 = vshrl.u32 2102212464, %v4064
        %v4074 = vor.u32 %v4072, %v4073
        %v4075 = vshll.u32 2102212464, %v4063
        %v4076 = vshrl.u32 920167782, %v4064
        %v4077 = vor.u32 %v4075, %v4076
        %v4078 = vshll.u32 920167782, %v4063
        %v4079 = vshrl.u32 1326507024, %v4064
        %v4080 = vor.u32 %v4078, %v4079
        %vm4081 = vcmp.lt.s32.totalorder %v4062, 1
        %vm4082 = vcmp.lt.s32.totalorder %v4062, 2
        %vm4083 = vcmp.lt.s32.totalorder %v4062, 3
        %vm4084 = vcmp.lt.s32.totalorder %v4062, 4
        %v4085 = vsel %vm4081, %v4065, %v4068
        %v4086 = vsel %vm4084, %v4074, 2102212464
        %v4087 = vsel %vm4083, %v4071, %v4086
        %v4088 = vsel %vm4082, %v4085, %v4087
        %v4089 = vsel %vm4081, %v4068, %v4071
        %v4090 = vsel %vm4084, %v4077, 920167782
        %v4091 = vsel %vm4083, %v4074, %v4090
        %v4092 = vsel %vm4082, %v4089, %v4091
        %v4093 = vsel %vm4081, %v4071, %v4074
        %v4094 = vsel %vm4084, %v4080, 1326507024
        %v4095 = vsel %vm4083, %v4077, %v4094
        %v4096 = vsel %vm4082, %v4093, %v4095
        %v4097 = vshll.u32 %v4057, 8
        %v4098 = vand.u32 %v4097, 65535
        %v4099 = vshrl.u32 %v4097, 16
        %v4100 = vand.u32 %v4096, 65535
        %v4101 = vshrl.u32 %v4096, 16
        %v4102 = vmul.u32 %v4098, %v4100
        %v4103 = vmul.u32 %v4098, %v4101
        %v4104 = vmul.u32 %v4099, %v4100
        %v4105 = vmul.u32 %v4099, %v4101
        %v4106 = vshll.u32 %v4103, 16
        %v4107 = vshrl.u32 %v4103, 16
        %v4108 = vshll.u32 %v4104, 16
        %v4109 = vshrl.u32 %v4104, 16
        %vm4110 = vc.u32 %v4102, %v4106
        %v4111 = vsel %vm4110, 1, 0
        %v4112 = vadd.s32 %v4102, %v4106
        %v4113 = vadd.s32 %v4105, %v4111
        %vm4114 = vc.u32 %v4112, %v4108
        %v4115 = vsel %vm4114, 1, 0
        %v4116 = vadd.s32 %v4112, %v4108
        %v4117 = vadd.s32 %v4113, %v4115
        %v4118 = vadd.s32 %v4117, %v4107
        %v4119 = vadd.s32 %v4118, %v4109
        %v4120 = vand.u32 %v4097, 65535
        %v4121 = vshrl.u32 %v4097, 16
        %v4122 = vand.u32 %v4092, 65535
        %v4123 = vshrl.u32 %v4092, 16
        %v4124 = vmul.u32 %v4120, %v4122
        %v4125 = vmul.u32 %v4120, %v4123
        %v4126 = vmul.u32 %v4121, %v4122
        %v4127 = vmul.u32 %v4121, %v4123
        %v4128 = vshll.u32 %v4125, 16
        %v4129 = vshrl.u32 %v4125, 16
        %v4130 = vshll.u32 %v4126, 16
        %v4131 = vshrl.u32 %v4126, 16
        %vm4132 = vc.u32 %v4124, %v4128
        %v4133 = vsel %vm4132, 1, 0
        %v4134 = vadd.s32 %v4124, %v4128
        %v4135 = vadd.s32 %v4127, %v4133
        %vm4136 = vc.u32 %v4134, %v4130
        %v4137 = vsel %vm4136, 1, 0
        %v4138 = vadd.s32 %v4134, %v4130
        %v4139 = vadd.s32 %v4135, %v4137
        %v4140 = vadd.s32 %v4139, %v4129
        %v4141 = vadd.s32 %v4140, %v4131
        %v4142 = vmul.u32 %v4097, %v4088
        %v4143 = vadd.s32 %v4119, %v4138
        %vm4144 = vc.u32 %v4119, %v4138
        %v4145 = vadd.s32 %v4141, 1
        %v4146 = vsel %vm4144, %v4145, %v4141
        %v4147 = vadd.s32 %v4142, %v4146
        %v4148 = vadd.s32 %v4147, 536870912
        %v4149 = vshrl.u32 %v4148, 30
        %v4150 = vshll.u32 %v4149, 30
        %v4151 = vsub.s32 %v4147, %v4150
        %vm4152 = vcmp.lt.s32.totalorder %v4151, 0
        %v4153 = vsub.s32 0, %v4151
        %v4154 = vsel %vm4152, %v4153, %v4151
        %v4155 = vclz %v4154
        %v4156 = vsub.s32 %v4155, 2
        %vm4157 = vcmp.gt.s32.totalorder 0, %v4156
        %v4158 = vsel %vm4157, 0, %v4156
        %v4159 = vsub.s32 32, %v4158
        %v4160 = vshll.u32 %v4151, %v4158
        %v4161 = vshrl.u32 %v4143, %v4159
        %v4162 = vor.u32 %v4160, %v4161
        %v4163 = vsub.s32 4294967266, %v4158
        %v4164 = vadd.s32 %v4163, 127
        %v4165 = vshll.u32 %v4164, 23
        %v4166 = vor.u32 4788187, %v4165
        %v4167 = vand.u32 2147483647, %v4166
        %v4169 = vcvt.s32.f32 %v4162
        %v4170 = vmul.f32 %v4169, %v4167
        %v4171 = vxor.u32 %v4170, 2147483648
        %v4172 = vsel %vm4051, %v4171, %v4170
        %v4173 = vsub.s32 4, %v4149
        %v4174 = vsel %vm4051, %v4173, %v4149
        %v4175 = vsel %vm4050, %v619, %v4172
        %v4176 = vsel %vm4050, 0, %v4174
        %v4177 = vmul.f32 %v4175, %v4175
        %v4178 = vmul.f32 %v4177, -0.001358992
        %v4179 = vadd.f32 %v4178, 0.041655596
        %v4180 = vmul.f32 %v4177, %v4179
        %v4181 = vadd.f32 %v4180, -0.4999988
        %v4182 = vmul.f32 %v4177, %v4181
        %v4183 = vadd.f32 1.0, %v4182
        %v4184 = vmul.f32 %v4175, %v4175
        %v4185 = vmul.f32 %v4184, -0.00019511016
        %v4186 = vadd.f32 %v4185, 0.008332121
        %v4187 = vmul.f32 %v4184, %v4186
        %v4188 = vadd.f32 %v4187, -0.16666654
        %v4189 = vmul.f32 %v4184, %v4188
        %v4190 = vadd.f32 %v4189, 1.0
        %v4191 = vmul.f32 %v4190, %v4175
        %vm4192 = vweird.f32 %v619
        %v4193 = vand.u32 %v4176, 3
        %vm4194 = vcmp.lt.s32.totalorder %v4193, 2
        %vm4195 = vcmp.eq.s32.totalorder %v4193, 0
        %v4196 = vxor.u32 %v4191, 2147483648
        %v4197 = vsel %vm4195, %v4183, %v4196
        %vm4198 = vcmp.eq.s32.totalorder %v4193, 2
        %v4199 = vxor.u32 %v4183, 2147483648
        %v4200 = vsel %vm4198, %v4199, %v4191
        %v4201 = vsel %vm4194, %v4197, %v4200
        %v4202 = vsel %vm4192, nan, %v4201
        %v4203 = vand.u32 2147483647, %v620
        %vm4204 = vcmp.le.f32.partialorder %v4203, 0.7853982
        %vm4205 = vcmp.lt.s32.totalorder %v620, 0
        %v4206 = vand.u32 %v620, 2139095040
        %v4207 = vshrl.u32 %v4206, 23
        %v4208 = vsub.s32 %v4207, 127
        %v4209 = vand.u32 2147483647, %v620
        %v4210 = vand.u32 %v4209, 8388607
        %v4211 = vor.u32 %v4210, 8388608
        %v4212 = vsub.s32 0, %v4211
        %v4213 = vadd.s32 %v4208, 1
        %vm4214 = vcmp.gt.s32.totalorder %v4213, 0
        %v4215 = vsel %vm4214, %v4213, 0
        %v4216 = vshrl.u32 %v4215, 5
        %v4217 = vand.u32 %v4215, 31
        %v4218 = vsub.s32 32, %v4217
        %v4219 = vshrl.u32 683565275, %v4218
        %v4220 = vshll.u32 683565275, %v4217
        %v4221 = vshrl.u32 2475754826, %v4218
        %v4222 = vor.u32 %v4220, %v4221
        %v4223 = vshll.u32 2475754826, %v4217
        %v4224 = vshrl.u32 2131351028, %v4218
        %v4225 = vor.u32 %v4223, %v4224
        %v4226 = vshll.u32 2131351028, %v4217
        %v4227 = vshrl.u32 2102212464, %v4218
        %v4228 = vor.u32 %v4226, %v4227
        %v4229 = vshll.u32 2102212464, %v4217
        %v4230 = vshrl.u32 920167782, %v4218
        %v4231 = vor.u32 %v4229, %v4230
        %v4232 = vshll.u32 920167782, %v4217
        %v4233 = vshrl.u32 1326507024, %v4218
        %v4234 = vor.u32 %v4232, %v4233
        %vm4235 = vcmp.lt.s32.totalorder %v4216, 1
        %vm4236 = vcmp.lt.s32.totalorder %v4216, 2
        %vm4237 = vcmp.lt.s32.totalorder %v4216, 3
        %vm4238 = vcmp.lt.s32.totalorder %v4216, 4
        %v4239 = vsel %vm4235, %v4219, %v4222
        %v4240 = vsel %vm4238, %v4228, 2102212464
        %v4241 = vsel %vm4237, %v4225, %v4240
        %v4242 = vsel %vm4236, %v4239, %v4241
        %v4243 = vsel %vm4235, %v4222, %v4225
        %v4244 = vsel %vm4238, %v4231, 920167782
        %v4245 = vsel %vm4237, %v4228, %v4244
        %v4246 = vsel %vm4236, %v4243, %v4245
        %v4247 = vsel %vm4235, %v4225, %v4228
        %v4248 = vsel %vm4238, %v4234, 1326507024
        %v4249 = vsel %vm4237, %v4231, %v4248
        %v4250 = vsel %vm4236, %v4247, %v4249
        %v4251 = vshll.u32 %v4211, 8
        %v4252 = vand.u32 %v4251, 65535
        %v4253 = vshrl.u32 %v4251, 16
        %v4254 = vand.u32 %v4250, 65535
        %v4255 = vshrl.u32 %v4250, 16
        %v4256 = vmul.u32 %v4252, %v4254
        %v4257 = vmul.u32 %v4252, %v4255
        %v4258 = vmul.u32 %v4253, %v4254
        %v4259 = vmul.u32 %v4253, %v4255
        %v4260 = vshll.u32 %v4257, 16
        %v4261 = vshrl.u32 %v4257, 16
        %v4262 = vshll.u32 %v4258, 16
        %v4263 = vshrl.u32 %v4258, 16
        %vm4264 = vc.u32 %v4256, %v4260
        %v4265 = vsel %vm4264, 1, 0
        %v4266 = vadd.s32 %v4256, %v4260
        %v4267 = vadd.s32 %v4259, %v4265
        %vm4268 = vc.u32 %v4266, %v4262
        %v4269 = vsel %vm4268, 1, 0
        %v4270 = vadd.s32 %v4266, %v4262
        %v4271 = vadd.s32 %v4267, %v4269
        %v4272 = vadd.s32 %v4271, %v4261
        %v4273 = vadd.s32 %v4272, %v4263
        %v4274 = vand.u32 %v4251, 65535
        %v4275 = vshrl.u32 %v4251, 16
        %v4276 = vand.u32 %v4246, 65535
        %v4277 = vshrl.u32 %v4246, 16
        %v4278 = vmul.u32 %v4274, %v4276
        %v4279 = vmul.u32 %v4274, %v4277
        %v4280 = vmul.u32 %v4275, %v4276
        %v4281 = vmul.u32 %v4275, %v4277
        %v4282 = vshll.u32 %v4279, 16
        %v4283 = vshrl.u32 %v4279, 16
        %v4284 = vshll.u32 %v4280, 16
        %v4285 = vshrl.u32 %v4280, 16
        %vm4286 = vc.u32 %v4278, %v4282
        %v4287 = vsel %vm4286, 1, 0
        %v4288 = vadd.s32 %v4278, %v4282
        %v4289 = vadd.s32 %v4281, %v4287
        %vm4290 = vc.u32 %v4288, %v4284
        %v4291 = vsel %vm4290, 1, 0
        %v4292 = vadd.s32 %v4288, %v4284
        %v4293 = vadd.s32 %v4289, %v4291
        %v4294 = vadd.s32 %v4293, %v4283
        %v4295 = vadd.s32 %v4294, %v4285
        %v4296 = vmul.u32 %v4251, %v4242
        %v4297 = vadd.s32 %v4273, %v4292
        %vm4298 = vc.u32 %v4273, %v4292
        %v4299 = vadd.s32 %v4295, 1
        %v4300 = vsel %vm4298, %v4299, %v4295
        %v4301 = vadd.s32 %v4296, %v4300
        %v4302 = vadd.s32 %v4301, 536870912
        %v4303 = vshrl.u32 %v4302, 30
        %v4304 = vshll.u32 %v4303, 30
        %v4305 = vsub.s32 %v4301, %v4304
        %vm4306 = vcmp.lt.s32.totalorder %v4305, 0
        %v4307 = vsub.s32 0, %v4305
        %v4308 = vsel %vm4306, %v4307, %v4305
        %v4309 = vclz %v4308
        %v4310 = vsub.s32 %v4309, 2
        %vm4311 = vcmp.gt.s32.totalorder 0, %v4310
        %v4312 = vsel %vm4311, 0, %v4310
        %v4313 = vsub.s32 32, %v4312
        %v4314 = vshll.u32 %v4305, %v4312
        %v4315 = vshrl.u32 %v4297, %v4313
        %v4316 = vor.u32 %v4314, %v4315
        %v4317 = vsub.s32 4294967266, %v4312
        %v4318 = vadd.s32 %v4317, 127
        %v4319 = vshll.u32 %v4318, 23
        %v4320 = vor.u32 4788187, %v4319
        %v4321 = vand.u32 2147483647, %v4320
        %v4323 = vcvt.s32.f32 %v4316
        %v4324 = vmul.f32 %v4323, %v4321
        %v4325 = vxor.u32 %v4324, 2147483648
        %v4326 = vsel %vm4205, %v4325, %v4324
        %v4327 = vsub.s32 4, %v4303
        %v4328 = vsel %vm4205, %v4327, %v4303
        %v4329 = vsel %vm4204, %v620, %v4326
        %v4330 = vsel %vm4204, 0, %v4328
        %v4331 = vmul.f32 %v4329, %v4329
        %v4332 = vmul.f32 %v4331, -0.001358992
        %v4333 = vadd.f32 %v4332, 0.041655596
        %v4334 = vmul.f32 %v4331, %v4333
        %v4335 = vadd.f32 %v4334, -0.4999988
        %v4336 = vmul.f32 %v4331, %v4335
        %v4337 = vadd.f32 1.0, %v4336
        %v4338 = vmul.f32 %v4329, %v4329
        %v4339 = vmul.f32 %v4338, -0.00019511016
        %v4340 = vadd.f32 %v4339, 0.008332121
        %v4341 = vmul.f32 %v4338, %v4340
        %v4342 = vadd.f32 %v4341, -0.16666654
        %v4343 = vmul.f32 %v4338, %v4342
        %v4344 = vadd.f32 %v4343, 1.0
        %v4345 = vmul.f32 %v4344, %v4329
        %vm4346 = vweird.f32 %v620
        %v4347 = vand.u32 %v4330, 3
        %vm4348 = vcmp.lt.s32.totalorder %v4347, 2
        %vm4349 = vcmp.eq.s32.totalorder %v4347, 0
        %v4350 = vxor.u32 %v4345, 2147483648
        %v4351 = vsel %vm4349, %v4337, %v4350
        %vm4352 = vcmp.eq.s32.totalorder %v4347, 2
        %v4353 = vxor.u32 %v4337, 2147483648
        %v4354 = vsel %vm4352, %v4353, %v4345
        %v4355 = vsel %vm4348, %v4351, %v4354
        %v4356 = vsel %vm4346, nan, %v4355
        %v4357 = vand.u32 2147483647, %v621
        %vm4358 = vcmp.le.f32.partialorder %v4357, 0.7853982
        %vm4359 = vcmp.lt.s32.totalorder %v621, 0
        %v4360 = vand.u32 %v621, 2139095040
        %v4361 = vshrl.u32 %v4360, 23
        %v4362 = vsub.s32 %v4361, 127
        %v4363 = vand.u32 2147483647, %v621
        %v4364 = vand.u32 %v4363, 8388607
        %v4365 = vor.u32 %v4364, 8388608
        %v4366 = vsub.s32 0, %v4365
        %v4367 = vadd.s32 %v4362, 1
        %vm4368 = vcmp.gt.s32.totalorder %v4367, 0
        %v4369 = vsel %vm4368, %v4367, 0
        %v4370 = vshrl.u32 %v4369, 5
        %v4371 = vand.u32 %v4369, 31
        %v4372 = vsub.s32 32, %v4371
        %v4373 = vshrl.u32 683565275, %v4372
        %v4374 = vshll.u32 683565275, %v4371
        %v4375 = vshrl.u32 2475754826, %v4372
        %v4376 = vor.u32 %v4374, %v4375
        %v4377 = vshll.u32 2475754826, %v4371
        %v4378 = vshrl.u32 2131351028, %v4372
        %v4379 = vor.u32 %v4377, %v4378
        %v4380 = vshll.u32 2131351028, %v4371
        %v4381 = vshrl.u32 2102212464, %v4372
        %v4382 = vor.u32 %v4380, %v4381
        %v4383 = vshll.u32 2102212464, %v4371
        %v4384 = vshrl.u32 920167782, %v4372
        %v4385 = vor.u32 %v4383, %v4384
        %v4386 = vshll.u32 920167782, %v4371
        %v4387 = vshrl.u32 1326507024, %v4372
        %v4388 = vor.u32 %v4386, %v4387
        %vm4389 = vcmp.lt.s32.totalorder %v4370, 1
        %vm4390 = vcmp.lt.s32.totalorder %v4370, 2
        %vm4391 = vcmp.lt.s32.totalorder %v4370, 3
        %vm4392 = vcmp.lt.s32.totalorder %v4370, 4
        %v4393 = vsel %vm4389, %v4373, %v4376
        %v4394 = vsel %vm4392, %v4382, 2102212464
        %v4395 = vsel %vm4391, %v4379, %v4394
        %v4396 = vsel %vm4390, %v4393, %v4395
        %v4397 = vsel %vm4389, %v4376, %v4379
        %v4398 = vsel %vm4392, %v4385, 920167782
        %v4399 = vsel %vm4391, %v4382, %v4398
        %v4400 = vsel %vm4390, %v4397, %v4399
        %v4401 = vsel %vm4389, %v4379, %v4382
        %v4402 = vsel %vm4392, %v4388, 1326507024
        %v4403 = vsel %vm4391, %v4385, %v4402
        %v4404 = vsel %vm4390, %v4401, %v4403
        %v4405 = vshll.u32 %v4365, 8
        %v4406 = vand.u32 %v4405, 65535
        %v4407 = vshrl.u32 %v4405, 16
        %v4408 = vand.u32 %v4404, 65535
        %v4409 = vshrl.u32 %v4404, 16
        %v4410 = vmul.u32 %v4406, %v4408
        %v4411 = vmul.u32 %v4406, %v4409
        %v4412 = vmul.u32 %v4407, %v4408
        %v4413 = vmul.u32 %v4407, %v4409
        %v4414 = vshll.u32 %v4411, 16
        %v4415 = vshrl.u32 %v4411, 16
        %v4416 = vshll.u32 %v4412, 16
        %v4417 = vshrl.u32 %v4412, 16
        %vm4418 = vc.u32 %v4410, %v4414
        %v4419 = vsel %vm4418, 1, 0
        %v4420 = vadd.s32 %v4410, %v4414
        %v4421 = vadd.s32 %v4413, %v4419
        %vm4422 = vc.u32 %v4420, %v4416
        %v4423 = vsel %vm4422, 1, 0
        %v4424 = vadd.s32 %v4420, %v4416
        %v4425 = vadd.s32 %v4421, %v4423
        %v4426 = vadd.s32 %v4425, %v4415
        %v4427 = vadd.s32 %v4426, %v4417
        %v4428 = vand.u32 %v4405, 65535
        %v4429 = vshrl.u32 %v4405, 16
        %v4430 = vand.u32 %v4400, 65535
        %v4431 = vshrl.u32 %v4400, 16
        %v4432 = vmul.u32 %v4428, %v4430
        %v4433 = vmul.u32 %v4428, %v4431
        %v4434 = vmul.u32 %v4429, %v4430
        %v4435 = vmul.u32 %v4429, %v4431
        %v4436 = vshll.u32 %v4433, 16
        %v4437 = vshrl.u32 %v4433, 16
        %v4438 = vshll.u32 %v4434, 16
        %v4439 = vshrl.u32 %v4434, 16
        %vm4440 = vc.u32 %v4432, %v4436
        %v4441 = vsel %vm4440, 1, 0
        %v4442 = vadd.s32 %v4432, %v4436
        %v4443 = vadd.s32 %v4435, %v4441
        %vm4444 = vc.u32 %v4442, %v4438
        %v4445 = vsel %vm4444, 1, 0
        %v4446 = vadd.s32 %v4442, %v4438
        %v4447 = vadd.s32 %v4443, %v4445
        %v4448 = vadd.s32 %v4447, %v4437
        %v4449 = vadd.s32 %v4448, %v4439
        %v4450 = vmul.u32 %v4405, %v4396
        %v4451 = vadd.s32 %v4427, %v4446
        %vm4452 = vc.u32 %v4427, %v4446
        %v4453 = vadd.s32 %v4449, 1
        %v4454 = vsel %vm4452, %v4453, %v4449
        %v4455 = vadd.s32 %v4450, %v4454
        %v4456 = vadd.s32 %v4455, 536870912
        %v4457 = vshrl.u32 %v4456, 30
        %v4458 = vshll.u32 %v4457, 30
        %v4459 = vsub.s32 %v4455, %v4458
        %vm4460 = vcmp.lt.s32.totalorder %v4459, 0
        %v4461 = vsub.s32 0, %v4459
        %v4462 = vsel %vm4460, %v4461, %v4459
        %v4463 = vclz %v4462
        %v4464 = vsub.s32 %v4463, 2
        %vm4465 = vcmp.gt.s32.totalorder 0, %v4464
        %v4466 = vsel %vm4465, 0, %v4464
        %v4467 = vsub.s32 32, %v4466
        %v4468 = vshll.u32 %v4459, %v4466
        %v4469 = vshrl.u32 %v4451, %v4467
        %v4470 = vor.u32 %v4468, %v4469
        %v4471 = vsub.s32 4294967266, %v4466
        %v4472 = vadd.s32 %v4471, 127
        %v4473 = vshll.u32 %v4472, 23
        %v4474 = vor.u32 4788187, %v4473
        %v4475 = vand.u32 2147483647, %v4474
        %v4477 = vcvt.s32.f32 %v4470
        %v4478 = vmul.f32 %v4477, %v4475
        %v4479 = vxor.u32 %v4478, 2147483648
        %v4480 = vsel %vm4359, %v4479, %v4478
        %v4481 = vsub.s32 4, %v4457
        %v4482 = vsel %vm4359, %v4481, %v4457
        %v4483 = vsel %vm4358, %v621, %v4480
        %v4484 = vsel %vm4358, 0, %v4482
        %v4485 = vmul.f32 %v4483, %v4483
        %v4486 = vmul.f32 %v4485, -0.001358992
        %v4487 = vadd.f32 %v4486, 0.041655596
        %v4488 = vmul.f32 %v4485, %v4487
        %v4489 = vadd.f32 %v4488, -0.4999988
        %v4490 = vmul.f32 %v4485, %v4489
        %v4491 = vadd.f32 1.0, %v4490
        %v4492 = vmul.f32 %v4483, %v4483
        %v4493 = vmul.f32 %v4492, -0.00019511016
        %v4494 = vadd.f32 %v4493, 0.008332121
        %v4495 = vmul.f32 %v4492, %v4494
        %v4496 = vadd.f32 %v4495, -0.16666654
        %v4497 = vmul.f32 %v4492, %v4496
        %v4498 = vadd.f32 %v4497, 1.0
        %v4499 = vmul.f32 %v4498, %v4483
        %vm4500 = vweird.f32 %v621
        %v4501 = vand.u32 %v4484, 3
        %vm4502 = vcmp.lt.s32.totalorder %v4501, 2
        %vm4503 = vcmp.eq.s32.totalorder %v4501, 0
        %v4504 = vxor.u32 %v4499, 2147483648
        %v4505 = vsel %vm4503, %v4491, %v4504
        %vm4506 = vcmp.eq.s32.totalorder %v4501, 2
        %v4507 = vxor.u32 %v4491, 2147483648
        %v4508 = vsel %vm4506, %v4507, %v4499
        %v4509 = vsel %vm4502, %v4505, %v4508
        %v4510 = vsel %vm4500, nan, %v4509
        %v4511 = vand.u32 2147483647, %v622
        %vm4512 = vcmp.le.f32.partialorder %v4511, 0.7853982
        %vm4513 = vcmp.lt.s32.totalorder %v622, 0
        %v4514 = vand.u32 %v622, 2139095040
        %v4515 = vshrl.u32 %v4514, 23
        %v4516 = vsub.s32 %v4515, 127
        %v4517 = vand.u32 2147483647, %v622
        %v4518 = vand.u32 %v4517, 8388607
        %v4519 = vor.u32 %v4518, 8388608
        %v4520 = vsub.s32 0, %v4519
        %v4521 = vadd.s32 %v4516, 1
        %vm4522 = vcmp.gt.s32.totalorder %v4521, 0
        %v4523 = vsel %vm4522, %v4521, 0
        %v4524 = vshrl.u32 %v4523, 5
        %v4525 = vand.u32 %v4523, 31
        %v4526 = vsub.s32 32, %v4525
        %v4527 = vshrl.u32 683565275, %v4526
        %v4528 = vshll.u32 683565275, %v4525
        %v4529 = vshrl.u32 2475754826, %v4526
        %v4530 = vor.u32 %v4528, %v4529
        %v4531 = vshll.u32 2475754826, %v4525
        %v4532 = vshrl.u32 2131351028, %v4526
        %v4533 = vor.u32 %v4531, %v4532
        %v4534 = vshll.u32 2131351028, %v4525
        %v4535 = vshrl.u32 2102212464, %v4526
        %v4536 = vor.u32 %v4534, %v4535
        %v4537 = vshll.u32 2102212464, %v4525
        %v4538 = vshrl.u32 920167782, %v4526
        %v4539 = vor.u32 %v4537, %v4538
        %v4540 = vshll.u32 920167782, %v4525
        %v4541 = vshrl.u32 1326507024, %v4526
        %v4542 = vor.u32 %v4540, %v4541
        %vm4543 = vcmp.lt.s32.totalorder %v4524, 1
        %vm4544 = vcmp.lt.s32.totalorder %v4524, 2
        %vm4545 = vcmp.lt.s32.totalorder %v4524, 3
        %vm4546 = vcmp.lt.s32.totalorder %v4524, 4
        %v4547 = vsel %vm4543, %v4527, %v4530
        %v4548 = vsel %vm4546, %v4536, 2102212464
        %v4549 = vsel %vm4545, %v4533, %v4548
        %v4550 = vsel %vm4544, %v4547, %v4549
        %v4551 = vsel %vm4543, %v4530, %v4533
        %v4552 = vsel %vm4546, %v4539, 920167782
        %v4553 = vsel %vm4545, %v4536, %v4552
        %v4554 = vsel %vm4544, %v4551, %v4553
        %v4555 = vsel %vm4543, %v4533, %v4536
        %v4556 = vsel %vm4546, %v4542, 1326507024
        %v4557 = vsel %vm4545, %v4539, %v4556
        %v4558 = vsel %vm4544, %v4555, %v4557
        %v4559 = vshll.u32 %v4519, 8
        %v4560 = vand.u32 %v4559, 65535
        %v4561 = vshrl.u32 %v4559, 16
        %v4562 = vand.u32 %v4558, 65535
        %v4563 = vshrl.u32 %v4558, 16
        %v4564 = vmul.u32 %v4560, %v4562
        %v4565 = vmul.u32 %v4560, %v4563
        %v4566 = vmul.u32 %v4561, %v4562
        %v4567 = vmul.u32 %v4561, %v4563
        %v4568 = vshll.u32 %v4565, 16
        %v4569 = vshrl.u32 %v4565, 16
        %v4570 = vshll.u32 %v4566, 16
        %v4571 = vshrl.u32 %v4566, 16
        %vm4572 = vc.u32 %v4564, %v4568
        %v4573 = vsel %vm4572, 1, 0
        %v4574 = vadd.s32 %v4564, %v4568
        %v4575 = vadd.s32 %v4567, %v4573
        %vm4576 = vc.u32 %v4574, %v4570
        %v4577 = vsel %vm4576, 1, 0
        %v4578 = vadd.s32 %v4574, %v4570
        %v4579 = vadd.s32 %v4575, %v4577
        %v4580 = vadd.s32 %v4579, %v4569
        %v4581 = vadd.s32 %v4580, %v4571
        %v4582 = vand.u32 %v4559, 65535
        %v4583 = vshrl.u32 %v4559, 16
        %v4584 = vand.u32 %v4554, 65535
        %v4585 = vshrl.u32 %v4554, 16
        %v4586 = vmul.u32 %v4582, %v4584
        %v4587 = vmul.u32 %v4582, %v4585
        %v4588 = vmul.u32 %v4583, %v4584
        %v4589 = vmul.u32 %v4583, %v4585
        %v4590 = vshll.u32 %v4587, 16
        %v4591 = vshrl.u32 %v4587, 16
        %v4592 = vshll.u32 %v4588, 16
        %v4593 = vshrl.u32 %v4588, 16
        %vm4594 = vc.u32 %v4586, %v4590
        %v4595 = vsel %vm4594, 1, 0
        %v4596 = vadd.s32 %v4586, %v4590
        %v4597 = vadd.s32 %v4589, %v4595
        %vm4598 = vc.u32 %v4596, %v4592
        %v4599 = vsel %vm4598, 1, 0
        %v4600 = vadd.s32 %v4596, %v4592
        %v4601 = vadd.s32 %v4597, %v4599
        %v4602 = vadd.s32 %v4601, %v4591
        %v4603 = vadd.s32 %v4602, %v4593
        %v4604 = vmul.u32 %v4559, %v4550
        %v4605 = vadd.s32 %v4581, %v4600
        %vm4606 = vc.u32 %v4581, %v4600
        %v4607 = vadd.s32 %v4603, 1
        %v4608 = vsel %vm4606, %v4607, %v4603
        %v4609 = vadd.s32 %v4604, %v4608
        %v4610 = vadd.s32 %v4609, 536870912
        %v4611 = vshrl.u32 %v4610, 30
        %v4612 = vshll.u32 %v4611, 30
        %v4613 = vsub.s32 %v4609, %v4612
        %vm4614 = vcmp.lt.s32.totalorder %v4613, 0
        %v4615 = vsub.s32 0, %v4613
        %v4616 = vsel %vm4614, %v4615, %v4613
        %v4617 = vclz %v4616
        %v4618 = vsub.s32 %v4617, 2
        %vm4619 = vcmp.gt.s32.totalorder 0, %v4618
        %v4620 = vsel %vm4619, 0, %v4618
        %v4621 = vsub.s32 32, %v4620
        %v4622 = vshll.u32 %v4613, %v4620
        %v4623 = vshrl.u32 %v4605, %v4621
        %v4624 = vor.u32 %v4622, %v4623
        %v4625 = vsub.s32 4294967266, %v4620
        %v4626 = vadd.s32 %v4625, 127
        %v4627 = vshll.u32 %v4626, 23
        %v4628 = vor.u32 4788187, %v4627
        %v4629 = vand.u32 2147483647, %v4628
        %v4631 = vcvt.s32.f32 %v4624
        %v4632 = vmul.f32 %v4631, %v4629
        %v4633 = vxor.u32 %v4632, 2147483648
        %v4634 = vsel %vm4513, %v4633, %v4632
        %v4635 = vsub.s32 4, %v4611
        %v4636 = vsel %vm4513, %v4635, %v4611
        %v4637 = vsel %vm4512, %v622, %v4634
        %v4638 = vsel %vm4512, 0, %v4636
        %v4639 = vmul.f32 %v4637, %v4637
        %v4640 = vmul.f32 %v4639, -0.001358992
        %v4641 = vadd.f32 %v4640, 0.041655596
        %v4642 = vmul.f32 %v4639, %v4641
        %v4643 = vadd.f32 %v4642, -0.4999988
        %v4644 = vmul.f32 %v4639, %v4643
        %v4645 = vadd.f32 1.0, %v4644
        %v4646 = vmul.f32 %v4637, %v4637
        %v4647 = vmul.f32 %v4646, -0.00019511016
        %v4648 = vadd.f32 %v4647, 0.008332121
        %v4649 = vmul.f32 %v4646, %v4648
        %v4650 = vadd.f32 %v4649, -0.16666654
        %v4651 = vmul.f32 %v4646, %v4650
        %v4652 = vadd.f32 %v4651, 1.0
        %v4653 = vmul.f32 %v4652, %v4637
        %vm4654 = vweird.f32 %v622
        %v4655 = vand.u32 %v4638, 3
        %vm4656 = vcmp.lt.s32.totalorder %v4655, 2
        %vm4657 = vcmp.eq.s32.totalorder %v4655, 0
        %v4658 = vxor.u32 %v4653, 2147483648
        %v4659 = vsel %vm4657, %v4645, %v4658
        %vm4660 = vcmp.eq.s32.totalorder %v4655, 2
        %v4661 = vxor.u32 %v4645, 2147483648
        %v4662 = vsel %vm4660, %v4661, %v4653
        %v4663 = vsel %vm4656, %v4659, %v4662
        %v4664 = vsel %vm4654, nan, %v4663
        %v4665 = vand.u32 2147483647, %v623
        %vm4666 = vcmp.le.f32.partialorder %v4665, 0.7853982
        %vm4667 = vcmp.lt.s32.totalorder %v623, 0
        %v4668 = vand.u32 %v623, 2139095040
        %v4669 = vshrl.u32 %v4668, 23
        %v4670 = vsub.s32 %v4669, 127
        %v4671 = vand.u32 2147483647, %v623
        %v4672 = vand.u32 %v4671, 8388607
        %v4673 = vor.u32 %v4672, 8388608
        %v4674 = vsub.s32 0, %v4673
        %v4675 = vadd.s32 %v4670, 1
        %vm4676 = vcmp.gt.s32.totalorder %v4675, 0
        %v4677 = vsel %vm4676, %v4675, 0
        %v4678 = vshrl.u32 %v4677, 5
        %v4679 = vand.u32 %v4677, 31
        %v4680 = vsub.s32 32, %v4679
        %v4681 = vshrl.u32 683565275, %v4680
        %v4682 = vshll.u32 683565275, %v4679
        %v4683 = vshrl.u32 2475754826, %v4680
        %v4684 = vor.u32 %v4682, %v4683
        %v4685 = vshll.u32 2475754826, %v4679
        %v4686 = vshrl.u32 2131351028, %v4680
        %v4687 = vor.u32 %v4685, %v4686
        %v4688 = vshll.u32 2131351028, %v4679
        %v4689 = vshrl.u32 2102212464, %v4680
        %v4690 = vor.u32 %v4688, %v4689
        %v4691 = vshll.u32 2102212464, %v4679
        %v4692 = vshrl.u32 920167782, %v4680
        %v4693 = vor.u32 %v4691, %v4692
        %v4694 = vshll.u32 920167782, %v4679
        %v4695 = vshrl.u32 1326507024, %v4680
        %v4696 = vor.u32 %v4694, %v4695
        %vm4697 = vcmp.lt.s32.totalorder %v4678, 1
        %vm4698 = vcmp.lt.s32.totalorder %v4678, 2
        %vm4699 = vcmp.lt.s32.totalorder %v4678, 3
        %vm4700 = vcmp.lt.s32.totalorder %v4678, 4
        %v4701 = vsel %vm4697, %v4681, %v4684
        %v4702 = vsel %vm4700, %v4690, 2102212464
        %v4703 = vsel %vm4699, %v4687, %v4702
        %v4704 = vsel %vm4698, %v4701, %v4703
        %v4705 = vsel %vm4697, %v4684, %v4687
        %v4706 = vsel %vm4700, %v4693, 920167782
        %v4707 = vsel %vm4699, %v4690, %v4706
        %v4708 = vsel %vm4698, %v4705, %v4707
        %v4709 = vsel %vm4697, %v4687, %v4690
        %v4710 = vsel %vm4700, %v4696, 1326507024
        %v4711 = vsel %vm4699, %v4693, %v4710
        %v4712 = vsel %vm4698, %v4709, %v4711
        %v4713 = vshll.u32 %v4673, 8
        %v4714 = vand.u32 %v4713, 65535
        %v4715 = vshrl.u32 %v4713, 16
        %v4716 = vand.u32 %v4712, 65535
        %v4717 = vshrl.u32 %v4712, 16
        %v4718 = vmul.u32 %v4714, %v4716
        %v4719 = vmul.u32 %v4714, %v4717
        %v4720 = vmul.u32 %v4715, %v4716
        %v4721 = vmul.u32 %v4715, %v4717
        %v4722 = vshll.u32 %v4719, 16
        %v4723 = vshrl.u32 %v4719, 16
        %v4724 = vshll.u32 %v4720, 16
        %v4725 = vshrl.u32 %v4720, 16
        %vm4726 = vc.u32 %v4718, %v4722
        %v4727 = vsel %vm4726, 1, 0
        %v4728 = vadd.s32 %v4718, %v4722
        %v4729 = vadd.s32 %v4721, %v4727
        %vm4730 = vc.u32 %v4728, %v4724
        %v4731 = vsel %vm4730, 1, 0
        %v4732 = vadd.s32 %v4728, %v4724
        %v4733 = vadd.s32 %v4729, %v4731
        %v4734 = vadd.s32 %v4733, %v4723
        %v4735 = vadd.s32 %v4734, %v4725
        %v4736 = vand.u32 %v4713, 65535
        %v4737 = vshrl.u32 %v4713, 16
        %v4738 = vand.u32 %v4708, 65535
        %v4739 = vshrl.u32 %v4708, 16
        %v4740 = vmul.u32 %v4736, %v4738
        %v4741 = vmul.u32 %v4736, %v4739
        %v4742 = vmul.u32 %v4737, %v4738
        %v4743 = vmul.u32 %v4737, %v4739
        %v4744 = vshll.u32 %v4741, 16
        %v4745 = vshrl.u32 %v4741, 16
        %v4746 = vshll.u32 %v4742, 16
        %v4747 = vshrl.u32 %v4742, 16
        %vm4748 = vc.u32 %v4740, %v4744
        %v4749 = vsel %vm4748, 1, 0
        %v4750 = vadd.s32 %v4740, %v4744
        %v4751 = vadd.s32 %v4743, %v4749
        %vm4752 = vc.u32 %v4750, %v4746
        %v4753 = vsel %vm4752, 1, 0
        %v4754 = vadd.s32 %v4750, %v4746
        %v4755 = vadd.s32 %v4751, %v4753
        %v4756 = vadd.s32 %v4755, %v4745
        %v4757 = vadd.s32 %v4756, %v4747
        %v4758 = vmul.u32 %v4713, %v4704
        %v4759 = vadd.s32 %v4735, %v4754
        %vm4760 = vc.u32 %v4735, %v4754
        %v4761 = vadd.s32 %v4757, 1
        %v4762 = vsel %vm4760, %v4761, %v4757
        %v4763 = vadd.s32 %v4758, %v4762
        %v4764 = vadd.s32 %v4763, 536870912
        %v4765 = vshrl.u32 %v4764, 30
        %v4766 = vshll.u32 %v4765, 30
        %v4767 = vsub.s32 %v4763, %v4766
        %vm4768 = vcmp.lt.s32.totalorder %v4767, 0
        %v4769 = vsub.s32 0, %v4767
        %v4770 = vsel %vm4768, %v4769, %v4767
        %v4771 = vclz %v4770
        %v4772 = vsub.s32 %v4771, 2
        %vm4773 = vcmp.gt.s32.totalorder 0, %v4772
        %v4774 = vsel %vm4773, 0, %v4772
        %v4775 = vsub.s32 32, %v4774
        %v4776 = vshll.u32 %v4767, %v4774
        %v4777 = vshrl.u32 %v4759, %v4775
        %v4778 = vor.u32 %v4776, %v4777
        %v4779 = vsub.s32 4294967266, %v4774
        %v4780 = vadd.s32 %v4779, 127
        %v4781 = vshll.u32 %v4780, 23
        %v4782 = vor.u32 4788187, %v4781
        %v4783 = vand.u32 2147483647, %v4782
        %v4785 = vcvt.s32.f32 %v4778
        %v4786 = vmul.f32 %v4785, %v4783
        %v4787 = vxor.u32 %v4786, 2147483648
        %v4788 = vsel %vm4667, %v4787, %v4786
        %v4789 = vsub.s32 4, %v4765
        %v4790 = vsel %vm4667, %v4789, %v4765
        %v4791 = vsel %vm4666, %v623, %v4788
        %v4792 = vsel %vm4666, 0, %v4790
        %v4793 = vmul.f32 %v4791, %v4791
        %v4794 = vmul.f32 %v4793, -0.001358992
        %v4795 = vadd.f32 %v4794, 0.041655596
        %v4796 = vmul.f32 %v4793, %v4795
        %v4797 = vadd.f32 %v4796, -0.4999988
        %v4798 = vmul.f32 %v4793, %v4797
        %v4799 = vadd.f32 1.0, %v4798
        %v4800 = vmul.f32 %v4791, %v4791
        %v4801 = vmul.f32 %v4800, -0.00019511016
        %v4802 = vadd.f32 %v4801, 0.008332121
        %v4803 = vmul.f32 %v4800, %v4802
        %v4804 = vadd.f32 %v4803, -0.16666654
        %v4805 = vmul.f32 %v4800, %v4804
        %v4806 = vadd.f32 %v4805, 1.0
        %v4807 = vmul.f32 %v4806, %v4791
        %vm4808 = vweird.f32 %v623
        %v4809 = vand.u32 %v4792, 3
        %vm4810 = vcmp.lt.s32.totalorder %v4809, 2
        %vm4811 = vcmp.eq.s32.totalorder %v4809, 0
        %v4812 = vxor.u32 %v4807, 2147483648
        %v4813 = vsel %vm4811, %v4799, %v4812
        %vm4814 = vcmp.eq.s32.totalorder %v4809, 2
        %v4815 = vxor.u32 %v4799, 2147483648
        %v4816 = vsel %vm4814, %v4815, %v4807
        %v4817 = vsel %vm4810, %v4813, %v4816
        %v4818 = vsel %vm4808, nan, %v4817
        %v4819 = vand.u32 2147483647, %v624
        %vm4820 = vcmp.le.f32.partialorder %v4819, 0.7853982
        %vm4821 = vcmp.lt.s32.totalorder %v624, 0
        %v4822 = vand.u32 %v624, 2139095040
        %v4823 = vshrl.u32 %v4822, 23
        %v4824 = vsub.s32 %v4823, 127
        %v4825 = vand.u32 2147483647, %v624
        %v4826 = vand.u32 %v4825, 8388607
        %v4827 = vor.u32 %v4826, 8388608
        %v4828 = vsub.s32 0, %v4827
        %v4829 = vadd.s32 %v4824, 1
        %vm4830 = vcmp.gt.s32.totalorder %v4829, 0
        %v4831 = vsel %vm4830, %v4829, 0
        %v4832 = vshrl.u32 %v4831, 5
        %v4833 = vand.u32 %v4831, 31
        %v4834 = vsub.s32 32, %v4833
        %v4835 = vshrl.u32 683565275, %v4834
        %v4836 = vshll.u32 683565275, %v4833
        %v4837 = vshrl.u32 2475754826, %v4834
        %v4838 = vor.u32 %v4836, %v4837
        %v4839 = vshll.u32 2475754826, %v4833
        %v4840 = vshrl.u32 2131351028, %v4834
        %v4841 = vor.u32 %v4839, %v4840
        %v4842 = vshll.u32 2131351028, %v4833
        %v4843 = vshrl.u32 2102212464, %v4834
        %v4844 = vor.u32 %v4842, %v4843
        %v4845 = vshll.u32 2102212464, %v4833
        %v4846 = vshrl.u32 920167782, %v4834
        %v4847 = vor.u32 %v4845, %v4846
        %v4848 = vshll.u32 920167782, %v4833
        %v4849 = vshrl.u32 1326507024, %v4834
        %v4850 = vor.u32 %v4848, %v4849
        %vm4851 = vcmp.lt.s32.totalorder %v4832, 1
        %vm4852 = vcmp.lt.s32.totalorder %v4832, 2
        %vm4853 = vcmp.lt.s32.totalorder %v4832, 3
        %vm4854 = vcmp.lt.s32.totalorder %v4832, 4
        %v4855 = vsel %vm4851, %v4835, %v4838
        %v4856 = vsel %vm4854, %v4844, 2102212464
        %v4857 = vsel %vm4853, %v4841, %v4856
        %v4858 = vsel %vm4852, %v4855, %v4857
        %v4859 = vsel %vm4851, %v4838, %v4841
        %v4860 = vsel %vm4854, %v4847, 920167782
        %v4861 = vsel %vm4853, %v4844, %v4860
        %v4862 = vsel %vm4852, %v4859, %v4861
        %v4863 = vsel %vm4851, %v4841, %v4844
        %v4864 = vsel %vm4854, %v4850, 1326507024
        %v4865 = vsel %vm4853, %v4847, %v4864
        %v4866 = vsel %vm4852, %v4863, %v4865
        %v4867 = vshll.u32 %v4827, 8
        %v4868 = vand.u32 %v4867, 65535
        %v4869 = vshrl.u32 %v4867, 16
        %v4870 = vand.u32 %v4866, 65535
        %v4871 = vshrl.u32 %v4866, 16
        %v4872 = vmul.u32 %v4868, %v4870
        %v4873 = vmul.u32 %v4868, %v4871
        %v4874 = vmul.u32 %v4869, %v4870
        %v4875 = vmul.u32 %v4869, %v4871
        %v4876 = vshll.u32 %v4873, 16
        %v4877 = vshrl.u32 %v4873, 16
        %v4878 = vshll.u32 %v4874, 16
        %v4879 = vshrl.u32 %v4874, 16
        %vm4880 = vc.u32 %v4872, %v4876
        %v4881 = vsel %vm4880, 1, 0
        %v4882 = vadd.s32 %v4872, %v4876
        %v4883 = vadd.s32 %v4875, %v4881
        %vm4884 = vc.u32 %v4882, %v4878
        %v4885 = vsel %vm4884, 1, 0
        %v4886 = vadd.s32 %v4882, %v4878
        %v4887 = vadd.s32 %v4883, %v4885
        %v4888 = vadd.s32 %v4887, %v4877
        %v4889 = vadd.s32 %v4888, %v4879
        %v4890 = vand.u32 %v4867, 65535
        %v4891 = vshrl.u32 %v4867, 16
        %v4892 = vand.u32 %v4862, 65535
        %v4893 = vshrl.u32 %v4862, 16
        %v4894 = vmul.u32 %v4890, %v4892
        %v4895 = vmul.u32 %v4890, %v4893
        %v4896 = vmul.u32 %v4891, %v4892
        %v4897 = vmul.u32 %v4891, %v4893
        %v4898 = vshll.u32 %v4895, 16
        %v4899 = vshrl.u32 %v4895, 16
        %v4900 = vshll.u32 %v4896, 16
        %v4901 = vshrl.u32 %v4896, 16
        %vm4902 = vc.u32 %v4894, %v4898
        %v4903 = vsel %vm4902, 1, 0
        %v4904 = vadd.s32 %v4894, %v4898
        %v4905 = vadd.s32 %v4897, %v4903
        %vm4906 = vc.u32 %v4904, %v4900
        %v4907 = vsel %vm4906, 1, 0
        %v4908 = vadd.s32 %v4904, %v4900
        %v4909 = vadd.s32 %v4905, %v4907
        %v4910 = vadd.s32 %v4909, %v4899
        %v4911 = vadd.s32 %v4910, %v4901
        %v4912 = vmul.u32 %v4867, %v4858
        %v4913 = vadd.s32 %v4889, %v4908
        %vm4914 = vc.u32 %v4889, %v4908
        %v4915 = vadd.s32 %v4911, 1
        %v4916 = vsel %vm4914, %v4915, %v4911
        %v4917 = vadd.s32 %v4912, %v4916
        %v4918 = vadd.s32 %v4917, 536870912
        %v4919 = vshrl.u32 %v4918, 30
        %v4920 = vshll.u32 %v4919, 30
        %v4921 = vsub.s32 %v4917, %v4920
        %vm4922 = vcmp.lt.s32.totalorder %v4921, 0
        %v4923 = vsub.s32 0, %v4921
        %v4924 = vsel %vm4922, %v4923, %v4921
        %v4925 = vclz %v4924
        %v4926 = vsub.s32 %v4925, 2
        %vm4927 = vcmp.gt.s32.totalorder 0, %v4926
        %v4928 = vsel %vm4927, 0, %v4926
        %v4929 = vsub.s32 32, %v4928
        %v4930 = vshll.u32 %v4921, %v4928
        %v4931 = vshrl.u32 %v4913, %v4929
        %v4932 = vor.u32 %v4930, %v4931
        %v4933 = vsub.s32 4294967266, %v4928
        %v4934 = vadd.s32 %v4933, 127
        %v4935 = vshll.u32 %v4934, 23
        %v4936 = vor.u32 4788187, %v4935
        %v4937 = vand.u32 2147483647, %v4936
        %v4939 = vcvt.s32.f32 %v4932
        %v4940 = vmul.f32 %v4939, %v4937
        %v4941 = vxor.u32 %v4940, 2147483648
        %v4942 = vsel %vm4821, %v4941, %v4940
        %v4943 = vsub.s32 4, %v4919
        %v4944 = vsel %vm4821, %v4943, %v4919
        %v4945 = vsel %vm4820, %v624, %v4942
        %v4946 = vsel %vm4820, 0, %v4944
        %v4947 = vmul.f32 %v4945, %v4945
        %v4948 = vmul.f32 %v4947, -0.001358992
        %v4949 = vadd.f32 %v4948, 0.041655596
        %v4950 = vmul.f32 %v4947, %v4949
        %v4951 = vadd.f32 %v4950, -0.4999988
        %v4952 = vmul.f32 %v4947, %v4951
        %v4953 = vadd.f32 1.0, %v4952
        %v4954 = vmul.f32 %v4945, %v4945
        %v4955 = vmul.f32 %v4954, -0.00019511016
        %v4956 = vadd.f32 %v4955, 0.008332121
        %v4957 = vmul.f32 %v4954, %v4956
        %v4958 = vadd.f32 %v4957, -0.16666654
        %v4959 = vmul.f32 %v4954, %v4958
        %v4960 = vadd.f32 %v4959, 1.0
        %v4961 = vmul.f32 %v4960, %v4945
        %vm4962 = vweird.f32 %v624
        %v4963 = vand.u32 %v4946, 3
        %vm4964 = vcmp.lt.s32.totalorder %v4963, 2
        %vm4965 = vcmp.eq.s32.totalorder %v4963, 0
        %v4966 = vxor.u32 %v4961, 2147483648
        %v4967 = vsel %vm4965, %v4953, %v4966
        %vm4968 = vcmp.eq.s32.totalorder %v4963, 2
        %v4969 = vxor.u32 %v4953, 2147483648
        %v4970 = vsel %vm4968, %v4969, %v4961
        %v4971 = vsel %vm4964, %v4967, %v4970
        %v4972 = vsel %vm4962, nan, %v4971
        %v4973 = vand.u32 2147483647, %v625
        %vm4974 = vcmp.le.f32.partialorder %v4973, 0.7853982
        %vm4975 = vcmp.lt.s32.totalorder %v625, 0
        %v4976 = vand.u32 %v625, 2139095040
        %v4977 = vshrl.u32 %v4976, 23
        %v4978 = vsub.s32 %v4977, 127
        %v4979 = vand.u32 2147483647, %v625
        %v4980 = vand.u32 %v4979, 8388607
        %v4981 = vor.u32 %v4980, 8388608
        %v4982 = vsub.s32 0, %v4981
        %v4983 = vadd.s32 %v4978, 1
        %vm4984 = vcmp.gt.s32.totalorder %v4983, 0
        %v4985 = vsel %vm4984, %v4983, 0
        %v4986 = vshrl.u32 %v4985, 5
        %v4987 = vand.u32 %v4985, 31
        %v4988 = vsub.s32 32, %v4987
        %v4989 = vshrl.u32 683565275, %v4988
        %v4990 = vshll.u32 683565275, %v4987
        %v4991 = vshrl.u32 2475754826, %v4988
        %v4992 = vor.u32 %v4990, %v4991
        %v4993 = vshll.u32 2475754826, %v4987
        %v4994 = vshrl.u32 2131351028, %v4988
        %v4995 = vor.u32 %v4993, %v4994
        %v4996 = vshll.u32 2131351028, %v4987
        %v4997 = vshrl.u32 2102212464, %v4988
        %v4998 = vor.u32 %v4996, %v4997
        %v4999 = vshll.u32 2102212464, %v4987
        %v5000 = vshrl.u32 920167782, %v4988
        %v5001 = vor.u32 %v4999, %v5000
        %v5002 = vshll.u32 920167782, %v4987
        %v5003 = vshrl.u32 1326507024, %v4988
        %v5004 = vor.u32 %v5002, %v5003
        %vm5005 = vcmp.lt.s32.totalorder %v4986, 1
        %vm5006 = vcmp.lt.s32.totalorder %v4986, 2
        %vm5007 = vcmp.lt.s32.totalorder %v4986, 3
        %vm5008 = vcmp.lt.s32.totalorder %v4986, 4
        %v5009 = vsel %vm5005, %v4989, %v4992
        %v5010 = vsel %vm5008, %v4998, 2102212464
        %v5011 = vsel %vm5007, %v4995, %v5010
        %v5012 = vsel %vm5006, %v5009, %v5011
        %v5013 = vsel %vm5005, %v4992, %v4995
        %v5014 = vsel %vm5008, %v5001, 920167782
        %v5015 = vsel %vm5007, %v4998, %v5014
        %v5016 = vsel %vm5006, %v5013, %v5015
        %v5017 = vsel %vm5005, %v4995, %v4998
        %v5018 = vsel %vm5008, %v5004, 1326507024
        %v5019 = vsel %vm5007, %v5001, %v5018
        %v5020 = vsel %vm5006, %v5017, %v5019
        %v5021 = vshll.u32 %v4981, 8
        %v5022 = vand.u32 %v5021, 65535
        %v5023 = vshrl.u32 %v5021, 16
        %v5024 = vand.u32 %v5020, 65535
        %v5025 = vshrl.u32 %v5020, 16
        %v5026 = vmul.u32 %v5022, %v5024
        %v5027 = vmul.u32 %v5022, %v5025
        %v5028 = vmul.u32 %v5023, %v5024
        %v5029 = vmul.u32 %v5023, %v5025
        %v5030 = vshll.u32 %v5027, 16
        %v5031 = vshrl.u32 %v5027, 16
        %v5032 = vshll.u32 %v5028, 16
        %v5033 = vshrl.u32 %v5028, 16
        %vm5034 = vc.u32 %v5026, %v5030
        %v5035 = vsel %vm5034, 1, 0
        %v5036 = vadd.s32 %v5026, %v5030
        %v5037 = vadd.s32 %v5029, %v5035
        %vm5038 = vc.u32 %v5036, %v5032
        %v5039 = vsel %vm5038, 1, 0
        %v5040 = vadd.s32 %v5036, %v5032
        %v5041 = vadd.s32 %v5037, %v5039
        %v5042 = vadd.s32 %v5041, %v5031
        %v5043 = vadd.s32 %v5042, %v5033
        %v5044 = vand.u32 %v5021, 65535
        %v5045 = vshrl.u32 %v5021, 16
        %v5046 = vand.u32 %v5016, 65535
        %v5047 = vshrl.u32 %v5016, 16
        %v5048 = vmul.u32 %v5044, %v5046
        %v5049 = vmul.u32 %v5044, %v5047
        %v5050 = vmul.u32 %v5045, %v5046
        %v5051 = vmul.u32 %v5045, %v5047
        %v5052 = vshll.u32 %v5049, 16
        %v5053 = vshrl.u32 %v5049, 16
        %v5054 = vshll.u32 %v5050, 16
        %v5055 = vshrl.u32 %v5050, 16
        %vm5056 = vc.u32 %v5048, %v5052
        %v5057 = vsel %vm5056, 1, 0
        %v5058 = vadd.s32 %v5048, %v5052
        %v5059 = vadd.s32 %v5051, %v5057
        %vm5060 = vc.u32 %v5058, %v5054
        %v5061 = vsel %vm5060, 1, 0
        %v5062 = vadd.s32 %v5058, %v5054
        %v5063 = vadd.s32 %v5059, %v5061
        %v5064 = vadd.s32 %v5063, %v5053
        %v5065 = vadd.s32 %v5064, %v5055
        %v5066 = vmul.u32 %v5021, %v5012
        %v5067 = vadd.s32 %v5043, %v5062
        %vm5068 = vc.u32 %v5043, %v5062
        %v5069 = vadd.s32 %v5065, 1
        %v5070 = vsel %vm5068, %v5069, %v5065
        %v5071 = vadd.s32 %v5066, %v5070
        %v5072 = vadd.s32 %v5071, 536870912
        %v5073 = vshrl.u32 %v5072, 30
        %v5074 = vshll.u32 %v5073, 30
        %v5075 = vsub.s32 %v5071, %v5074
        %vm5076 = vcmp.lt.s32.totalorder %v5075, 0
        %v5077 = vsub.s32 0, %v5075
        %v5078 = vsel %vm5076, %v5077, %v5075
        %v5079 = vclz %v5078
        %v5080 = vsub.s32 %v5079, 2
        %vm5081 = vcmp.gt.s32.totalorder 0, %v5080
        %v5082 = vsel %vm5081, 0, %v5080
        %v5083 = vsub.s32 32, %v5082
        %v5084 = vshll.u32 %v5075, %v5082
        %v5085 = vshrl.u32 %v5067, %v5083
        %v5086 = vor.u32 %v5084, %v5085
        %v5087 = vsub.s32 4294967266, %v5082
        %v5088 = vadd.s32 %v5087, 127
        %v5089 = vshll.u32 %v5088, 23
        %v5090 = vor.u32 4788187, %v5089
        %v5091 = vand.u32 2147483647, %v5090
        %v5093 = vcvt.s32.f32 %v5086
        %v5094 = vmul.f32 %v5093, %v5091
        %v5095 = vxor.u32 %v5094, 2147483648
        %v5096 = vsel %vm4975, %v5095, %v5094
        %v5097 = vsub.s32 4, %v5073
        %v5098 = vsel %vm4975, %v5097, %v5073
        %v5099 = vsel %vm4974, %v625, %v5096
        %v5100 = vsel %vm4974, 0, %v5098
        %v5101 = vmul.f32 %v5099, %v5099
        %v5102 = vmul.f32 %v5101, -0.001358992
        %v5103 = vadd.f32 %v5102, 0.041655596
        %v5104 = vmul.f32 %v5101, %v5103
        %v5105 = vadd.f32 %v5104, -0.4999988
        %v5106 = vmul.f32 %v5101, %v5105
        %v5107 = vadd.f32 1.0, %v5106
        %v5108 = vmul.f32 %v5099, %v5099
        %v5109 = vmul.f32 %v5108, -0.00019511016
        %v5110 = vadd.f32 %v5109, 0.008332121
        %v5111 = vmul.f32 %v5108, %v5110
        %v5112 = vadd.f32 %v5111, -0.16666654
        %v5113 = vmul.f32 %v5108, %v5112
        %v5114 = vadd.f32 %v5113, 1.0
        %v5115 = vmul.f32 %v5114, %v5099
        %vm5116 = vweird.f32 %v625
        %v5117 = vand.u32 %v5100, 3
        %vm5118 = vcmp.lt.s32.totalorder %v5117, 2
        %vm5119 = vcmp.eq.s32.totalorder %v5117, 0
        %v5120 = vxor.u32 %v5115, 2147483648
        %v5121 = vsel %vm5119, %v5107, %v5120
        %vm5122 = vcmp.eq.s32.totalorder %v5117, 2
        %v5123 = vxor.u32 %v5107, 2147483648
        %v5124 = vsel %vm5122, %v5123, %v5115
        %v5125 = vsel %vm5118, %v5121, %v5124
        %v5126 = vsel %vm5116, nan, %v5125
        %v5127 = vand.u32 2147483647, %v626
        %vm5128 = vcmp.le.f32.partialorder %v5127, 0.7853982
        %vm5129 = vcmp.lt.s32.totalorder %v626, 0
        %v5130 = vand.u32 %v626, 2139095040
        %v5131 = vshrl.u32 %v5130, 23
        %v5132 = vsub.s32 %v5131, 127
        %v5133 = vand.u32 2147483647, %v626
        %v5134 = vand.u32 %v5133, 8388607
        %v5135 = vor.u32 %v5134, 8388608
        %v5136 = vsub.s32 0, %v5135
        %v5137 = vadd.s32 %v5132, 1
        %vm5138 = vcmp.gt.s32.totalorder %v5137, 0
        %v5139 = vsel %vm5138, %v5137, 0
        %v5140 = vshrl.u32 %v5139, 5
        %v5141 = vand.u32 %v5139, 31
        %v5142 = vsub.s32 32, %v5141
        %v5143 = vshrl.u32 683565275, %v5142
        %v5144 = vshll.u32 683565275, %v5141
        %v5145 = vshrl.u32 2475754826, %v5142
        %v5146 = vor.u32 %v5144, %v5145
        %v5147 = vshll.u32 2475754826, %v5141
        %v5148 = vshrl.u32 2131351028, %v5142
        %v5149 = vor.u32 %v5147, %v5148
        %v5150 = vshll.u32 2131351028, %v5141
        %v5151 = vshrl.u32 2102212464, %v5142
        %v5152 = vor.u32 %v5150, %v5151
        %v5153 = vshll.u32 2102212464, %v5141
        %v5154 = vshrl.u32 920167782, %v5142
        %v5155 = vor.u32 %v5153, %v5154
        %v5156 = vshll.u32 920167782, %v5141
        %v5157 = vshrl.u32 1326507024, %v5142
        %v5158 = vor.u32 %v5156, %v5157
        %vm5159 = vcmp.lt.s32.totalorder %v5140, 1
        %vm5160 = vcmp.lt.s32.totalorder %v5140, 2
        %vm5161 = vcmp.lt.s32.totalorder %v5140, 3
        %vm5162 = vcmp.lt.s32.totalorder %v5140, 4
        %v5163 = vsel %vm5159, %v5143, %v5146
        %v5164 = vsel %vm5162, %v5152, 2102212464
        %v5165 = vsel %vm5161, %v5149, %v5164
        %v5166 = vsel %vm5160, %v5163, %v5165
        %v5167 = vsel %vm5159, %v5146, %v5149
        %v5168 = vsel %vm5162, %v5155, 920167782
        %v5169 = vsel %vm5161, %v5152, %v5168
        %v5170 = vsel %vm5160, %v5167, %v5169
        %v5171 = vsel %vm5159, %v5149, %v5152
        %v5172 = vsel %vm5162, %v5158, 1326507024
        %v5173 = vsel %vm5161, %v5155, %v5172
        %v5174 = vsel %vm5160, %v5171, %v5173
        %v5175 = vshll.u32 %v5135, 8
        %v5176 = vand.u32 %v5175, 65535
        %v5177 = vshrl.u32 %v5175, 16
        %v5178 = vand.u32 %v5174, 65535
        %v5179 = vshrl.u32 %v5174, 16
        %v5180 = vmul.u32 %v5176, %v5178
        %v5181 = vmul.u32 %v5176, %v5179
        %v5182 = vmul.u32 %v5177, %v5178
        %v5183 = vmul.u32 %v5177, %v5179
        %v5184 = vshll.u32 %v5181, 16
        %v5185 = vshrl.u32 %v5181, 16
        %v5186 = vshll.u32 %v5182, 16
        %v5187 = vshrl.u32 %v5182, 16
        %vm5188 = vc.u32 %v5180, %v5184
        %v5189 = vsel %vm5188, 1, 0
        %v5190 = vadd.s32 %v5180, %v5184
        %v5191 = vadd.s32 %v5183, %v5189
        %vm5192 = vc.u32 %v5190, %v5186
        %v5193 = vsel %vm5192, 1, 0
        %v5194 = vadd.s32 %v5190, %v5186
        %v5195 = vadd.s32 %v5191, %v5193
        %v5196 = vadd.s32 %v5195, %v5185
        %v5197 = vadd.s32 %v5196, %v5187
        %v5198 = vand.u32 %v5175, 65535
        %v5199 = vshrl.u32 %v5175, 16
        %v5200 = vand.u32 %v5170, 65535
        %v5201 = vshrl.u32 %v5170, 16
        %v5202 = vmul.u32 %v5198, %v5200
        %v5203 = vmul.u32 %v5198, %v5201
        %v5204 = vmul.u32 %v5199, %v5200
        %v5205 = vmul.u32 %v5199, %v5201
        %v5206 = vshll.u32 %v5203, 16
        %v5207 = vshrl.u32 %v5203, 16
        %v5208 = vshll.u32 %v5204, 16
        %v5209 = vshrl.u32 %v5204, 16
        %vm5210 = vc.u32 %v5202, %v5206
        %v5211 = vsel %vm5210, 1, 0
        %v5212 = vadd.s32 %v5202, %v5206
        %v5213 = vadd.s32 %v5205, %v5211
        %vm5214 = vc.u32 %v5212, %v5208
        %v5215 = vsel %vm5214, 1, 0
        %v5216 = vadd.s32 %v5212, %v5208
        %v5217 = vadd.s32 %v5213, %v5215
        %v5218 = vadd.s32 %v5217, %v5207
        %v5219 = vadd.s32 %v5218, %v5209
        %v5220 = vmul.u32 %v5175, %v5166
        %v5221 = vadd.s32 %v5197, %v5216
        %vm5222 = vc.u32 %v5197, %v5216
        %v5223 = vadd.s32 %v5219, 1
        %v5224 = vsel %vm5222, %v5223, %v5219
        %v5225 = vadd.s32 %v5220, %v5224
        %v5226 = vadd.s32 %v5225, 536870912
        %v5227 = vshrl.u32 %v5226, 30
        %v5228 = vshll.u32 %v5227, 30
        %v5229 = vsub.s32 %v5225, %v5228
        %vm5230 = vcmp.lt.s32.totalorder %v5229, 0
        %v5231 = vsub.s32 0, %v5229
        %v5232 = vsel %vm5230, %v5231, %v5229
        %v5233 = vclz %v5232
        %v5234 = vsub.s32 %v5233, 2
        %vm5235 = vcmp.gt.s32.totalorder 0, %v5234
        %v5236 = vsel %vm5235, 0, %v5234
        %v5237 = vsub.s32 32, %v5236
        %v5238 = vshll.u32 %v5229, %v5236
        %v5239 = vshrl.u32 %v5221, %v5237
        %v5240 = vor.u32 %v5238, %v5239
        %v5241 = vsub.s32 4294967266, %v5236
        %v5242 = vadd.s32 %v5241, 127
        %v5243 = vshll.u32 %v5242, 23
        %v5244 = vor.u32 4788187, %v5243
        %v5245 = vand.u32 2147483647, %v5244
        %v5247 = vcvt.s32.f32 %v5240
        %v5248 = vmul.f32 %v5247, %v5245
        %v5249 = vxor.u32 %v5248, 2147483648
        %v5250 = vsel %vm5129, %v5249, %v5248
        %v5251 = vsub.s32 4, %v5227
        %v5252 = vsel %vm5129, %v5251, %v5227
        %v5253 = vsel %vm5128, %v626, %v5250
        %v5254 = vsel %vm5128, 0, %v5252
        %v5255 = vmul.f32 %v5253, %v5253
        %v5256 = vmul.f32 %v5255, -0.001358992
        %v5257 = vadd.f32 %v5256, 0.041655596
        %v5258 = vmul.f32 %v5255, %v5257
        %v5259 = vadd.f32 %v5258, -0.4999988
        %v5260 = vmul.f32 %v5255, %v5259
        %v5261 = vadd.f32 1.0, %v5260
        %v5262 = vmul.f32 %v5253, %v5253
        %v5263 = vmul.f32 %v5262, -0.00019511016
        %v5264 = vadd.f32 %v5263, 0.008332121
        %v5265 = vmul.f32 %v5262, %v5264
        %v5266 = vadd.f32 %v5265, -0.16666654
        %v5267 = vmul.f32 %v5262, %v5266
        %v5268 = vadd.f32 %v5267, 1.0
        %v5269 = vmul.f32 %v5268, %v5253
        %vm5270 = vweird.f32 %v626
        %v5271 = vand.u32 %v5254, 3
        %vm5272 = vcmp.lt.s32.totalorder %v5271, 2
        %vm5273 = vcmp.eq.s32.totalorder %v5271, 0
        %v5274 = vxor.u32 %v5269, 2147483648
        %v5275 = vsel %vm5273, %v5261, %v5274
        %vm5276 = vcmp.eq.s32.totalorder %v5271, 2
        %v5277 = vxor.u32 %v5261, 2147483648
        %v5278 = vsel %vm5276, %v5277, %v5269
        %v5279 = vsel %vm5272, %v5275, %v5278
        %v5280 = vsel %vm5270, nan, %v5279
        %v5281 = vand.u32 2147483647, %v627
        %vm5282 = vcmp.le.f32.partialorder %v5281, 0.7853982
        %vm5283 = vcmp.lt.s32.totalorder %v627, 0
        %v5284 = vand.u32 %v627, 2139095040
        %v5285 = vshrl.u32 %v5284, 23
        %v5286 = vsub.s32 %v5285, 127
        %v5287 = vand.u32 2147483647, %v627
        %v5288 = vand.u32 %v5287, 8388607
        %v5289 = vor.u32 %v5288, 8388608
        %v5290 = vsub.s32 0, %v5289
        %v5291 = vadd.s32 %v5286, 1
        %vm5292 = vcmp.gt.s32.totalorder %v5291, 0
        %v5293 = vsel %vm5292, %v5291, 0
        %v5294 = vshrl.u32 %v5293, 5
        %v5295 = vand.u32 %v5293, 31
        %v5296 = vsub.s32 32, %v5295
        %v5297 = vshrl.u32 683565275, %v5296
        %v5298 = vshll.u32 683565275, %v5295
        %v5299 = vshrl.u32 2475754826, %v5296
        %v5300 = vor.u32 %v5298, %v5299
        %v5301 = vshll.u32 2475754826, %v5295
        %v5302 = vshrl.u32 2131351028, %v5296
        %v5303 = vor.u32 %v5301, %v5302
        %v5304 = vshll.u32 2131351028, %v5295
        %v5305 = vshrl.u32 2102212464, %v5296
        %v5306 = vor.u32 %v5304, %v5305
        %v5307 = vshll.u32 2102212464, %v5295
        %v5308 = vshrl.u32 920167782, %v5296
        %v5309 = vor.u32 %v5307, %v5308
        %v5310 = vshll.u32 920167782, %v5295
        %v5311 = vshrl.u32 1326507024, %v5296
        %v5312 = vor.u32 %v5310, %v5311
        %vm5313 = vcmp.lt.s32.totalorder %v5294, 1
        %vm5314 = vcmp.lt.s32.totalorder %v5294, 2
        %vm5315 = vcmp.lt.s32.totalorder %v5294, 3
        %vm5316 = vcmp.lt.s32.totalorder %v5294, 4
        %v5317 = vsel %vm5313, %v5297, %v5300
        %v5318 = vsel %vm5316, %v5306, 2102212464
        %v5319 = vsel %vm5315, %v5303, %v5318
        %v5320 = vsel %vm5314, %v5317, %v5319
        %v5321 = vsel %vm5313, %v5300, %v5303
        %v5322 = vsel %vm5316, %v5309, 920167782
        %v5323 = vsel %vm5315, %v5306, %v5322
        %v5324 = vsel %vm5314, %v5321, %v5323
        %v5325 = vsel %vm5313, %v5303, %v5306
        %v5326 = vsel %vm5316, %v5312, 1326507024
        %v5327 = vsel %vm5315, %v5309, %v5326
        %v5328 = vsel %vm5314, %v5325, %v5327
        %v5329 = vshll.u32 %v5289, 8
        %v5330 = vand.u32 %v5329, 65535
        %v5331 = vshrl.u32 %v5329, 16
        %v5332 = vand.u32 %v5328, 65535
        %v5333 = vshrl.u32 %v5328, 16
        %v5334 = vmul.u32 %v5330, %v5332
        %v5335 = vmul.u32 %v5330, %v5333
        %v5336 = vmul.u32 %v5331, %v5332
        %v5337 = vmul.u32 %v5331, %v5333
        %v5338 = vshll.u32 %v5335, 16
        %v5339 = vshrl.u32 %v5335, 16
        %v5340 = vshll.u32 %v5336, 16
        %v5341 = vshrl.u32 %v5336, 16
        %vm5342 = vc.u32 %v5334, %v5338
        %v5343 = vsel %vm5342, 1, 0
        %v5344 = vadd.s32 %v5334, %v5338
        %v5345 = vadd.s32 %v5337, %v5343
        %vm5346 = vc.u32 %v5344, %v5340
        %v5347 = vsel %vm5346, 1, 0
        %v5348 = vadd.s32 %v5344, %v5340
        %v5349 = vadd.s32 %v5345, %v5347
        %v5350 = vadd.s32 %v5349, %v5339
        %v5351 = vadd.s32 %v5350, %v5341
        %v5352 = vand.u32 %v5329, 65535
        %v5353 = vshrl.u32 %v5329, 16
        %v5354 = vand.u32 %v5324, 65535
        %v5355 = vshrl.u32 %v5324, 16
        %v5356 = vmul.u32 %v5352, %v5354
        %v5357 = vmul.u32 %v5352, %v5355
        %v5358 = vmul.u32 %v5353, %v5354
        %v5359 = vmul.u32 %v5353, %v5355
        %v5360 = vshll.u32 %v5357, 16
        %v5361 = vshrl.u32 %v5357, 16
        %v5362 = vshll.u32 %v5358, 16
        %v5363 = vshrl.u32 %v5358, 16
        %vm5364 = vc.u32 %v5356, %v5360
        %v5365 = vsel %vm5364, 1, 0
        %v5366 = vadd.s32 %v5356, %v5360
        %v5367 = vadd.s32 %v5359, %v5365
        %vm5368 = vc.u32 %v5366, %v5362
        %v5369 = vsel %vm5368, 1, 0
        %v5370 = vadd.s32 %v5366, %v5362
        %v5371 = vadd.s32 %v5367, %v5369
        %v5372 = vadd.s32 %v5371, %v5361
        %v5373 = vadd.s32 %v5372, %v5363
        %v5374 = vmul.u32 %v5329, %v5320
        %v5375 = vadd.s32 %v5351, %v5370
        %vm5376 = vc.u32 %v5351, %v5370
        %v5377 = vadd.s32 %v5373, 1
        %v5378 = vsel %vm5376, %v5377, %v5373
        %v5379 = vadd.s32 %v5374, %v5378
        %v5380 = vadd.s32 %v5379, 536870912
        %v5381 = vshrl.u32 %v5380, 30
        %v5382 = vshll.u32 %v5381, 30
        %v5383 = vsub.s32 %v5379, %v5382
        %vm5384 = vcmp.lt.s32.totalorder %v5383, 0
        %v5385 = vsub.s32 0, %v5383
        %v5386 = vsel %vm5384, %v5385, %v5383
        %v5387 = vclz %v5386
        %v5388 = vsub.s32 %v5387, 2
        %vm5389 = vcmp.gt.s32.totalorder 0, %v5388
        %v5390 = vsel %vm5389, 0, %v5388
        %v5391 = vsub.s32 32, %v5390
        %v5392 = vshll.u32 %v5383, %v5390
        %v5393 = vshrl.u32 %v5375, %v5391
        %v5394 = vor.u32 %v5392, %v5393
        %v5395 = vsub.s32 4294967266, %v5390
        %v5396 = vadd.s32 %v5395, 127
        %v5397 = vshll.u32 %v5396, 23
        %v5398 = vor.u32 4788187, %v5397
        %v5399 = vand.u32 2147483647, %v5398
        %v5401 = vcvt.s32.f32 %v5394
        %v5402 = vmul.f32 %v5401, %v5399
        %v5403 = vxor.u32 %v5402, 2147483648
        %v5404 = vsel %vm5283, %v5403, %v5402
        %v5405 = vsub.s32 4, %v5381
        %v5406 = vsel %vm5283, %v5405, %v5381
        %v5407 = vsel %vm5282, %v627, %v5404
        %v5408 = vsel %vm5282, 0, %v5406
        %v5409 = vmul.f32 %v5407, %v5407
        %v5410 = vmul.f32 %v5409, -0.001358992
        %v5411 = vadd.f32 %v5410, 0.041655596
        %v5412 = vmul.f32 %v5409, %v5411
        %v5413 = vadd.f32 %v5412, -0.4999988
        %v5414 = vmul.f32 %v5409, %v5413
        %v5415 = vadd.f32 1.0, %v5414
        %v5416 = vmul.f32 %v5407, %v5407
        %v5417 = vmul.f32 %v5416, -0.00019511016
        %v5418 = vadd.f32 %v5417, 0.008332121
        %v5419 = vmul.f32 %v5416, %v5418
        %v5420 = vadd.f32 %v5419, -0.16666654
        %v5421 = vmul.f32 %v5416, %v5420
        %v5422 = vadd.f32 %v5421, 1.0
        %v5423 = vmul.f32 %v5422, %v5407
        %vm5424 = vweird.f32 %v627
        %v5425 = vand.u32 %v5408, 3
        %vm5426 = vcmp.lt.s32.totalorder %v5425, 2
        %vm5427 = vcmp.eq.s32.totalorder %v5425, 0
        %v5428 = vxor.u32 %v5423, 2147483648
        %v5429 = vsel %vm5427, %v5415, %v5428
        %vm5430 = vcmp.eq.s32.totalorder %v5425, 2
        %v5431 = vxor.u32 %v5415, 2147483648
        %v5432 = vsel %vm5430, %v5431, %v5423
        %v5433 = vsel %vm5426, %v5429, %v5432
        %v5434 = vsel %vm5424, nan, %v5433
        %v5435 = vand.u32 2147483647, %v628
        %vm5436 = vcmp.le.f32.partialorder %v5435, 0.7853982
        %vm5437 = vcmp.lt.s32.totalorder %v628, 0
        %v5438 = vand.u32 %v628, 2139095040
        %v5439 = vshrl.u32 %v5438, 23
        %v5440 = vsub.s32 %v5439, 127
        %v5441 = vand.u32 2147483647, %v628
        %v5442 = vand.u32 %v5441, 8388607
        %v5443 = vor.u32 %v5442, 8388608
        %v5444 = vsub.s32 0, %v5443
        %v5445 = vadd.s32 %v5440, 1
        %vm5446 = vcmp.gt.s32.totalorder %v5445, 0
        %v5447 = vsel %vm5446, %v5445, 0
        %v5448 = vshrl.u32 %v5447, 5
        %v5449 = vand.u32 %v5447, 31
        %v5450 = vsub.s32 32, %v5449
        %v5451 = vshrl.u32 683565275, %v5450
        %v5452 = vshll.u32 683565275, %v5449
        %v5453 = vshrl.u32 2475754826, %v5450
        %v5454 = vor.u32 %v5452, %v5453
        %v5455 = vshll.u32 2475754826, %v5449
        %v5456 = vshrl.u32 2131351028, %v5450
        %v5457 = vor.u32 %v5455, %v5456
        %v5458 = vshll.u32 2131351028, %v5449
        %v5459 = vshrl.u32 2102212464, %v5450
        %v5460 = vor.u32 %v5458, %v5459
        %v5461 = vshll.u32 2102212464, %v5449
        %v5462 = vshrl.u32 920167782, %v5450
        %v5463 = vor.u32 %v5461, %v5462
        %v5464 = vshll.u32 920167782, %v5449
        %v5465 = vshrl.u32 1326507024, %v5450
        %v5466 = vor.u32 %v5464, %v5465
        %vm5467 = vcmp.lt.s32.totalorder %v5448, 1
        %vm5468 = vcmp.lt.s32.totalorder %v5448, 2
        %vm5469 = vcmp.lt.s32.totalorder %v5448, 3
        %vm5470 = vcmp.lt.s32.totalorder %v5448, 4
        %v5471 = vsel %vm5467, %v5451, %v5454
        %v5472 = vsel %vm5470, %v5460, 2102212464
        %v5473 = vsel %vm5469, %v5457, %v5472
        %v5474 = vsel %vm5468, %v5471, %v5473
        %v5475 = vsel %vm5467, %v5454, %v5457
        %v5476 = vsel %vm5470, %v5463, 920167782
        %v5477 = vsel %vm5469, %v5460, %v5476
        %v5478 = vsel %vm5468, %v5475, %v5477
        %v5479 = vsel %vm5467, %v5457, %v5460
        %v5480 = vsel %vm5470, %v5466, 1326507024
        %v5481 = vsel %vm5469, %v5463, %v5480
        %v5482 = vsel %vm5468, %v5479, %v5481
        %v5483 = vshll.u32 %v5443, 8
        %v5484 = vand.u32 %v5483, 65535
        %v5485 = vshrl.u32 %v5483, 16
        %v5486 = vand.u32 %v5482, 65535
        %v5487 = vshrl.u32 %v5482, 16
        %v5488 = vmul.u32 %v5484, %v5486
        %v5489 = vmul.u32 %v5484, %v5487
        %v5490 = vmul.u32 %v5485, %v5486
        %v5491 = vmul.u32 %v5485, %v5487
        %v5492 = vshll.u32 %v5489, 16
        %v5493 = vshrl.u32 %v5489, 16
        %v5494 = vshll.u32 %v5490, 16
        %v5495 = vshrl.u32 %v5490, 16
        %vm5496 = vc.u32 %v5488, %v5492
        %v5497 = vsel %vm5496, 1, 0
        %v5498 = vadd.s32 %v5488, %v5492
        %v5499 = vadd.s32 %v5491, %v5497
        %vm5500 = vc.u32 %v5498, %v5494
        %v5501 = vsel %vm5500, 1, 0
        %v5502 = vadd.s32 %v5498, %v5494
        %v5503 = vadd.s32 %v5499, %v5501
        %v5504 = vadd.s32 %v5503, %v5493
        %v5505 = vadd.s32 %v5504, %v5495
        %v5506 = vand.u32 %v5483, 65535
        %v5507 = vshrl.u32 %v5483, 16
        %v5508 = vand.u32 %v5478, 65535
        %v5509 = vshrl.u32 %v5478, 16
        %v5510 = vmul.u32 %v5506, %v5508
        %v5511 = vmul.u32 %v5506, %v5509
        %v5512 = vmul.u32 %v5507, %v5508
        %v5513 = vmul.u32 %v5507, %v5509
        %v5514 = vshll.u32 %v5511, 16
        %v5515 = vshrl.u32 %v5511, 16
        %v5516 = vshll.u32 %v5512, 16
        %v5517 = vshrl.u32 %v5512, 16
        %vm5518 = vc.u32 %v5510, %v5514
        %v5519 = vsel %vm5518, 1, 0
        %v5520 = vadd.s32 %v5510, %v5514
        %v5521 = vadd.s32 %v5513, %v5519
        %vm5522 = vc.u32 %v5520, %v5516
        %v5523 = vsel %vm5522, 1, 0
        %v5524 = vadd.s32 %v5520, %v5516
        %v5525 = vadd.s32 %v5521, %v5523
        %v5526 = vadd.s32 %v5525, %v5515
        %v5527 = vadd.s32 %v5526, %v5517
        %v5528 = vmul.u32 %v5483, %v5474
        %v5529 = vadd.s32 %v5505, %v5524
        %vm5530 = vc.u32 %v5505, %v5524
        %v5531 = vadd.s32 %v5527, 1
        %v5532 = vsel %vm5530, %v5531, %v5527
        %v5533 = vadd.s32 %v5528, %v5532
        %v5534 = vadd.s32 %v5533, 536870912
        %v5535 = vshrl.u32 %v5534, 30
        %v5536 = vshll.u32 %v5535, 30
        %v5537 = vsub.s32 %v5533, %v5536
        %vm5538 = vcmp.lt.s32.totalorder %v5537, 0
        %v5539 = vsub.s32 0, %v5537
        %v5540 = vsel %vm5538, %v5539, %v5537
        %v5541 = vclz %v5540
        %v5542 = vsub.s32 %v5541, 2
        %vm5543 = vcmp.gt.s32.totalorder 0, %v5542
        %v5544 = vsel %vm5543, 0, %v5542
        %v5545 = vsub.s32 32, %v5544
        %v5546 = vshll.u32 %v5537, %v5544
        %v5547 = vshrl.u32 %v5529, %v5545
        %v5548 = vor.u32 %v5546, %v5547
        %v5549 = vsub.s32 4294967266, %v5544
        %v5550 = vadd.s32 %v5549, 127
        %v5551 = vshll.u32 %v5550, 23
        %v5552 = vor.u32 4788187, %v5551
        %v5553 = vand.u32 2147483647, %v5552
        %v5555 = vcvt.s32.f32 %v5548
        %v5556 = vmul.f32 %v5555, %v5553
        %v5557 = vxor.u32 %v5556, 2147483648
        %v5558 = vsel %vm5437, %v5557, %v5556
        %v5559 = vsub.s32 4, %v5535
        %v5560 = vsel %vm5437, %v5559, %v5535
        %v5561 = vsel %vm5436, %v628, %v5558
        %v5562 = vsel %vm5436, 0, %v5560
        %v5563 = vmul.f32 %v5561, %v5561
        %v5564 = vmul.f32 %v5563, -0.001358992
        %v5565 = vadd.f32 %v5564, 0.041655596
        %v5566 = vmul.f32 %v5563, %v5565
        %v5567 = vadd.f32 %v5566, -0.4999988
        %v5568 = vmul.f32 %v5563, %v5567
        %v5569 = vadd.f32 1.0, %v5568
        %v5570 = vmul.f32 %v5561, %v5561
        %v5571 = vmul.f32 %v5570, -0.00019511016
        %v5572 = vadd.f32 %v5571, 0.008332121
        %v5573 = vmul.f32 %v5570, %v5572
        %v5574 = vadd.f32 %v5573, -0.16666654
        %v5575 = vmul.f32 %v5570, %v5574
        %v5576 = vadd.f32 %v5575, 1.0
        %v5577 = vmul.f32 %v5576, %v5561
        %vm5578 = vweird.f32 %v628
        %v5579 = vand.u32 %v5562, 3
        %vm5580 = vcmp.lt.s32.totalorder %v5579, 2
        %vm5581 = vcmp.eq.s32.totalorder %v5579, 0
        %v5582 = vxor.u32 %v5577, 2147483648
        %v5583 = vsel %vm5581, %v5569, %v5582
        %vm5584 = vcmp.eq.s32.totalorder %v5579, 2
        %v5585 = vxor.u32 %v5569, 2147483648
        %v5586 = vsel %vm5584, %v5585, %v5577
        %v5587 = vsel %vm5580, %v5583, %v5586
        %v5588 = vsel %vm5578, nan, %v5587
        %v5589 = vand.u32 2147483647, %v629
        %vm5590 = vcmp.le.f32.partialorder %v5589, 0.7853982
        %vm5591 = vcmp.lt.s32.totalorder %v629, 0
        %v5592 = vand.u32 %v629, 2139095040
        %v5593 = vshrl.u32 %v5592, 23
        %v5594 = vsub.s32 %v5593, 127
        %v5595 = vand.u32 2147483647, %v629
        %v5596 = vand.u32 %v5595, 8388607
        %v5597 = vor.u32 %v5596, 8388608
        %v5598 = vsub.s32 0, %v5597
        %v5599 = vadd.s32 %v5594, 1
        %vm5600 = vcmp.gt.s32.totalorder %v5599, 0
        %v5601 = vsel %vm5600, %v5599, 0
        %v5602 = vshrl.u32 %v5601, 5
        %v5603 = vand.u32 %v5601, 31
        %v5604 = vsub.s32 32, %v5603
        %v5605 = vshrl.u32 683565275, %v5604
        %v5606 = vshll.u32 683565275, %v5603
        %v5607 = vshrl.u32 2475754826, %v5604
        %v5608 = vor.u32 %v5606, %v5607
        %v5609 = vshll.u32 2475754826, %v5603
        %v5610 = vshrl.u32 2131351028, %v5604
        %v5611 = vor.u32 %v5609, %v5610
        %v5612 = vshll.u32 2131351028, %v5603
        %v5613 = vshrl.u32 2102212464, %v5604
        %v5614 = vor.u32 %v5612, %v5613
        %v5615 = vshll.u32 2102212464, %v5603
        %v5616 = vshrl.u32 920167782, %v5604
        %v5617 = vor.u32 %v5615, %v5616
        %v5618 = vshll.u32 920167782, %v5603
        %v5619 = vshrl.u32 1326507024, %v5604
        %v5620 = vor.u32 %v5618, %v5619
        %vm5621 = vcmp.lt.s32.totalorder %v5602, 1
        %vm5622 = vcmp.lt.s32.totalorder %v5602, 2
        %vm5623 = vcmp.lt.s32.totalorder %v5602, 3
        %vm5624 = vcmp.lt.s32.totalorder %v5602, 4
        %v5625 = vsel %vm5621, %v5605, %v5608
        %v5626 = vsel %vm5624, %v5614, 2102212464
        %v5627 = vsel %vm5623, %v5611, %v5626
        %v5628 = vsel %vm5622, %v5625, %v5627
        %v5629 = vsel %vm5621, %v5608, %v5611
        %v5630 = vsel %vm5624, %v5617, 920167782
        %v5631 = vsel %vm5623, %v5614, %v5630
        %v5632 = vsel %vm5622, %v5629, %v5631
        %v5633 = vsel %vm5621, %v5611, %v5614
        %v5634 = vsel %vm5624, %v5620, 1326507024
        %v5635 = vsel %vm5623, %v5617, %v5634
        %v5636 = vsel %vm5622, %v5633, %v5635
        %v5637 = vshll.u32 %v5597, 8
        %v5638 = vand.u32 %v5637, 65535
        %v5639 = vshrl.u32 %v5637, 16
        %v5640 = vand.u32 %v5636, 65535
        %v5641 = vshrl.u32 %v5636, 16
        %v5642 = vmul.u32 %v5638, %v5640
        %v5643 = vmul.u32 %v5638, %v5641
        %v5644 = vmul.u32 %v5639, %v5640
        %v5645 = vmul.u32 %v5639, %v5641
        %v5646 = vshll.u32 %v5643, 16
        %v5647 = vshrl.u32 %v5643, 16
        %v5648 = vshll.u32 %v5644, 16
        %v5649 = vshrl.u32 %v5644, 16
        %vm5650 = vc.u32 %v5642, %v5646
        %v5651 = vsel %vm5650, 1, 0
        %v5652 = vadd.s32 %v5642, %v5646
        %v5653 = vadd.s32 %v5645, %v5651
        %vm5654 = vc.u32 %v5652, %v5648
        %v5655 = vsel %vm5654, 1, 0
        %v5656 = vadd.s32 %v5652, %v5648
        %v5657 = vadd.s32 %v5653, %v5655
        %v5658 = vadd.s32 %v5657, %v5647
        %v5659 = vadd.s32 %v5658, %v5649
        %v5660 = vand.u32 %v5637, 65535
        %v5661 = vshrl.u32 %v5637, 16
        %v5662 = vand.u32 %v5632, 65535
        %v5663 = vshrl.u32 %v5632, 16
        %v5664 = vmul.u32 %v5660, %v5662
        %v5665 = vmul.u32 %v5660, %v5663
        %v5666 = vmul.u32 %v5661, %v5662
        %v5667 = vmul.u32 %v5661, %v5663
        %v5668 = vshll.u32 %v5665, 16
        %v5669 = vshrl.u32 %v5665, 16
        %v5670 = vshll.u32 %v5666, 16
        %v5671 = vshrl.u32 %v5666, 16
        %vm5672 = vc.u32 %v5664, %v5668
        %v5673 = vsel %vm5672, 1, 0
        %v5674 = vadd.s32 %v5664, %v5668
        %v5675 = vadd.s32 %v5667, %v5673
        %vm5676 = vc.u32 %v5674, %v5670
        %v5677 = vsel %vm5676, 1, 0
        %v5678 = vadd.s32 %v5674, %v5670
        %v5679 = vadd.s32 %v5675, %v5677
        %v5680 = vadd.s32 %v5679, %v5669
        %v5681 = vadd.s32 %v5680, %v5671
        %v5682 = vmul.u32 %v5637, %v5628
        %v5683 = vadd.s32 %v5659, %v5678
        %vm5684 = vc.u32 %v5659, %v5678
        %v5685 = vadd.s32 %v5681, 1
        %v5686 = vsel %vm5684, %v5685, %v5681
        %v5687 = vadd.s32 %v5682, %v5686
        %v5688 = vadd.s32 %v5687, 536870912
        %v5689 = vshrl.u32 %v5688, 30
        %v5690 = vshll.u32 %v5689, 30
        %v5691 = vsub.s32 %v5687, %v5690
        %vm5692 = vcmp.lt.s32.totalorder %v5691, 0
        %v5693 = vsub.s32 0, %v5691
        %v5694 = vsel %vm5692, %v5693, %v5691
        %v5695 = vclz %v5694
        %v5696 = vsub.s32 %v5695, 2
        %vm5697 = vcmp.gt.s32.totalorder 0, %v5696
        %v5698 = vsel %vm5697, 0, %v5696
        %v5699 = vsub.s32 32, %v5698
        %v5700 = vshll.u32 %v5691, %v5698
        %v5701 = vshrl.u32 %v5683, %v5699
        %v5702 = vor.u32 %v5700, %v5701
        %v5703 = vsub.s32 4294967266, %v5698
        %v5704 = vadd.s32 %v5703, 127
        %v5705 = vshll.u32 %v5704, 23
        %v5706 = vor.u32 4788187, %v5705
        %v5707 = vand.u32 2147483647, %v5706
        %v5709 = vcvt.s32.f32 %v5702
        %v5710 = vmul.f32 %v5709, %v5707
        %v5711 = vxor.u32 %v5710, 2147483648
        %v5712 = vsel %vm5591, %v5711, %v5710
        %v5713 = vsub.s32 4, %v5689
        %v5714 = vsel %vm5591, %v5713, %v5689
        %v5715 = vsel %vm5590, %v629, %v5712
        %v5716 = vsel %vm5590, 0, %v5714
        %v5717 = vmul.f32 %v5715, %v5715
        %v5718 = vmul.f32 %v5717, -0.001358992
        %v5719 = vadd.f32 %v5718, 0.041655596
        %v5720 = vmul.f32 %v5717, %v5719
        %v5721 = vadd.f32 %v5720, -0.4999988
        %v5722 = vmul.f32 %v5717, %v5721
        %v5723 = vadd.f32 1.0, %v5722
        %v5724 = vmul.f32 %v5715, %v5715
        %v5725 = vmul.f32 %v5724, -0.00019511016
        %v5726 = vadd.f32 %v5725, 0.008332121
        %v5727 = vmul.f32 %v5724, %v5726
        %v5728 = vadd.f32 %v5727, -0.16666654
        %v5729 = vmul.f32 %v5724, %v5728
        %v5730 = vadd.f32 %v5729, 1.0
        %v5731 = vmul.f32 %v5730, %v5715
        %vm5732 = vweird.f32 %v629
        %v5733 = vand.u32 %v5716, 3
        %vm5734 = vcmp.lt.s32.totalorder %v5733, 2
        %vm5735 = vcmp.eq.s32.totalorder %v5733, 0
        %v5736 = vxor.u32 %v5731, 2147483648
        %v5737 = vsel %vm5735, %v5723, %v5736
        %vm5738 = vcmp.eq.s32.totalorder %v5733, 2
        %v5739 = vxor.u32 %v5723, 2147483648
        %v5740 = vsel %vm5738, %v5739, %v5731
        %v5741 = vsel %vm5734, %v5737, %v5740
        %v5742 = vsel %vm5732, nan, %v5741
        %v5743 = vand.u32 2147483647, %v630
        %vm5744 = vcmp.le.f32.partialorder %v5743, 0.7853982
        %vm5745 = vcmp.lt.s32.totalorder %v630, 0
        %v5746 = vand.u32 %v630, 2139095040
        %v5747 = vshrl.u32 %v5746, 23
        %v5748 = vsub.s32 %v5747, 127
        %v5749 = vand.u32 2147483647, %v630
        %v5750 = vand.u32 %v5749, 8388607
        %v5751 = vor.u32 %v5750, 8388608
        %v5752 = vsub.s32 0, %v5751
        %v5753 = vadd.s32 %v5748, 1
        %vm5754 = vcmp.gt.s32.totalorder %v5753, 0
        %v5755 = vsel %vm5754, %v5753, 0
        %v5756 = vshrl.u32 %v5755, 5
        %v5757 = vand.u32 %v5755, 31
        %v5758 = vsub.s32 32, %v5757
        %v5759 = vshrl.u32 683565275, %v5758
        %v5760 = vshll.u32 683565275, %v5757
        %v5761 = vshrl.u32 2475754826, %v5758
        %v5762 = vor.u32 %v5760, %v5761
        %v5763 = vshll.u32 2475754826, %v5757
        %v5764 = vshrl.u32 2131351028, %v5758
        %v5765 = vor.u32 %v5763, %v5764
        %v5766 = vshll.u32 2131351028, %v5757
        %v5767 = vshrl.u32 2102212464, %v5758
        %v5768 = vor.u32 %v5766, %v5767
        %v5769 = vshll.u32 2102212464, %v5757
        %v5770 = vshrl.u32 920167782, %v5758
        %v5771 = vor.u32 %v5769, %v5770
        %v5772 = vshll.u32 920167782, %v5757
        %v5773 = vshrl.u32 1326507024, %v5758
        %v5774 = vor.u32 %v5772, %v5773
        %vm5775 = vcmp.lt.s32.totalorder %v5756, 1
        %vm5776 = vcmp.lt.s32.totalorder %v5756, 2
        %vm5777 = vcmp.lt.s32.totalorder %v5756, 3
        %vm5778 = vcmp.lt.s32.totalorder %v5756, 4
        %v5779 = vsel %vm5775, %v5759, %v5762
        %v5780 = vsel %vm5778, %v5768, 2102212464
        %v5781 = vsel %vm5777, %v5765, %v5780
        %v5782 = vsel %vm5776, %v5779, %v5781
        %v5783 = vsel %vm5775, %v5762, %v5765
        %v5784 = vsel %vm5778, %v5771, 920167782
        %v5785 = vsel %vm5777, %v5768, %v5784
        %v5786 = vsel %vm5776, %v5783, %v5785
        %v5787 = vsel %vm5775, %v5765, %v5768
        %v5788 = vsel %vm5778, %v5774, 1326507024
        %v5789 = vsel %vm5777, %v5771, %v5788
        %v5790 = vsel %vm5776, %v5787, %v5789
        %v5791 = vshll.u32 %v5751, 8
        %v5792 = vand.u32 %v5791, 65535
        %v5793 = vshrl.u32 %v5791, 16
        %v5794 = vand.u32 %v5790, 65535
        %v5795 = vshrl.u32 %v5790, 16
        %v5796 = vmul.u32 %v5792, %v5794
        %v5797 = vmul.u32 %v5792, %v5795
        %v5798 = vmul.u32 %v5793, %v5794
        %v5799 = vmul.u32 %v5793, %v5795
        %v5800 = vshll.u32 %v5797, 16
        %v5801 = vshrl.u32 %v5797, 16
        %v5802 = vshll.u32 %v5798, 16
        %v5803 = vshrl.u32 %v5798, 16
        %vm5804 = vc.u32 %v5796, %v5800
        %v5805 = vsel %vm5804, 1, 0
        %v5806 = vadd.s32 %v5796, %v5800
        %v5807 = vadd.s32 %v5799, %v5805
        %vm5808 = vc.u32 %v5806, %v5802
        %v5809 = vsel %vm5808, 1, 0
        %v5810 = vadd.s32 %v5806, %v5802
        %v5811 = vadd.s32 %v5807, %v5809
        %v5812 = vadd.s32 %v5811, %v5801
        %v5813 = vadd.s32 %v5812, %v5803
        %v5814 = vand.u32 %v5791, 65535
        %v5815 = vshrl.u32 %v5791, 16
        %v5816 = vand.u32 %v5786, 65535
        %v5817 = vshrl.u32 %v5786, 16
        %v5818 = vmul.u32 %v5814, %v5816
        %v5819 = vmul.u32 %v5814, %v5817
        %v5820 = vmul.u32 %v5815, %v5816
        %v5821 = vmul.u32 %v5815, %v5817
        %v5822 = vshll.u32 %v5819, 16
        %v5823 = vshrl.u32 %v5819, 16
        %v5824 = vshll.u32 %v5820, 16
        %v5825 = vshrl.u32 %v5820, 16
        %vm5826 = vc.u32 %v5818, %v5822
        %v5827 = vsel %vm5826, 1, 0
        %v5828 = vadd.s32 %v5818, %v5822
        %v5829 = vadd.s32 %v5821, %v5827
        %vm5830 = vc.u32 %v5828, %v5824
        %v5831 = vsel %vm5830, 1, 0
        %v5832 = vadd.s32 %v5828, %v5824
        %v5833 = vadd.s32 %v5829, %v5831
        %v5834 = vadd.s32 %v5833, %v5823
        %v5835 = vadd.s32 %v5834, %v5825
        %v5836 = vmul.u32 %v5791, %v5782
        %v5837 = vadd.s32 %v5813, %v5832
        %vm5838 = vc.u32 %v5813, %v5832
        %v5839 = vadd.s32 %v5835, 1
        %v5840 = vsel %vm5838, %v5839, %v5835
        %v5841 = vadd.s32 %v5836, %v5840
        %v5842 = vadd.s32 %v5841, 536870912
        %v5843 = vshrl.u32 %v5842, 30
        %v5844 = vshll.u32 %v5843, 30
        %v5845 = vsub.s32 %v5841, %v5844
        %vm5846 = vcmp.lt.s32.totalorder %v5845, 0
        %v5847 = vsub.s32 0, %v5845
        %v5848 = vsel %vm5846, %v5847, %v5845
        %v5849 = vclz %v5848
        %v5850 = vsub.s32 %v5849, 2
        %vm5851 = vcmp.gt.s32.totalorder 0, %v5850
        %v5852 = vsel %vm5851, 0, %v5850
        %v5853 = vsub.s32 32, %v5852
        %v5854 = vshll.u32 %v5845, %v5852
        %v5855 = vshrl.u32 %v5837, %v5853
        %v5856 = vor.u32 %v5854, %v5855
        %v5857 = vsub.s32 4294967266, %v5852
        %v5858 = vadd.s32 %v5857, 127
        %v5859 = vshll.u32 %v5858, 23
        %v5860 = vor.u32 4788187, %v5859
        %v5861 = vand.u32 2147483647, %v5860
        %v5863 = vcvt.s32.f32 %v5856
        %v5864 = vmul.f32 %v5863, %v5861
        %v5865 = vxor.u32 %v5864, 2147483648
        %v5866 = vsel %vm5745, %v5865, %v5864
        %v5867 = vsub.s32 4, %v5843
        %v5868 = vsel %vm5745, %v5867, %v5843
        %v5869 = vsel %vm5744, %v630, %v5866
        %v5870 = vsel %vm5744, 0, %v5868
        %v5871 = vmul.f32 %v5869, %v5869
        %v5872 = vmul.f32 %v5871, -0.001358992
        %v5873 = vadd.f32 %v5872, 0.041655596
        %v5874 = vmul.f32 %v5871, %v5873
        %v5875 = vadd.f32 %v5874, -0.4999988
        %v5876 = vmul.f32 %v5871, %v5875
        %v5877 = vadd.f32 1.0, %v5876
        %v5878 = vmul.f32 %v5869, %v5869
        %v5879 = vmul.f32 %v5878, -0.00019511016
        %v5880 = vadd.f32 %v5879, 0.008332121
        %v5881 = vmul.f32 %v5878, %v5880
        %v5882 = vadd.f32 %v5881, -0.16666654
        %v5883 = vmul.f32 %v5878, %v5882
        %v5884 = vadd.f32 %v5883, 1.0
        %v5885 = vmul.f32 %v5884, %v5869
        %vm5886 = vweird.f32 %v630
        %v5887 = vand.u32 %v5870, 3
        %vm5888 = vcmp.lt.s32.totalorder %v5887, 2
        %vm5889 = vcmp.eq.s32.totalorder %v5887, 0
        %v5890 = vxor.u32 %v5885, 2147483648
        %v5891 = vsel %vm5889, %v5877, %v5890
        %vm5892 = vcmp.eq.s32.totalorder %v5887, 2
        %v5893 = vxor.u32 %v5877, 2147483648
        %v5894 = vsel %vm5892, %v5893, %v5885
        %v5895 = vsel %vm5888, %v5891, %v5894
        %v5896 = vsel %vm5886, nan, %v5895
        %v5897 = vand.u32 2147483647, %v631
        %vm5898 = vcmp.le.f32.partialorder %v5897, 0.7853982
        %vm5899 = vcmp.lt.s32.totalorder %v631, 0
        %v5900 = vand.u32 %v631, 2139095040
        %v5901 = vshrl.u32 %v5900, 23
        %v5902 = vsub.s32 %v5901, 127
        %v5903 = vand.u32 2147483647, %v631
        %v5904 = vand.u32 %v5903, 8388607
        %v5905 = vor.u32 %v5904, 8388608
        %v5906 = vsub.s32 0, %v5905
        %v5907 = vadd.s32 %v5902, 1
        %vm5908 = vcmp.gt.s32.totalorder %v5907, 0
        %v5909 = vsel %vm5908, %v5907, 0
        %v5910 = vshrl.u32 %v5909, 5
        %v5911 = vand.u32 %v5909, 31
        %v5912 = vsub.s32 32, %v5911
        %v5913 = vshrl.u32 683565275, %v5912
        %v5914 = vshll.u32 683565275, %v5911
        %v5915 = vshrl.u32 2475754826, %v5912
        %v5916 = vor.u32 %v5914, %v5915
        %v5917 = vshll.u32 2475754826, %v5911
        %v5918 = vshrl.u32 2131351028, %v5912
        %v5919 = vor.u32 %v5917, %v5918
        %v5920 = vshll.u32 2131351028, %v5911
        %v5921 = vshrl.u32 2102212464, %v5912
        %v5922 = vor.u32 %v5920, %v5921
        %v5923 = vshll.u32 2102212464, %v5911
        %v5924 = vshrl.u32 920167782, %v5912
        %v5925 = vor.u32 %v5923, %v5924
        %v5926 = vshll.u32 920167782, %v5911
        %v5927 = vshrl.u32 1326507024, %v5912
        %v5928 = vor.u32 %v5926, %v5927
        %vm5929 = vcmp.lt.s32.totalorder %v5910, 1
        %vm5930 = vcmp.lt.s32.totalorder %v5910, 2
        %vm5931 = vcmp.lt.s32.totalorder %v5910, 3
        %vm5932 = vcmp.lt.s32.totalorder %v5910, 4
        %v5933 = vsel %vm5929, %v5913, %v5916
        %v5934 = vsel %vm5932, %v5922, 2102212464
        %v5935 = vsel %vm5931, %v5919, %v5934
        %v5936 = vsel %vm5930, %v5933, %v5935
        %v5937 = vsel %vm5929, %v5916, %v5919
        %v5938 = vsel %vm5932, %v5925, 920167782
        %v5939 = vsel %vm5931, %v5922, %v5938
        %v5940 = vsel %vm5930, %v5937, %v5939
        %v5941 = vsel %vm5929, %v5919, %v5922
        %v5942 = vsel %vm5932, %v5928, 1326507024
        %v5943 = vsel %vm5931, %v5925, %v5942
        %v5944 = vsel %vm5930, %v5941, %v5943
        %v5945 = vshll.u32 %v5905, 8
        %v5946 = vand.u32 %v5945, 65535
        %v5947 = vshrl.u32 %v5945, 16
        %v5948 = vand.u32 %v5944, 65535
        %v5949 = vshrl.u32 %v5944, 16
        %v5950 = vmul.u32 %v5946, %v5948
        %v5951 = vmul.u32 %v5946, %v5949
        %v5952 = vmul.u32 %v5947, %v5948
        %v5953 = vmul.u32 %v5947, %v5949
        %v5954 = vshll.u32 %v5951, 16
        %v5955 = vshrl.u32 %v5951, 16
        %v5956 = vshll.u32 %v5952, 16
        %v5957 = vshrl.u32 %v5952, 16
        %vm5958 = vc.u32 %v5950, %v5954
        %v5959 = vsel %vm5958, 1, 0
        %v5960 = vadd.s32 %v5950, %v5954
        %v5961 = vadd.s32 %v5953, %v5959
        %vm5962 = vc.u32 %v5960, %v5956
        %v5963 = vsel %vm5962, 1, 0
        %v5964 = vadd.s32 %v5960, %v5956
        %v5965 = vadd.s32 %v5961, %v5963
        %v5966 = vadd.s32 %v5965, %v5955
        %v5967 = vadd.s32 %v5966, %v5957
        %v5968 = vand.u32 %v5945, 65535
        %v5969 = vshrl.u32 %v5945, 16
        %v5970 = vand.u32 %v5940, 65535
        %v5971 = vshrl.u32 %v5940, 16
        %v5972 = vmul.u32 %v5968, %v5970
        %v5973 = vmul.u32 %v5968, %v5971
        %v5974 = vmul.u32 %v5969, %v5970
        %v5975 = vmul.u32 %v5969, %v5971
        %v5976 = vshll.u32 %v5973, 16
        %v5977 = vshrl.u32 %v5973, 16
        %v5978 = vshll.u32 %v5974, 16
        %v5979 = vshrl.u32 %v5974, 16
        %vm5980 = vc.u32 %v5972, %v5976
        %v5981 = vsel %vm5980, 1, 0
        %v5982 = vadd.s32 %v5972, %v5976
        %v5983 = vadd.s32 %v5975, %v5981
        %vm5984 = vc.u32 %v5982, %v5978
        %v5985 = vsel %vm5984, 1, 0
        %v5986 = vadd.s32 %v5982, %v5978
        %v5987 = vadd.s32 %v5983, %v5985
        %v5988 = vadd.s32 %v5987, %v5977
        %v5989 = vadd.s32 %v5988, %v5979
        %v5990 = vmul.u32 %v5945, %v5936
        %v5991 = vadd.s32 %v5967, %v5986
        %vm5992 = vc.u32 %v5967, %v5986
        %v5993 = vadd.s32 %v5989, 1
        %v5994 = vsel %vm5992, %v5993, %v5989
        %v5995 = vadd.s32 %v5990, %v5994
        %v5996 = vadd.s32 %v5995, 536870912
        %v5997 = vshrl.u32 %v5996, 30
        %v5998 = vshll.u32 %v5997, 30
        %v5999 = vsub.s32 %v5995, %v5998
        %vm6000 = vcmp.lt.s32.totalorder %v5999, 0
        %v6001 = vsub.s32 0, %v5999
        %v6002 = vsel %vm6000, %v6001, %v5999
        %v6003 = vclz %v6002
        %v6004 = vsub.s32 %v6003, 2
        %vm6005 = vcmp.gt.s32.totalorder 0, %v6004
        %v6006 = vsel %vm6005, 0, %v6004
        %v6007 = vsub.s32 32, %v6006
        %v6008 = vshll.u32 %v5999, %v6006
        %v6009 = vshrl.u32 %v5991, %v6007
        %v6010 = vor.u32 %v6008, %v6009
        %v6011 = vsub.s32 4294967266, %v6006
        %v6012 = vadd.s32 %v6011, 127
        %v6013 = vshll.u32 %v6012, 23
        %v6014 = vor.u32 4788187, %v6013
        %v6015 = vand.u32 2147483647, %v6014
        %v6017 = vcvt.s32.f32 %v6010
        %v6018 = vmul.f32 %v6017, %v6015
        %v6019 = vxor.u32 %v6018, 2147483648
        %v6020 = vsel %vm5899, %v6019, %v6018
        %v6021 = vsub.s32 4, %v5997
        %v6022 = vsel %vm5899, %v6021, %v5997
        %v6023 = vsel %vm5898, %v631, %v6020
        %v6024 = vsel %vm5898, 0, %v6022
        %v6025 = vmul.f32 %v6023, %v6023
        %v6026 = vmul.f32 %v6025, -0.001358992
        %v6027 = vadd.f32 %v6026, 0.041655596
        %v6028 = vmul.f32 %v6025, %v6027
        %v6029 = vadd.f32 %v6028, -0.4999988
        %v6030 = vmul.f32 %v6025, %v6029
        %v6031 = vadd.f32 1.0, %v6030
        %v6032 = vmul.f32 %v6023, %v6023
        %v6033 = vmul.f32 %v6032, -0.00019511016
        %v6034 = vadd.f32 %v6033, 0.008332121
        %v6035 = vmul.f32 %v6032, %v6034
        %v6036 = vadd.f32 %v6035, -0.16666654
        %v6037 = vmul.f32 %v6032, %v6036
        %v6038 = vadd.f32 %v6037, 1.0
        %v6039 = vmul.f32 %v6038, %v6023
        %vm6040 = vweird.f32 %v631
        %v6041 = vand.u32 %v6024, 3
        %vm6042 = vcmp.lt.s32.totalorder %v6041, 2
        %vm6043 = vcmp.eq.s32.totalorder %v6041, 0
        %v6044 = vxor.u32 %v6039, 2147483648
        %v6045 = vsel %vm6043, %v6031, %v6044
        %vm6046 = vcmp.eq.s32.totalorder %v6041, 2
        %v6047 = vxor.u32 %v6031, 2147483648
        %v6048 = vsel %vm6046, %v6047, %v6039
        %v6049 = vsel %vm6042, %v6045, %v6048
        %v6050 = vsel %vm6040, nan, %v6049
        %v6051 = vand.u32 2147483647, %v632
        %vm6052 = vcmp.le.f32.partialorder %v6051, 0.7853982
        %vm6053 = vcmp.lt.s32.totalorder %v632, 0
        %v6054 = vand.u32 %v632, 2139095040
        %v6055 = vshrl.u32 %v6054, 23
        %v6056 = vsub.s32 %v6055, 127
        %v6057 = vand.u32 2147483647, %v632
        %v6058 = vand.u32 %v6057, 8388607
        %v6059 = vor.u32 %v6058, 8388608
        %v6060 = vsub.s32 0, %v6059
        %v6061 = vadd.s32 %v6056, 1
        %vm6062 = vcmp.gt.s32.totalorder %v6061, 0
        %v6063 = vsel %vm6062, %v6061, 0
        %v6064 = vshrl.u32 %v6063, 5
        %v6065 = vand.u32 %v6063, 31
        %v6066 = vsub.s32 32, %v6065
        %v6067 = vshrl.u32 683565275, %v6066
        %v6068 = vshll.u32 683565275, %v6065
        %v6069 = vshrl.u32 2475754826, %v6066
        %v6070 = vor.u32 %v6068, %v6069
        %v6071 = vshll.u32 2475754826, %v6065
        %v6072 = vshrl.u32 2131351028, %v6066
        %v6073 = vor.u32 %v6071, %v6072
        %v6074 = vshll.u32 2131351028, %v6065
        %v6075 = vshrl.u32 2102212464, %v6066
        %v6076 = vor.u32 %v6074, %v6075
        %v6077 = vshll.u32 2102212464, %v6065
        %v6078 = vshrl.u32 920167782, %v6066
        %v6079 = vor.u32 %v6077, %v6078
        %v6080 = vshll.u32 920167782, %v6065
        %v6081 = vshrl.u32 1326507024, %v6066
        %v6082 = vor.u32 %v6080, %v6081
        %vm6083 = vcmp.lt.s32.totalorder %v6064, 1
        %vm6084 = vcmp.lt.s32.totalorder %v6064, 2
        %vm6085 = vcmp.lt.s32.totalorder %v6064, 3
        %vm6086 = vcmp.lt.s32.totalorder %v6064, 4
        %v6087 = vsel %vm6083, %v6067, %v6070
        %v6088 = vsel %vm6086, %v6076, 2102212464
        %v6089 = vsel %vm6085, %v6073, %v6088
        %v6090 = vsel %vm6084, %v6087, %v6089
        %v6091 = vsel %vm6083, %v6070, %v6073
        %v6092 = vsel %vm6086, %v6079, 920167782
        %v6093 = vsel %vm6085, %v6076, %v6092
        %v6094 = vsel %vm6084, %v6091, %v6093
        %v6095 = vsel %vm6083, %v6073, %v6076
        %v6096 = vsel %vm6086, %v6082, 1326507024
        %v6097 = vsel %vm6085, %v6079, %v6096
        %v6098 = vsel %vm6084, %v6095, %v6097
        %v6099 = vshll.u32 %v6059, 8
        %v6100 = vand.u32 %v6099, 65535
        %v6101 = vshrl.u32 %v6099, 16
        %v6102 = vand.u32 %v6098, 65535
        %v6103 = vshrl.u32 %v6098, 16
        %v6104 = vmul.u32 %v6100, %v6102
        %v6105 = vmul.u32 %v6100, %v6103
        %v6106 = vmul.u32 %v6101, %v6102
        %v6107 = vmul.u32 %v6101, %v6103
        %v6108 = vshll.u32 %v6105, 16
        %v6109 = vshrl.u32 %v6105, 16
        %v6110 = vshll.u32 %v6106, 16
        %v6111 = vshrl.u32 %v6106, 16
        %vm6112 = vc.u32 %v6104, %v6108
        %v6113 = vsel %vm6112, 1, 0
        %v6114 = vadd.s32 %v6104, %v6108
        %v6115 = vadd.s32 %v6107, %v6113
        %vm6116 = vc.u32 %v6114, %v6110
        %v6117 = vsel %vm6116, 1, 0
        %v6118 = vadd.s32 %v6114, %v6110
        %v6119 = vadd.s32 %v6115, %v6117
        %v6120 = vadd.s32 %v6119, %v6109
        %v6121 = vadd.s32 %v6120, %v6111
        %v6122 = vand.u32 %v6099, 65535
        %v6123 = vshrl.u32 %v6099, 16
        %v6124 = vand.u32 %v6094, 65535
        %v6125 = vshrl.u32 %v6094, 16
        %v6126 = vmul.u32 %v6122, %v6124
        %v6127 = vmul.u32 %v6122, %v6125
        %v6128 = vmul.u32 %v6123, %v6124
        %v6129 = vmul.u32 %v6123, %v6125
        %v6130 = vshll.u32 %v6127, 16
        %v6131 = vshrl.u32 %v6127, 16
        %v6132 = vshll.u32 %v6128, 16
        %v6133 = vshrl.u32 %v6128, 16
        %vm6134 = vc.u32 %v6126, %v6130
        %v6135 = vsel %vm6134, 1, 0
        %v6136 = vadd.s32 %v6126, %v6130
        %v6137 = vadd.s32 %v6129, %v6135
        %vm6138 = vc.u32 %v6136, %v6132
        %v6139 = vsel %vm6138, 1, 0
        %v6140 = vadd.s32 %v6136, %v6132
        %v6141 = vadd.s32 %v6137, %v6139
        %v6142 = vadd.s32 %v6141, %v6131
        %v6143 = vadd.s32 %v6142, %v6133
        %v6144 = vmul.u32 %v6099, %v6090
        %v6145 = vadd.s32 %v6121, %v6140
        %vm6146 = vc.u32 %v6121, %v6140
        %v6147 = vadd.s32 %v6143, 1
        %v6148 = vsel %vm6146, %v6147, %v6143
        %v6149 = vadd.s32 %v6144, %v6148
        %v6150 = vadd.s32 %v6149, 536870912
        %v6151 = vshrl.u32 %v6150, 30
        %v6152 = vshll.u32 %v6151, 30
        %v6153 = vsub.s32 %v6149, %v6152
        %vm6154 = vcmp.lt.s32.totalorder %v6153, 0
        %v6155 = vsub.s32 0, %v6153
        %v6156 = vsel %vm6154, %v6155, %v6153
        %v6157 = vclz %v6156
        %v6158 = vsub.s32 %v6157, 2
        %vm6159 = vcmp.gt.s32.totalorder 0, %v6158
        %v6160 = vsel %vm6159, 0, %v6158
        %v6161 = vsub.s32 32, %v6160
        %v6162 = vshll.u32 %v6153, %v6160
        %v6163 = vshrl.u32 %v6145, %v6161
        %v6164 = vor.u32 %v6162, %v6163
        %v6165 = vsub.s32 4294967266, %v6160
        %v6166 = vadd.s32 %v6165, 127
        %v6167 = vshll.u32 %v6166, 23
        %v6168 = vor.u32 4788187, %v6167
        %v6169 = vand.u32 2147483647, %v6168
        %v6171 = vcvt.s32.f32 %v6164
        %v6172 = vmul.f32 %v6171, %v6169
        %v6173 = vxor.u32 %v6172, 2147483648
        %v6174 = vsel %vm6053, %v6173, %v6172
        %v6175 = vsub.s32 4, %v6151
        %v6176 = vsel %vm6053, %v6175, %v6151
        %v6177 = vsel %vm6052, %v632, %v6174
        %v6178 = vsel %vm6052, 0, %v6176
        %v6179 = vmul.f32 %v6177, %v6177
        %v6180 = vmul.f32 %v6179, -0.001358992
        %v6181 = vadd.f32 %v6180, 0.041655596
        %v6182 = vmul.f32 %v6179, %v6181
        %v6183 = vadd.f32 %v6182, -0.4999988
        %v6184 = vmul.f32 %v6179, %v6183
        %v6185 = vadd.f32 1.0, %v6184
        %v6186 = vmul.f32 %v6177, %v6177
        %v6187 = vmul.f32 %v6186, -0.00019511016
        %v6188 = vadd.f32 %v6187, 0.008332121
        %v6189 = vmul.f32 %v6186, %v6188
        %v6190 = vadd.f32 %v6189, -0.16666654
        %v6191 = vmul.f32 %v6186, %v6190
        %v6192 = vadd.f32 %v6191, 1.0
        %v6193 = vmul.f32 %v6192, %v6177
        %vm6194 = vweird.f32 %v632
        %v6195 = vand.u32 %v6178, 3
        %vm6196 = vcmp.lt.s32.totalorder %v6195, 2
        %vm6197 = vcmp.eq.s32.totalorder %v6195, 0
        %v6198 = vxor.u32 %v6193, 2147483648
        %v6199 = vsel %vm6197, %v6185, %v6198
        %vm6200 = vcmp.eq.s32.totalorder %v6195, 2
        %v6201 = vxor.u32 %v6185, 2147483648
        %v6202 = vsel %vm6200, %v6201, %v6193
        %v6203 = vsel %vm6196, %v6199, %v6202
        %v6204 = vsel %vm6194, nan, %v6203
        %v6205 = vand.u32 2147483647, %v633
        %vm6206 = vcmp.le.f32.partialorder %v6205, 0.7853982
        %vm6207 = vcmp.lt.s32.totalorder %v633, 0
        %v6208 = vand.u32 %v633, 2139095040
        %v6209 = vshrl.u32 %v6208, 23
        %v6210 = vsub.s32 %v6209, 127
        %v6211 = vand.u32 2147483647, %v633
        %v6212 = vand.u32 %v6211, 8388607
        %v6213 = vor.u32 %v6212, 8388608
        %v6214 = vsub.s32 0, %v6213
        %v6215 = vadd.s32 %v6210, 1
        %vm6216 = vcmp.gt.s32.totalorder %v6215, 0
        %v6217 = vsel %vm6216, %v6215, 0
        %v6218 = vshrl.u32 %v6217, 5
        %v6219 = vand.u32 %v6217, 31
        %v6220 = vsub.s32 32, %v6219
        %v6221 = vshrl.u32 683565275, %v6220
        %v6222 = vshll.u32 683565275, %v6219
        %v6223 = vshrl.u32 2475754826, %v6220
        %v6224 = vor.u32 %v6222, %v6223
        %v6225 = vshll.u32 2475754826, %v6219
        %v6226 = vshrl.u32 2131351028, %v6220
        %v6227 = vor.u32 %v6225, %v6226
        %v6228 = vshll.u32 2131351028, %v6219
        %v6229 = vshrl.u32 2102212464, %v6220
        %v6230 = vor.u32 %v6228, %v6229
        %v6231 = vshll.u32 2102212464, %v6219
        %v6232 = vshrl.u32 920167782, %v6220
        %v6233 = vor.u32 %v6231, %v6232
        %v6234 = vshll.u32 920167782, %v6219
        %v6235 = vshrl.u32 1326507024, %v6220
        %v6236 = vor.u32 %v6234, %v6235
        %vm6237 = vcmp.lt.s32.totalorder %v6218, 1
        %vm6238 = vcmp.lt.s32.totalorder %v6218, 2
        %vm6239 = vcmp.lt.s32.totalorder %v6218, 3
        %vm6240 = vcmp.lt.s32.totalorder %v6218, 4
        %v6241 = vsel %vm6237, %v6221, %v6224
        %v6242 = vsel %vm6240, %v6230, 2102212464
        %v6243 = vsel %vm6239, %v6227, %v6242
        %v6244 = vsel %vm6238, %v6241, %v6243
        %v6245 = vsel %vm6237, %v6224, %v6227
        %v6246 = vsel %vm6240, %v6233, 920167782
        %v6247 = vsel %vm6239, %v6230, %v6246
        %v6248 = vsel %vm6238, %v6245, %v6247
        %v6249 = vsel %vm6237, %v6227, %v6230
        %v6250 = vsel %vm6240, %v6236, 1326507024
        %v6251 = vsel %vm6239, %v6233, %v6250
        %v6252 = vsel %vm6238, %v6249, %v6251
        %v6253 = vshll.u32 %v6213, 8
        %v6254 = vand.u32 %v6253, 65535
        %v6255 = vshrl.u32 %v6253, 16
        %v6256 = vand.u32 %v6252, 65535
        %v6257 = vshrl.u32 %v6252, 16
        %v6258 = vmul.u32 %v6254, %v6256
        %v6259 = vmul.u32 %v6254, %v6257
        %v6260 = vmul.u32 %v6255, %v6256
        %v6261 = vmul.u32 %v6255, %v6257
        %v6262 = vshll.u32 %v6259, 16
        %v6263 = vshrl.u32 %v6259, 16
        %v6264 = vshll.u32 %v6260, 16
        %v6265 = vshrl.u32 %v6260, 16
        %vm6266 = vc.u32 %v6258, %v6262
        %v6267 = vsel %vm6266, 1, 0
        %v6268 = vadd.s32 %v6258, %v6262
        %v6269 = vadd.s32 %v6261, %v6267
        %vm6270 = vc.u32 %v6268, %v6264
        %v6271 = vsel %vm6270, 1, 0
        %v6272 = vadd.s32 %v6268, %v6264
        %v6273 = vadd.s32 %v6269, %v6271
        %v6274 = vadd.s32 %v6273, %v6263
        %v6275 = vadd.s32 %v6274, %v6265
        %v6276 = vand.u32 %v6253, 65535
        %v6277 = vshrl.u32 %v6253, 16
        %v6278 = vand.u32 %v6248, 65535
        %v6279 = vshrl.u32 %v6248, 16
        %v6280 = vmul.u32 %v6276, %v6278
        %v6281 = vmul.u32 %v6276, %v6279
        %v6282 = vmul.u32 %v6277, %v6278
        %v6283 = vmul.u32 %v6277, %v6279
        %v6284 = vshll.u32 %v6281, 16
        %v6285 = vshrl.u32 %v6281, 16
        %v6286 = vshll.u32 %v6282, 16
        %v6287 = vshrl.u32 %v6282, 16
        %vm6288 = vc.u32 %v6280, %v6284
        %v6289 = vsel %vm6288, 1, 0
        %v6290 = vadd.s32 %v6280, %v6284
        %v6291 = vadd.s32 %v6283, %v6289
        %vm6292 = vc.u32 %v6290, %v6286
        %v6293 = vsel %vm6292, 1, 0
        %v6294 = vadd.s32 %v6290, %v6286
        %v6295 = vadd.s32 %v6291, %v6293
        %v6296 = vadd.s32 %v6295, %v6285
        %v6297 = vadd.s32 %v6296, %v6287
        %v6298 = vmul.u32 %v6253, %v6244
        %v6299 = vadd.s32 %v6275, %v6294
        %vm6300 = vc.u32 %v6275, %v6294
        %v6301 = vadd.s32 %v6297, 1
        %v6302 = vsel %vm6300, %v6301, %v6297
        %v6303 = vadd.s32 %v6298, %v6302
        %v6304 = vadd.s32 %v6303, 536870912
        %v6305 = vshrl.u32 %v6304, 30
        %v6306 = vshll.u32 %v6305, 30
        %v6307 = vsub.s32 %v6303, %v6306
        %vm6308 = vcmp.lt.s32.totalorder %v6307, 0
        %v6309 = vsub.s32 0, %v6307
        %v6310 = vsel %vm6308, %v6309, %v6307
        %v6311 = vclz %v6310
        %v6312 = vsub.s32 %v6311, 2
        %vm6313 = vcmp.gt.s32.totalorder 0, %v6312
        %v6314 = vsel %vm6313, 0, %v6312
        %v6315 = vsub.s32 32, %v6314
        %v6316 = vshll.u32 %v6307, %v6314
        %v6317 = vshrl.u32 %v6299, %v6315
        %v6318 = vor.u32 %v6316, %v6317
        %v6319 = vsub.s32 4294967266, %v6314
        %v6320 = vadd.s32 %v6319, 127
        %v6321 = vshll.u32 %v6320, 23
        %v6322 = vor.u32 4788187, %v6321
        %v6323 = vand.u32 2147483647, %v6322
        %v6325 = vcvt.s32.f32 %v6318
        %v6326 = vmul.f32 %v6325, %v6323
        %v6327 = vxor.u32 %v6326, 2147483648
        %v6328 = vsel %vm6207, %v6327, %v6326
        %v6329 = vsub.s32 4, %v6305
        %v6330 = vsel %vm6207, %v6329, %v6305
        %v6331 = vsel %vm6206, %v633, %v6328
        %v6332 = vsel %vm6206, 0, %v6330
        %v6333 = vmul.f32 %v6331, %v6331
        %v6334 = vmul.f32 %v6333, -0.001358992
        %v6335 = vadd.f32 %v6334, 0.041655596
        %v6336 = vmul.f32 %v6333, %v6335
        %v6337 = vadd.f32 %v6336, -0.4999988
        %v6338 = vmul.f32 %v6333, %v6337
        %v6339 = vadd.f32 1.0, %v6338
        %v6340 = vmul.f32 %v6331, %v6331
        %v6341 = vmul.f32 %v6340, -0.00019511016
        %v6342 = vadd.f32 %v6341, 0.008332121
        %v6343 = vmul.f32 %v6340, %v6342
        %v6344 = vadd.f32 %v6343, -0.16666654
        %v6345 = vmul.f32 %v6340, %v6344
        %v6346 = vadd.f32 %v6345, 1.0
        %v6347 = vmul.f32 %v6346, %v6331
        %vm6348 = vweird.f32 %v633
        %v6349 = vand.u32 %v6332, 3
        %vm6350 = vcmp.lt.s32.totalorder %v6349, 2
        %vm6351 = vcmp.eq.s32.totalorder %v6349, 0
        %v6352 = vxor.u32 %v6347, 2147483648
        %v6353 = vsel %vm6351, %v6339, %v6352
        %vm6354 = vcmp.eq.s32.totalorder %v6349, 2
        %v6355 = vxor.u32 %v6339, 2147483648
        %v6356 = vsel %vm6354, %v6355, %v6347
        %v6357 = vsel %vm6350, %v6353, %v6356
        %v6358 = vsel %vm6348, nan, %v6357
        %v6359 = vand.u32 2147483647, %v634
        %vm6360 = vcmp.le.f32.partialorder %v6359, 0.7853982
        %vm6361 = vcmp.lt.s32.totalorder %v634, 0
        %v6362 = vand.u32 %v634, 2139095040
        %v6363 = vshrl.u32 %v6362, 23
        %v6364 = vsub.s32 %v6363, 127
        %v6365 = vand.u32 2147483647, %v634
        %v6366 = vand.u32 %v6365, 8388607
        %v6367 = vor.u32 %v6366, 8388608
        %v6368 = vsub.s32 0, %v6367
        %v6369 = vadd.s32 %v6364, 1
        %vm6370 = vcmp.gt.s32.totalorder %v6369, 0
        %v6371 = vsel %vm6370, %v6369, 0
        %v6372 = vshrl.u32 %v6371, 5
        %v6373 = vand.u32 %v6371, 31
        %v6374 = vsub.s32 32, %v6373
        %v6375 = vshrl.u32 683565275, %v6374
        %v6376 = vshll.u32 683565275, %v6373
        %v6377 = vshrl.u32 2475754826, %v6374
        %v6378 = vor.u32 %v6376, %v6377
        %v6379 = vshll.u32 2475754826, %v6373
        %v6380 = vshrl.u32 2131351028, %v6374
        %v6381 = vor.u32 %v6379, %v6380
        %v6382 = vshll.u32 2131351028, %v6373
        %v6383 = vshrl.u32 2102212464, %v6374
        %v6384 = vor.u32 %v6382, %v6383
        %v6385 = vshll.u32 2102212464, %v6373
        %v6386 = vshrl.u32 920167782, %v6374
        %v6387 = vor.u32 %v6385, %v6386
        %v6388 = vshll.u32 920167782, %v6373
        %v6389 = vshrl.u32 1326507024, %v6374
        %v6390 = vor.u32 %v6388, %v6389
        %vm6391 = vcmp.lt.s32.totalorder %v6372, 1
        %vm6392 = vcmp.lt.s32.totalorder %v6372, 2
        %vm6393 = vcmp.lt.s32.totalorder %v6372, 3
        %vm6394 = vcmp.lt.s32.totalorder %v6372, 4
        %v6395 = vsel %vm6391, %v6375, %v6378
        %v6396 = vsel %vm6394, %v6384, 2102212464
        %v6397 = vsel %vm6393, %v6381, %v6396
        %v6398 = vsel %vm6392, %v6395, %v6397
        %v6399 = vsel %vm6391, %v6378, %v6381
        %v6400 = vsel %vm6394, %v6387, 920167782
        %v6401 = vsel %vm6393, %v6384, %v6400
        %v6402 = vsel %vm6392, %v6399, %v6401
        %v6403 = vsel %vm6391, %v6381, %v6384
        %v6404 = vsel %vm6394, %v6390, 1326507024
        %v6405 = vsel %vm6393, %v6387, %v6404
        %v6406 = vsel %vm6392, %v6403, %v6405
        %v6407 = vshll.u32 %v6367, 8
        %v6408 = vand.u32 %v6407, 65535
        %v6409 = vshrl.u32 %v6407, 16
        %v6410 = vand.u32 %v6406, 65535
        %v6411 = vshrl.u32 %v6406, 16
        %v6412 = vmul.u32 %v6408, %v6410
        %v6413 = vmul.u32 %v6408, %v6411
        %v6414 = vmul.u32 %v6409, %v6410
        %v6415 = vmul.u32 %v6409, %v6411
        %v6416 = vshll.u32 %v6413, 16
        %v6417 = vshrl.u32 %v6413, 16
        %v6418 = vshll.u32 %v6414, 16
        %v6419 = vshrl.u32 %v6414, 16
        %vm6420 = vc.u32 %v6412, %v6416
        %v6421 = vsel %vm6420, 1, 0
        %v6422 = vadd.s32 %v6412, %v6416
        %v6423 = vadd.s32 %v6415, %v6421
        %vm6424 = vc.u32 %v6422, %v6418
        %v6425 = vsel %vm6424, 1, 0
        %v6426 = vadd.s32 %v6422, %v6418
        %v6427 = vadd.s32 %v6423, %v6425
        %v6428 = vadd.s32 %v6427, %v6417
        %v6429 = vadd.s32 %v6428, %v6419
        %v6430 = vand.u32 %v6407, 65535
        %v6431 = vshrl.u32 %v6407, 16
        %v6432 = vand.u32 %v6402, 65535
        %v6433 = vshrl.u32 %v6402, 16
        %v6434 = vmul.u32 %v6430, %v6432
        %v6435 = vmul.u32 %v6430, %v6433
        %v6436 = vmul.u32 %v6431, %v6432
        %v6437 = vmul.u32 %v6431, %v6433
        %v6438 = vshll.u32 %v6435, 16
        %v6439 = vshrl.u32 %v6435, 16
        %v6440 = vshll.u32 %v6436, 16
        %v6441 = vshrl.u32 %v6436, 16
        %vm6442 = vc.u32 %v6434, %v6438
        %v6443 = vsel %vm6442, 1, 0
        %v6444 = vadd.s32 %v6434, %v6438
        %v6445 = vadd.s32 %v6437, %v6443
        %vm6446 = vc.u32 %v6444, %v6440
        %v6447 = vsel %vm6446, 1, 0
        %v6448 = vadd.s32 %v6444, %v6440
        %v6449 = vadd.s32 %v6445, %v6447
        %v6450 = vadd.s32 %v6449, %v6439
        %v6451 = vadd.s32 %v6450, %v6441
        %v6452 = vmul.u32 %v6407, %v6398
        %v6453 = vadd.s32 %v6429, %v6448
        %vm6454 = vc.u32 %v6429, %v6448
        %v6455 = vadd.s32 %v6451, 1
        %v6456 = vsel %vm6454, %v6455, %v6451
        %v6457 = vadd.s32 %v6452, %v6456
        %v6458 = vadd.s32 %v6457, 536870912
        %v6459 = vshrl.u32 %v6458, 30
        %v6460 = vshll.u32 %v6459, 30
        %v6461 = vsub.s32 %v6457, %v6460
        %vm6462 = vcmp.lt.s32.totalorder %v6461, 0
        %v6463 = vsub.s32 0, %v6461
        %v6464 = vsel %vm6462, %v6463, %v6461
        %v6465 = vclz %v6464
        %v6466 = vsub.s32 %v6465, 2
        %vm6467 = vcmp.gt.s32.totalorder 0, %v6466
        %v6468 = vsel %vm6467, 0, %v6466
        %v6469 = vsub.s32 32, %v6468
        %v6470 = vshll.u32 %v6461, %v6468
        %v6471 = vshrl.u32 %v6453, %v6469
        %v6472 = vor.u32 %v6470, %v6471
        %v6473 = vsub.s32 4294967266, %v6468
        %v6474 = vadd.s32 %v6473, 127
        %v6475 = vshll.u32 %v6474, 23
        %v6476 = vor.u32 4788187, %v6475
        %v6477 = vand.u32 2147483647, %v6476
        %v6479 = vcvt.s32.f32 %v6472
        %v6480 = vmul.f32 %v6479, %v6477
        %v6481 = vxor.u32 %v6480, 2147483648
        %v6482 = vsel %vm6361, %v6481, %v6480
        %v6483 = vsub.s32 4, %v6459
        %v6484 = vsel %vm6361, %v6483, %v6459
        %v6485 = vsel %vm6360, %v634, %v6482
        %v6486 = vsel %vm6360, 0, %v6484
        %v6487 = vmul.f32 %v6485, %v6485
        %v6488 = vmul.f32 %v6487, -0.001358992
        %v6489 = vadd.f32 %v6488, 0.041655596
        %v6490 = vmul.f32 %v6487, %v6489
        %v6491 = vadd.f32 %v6490, -0.4999988
        %v6492 = vmul.f32 %v6487, %v6491
        %v6493 = vadd.f32 1.0, %v6492
        %v6494 = vmul.f32 %v6485, %v6485
        %v6495 = vmul.f32 %v6494, -0.00019511016
        %v6496 = vadd.f32 %v6495, 0.008332121
        %v6497 = vmul.f32 %v6494, %v6496
        %v6498 = vadd.f32 %v6497, -0.16666654
        %v6499 = vmul.f32 %v6494, %v6498
        %v6500 = vadd.f32 %v6499, 1.0
        %v6501 = vmul.f32 %v6500, %v6485
        %vm6502 = vweird.f32 %v634
        %v6503 = vand.u32 %v6486, 3
        %vm6504 = vcmp.lt.s32.totalorder %v6503, 2
        %vm6505 = vcmp.eq.s32.totalorder %v6503, 0
        %v6506 = vxor.u32 %v6501, 2147483648
        %v6507 = vsel %vm6505, %v6493, %v6506
        %vm6508 = vcmp.eq.s32.totalorder %v6503, 2
        %v6509 = vxor.u32 %v6493, 2147483648
        %v6510 = vsel %vm6508, %v6509, %v6501
        %v6511 = vsel %vm6504, %v6507, %v6510
        %v6512 = vsel %vm6502, nan, %v6511
        %v6513 = vand.u32 2147483647, %v635
        %vm6514 = vcmp.le.f32.partialorder %v6513, 0.7853982
        %vm6515 = vcmp.lt.s32.totalorder %v635, 0
        %v6516 = vand.u32 %v635, 2139095040
        %v6517 = vshrl.u32 %v6516, 23
        %v6518 = vsub.s32 %v6517, 127
        %v6519 = vand.u32 2147483647, %v635
        %v6520 = vand.u32 %v6519, 8388607
        %v6521 = vor.u32 %v6520, 8388608
        %v6522 = vsub.s32 0, %v6521
        %v6523 = vadd.s32 %v6518, 1
        %vm6524 = vcmp.gt.s32.totalorder %v6523, 0
        %v6525 = vsel %vm6524, %v6523, 0
        %v6526 = vshrl.u32 %v6525, 5
        %v6527 = vand.u32 %v6525, 31
        %v6528 = vsub.s32 32, %v6527
        %v6529 = vshrl.u32 683565275, %v6528
        %v6530 = vshll.u32 683565275, %v6527
        %v6531 = vshrl.u32 2475754826, %v6528
        %v6532 = vor.u32 %v6530, %v6531
        %v6533 = vshll.u32 2475754826, %v6527
        %v6534 = vshrl.u32 2131351028, %v6528
        %v6535 = vor.u32 %v6533, %v6534
        %v6536 = vshll.u32 2131351028, %v6527
        %v6537 = vshrl.u32 2102212464, %v6528
        %v6538 = vor.u32 %v6536, %v6537
        %v6539 = vshll.u32 2102212464, %v6527
        %v6540 = vshrl.u32 920167782, %v6528
        %v6541 = vor.u32 %v6539, %v6540
        %v6542 = vshll.u32 920167782, %v6527
        %v6543 = vshrl.u32 1326507024, %v6528
        %v6544 = vor.u32 %v6542, %v6543
        %vm6545 = vcmp.lt.s32.totalorder %v6526, 1
        %vm6546 = vcmp.lt.s32.totalorder %v6526, 2
        %vm6547 = vcmp.lt.s32.totalorder %v6526, 3
        %vm6548 = vcmp.lt.s32.totalorder %v6526, 4
        %v6549 = vsel %vm6545, %v6529, %v6532
        %v6550 = vsel %vm6548, %v6538, 2102212464
        %v6551 = vsel %vm6547, %v6535, %v6550
        %v6552 = vsel %vm6546, %v6549, %v6551
        %v6553 = vsel %vm6545, %v6532, %v6535
        %v6554 = vsel %vm6548, %v6541, 920167782
        %v6555 = vsel %vm6547, %v6538, %v6554
        %v6556 = vsel %vm6546, %v6553, %v6555
        %v6557 = vsel %vm6545, %v6535, %v6538
        %v6558 = vsel %vm6548, %v6544, 1326507024
        %v6559 = vsel %vm6547, %v6541, %v6558
        %v6560 = vsel %vm6546, %v6557, %v6559
        %v6561 = vshll.u32 %v6521, 8
        %v6562 = vand.u32 %v6561, 65535
        %v6563 = vshrl.u32 %v6561, 16
        %v6564 = vand.u32 %v6560, 65535
        %v6565 = vshrl.u32 %v6560, 16
        %v6566 = vmul.u32 %v6562, %v6564
        %v6567 = vmul.u32 %v6562, %v6565
        %v6568 = vmul.u32 %v6563, %v6564
        %v6569 = vmul.u32 %v6563, %v6565
        %v6570 = vshll.u32 %v6567, 16
        %v6571 = vshrl.u32 %v6567, 16
        %v6572 = vshll.u32 %v6568, 16
        %v6573 = vshrl.u32 %v6568, 16
        %vm6574 = vc.u32 %v6566, %v6570
        %v6575 = vsel %vm6574, 1, 0
        %v6576 = vadd.s32 %v6566, %v6570
        %v6577 = vadd.s32 %v6569, %v6575
        %vm6578 = vc.u32 %v6576, %v6572
        %v6579 = vsel %vm6578, 1, 0
        %v6580 = vadd.s32 %v6576, %v6572
        %v6581 = vadd.s32 %v6577, %v6579
        %v6582 = vadd.s32 %v6581, %v6571
        %v6583 = vadd.s32 %v6582, %v6573
        %v6584 = vand.u32 %v6561, 65535
        %v6585 = vshrl.u32 %v6561, 16
        %v6586 = vand.u32 %v6556, 65535
        %v6587 = vshrl.u32 %v6556, 16
        %v6588 = vmul.u32 %v6584, %v6586
        %v6589 = vmul.u32 %v6584, %v6587
        %v6590 = vmul.u32 %v6585, %v6586
        %v6591 = vmul.u32 %v6585, %v6587
        %v6592 = vshll.u32 %v6589, 16
        %v6593 = vshrl.u32 %v6589, 16
        %v6594 = vshll.u32 %v6590, 16
        %v6595 = vshrl.u32 %v6590, 16
        %vm6596 = vc.u32 %v6588, %v6592
        %v6597 = vsel %vm6596, 1, 0
        %v6598 = vadd.s32 %v6588, %v6592
        %v6599 = vadd.s32 %v6591, %v6597
        %vm6600 = vc.u32 %v6598, %v6594
        %v6601 = vsel %vm6600, 1, 0
        %v6602 = vadd.s32 %v6598, %v6594
        %v6603 = vadd.s32 %v6599, %v6601
        %v6604 = vadd.s32 %v6603, %v6593
        %v6605 = vadd.s32 %v6604, %v6595
        %v6606 = vmul.u32 %v6561, %v6552
        %v6607 = vadd.s32 %v6583, %v6602
        %vm6608 = vc.u32 %v6583, %v6602
        %v6609 = vadd.s32 %v6605, 1
        %v6610 = vsel %vm6608, %v6609, %v6605
        %v6611 = vadd.s32 %v6606, %v6610
        %v6612 = vadd.s32 %v6611, 536870912
        %v6613 = vshrl.u32 %v6612, 30
        %v6614 = vshll.u32 %v6613, 30
        %v6615 = vsub.s32 %v6611, %v6614
        %vm6616 = vcmp.lt.s32.totalorder %v6615, 0
        %v6617 = vsub.s32 0, %v6615
        %v6618 = vsel %vm6616, %v6617, %v6615
        %v6619 = vclz %v6618
        %v6620 = vsub.s32 %v6619, 2
        %vm6621 = vcmp.gt.s32.totalorder 0, %v6620
        %v6622 = vsel %vm6621, 0, %v6620
        %v6623 = vsub.s32 32, %v6622
        %v6624 = vshll.u32 %v6615, %v6622
        %v6625 = vshrl.u32 %v6607, %v6623
        %v6626 = vor.u32 %v6624, %v6625
        %v6627 = vsub.s32 4294967266, %v6622
        %v6628 = vadd.s32 %v6627, 127
        %v6629 = vshll.u32 %v6628, 23
        %v6630 = vor.u32 4788187, %v6629
        %v6631 = vand.u32 2147483647, %v6630
        %v6633 = vcvt.s32.f32 %v6626
        %v6634 = vmul.f32 %v6633, %v6631
        %v6635 = vxor.u32 %v6634, 2147483648
        %v6636 = vsel %vm6515, %v6635, %v6634
        %v6637 = vsub.s32 4, %v6613
        %v6638 = vsel %vm6515, %v6637, %v6613
        %v6639 = vsel %vm6514, %v635, %v6636
        %v6640 = vsel %vm6514, 0, %v6638
        %v6641 = vmul.f32 %v6639, %v6639
        %v6642 = vmul.f32 %v6641, -0.001358992
        %v6643 = vadd.f32 %v6642, 0.041655596
        %v6644 = vmul.f32 %v6641, %v6643
        %v6645 = vadd.f32 %v6644, -0.4999988
        %v6646 = vmul.f32 %v6641, %v6645
        %v6647 = vadd.f32 1.0, %v6646
        %v6648 = vmul.f32 %v6639, %v6639
        %v6649 = vmul.f32 %v6648, -0.00019511016
        %v6650 = vadd.f32 %v6649, 0.008332121
        %v6651 = vmul.f32 %v6648, %v6650
        %v6652 = vadd.f32 %v6651, -0.16666654
        %v6653 = vmul.f32 %v6648, %v6652
        %v6654 = vadd.f32 %v6653, 1.0
        %v6655 = vmul.f32 %v6654, %v6639
        %vm6656 = vweird.f32 %v635
        %v6657 = vand.u32 %v6640, 3
        %vm6658 = vcmp.lt.s32.totalorder %v6657, 2
        %vm6659 = vcmp.eq.s32.totalorder %v6657, 0
        %v6660 = vxor.u32 %v6655, 2147483648
        %v6661 = vsel %vm6659, %v6647, %v6660
        %vm6662 = vcmp.eq.s32.totalorder %v6657, 2
        %v6663 = vxor.u32 %v6647, 2147483648
        %v6664 = vsel %vm6662, %v6663, %v6655
        %v6665 = vsel %vm6658, %v6661, %v6664
        %v6666 = vsel %vm6656, nan, %v6665
        %v6667 = vand.u32 2147483647, %v636
        %vm6668 = vcmp.le.f32.partialorder %v6667, 0.7853982
        %vm6669 = vcmp.lt.s32.totalorder %v636, 0
        %v6670 = vand.u32 %v636, 2139095040
        %v6671 = vshrl.u32 %v6670, 23
        %v6672 = vsub.s32 %v6671, 127
        %v6673 = vand.u32 2147483647, %v636
        %v6674 = vand.u32 %v6673, 8388607
        %v6675 = vor.u32 %v6674, 8388608
        %v6676 = vsub.s32 0, %v6675
        %v6677 = vadd.s32 %v6672, 1
        %vm6678 = vcmp.gt.s32.totalorder %v6677, 0
        %v6679 = vsel %vm6678, %v6677, 0
        %v6680 = vshrl.u32 %v6679, 5
        %v6681 = vand.u32 %v6679, 31
        %v6682 = vsub.s32 32, %v6681
        %v6683 = vshrl.u32 683565275, %v6682
        %v6684 = vshll.u32 683565275, %v6681
        %v6685 = vshrl.u32 2475754826, %v6682
        %v6686 = vor.u32 %v6684, %v6685
        %v6687 = vshll.u32 2475754826, %v6681
        %v6688 = vshrl.u32 2131351028, %v6682
        %v6689 = vor.u32 %v6687, %v6688
        %v6690 = vshll.u32 2131351028, %v6681
        %v6691 = vshrl.u32 2102212464, %v6682
        %v6692 = vor.u32 %v6690, %v6691
        %v6693 = vshll.u32 2102212464, %v6681
        %v6694 = vshrl.u32 920167782, %v6682
        %v6695 = vor.u32 %v6693, %v6694
        %v6696 = vshll.u32 920167782, %v6681
        %v6697 = vshrl.u32 1326507024, %v6682
        %v6698 = vor.u32 %v6696, %v6697
        %vm6699 = vcmp.lt.s32.totalorder %v6680, 1
        %vm6700 = vcmp.lt.s32.totalorder %v6680, 2
        %vm6701 = vcmp.lt.s32.totalorder %v6680, 3
        %vm6702 = vcmp.lt.s32.totalorder %v6680, 4
        %v6703 = vsel %vm6699, %v6683, %v6686
        %v6704 = vsel %vm6702, %v6692, 2102212464
        %v6705 = vsel %vm6701, %v6689, %v6704
        %v6706 = vsel %vm6700, %v6703, %v6705
        %v6707 = vsel %vm6699, %v6686, %v6689
        %v6708 = vsel %vm6702, %v6695, 920167782
        %v6709 = vsel %vm6701, %v6692, %v6708
        %v6710 = vsel %vm6700, %v6707, %v6709
        %v6711 = vsel %vm6699, %v6689, %v6692
        %v6712 = vsel %vm6702, %v6698, 1326507024
        %v6713 = vsel %vm6701, %v6695, %v6712
        %v6714 = vsel %vm6700, %v6711, %v6713
        %v6715 = vshll.u32 %v6675, 8
        %v6716 = vand.u32 %v6715, 65535
        %v6717 = vshrl.u32 %v6715, 16
        %v6718 = vand.u32 %v6714, 65535
        %v6719 = vshrl.u32 %v6714, 16
        %v6720 = vmul.u32 %v6716, %v6718
        %v6721 = vmul.u32 %v6716, %v6719
        %v6722 = vmul.u32 %v6717, %v6718
        %v6723 = vmul.u32 %v6717, %v6719
        %v6724 = vshll.u32 %v6721, 16
        %v6725 = vshrl.u32 %v6721, 16
        %v6726 = vshll.u32 %v6722, 16
        %v6727 = vshrl.u32 %v6722, 16
        %vm6728 = vc.u32 %v6720, %v6724
        %v6729 = vsel %vm6728, 1, 0
        %v6730 = vadd.s32 %v6720, %v6724
        %v6731 = vadd.s32 %v6723, %v6729
        %vm6732 = vc.u32 %v6730, %v6726
        %v6733 = vsel %vm6732, 1, 0
        %v6734 = vadd.s32 %v6730, %v6726
        %v6735 = vadd.s32 %v6731, %v6733
        %v6736 = vadd.s32 %v6735, %v6725
        %v6737 = vadd.s32 %v6736, %v6727
        %v6738 = vand.u32 %v6715, 65535
        %v6739 = vshrl.u32 %v6715, 16
        %v6740 = vand.u32 %v6710, 65535
        %v6741 = vshrl.u32 %v6710, 16
        %v6742 = vmul.u32 %v6738, %v6740
        %v6743 = vmul.u32 %v6738, %v6741
        %v6744 = vmul.u32 %v6739, %v6740
        %v6745 = vmul.u32 %v6739, %v6741
        %v6746 = vshll.u32 %v6743, 16
        %v6747 = vshrl.u32 %v6743, 16
        %v6748 = vshll.u32 %v6744, 16
        %v6749 = vshrl.u32 %v6744, 16
        %vm6750 = vc.u32 %v6742, %v6746
        %v6751 = vsel %vm6750, 1, 0
        %v6752 = vadd.s32 %v6742, %v6746
        %v6753 = vadd.s32 %v6745, %v6751
        %vm6754 = vc.u32 %v6752, %v6748
        %v6755 = vsel %vm6754, 1, 0
        %v6756 = vadd.s32 %v6752, %v6748
        %v6757 = vadd.s32 %v6753, %v6755
        %v6758 = vadd.s32 %v6757, %v6747
        %v6759 = vadd.s32 %v6758, %v6749
        %v6760 = vmul.u32 %v6715, %v6706
        %v6761 = vadd.s32 %v6737, %v6756
        %vm6762 = vc.u32 %v6737, %v6756
        %v6763 = vadd.s32 %v6759, 1
        %v6764 = vsel %vm6762, %v6763, %v6759
        %v6765 = vadd.s32 %v6760, %v6764
        %v6766 = vadd.s32 %v6765, 536870912
        %v6767 = vshrl.u32 %v6766, 30
        %v6768 = vshll.u32 %v6767, 30
        %v6769 = vsub.s32 %v6765, %v6768
        %vm6770 = vcmp.lt.s32.totalorder %v6769, 0
        %v6771 = vsub.s32 0, %v6769
        %v6772 = vsel %vm6770, %v6771, %v6769
        %v6773 = vclz %v6772
        %v6774 = vsub.s32 %v6773, 2
        %vm6775 = vcmp.gt.s32.totalorder 0, %v6774
        %v6776 = vsel %vm6775, 0, %v6774
        %v6777 = vsub.s32 32, %v6776
        %v6778 = vshll.u32 %v6769, %v6776
        %v6779 = vshrl.u32 %v6761, %v6777
        %v6780 = vor.u32 %v6778, %v6779
        %v6781 = vsub.s32 4294967266, %v6776
        %v6782 = vadd.s32 %v6781, 127
        %v6783 = vshll.u32 %v6782, 23
        %v6784 = vor.u32 4788187, %v6783
        %v6785 = vand.u32 2147483647, %v6784
        %v6787 = vcvt.s32.f32 %v6780
        %v6788 = vmul.f32 %v6787, %v6785
        %v6789 = vxor.u32 %v6788, 2147483648
        %v6790 = vsel %vm6669, %v6789, %v6788
        %v6791 = vsub.s32 4, %v6767
        %v6792 = vsel %vm6669, %v6791, %v6767
        %v6793 = vsel %vm6668, %v636, %v6790
        %v6794 = vsel %vm6668, 0, %v6792
        %v6795 = vmul.f32 %v6793, %v6793
        %v6796 = vmul.f32 %v6795, -0.001358992
        %v6797 = vadd.f32 %v6796, 0.041655596
        %v6798 = vmul.f32 %v6795, %v6797
        %v6799 = vadd.f32 %v6798, -0.4999988
        %v6800 = vmul.f32 %v6795, %v6799
        %v6801 = vadd.f32 1.0, %v6800
        %v6802 = vmul.f32 %v6793, %v6793
        %v6803 = vmul.f32 %v6802, -0.00019511016
        %v6804 = vadd.f32 %v6803, 0.008332121
        %v6805 = vmul.f32 %v6802, %v6804
        %v6806 = vadd.f32 %v6805, -0.16666654
        %v6807 = vmul.f32 %v6802, %v6806
        %v6808 = vadd.f32 %v6807, 1.0
        %v6809 = vmul.f32 %v6808, %v6793
        %vm6810 = vweird.f32 %v636
        %v6811 = vand.u32 %v6794, 3
        %vm6812 = vcmp.lt.s32.totalorder %v6811, 2
        %vm6813 = vcmp.eq.s32.totalorder %v6811, 0
        %v6814 = vxor.u32 %v6809, 2147483648
        %v6815 = vsel %vm6813, %v6801, %v6814
        %vm6816 = vcmp.eq.s32.totalorder %v6811, 2
        %v6817 = vxor.u32 %v6801, 2147483648
        %v6818 = vsel %vm6816, %v6817, %v6809
        %v6819 = vsel %vm6812, %v6815, %v6818
        %v6820 = vsel %vm6810, nan, %v6819
        %v6821 = vand.u32 2147483647, %v637
        %vm6822 = vcmp.le.f32.partialorder %v6821, 0.7853982
        %vm6823 = vcmp.lt.s32.totalorder %v637, 0
        %v6824 = vand.u32 %v637, 2139095040
        %v6825 = vshrl.u32 %v6824, 23
        %v6826 = vsub.s32 %v6825, 127
        %v6827 = vand.u32 2147483647, %v637
        %v6828 = vand.u32 %v6827, 8388607
        %v6829 = vor.u32 %v6828, 8388608
        %v6830 = vsub.s32 0, %v6829
        %v6831 = vadd.s32 %v6826, 1
        %vm6832 = vcmp.gt.s32.totalorder %v6831, 0
        %v6833 = vsel %vm6832, %v6831, 0
        %v6834 = vshrl.u32 %v6833, 5
        %v6835 = vand.u32 %v6833, 31
        %v6836 = vsub.s32 32, %v6835
        %v6837 = vshrl.u32 683565275, %v6836
        %v6838 = vshll.u32 683565275, %v6835
        %v6839 = vshrl.u32 2475754826, %v6836
        %v6840 = vor.u32 %v6838, %v6839
        %v6841 = vshll.u32 2475754826, %v6835
        %v6842 = vshrl.u32 2131351028, %v6836
        %v6843 = vor.u32 %v6841, %v6842
        %v6844 = vshll.u32 2131351028, %v6835
        %v6845 = vshrl.u32 2102212464, %v6836
        %v6846 = vor.u32 %v6844, %v6845
        %v6847 = vshll.u32 2102212464, %v6835
        %v6848 = vshrl.u32 920167782, %v6836
        %v6849 = vor.u32 %v6847, %v6848
        %v6850 = vshll.u32 920167782, %v6835
        %v6851 = vshrl.u32 1326507024, %v6836
        %v6852 = vor.u32 %v6850, %v6851
        %vm6853 = vcmp.lt.s32.totalorder %v6834, 1
        %vm6854 = vcmp.lt.s32.totalorder %v6834, 2
        %vm6855 = vcmp.lt.s32.totalorder %v6834, 3
        %vm6856 = vcmp.lt.s32.totalorder %v6834, 4
        %v6857 = vsel %vm6853, %v6837, %v6840
        %v6858 = vsel %vm6856, %v6846, 2102212464
        %v6859 = vsel %vm6855, %v6843, %v6858
        %v6860 = vsel %vm6854, %v6857, %v6859
        %v6861 = vsel %vm6853, %v6840, %v6843
        %v6862 = vsel %vm6856, %v6849, 920167782
        %v6863 = vsel %vm6855, %v6846, %v6862
        %v6864 = vsel %vm6854, %v6861, %v6863
        %v6865 = vsel %vm6853, %v6843, %v6846
        %v6866 = vsel %vm6856, %v6852, 1326507024
        %v6867 = vsel %vm6855, %v6849, %v6866
        %v6868 = vsel %vm6854, %v6865, %v6867
        %v6869 = vshll.u32 %v6829, 8
        %v6870 = vand.u32 %v6869, 65535
        %v6871 = vshrl.u32 %v6869, 16
        %v6872 = vand.u32 %v6868, 65535
        %v6873 = vshrl.u32 %v6868, 16
        %v6874 = vmul.u32 %v6870, %v6872
        %v6875 = vmul.u32 %v6870, %v6873
        %v6876 = vmul.u32 %v6871, %v6872
        %v6877 = vmul.u32 %v6871, %v6873
        %v6878 = vshll.u32 %v6875, 16
        %v6879 = vshrl.u32 %v6875, 16
        %v6880 = vshll.u32 %v6876, 16
        %v6881 = vshrl.u32 %v6876, 16
        %vm6882 = vc.u32 %v6874, %v6878
        %v6883 = vsel %vm6882, 1, 0
        %v6884 = vadd.s32 %v6874, %v6878
        %v6885 = vadd.s32 %v6877, %v6883
        %vm6886 = vc.u32 %v6884, %v6880
        %v6887 = vsel %vm6886, 1, 0
        %v6888 = vadd.s32 %v6884, %v6880
        %v6889 = vadd.s32 %v6885, %v6887
        %v6890 = vadd.s32 %v6889, %v6879
        %v6891 = vadd.s32 %v6890, %v6881
        %v6892 = vand.u32 %v6869, 65535
        %v6893 = vshrl.u32 %v6869, 16
        %v6894 = vand.u32 %v6864, 65535
        %v6895 = vshrl.u32 %v6864, 16
        %v6896 = vmul.u32 %v6892, %v6894
        %v6897 = vmul.u32 %v6892, %v6895
        %v6898 = vmul.u32 %v6893, %v6894
        %v6899 = vmul.u32 %v6893, %v6895
        %v6900 = vshll.u32 %v6897, 16
        %v6901 = vshrl.u32 %v6897, 16
        %v6902 = vshll.u32 %v6898, 16
        %v6903 = vshrl.u32 %v6898, 16
        %vm6904 = vc.u32 %v6896, %v6900
        %v6905 = vsel %vm6904, 1, 0
        %v6906 = vadd.s32 %v6896, %v6900
        %v6907 = vadd.s32 %v6899, %v6905
        %vm6908 = vc.u32 %v6906, %v6902
        %v6909 = vsel %vm6908, 1, 0
        %v6910 = vadd.s32 %v6906, %v6902
        %v6911 = vadd.s32 %v6907, %v6909
        %v6912 = vadd.s32 %v6911, %v6901
        %v6913 = vadd.s32 %v6912, %v6903
        %v6914 = vmul.u32 %v6869, %v6860
        %v6915 = vadd.s32 %v6891, %v6910
        %vm6916 = vc.u32 %v6891, %v6910
        %v6917 = vadd.s32 %v6913, 1
        %v6918 = vsel %vm6916, %v6917, %v6913
        %v6919 = vadd.s32 %v6914, %v6918
        %v6920 = vadd.s32 %v6919, 536870912
        %v6921 = vshrl.u32 %v6920, 30
        %v6922 = vshll.u32 %v6921, 30
        %v6923 = vsub.s32 %v6919, %v6922
        %vm6924 = vcmp.lt.s32.totalorder %v6923, 0
        %v6925 = vsub.s32 0, %v6923
        %v6926 = vsel %vm6924, %v6925, %v6923
        %v6927 = vclz %v6926
        %v6928 = vsub.s32 %v6927, 2
        %vm6929 = vcmp.gt.s32.totalorder 0, %v6928
        %v6930 = vsel %vm6929, 0, %v6928
        %v6931 = vsub.s32 32, %v6930
        %v6932 = vshll.u32 %v6923, %v6930
        %v6933 = vshrl.u32 %v6915, %v6931
        %v6934 = vor.u32 %v6932, %v6933
        %v6935 = vsub.s32 4294967266, %v6930
        %v6936 = vadd.s32 %v6935, 127
        %v6937 = vshll.u32 %v6936, 23
        %v6938 = vor.u32 4788187, %v6937
        %v6939 = vand.u32 2147483647, %v6938
        %v6941 = vcvt.s32.f32 %v6934
        %v6942 = vmul.f32 %v6941, %v6939
        %v6943 = vxor.u32 %v6942, 2147483648
        %v6944 = vsel %vm6823, %v6943, %v6942
        %v6945 = vsub.s32 4, %v6921
        %v6946 = vsel %vm6823, %v6945, %v6921
        %v6947 = vsel %vm6822, %v637, %v6944
        %v6948 = vsel %vm6822, 0, %v6946
        %v6949 = vmul.f32 %v6947, %v6947
        %v6950 = vmul.f32 %v6949, -0.001358992
        %v6951 = vadd.f32 %v6950, 0.041655596
        %v6952 = vmul.f32 %v6949, %v6951
        %v6953 = vadd.f32 %v6952, -0.4999988
        %v6954 = vmul.f32 %v6949, %v6953
        %v6955 = vadd.f32 1.0, %v6954
        %v6956 = vmul.f32 %v6947, %v6947
        %v6957 = vmul.f32 %v6956, -0.00019511016
        %v6958 = vadd.f32 %v6957, 0.008332121
        %v6959 = vmul.f32 %v6956, %v6958
        %v6960 = vadd.f32 %v6959, -0.16666654
        %v6961 = vmul.f32 %v6956, %v6960
        %v6962 = vadd.f32 %v6961, 1.0
        %v6963 = vmul.f32 %v6962, %v6947
        %vm6964 = vweird.f32 %v637
        %v6965 = vand.u32 %v6948, 3
        %vm6966 = vcmp.lt.s32.totalorder %v6965, 2
        %vm6967 = vcmp.eq.s32.totalorder %v6965, 0
        %v6968 = vxor.u32 %v6963, 2147483648
        %v6969 = vsel %vm6967, %v6955, %v6968
        %vm6970 = vcmp.eq.s32.totalorder %v6965, 2
        %v6971 = vxor.u32 %v6955, 2147483648
        %v6972 = vsel %vm6970, %v6971, %v6963
        %v6973 = vsel %vm6966, %v6969, %v6972
        %v6974 = vsel %vm6964, nan, %v6973
        %v6975 = vand.u32 2147483647, %v638
        %vm6976 = vcmp.le.f32.partialorder %v6975, 0.7853982
        %vm6977 = vcmp.lt.s32.totalorder %v638, 0
        %v6978 = vand.u32 %v638, 2139095040
        %v6979 = vshrl.u32 %v6978, 23
        %v6980 = vsub.s32 %v6979, 127
        %v6981 = vand.u32 2147483647, %v638
        %v6982 = vand.u32 %v6981, 8388607
        %v6983 = vor.u32 %v6982, 8388608
        %v6984 = vsub.s32 0, %v6983
        %v6985 = vadd.s32 %v6980, 1
        %vm6986 = vcmp.gt.s32.totalorder %v6985, 0
        %v6987 = vsel %vm6986, %v6985, 0
        %v6988 = vshrl.u32 %v6987, 5
        %v6989 = vand.u32 %v6987, 31
        %v6990 = vsub.s32 32, %v6989
        %v6991 = vshrl.u32 683565275, %v6990
        %v6992 = vshll.u32 683565275, %v6989
        %v6993 = vshrl.u32 2475754826, %v6990
        %v6994 = vor.u32 %v6992, %v6993
        %v6995 = vshll.u32 2475754826, %v6989
        %v6996 = vshrl.u32 2131351028, %v6990
        %v6997 = vor.u32 %v6995, %v6996
        %v6998 = vshll.u32 2131351028, %v6989
        %v6999 = vshrl.u32 2102212464, %v6990
        %v7000 = vor.u32 %v6998, %v6999
        %v7001 = vshll.u32 2102212464, %v6989
        %v7002 = vshrl.u32 920167782, %v6990
        %v7003 = vor.u32 %v7001, %v7002
        %v7004 = vshll.u32 920167782, %v6989
        %v7005 = vshrl.u32 1326507024, %v6990
        %v7006 = vor.u32 %v7004, %v7005
        %vm7007 = vcmp.lt.s32.totalorder %v6988, 1
        %vm7008 = vcmp.lt.s32.totalorder %v6988, 2
        %vm7009 = vcmp.lt.s32.totalorder %v6988, 3
        %vm7010 = vcmp.lt.s32.totalorder %v6988, 4
        %v7011 = vsel %vm7007, %v6991, %v6994
        %v7012 = vsel %vm7010, %v7000, 2102212464
        %v7013 = vsel %vm7009, %v6997, %v7012
        %v7014 = vsel %vm7008, %v7011, %v7013
        %v7015 = vsel %vm7007, %v6994, %v6997
        %v7016 = vsel %vm7010, %v7003, 920167782
        %v7017 = vsel %vm7009, %v7000, %v7016
        %v7018 = vsel %vm7008, %v7015, %v7017
        %v7019 = vsel %vm7007, %v6997, %v7000
        %v7020 = vsel %vm7010, %v7006, 1326507024
        %v7021 = vsel %vm7009, %v7003, %v7020
        %v7022 = vsel %vm7008, %v7019, %v7021
        %v7023 = vshll.u32 %v6983, 8
        %v7024 = vand.u32 %v7023, 65535
        %v7025 = vshrl.u32 %v7023, 16
        %v7026 = vand.u32 %v7022, 65535
        %v7027 = vshrl.u32 %v7022, 16
        %v7028 = vmul.u32 %v7024, %v7026
        %v7029 = vmul.u32 %v7024, %v7027
        %v7030 = vmul.u32 %v7025, %v7026
        %v7031 = vmul.u32 %v7025, %v7027
        %v7032 = vshll.u32 %v7029, 16
        %v7033 = vshrl.u32 %v7029, 16
        %v7034 = vshll.u32 %v7030, 16
        %v7035 = vshrl.u32 %v7030, 16
        %vm7036 = vc.u32 %v7028, %v7032
        %v7037 = vsel %vm7036, 1, 0
        %v7038 = vadd.s32 %v7028, %v7032
        %v7039 = vadd.s32 %v7031, %v7037
        %vm7040 = vc.u32 %v7038, %v7034
        %v7041 = vsel %vm7040, 1, 0
        %v7042 = vadd.s32 %v7038, %v7034
        %v7043 = vadd.s32 %v7039, %v7041
        %v7044 = vadd.s32 %v7043, %v7033
        %v7045 = vadd.s32 %v7044, %v7035
        %v7046 = vand.u32 %v7023, 65535
        %v7047 = vshrl.u32 %v7023, 16
        %v7048 = vand.u32 %v7018, 65535
        %v7049 = vshrl.u32 %v7018, 16
        %v7050 = vmul.u32 %v7046, %v7048
        %v7051 = vmul.u32 %v7046, %v7049
        %v7052 = vmul.u32 %v7047, %v7048
        %v7053 = vmul.u32 %v7047, %v7049
        %v7054 = vshll.u32 %v7051, 16
        %v7055 = vshrl.u32 %v7051, 16
        %v7056 = vshll.u32 %v7052, 16
        %v7057 = vshrl.u32 %v7052, 16
        %vm7058 = vc.u32 %v7050, %v7054
        %v7059 = vsel %vm7058, 1, 0
        %v7060 = vadd.s32 %v7050, %v7054
        %v7061 = vadd.s32 %v7053, %v7059
        %vm7062 = vc.u32 %v7060, %v7056
        %v7063 = vsel %vm7062, 1, 0
        %v7064 = vadd.s32 %v7060, %v7056
        %v7065 = vadd.s32 %v7061, %v7063
        %v7066 = vadd.s32 %v7065, %v7055
        %v7067 = vadd.s32 %v7066, %v7057
        %v7068 = vmul.u32 %v7023, %v7014
        %v7069 = vadd.s32 %v7045, %v7064
        %vm7070 = vc.u32 %v7045, %v7064
        %v7071 = vadd.s32 %v7067, 1
        %v7072 = vsel %vm7070, %v7071, %v7067
        %v7073 = vadd.s32 %v7068, %v7072
        %v7074 = vadd.s32 %v7073, 536870912
        %v7075 = vshrl.u32 %v7074, 30
        %v7076 = vshll.u32 %v7075, 30
        %v7077 = vsub.s32 %v7073, %v7076
        %vm7078 = vcmp.lt.s32.totalorder %v7077, 0
        %v7079 = vsub.s32 0, %v7077
        %v7080 = vsel %vm7078, %v7079, %v7077
        %v7081 = vclz %v7080
        %v7082 = vsub.s32 %v7081, 2
        %vm7083 = vcmp.gt.s32.totalorder 0, %v7082
        %v7084 = vsel %vm7083, 0, %v7082
        %v7085 = vsub.s32 32, %v7084
        %v7086 = vshll.u32 %v7077, %v7084
        %v7087 = vshrl.u32 %v7069, %v7085
        %v7088 = vor.u32 %v7086, %v7087
        %v7089 = vsub.s32 4294967266, %v7084
        %v7090 = vadd.s32 %v7089, 127
        %v7091 = vshll.u32 %v7090, 23
        %v7092 = vor.u32 4788187, %v7091
        %v7093 = vand.u32 2147483647, %v7092
        %v7095 = vcvt.s32.f32 %v7088
        %v7096 = vmul.f32 %v7095, %v7093
        %v7097 = vxor.u32 %v7096, 2147483648
        %v7098 = vsel %vm6977, %v7097, %v7096
        %v7099 = vsub.s32 4, %v7075
        %v7100 = vsel %vm6977, %v7099, %v7075
        %v7101 = vsel %vm6976, %v638, %v7098
        %v7102 = vsel %vm6976, 0, %v7100
        %v7103 = vmul.f32 %v7101, %v7101
        %v7104 = vmul.f32 %v7103, -0.001358992
        %v7105 = vadd.f32 %v7104, 0.041655596
        %v7106 = vmul.f32 %v7103, %v7105
        %v7107 = vadd.f32 %v7106, -0.4999988
        %v7108 = vmul.f32 %v7103, %v7107
        %v7109 = vadd.f32 1.0, %v7108
        %v7110 = vmul.f32 %v7101, %v7101
        %v7111 = vmul.f32 %v7110, -0.00019511016
        %v7112 = vadd.f32 %v7111, 0.008332121
        %v7113 = vmul.f32 %v7110, %v7112
        %v7114 = vadd.f32 %v7113, -0.16666654
        %v7115 = vmul.f32 %v7110, %v7114
        %v7116 = vadd.f32 %v7115, 1.0
        %v7117 = vmul.f32 %v7116, %v7101
        %vm7118 = vweird.f32 %v638
        %v7119 = vand.u32 %v7102, 3
        %vm7120 = vcmp.lt.s32.totalorder %v7119, 2
        %vm7121 = vcmp.eq.s32.totalorder %v7119, 0
        %v7122 = vxor.u32 %v7117, 2147483648
        %v7123 = vsel %vm7121, %v7109, %v7122
        %vm7124 = vcmp.eq.s32.totalorder %v7119, 2
        %v7125 = vxor.u32 %v7109, 2147483648
        %v7126 = vsel %vm7124, %v7125, %v7117
        %v7127 = vsel %vm7120, %v7123, %v7126
        %v7128 = vsel %vm7118, nan, %v7127
        %v7129 = vand.u32 2147483647, %v639
        %vm7130 = vcmp.le.f32.partialorder %v7129, 0.7853982
        %vm7131 = vcmp.lt.s32.totalorder %v639, 0
        %v7132 = vand.u32 %v639, 2139095040
        %v7133 = vshrl.u32 %v7132, 23
        %v7134 = vsub.s32 %v7133, 127
        %v7135 = vand.u32 2147483647, %v639
        %v7136 = vand.u32 %v7135, 8388607
        %v7137 = vor.u32 %v7136, 8388608
        %v7138 = vsub.s32 0, %v7137
        %v7139 = vadd.s32 %v7134, 1
        %vm7140 = vcmp.gt.s32.totalorder %v7139, 0
        %v7141 = vsel %vm7140, %v7139, 0
        %v7142 = vshrl.u32 %v7141, 5
        %v7143 = vand.u32 %v7141, 31
        %v7144 = vsub.s32 32, %v7143
        %v7145 = vshrl.u32 683565275, %v7144
        %v7146 = vshll.u32 683565275, %v7143
        %v7147 = vshrl.u32 2475754826, %v7144
        %v7148 = vor.u32 %v7146, %v7147
        %v7149 = vshll.u32 2475754826, %v7143
        %v7150 = vshrl.u32 2131351028, %v7144
        %v7151 = vor.u32 %v7149, %v7150
        %v7152 = vshll.u32 2131351028, %v7143
        %v7153 = vshrl.u32 2102212464, %v7144
        %v7154 = vor.u32 %v7152, %v7153
        %v7155 = vshll.u32 2102212464, %v7143
        %v7156 = vshrl.u32 920167782, %v7144
        %v7157 = vor.u32 %v7155, %v7156
        %v7158 = vshll.u32 920167782, %v7143
        %v7159 = vshrl.u32 1326507024, %v7144
        %v7160 = vor.u32 %v7158, %v7159
        %vm7161 = vcmp.lt.s32.totalorder %v7142, 1
        %vm7162 = vcmp.lt.s32.totalorder %v7142, 2
        %vm7163 = vcmp.lt.s32.totalorder %v7142, 3
        %vm7164 = vcmp.lt.s32.totalorder %v7142, 4
        %v7165 = vsel %vm7161, %v7145, %v7148
        %v7166 = vsel %vm7164, %v7154, 2102212464
        %v7167 = vsel %vm7163, %v7151, %v7166
        %v7168 = vsel %vm7162, %v7165, %v7167
        %v7169 = vsel %vm7161, %v7148, %v7151
        %v7170 = vsel %vm7164, %v7157, 920167782
        %v7171 = vsel %vm7163, %v7154, %v7170
        %v7172 = vsel %vm7162, %v7169, %v7171
        %v7173 = vsel %vm7161, %v7151, %v7154
        %v7174 = vsel %vm7164, %v7160, 1326507024
        %v7175 = vsel %vm7163, %v7157, %v7174
        %v7176 = vsel %vm7162, %v7173, %v7175
        %v7177 = vshll.u32 %v7137, 8
        %v7178 = vand.u32 %v7177, 65535
        %v7179 = vshrl.u32 %v7177, 16
        %v7180 = vand.u32 %v7176, 65535
        %v7181 = vshrl.u32 %v7176, 16
        %v7182 = vmul.u32 %v7178, %v7180
        %v7183 = vmul.u32 %v7178, %v7181
        %v7184 = vmul.u32 %v7179, %v7180
        %v7185 = vmul.u32 %v7179, %v7181
        %v7186 = vshll.u32 %v7183, 16
        %v7187 = vshrl.u32 %v7183, 16
        %v7188 = vshll.u32 %v7184, 16
        %v7189 = vshrl.u32 %v7184, 16
        %vm7190 = vc.u32 %v7182, %v7186
        %v7191 = vsel %vm7190, 1, 0
        %v7192 = vadd.s32 %v7182, %v7186
        %v7193 = vadd.s32 %v7185, %v7191
        %vm7194 = vc.u32 %v7192, %v7188
        %v7195 = vsel %vm7194, 1, 0
        %v7196 = vadd.s32 %v7192, %v7188
        %v7197 = vadd.s32 %v7193, %v7195
        %v7198 = vadd.s32 %v7197, %v7187
        %v7199 = vadd.s32 %v7198, %v7189
        %v7200 = vand.u32 %v7177, 65535
        %v7201 = vshrl.u32 %v7177, 16
        %v7202 = vand.u32 %v7172, 65535
        %v7203 = vshrl.u32 %v7172, 16
        %v7204 = vmul.u32 %v7200, %v7202
        %v7205 = vmul.u32 %v7200, %v7203
        %v7206 = vmul.u32 %v7201, %v7202
        %v7207 = vmul.u32 %v7201, %v7203
        %v7208 = vshll.u32 %v7205, 16
        %v7209 = vshrl.u32 %v7205, 16
        %v7210 = vshll.u32 %v7206, 16
        %v7211 = vshrl.u32 %v7206, 16
        %vm7212 = vc.u32 %v7204, %v7208
        %v7213 = vsel %vm7212, 1, 0
        %v7214 = vadd.s32 %v7204, %v7208
        %v7215 = vadd.s32 %v7207, %v7213
        %vm7216 = vc.u32 %v7214, %v7210
        %v7217 = vsel %vm7216, 1, 0
        %v7218 = vadd.s32 %v7214, %v7210
        %v7219 = vadd.s32 %v7215, %v7217
        %v7220 = vadd.s32 %v7219, %v7209
        %v7221 = vadd.s32 %v7220, %v7211
        %v7222 = vmul.u32 %v7177, %v7168
        %v7223 = vadd.s32 %v7199, %v7218
        %vm7224 = vc.u32 %v7199, %v7218
        %v7225 = vadd.s32 %v7221, 1
        %v7226 = vsel %vm7224, %v7225, %v7221
        %v7227 = vadd.s32 %v7222, %v7226
        %v7228 = vadd.s32 %v7227, 536870912
        %v7229 = vshrl.u32 %v7228, 30
        %v7230 = vshll.u32 %v7229, 30
        %v7231 = vsub.s32 %v7227, %v7230
        %vm7232 = vcmp.lt.s32.totalorder %v7231, 0
        %v7233 = vsub.s32 0, %v7231
        %v7234 = vsel %vm7232, %v7233, %v7231
        %v7235 = vclz %v7234
        %v7236 = vsub.s32 %v7235, 2
        %vm7237 = vcmp.gt.s32.totalorder 0, %v7236
        %v7238 = vsel %vm7237, 0, %v7236
        %v7239 = vsub.s32 32, %v7238
        %v7240 = vshll.u32 %v7231, %v7238
        %v7241 = vshrl.u32 %v7223, %v7239
        %v7242 = vor.u32 %v7240, %v7241
        %v7243 = vsub.s32 4294967266, %v7238
        %v7244 = vadd.s32 %v7243, 127
        %v7245 = vshll.u32 %v7244, 23
        %v7246 = vor.u32 4788187, %v7245
        %v7247 = vand.u32 2147483647, %v7246
        %v7249 = vcvt.s32.f32 %v7242
        %v7250 = vmul.f32 %v7249, %v7247
        %v7251 = vxor.u32 %v7250, 2147483648
        %v7252 = vsel %vm7131, %v7251, %v7250
        %v7253 = vsub.s32 4, %v7229
        %v7254 = vsel %vm7131, %v7253, %v7229
        %v7255 = vsel %vm7130, %v639, %v7252
        %v7256 = vsel %vm7130, 0, %v7254
        %v7257 = vmul.f32 %v7255, %v7255
        %v7258 = vmul.f32 %v7257, -0.001358992
        %v7259 = vadd.f32 %v7258, 0.041655596
        %v7260 = vmul.f32 %v7257, %v7259
        %v7261 = vadd.f32 %v7260, -0.4999988
        %v7262 = vmul.f32 %v7257, %v7261
        %v7263 = vadd.f32 1.0, %v7262
        %v7264 = vmul.f32 %v7255, %v7255
        %v7265 = vmul.f32 %v7264, -0.00019511016
        %v7266 = vadd.f32 %v7265, 0.008332121
        %v7267 = vmul.f32 %v7264, %v7266
        %v7268 = vadd.f32 %v7267, -0.16666654
        %v7269 = vmul.f32 %v7264, %v7268
        %v7270 = vadd.f32 %v7269, 1.0
        %v7271 = vmul.f32 %v7270, %v7255
        %vm7272 = vweird.f32 %v639
        %v7273 = vand.u32 %v7256, 3
        %vm7274 = vcmp.lt.s32.totalorder %v7273, 2
        %vm7275 = vcmp.eq.s32.totalorder %v7273, 0
        %v7276 = vxor.u32 %v7271, 2147483648
        %v7277 = vsel %vm7275, %v7263, %v7276
        %vm7278 = vcmp.eq.s32.totalorder %v7273, 2
        %v7279 = vxor.u32 %v7263, 2147483648
        %v7280 = vsel %vm7278, %v7279, %v7271
        %v7281 = vsel %vm7274, %v7277, %v7280
        %v7282 = vsel %vm7272, nan, %v7281
        %v7283 = vand.u32 2147483647, %v640
        %vm7284 = vcmp.le.f32.partialorder %v7283, 0.7853982
        %vm7285 = vcmp.lt.s32.totalorder %v640, 0
        %v7286 = vand.u32 %v640, 2139095040
        %v7287 = vshrl.u32 %v7286, 23
        %v7288 = vsub.s32 %v7287, 127
        %v7289 = vand.u32 2147483647, %v640
        %v7290 = vand.u32 %v7289, 8388607
        %v7291 = vor.u32 %v7290, 8388608
        %v7292 = vsub.s32 0, %v7291
        %v7293 = vadd.s32 %v7288, 1
        %vm7294 = vcmp.gt.s32.totalorder %v7293, 0
        %v7295 = vsel %vm7294, %v7293, 0
        %v7296 = vshrl.u32 %v7295, 5
        %v7297 = vand.u32 %v7295, 31
        %v7298 = vsub.s32 32, %v7297
        %v7299 = vshrl.u32 683565275, %v7298
        %v7300 = vshll.u32 683565275, %v7297
        %v7301 = vshrl.u32 2475754826, %v7298
        %v7302 = vor.u32 %v7300, %v7301
        %v7303 = vshll.u32 2475754826, %v7297
        %v7304 = vshrl.u32 2131351028, %v7298
        %v7305 = vor.u32 %v7303, %v7304
        %v7306 = vshll.u32 2131351028, %v7297
        %v7307 = vshrl.u32 2102212464, %v7298
        %v7308 = vor.u32 %v7306, %v7307
        %v7309 = vshll.u32 2102212464, %v7297
        %v7310 = vshrl.u32 920167782, %v7298
        %v7311 = vor.u32 %v7309, %v7310
        %v7312 = vshll.u32 920167782, %v7297
        %v7313 = vshrl.u32 1326507024, %v7298
        %v7314 = vor.u32 %v7312, %v7313
        %vm7315 = vcmp.lt.s32.totalorder %v7296, 1
        %vm7316 = vcmp.lt.s32.totalorder %v7296, 2
        %vm7317 = vcmp.lt.s32.totalorder %v7296, 3
        %vm7318 = vcmp.lt.s32.totalorder %v7296, 4
        %v7319 = vsel %vm7315, %v7299, %v7302
        %v7320 = vsel %vm7318, %v7308, 2102212464
        %v7321 = vsel %vm7317, %v7305, %v7320
        %v7322 = vsel %vm7316, %v7319, %v7321
        %v7323 = vsel %vm7315, %v7302, %v7305
        %v7324 = vsel %vm7318, %v7311, 920167782
        %v7325 = vsel %vm7317, %v7308, %v7324
        %v7326 = vsel %vm7316, %v7323, %v7325
        %v7327 = vsel %vm7315, %v7305, %v7308
        %v7328 = vsel %vm7318, %v7314, 1326507024
        %v7329 = vsel %vm7317, %v7311, %v7328
        %v7330 = vsel %vm7316, %v7327, %v7329
        %v7331 = vshll.u32 %v7291, 8
        %v7332 = vand.u32 %v7331, 65535
        %v7333 = vshrl.u32 %v7331, 16
        %v7334 = vand.u32 %v7330, 65535
        %v7335 = vshrl.u32 %v7330, 16
        %v7336 = vmul.u32 %v7332, %v7334
        %v7337 = vmul.u32 %v7332, %v7335
        %v7338 = vmul.u32 %v7333, %v7334
        %v7339 = vmul.u32 %v7333, %v7335
        %v7340 = vshll.u32 %v7337, 16
        %v7341 = vshrl.u32 %v7337, 16
        %v7342 = vshll.u32 %v7338, 16
        %v7343 = vshrl.u32 %v7338, 16
        %vm7344 = vc.u32 %v7336, %v7340
        %v7345 = vsel %vm7344, 1, 0
        %v7346 = vadd.s32 %v7336, %v7340
        %v7347 = vadd.s32 %v7339, %v7345
        %vm7348 = vc.u32 %v7346, %v7342
        %v7349 = vsel %vm7348, 1, 0
        %v7350 = vadd.s32 %v7346, %v7342
        %v7351 = vadd.s32 %v7347, %v7349
        %v7352 = vadd.s32 %v7351, %v7341
        %v7353 = vadd.s32 %v7352, %v7343
        %v7354 = vand.u32 %v7331, 65535
        %v7355 = vshrl.u32 %v7331, 16
        %v7356 = vand.u32 %v7326, 65535
        %v7357 = vshrl.u32 %v7326, 16
        %v7358 = vmul.u32 %v7354, %v7356
        %v7359 = vmul.u32 %v7354, %v7357
        %v7360 = vmul.u32 %v7355, %v7356
        %v7361 = vmul.u32 %v7355, %v7357
        %v7362 = vshll.u32 %v7359, 16
        %v7363 = vshrl.u32 %v7359, 16
        %v7364 = vshll.u32 %v7360, 16
        %v7365 = vshrl.u32 %v7360, 16
        %vm7366 = vc.u32 %v7358, %v7362
        %v7367 = vsel %vm7366, 1, 0
        %v7368 = vadd.s32 %v7358, %v7362
        %v7369 = vadd.s32 %v7361, %v7367
        %vm7370 = vc.u32 %v7368, %v7364
        %v7371 = vsel %vm7370, 1, 0
        %v7372 = vadd.s32 %v7368, %v7364
        %v7373 = vadd.s32 %v7369, %v7371
        %v7374 = vadd.s32 %v7373, %v7363
        %v7375 = vadd.s32 %v7374, %v7365
        %v7376 = vmul.u32 %v7331, %v7322
        %v7377 = vadd.s32 %v7353, %v7372
        %vm7378 = vc.u32 %v7353, %v7372
        %v7379 = vadd.s32 %v7375, 1
        %v7380 = vsel %vm7378, %v7379, %v7375
        %v7381 = vadd.s32 %v7376, %v7380
        %v7382 = vadd.s32 %v7381, 536870912
        %v7383 = vshrl.u32 %v7382, 30
        %v7384 = vshll.u32 %v7383, 30
        %v7385 = vsub.s32 %v7381, %v7384
        %vm7386 = vcmp.lt.s32.totalorder %v7385, 0
        %v7387 = vsub.s32 0, %v7385
        %v7388 = vsel %vm7386, %v7387, %v7385
        %v7389 = vclz %v7388
        %v7390 = vsub.s32 %v7389, 2
        %vm7391 = vcmp.gt.s32.totalorder 0, %v7390
        %v7392 = vsel %vm7391, 0, %v7390
        %v7393 = vsub.s32 32, %v7392
        %v7394 = vshll.u32 %v7385, %v7392
        %v7395 = vshrl.u32 %v7377, %v7393
        %v7396 = vor.u32 %v7394, %v7395
        %v7397 = vsub.s32 4294967266, %v7392
        %v7398 = vadd.s32 %v7397, 127
        %v7399 = vshll.u32 %v7398, 23
        %v7400 = vor.u32 4788187, %v7399
        %v7401 = vand.u32 2147483647, %v7400
        %v7403 = vcvt.s32.f32 %v7396
        %v7404 = vmul.f32 %v7403, %v7401
        %v7405 = vxor.u32 %v7404, 2147483648
        %v7406 = vsel %vm7285, %v7405, %v7404
        %v7407 = vsub.s32 4, %v7383
        %v7408 = vsel %vm7285, %v7407, %v7383
        %v7409 = vsel %vm7284, %v640, %v7406
        %v7410 = vsel %vm7284, 0, %v7408
        %v7411 = vmul.f32 %v7409, %v7409
        %v7412 = vmul.f32 %v7411, -0.001358992
        %v7413 = vadd.f32 %v7412, 0.041655596
        %v7414 = vmul.f32 %v7411, %v7413
        %v7415 = vadd.f32 %v7414, -0.4999988
        %v7416 = vmul.f32 %v7411, %v7415
        %v7417 = vadd.f32 1.0, %v7416
        %v7418 = vmul.f32 %v7409, %v7409
        %v7419 = vmul.f32 %v7418, -0.00019511016
        %v7420 = vadd.f32 %v7419, 0.008332121
        %v7421 = vmul.f32 %v7418, %v7420
        %v7422 = vadd.f32 %v7421, -0.16666654
        %v7423 = vmul.f32 %v7418, %v7422
        %v7424 = vadd.f32 %v7423, 1.0
        %v7425 = vmul.f32 %v7424, %v7409
        %vm7426 = vweird.f32 %v640
        %v7427 = vand.u32 %v7410, 3
        %vm7428 = vcmp.lt.s32.totalorder %v7427, 2
        %vm7429 = vcmp.eq.s32.totalorder %v7427, 0
        %v7430 = vxor.u32 %v7425, 2147483648
        %v7431 = vsel %vm7429, %v7417, %v7430
        %vm7432 = vcmp.eq.s32.totalorder %v7427, 2
        %v7433 = vxor.u32 %v7417, 2147483648
        %v7434 = vsel %vm7432, %v7433, %v7425
        %v7435 = vsel %vm7428, %v7431, %v7434
        %v7436 = vsel %vm7426, nan, %v7435
        %v7437 = vand.u32 2147483647, %v641
        %vm7438 = vcmp.le.f32.partialorder %v7437, 0.7853982
        %vm7439 = vcmp.lt.s32.totalorder %v641, 0
        %v7440 = vand.u32 %v641, 2139095040
        %v7441 = vshrl.u32 %v7440, 23
        %v7442 = vsub.s32 %v7441, 127
        %v7443 = vand.u32 2147483647, %v641
        %v7444 = vand.u32 %v7443, 8388607
        %v7445 = vor.u32 %v7444, 8388608
        %v7446 = vsub.s32 0, %v7445
        %v7447 = vadd.s32 %v7442, 1
        %vm7448 = vcmp.gt.s32.totalorder %v7447, 0
        %v7449 = vsel %vm7448, %v7447, 0
        %v7450 = vshrl.u32 %v7449, 5
        %v7451 = vand.u32 %v7449, 31
        %v7452 = vsub.s32 32, %v7451
        %v7453 = vshrl.u32 683565275, %v7452
        %v7454 = vshll.u32 683565275, %v7451
        %v7455 = vshrl.u32 2475754826, %v7452
        %v7456 = vor.u32 %v7454, %v7455
        %v7457 = vshll.u32 2475754826, %v7451
        %v7458 = vshrl.u32 2131351028, %v7452
        %v7459 = vor.u32 %v7457, %v7458
        %v7460 = vshll.u32 2131351028, %v7451
        %v7461 = vshrl.u32 2102212464, %v7452
        %v7462 = vor.u32 %v7460, %v7461
        %v7463 = vshll.u32 2102212464, %v7451
        %v7464 = vshrl.u32 920167782, %v7452
        %v7465 = vor.u32 %v7463, %v7464
        %v7466 = vshll.u32 920167782, %v7451
        %v7467 = vshrl.u32 1326507024, %v7452
        %v7468 = vor.u32 %v7466, %v7467
        %vm7469 = vcmp.lt.s32.totalorder %v7450, 1
        %vm7470 = vcmp.lt.s32.totalorder %v7450, 2
        %vm7471 = vcmp.lt.s32.totalorder %v7450, 3
        %vm7472 = vcmp.lt.s32.totalorder %v7450, 4
        %v7473 = vsel %vm7469, %v7453, %v7456
        %v7474 = vsel %vm7472, %v7462, 2102212464
        %v7475 = vsel %vm7471, %v7459, %v7474
        %v7476 = vsel %vm7470, %v7473, %v7475
        %v7477 = vsel %vm7469, %v7456, %v7459
        %v7478 = vsel %vm7472, %v7465, 920167782
        %v7479 = vsel %vm7471, %v7462, %v7478
        %v7480 = vsel %vm7470, %v7477, %v7479
        %v7481 = vsel %vm7469, %v7459, %v7462
        %v7482 = vsel %vm7472, %v7468, 1326507024
        %v7483 = vsel %vm7471, %v7465, %v7482
        %v7484 = vsel %vm7470, %v7481, %v7483
        %v7485 = vshll.u32 %v7445, 8
        %v7486 = vand.u32 %v7485, 65535
        %v7487 = vshrl.u32 %v7485, 16
        %v7488 = vand.u32 %v7484, 65535
        %v7489 = vshrl.u32 %v7484, 16
        %v7490 = vmul.u32 %v7486, %v7488
        %v7491 = vmul.u32 %v7486, %v7489
        %v7492 = vmul.u32 %v7487, %v7488
        %v7493 = vmul.u32 %v7487, %v7489
        %v7494 = vshll.u32 %v7491, 16
        %v7495 = vshrl.u32 %v7491, 16
        %v7496 = vshll.u32 %v7492, 16
        %v7497 = vshrl.u32 %v7492, 16
        %vm7498 = vc.u32 %v7490, %v7494
        %v7499 = vsel %vm7498, 1, 0
        %v7500 = vadd.s32 %v7490, %v7494
        %v7501 = vadd.s32 %v7493, %v7499
        %vm7502 = vc.u32 %v7500, %v7496
        %v7503 = vsel %vm7502, 1, 0
        %v7504 = vadd.s32 %v7500, %v7496
        %v7505 = vadd.s32 %v7501, %v7503
        %v7506 = vadd.s32 %v7505, %v7495
        %v7507 = vadd.s32 %v7506, %v7497
        %v7508 = vand.u32 %v7485, 65535
        %v7509 = vshrl.u32 %v7485, 16
        %v7510 = vand.u32 %v7480, 65535
        %v7511 = vshrl.u32 %v7480, 16
        %v7512 = vmul.u32 %v7508, %v7510
        %v7513 = vmul.u32 %v7508, %v7511
        %v7514 = vmul.u32 %v7509, %v7510
        %v7515 = vmul.u32 %v7509, %v7511
        %v7516 = vshll.u32 %v7513, 16
        %v7517 = vshrl.u32 %v7513, 16
        %v7518 = vshll.u32 %v7514, 16
        %v7519 = vshrl.u32 %v7514, 16
        %vm7520 = vc.u32 %v7512, %v7516
        %v7521 = vsel %vm7520, 1, 0
        %v7522 = vadd.s32 %v7512, %v7516
        %v7523 = vadd.s32 %v7515, %v7521
        %vm7524 = vc.u32 %v7522, %v7518
        %v7525 = vsel %vm7524, 1, 0
        %v7526 = vadd.s32 %v7522, %v7518
        %v7527 = vadd.s32 %v7523, %v7525
        %v7528 = vadd.s32 %v7527, %v7517
        %v7529 = vadd.s32 %v7528, %v7519
        %v7530 = vmul.u32 %v7485, %v7476
        %v7531 = vadd.s32 %v7507, %v7526
        %vm7532 = vc.u32 %v7507, %v7526
        %v7533 = vadd.s32 %v7529, 1
        %v7534 = vsel %vm7532, %v7533, %v7529
        %v7535 = vadd.s32 %v7530, %v7534
        %v7536 = vadd.s32 %v7535, 536870912
        %v7537 = vshrl.u32 %v7536, 30
        %v7538 = vshll.u32 %v7537, 30
        %v7539 = vsub.s32 %v7535, %v7538
        %vm7540 = vcmp.lt.s32.totalorder %v7539, 0
        %v7541 = vsub.s32 0, %v7539
        %v7542 = vsel %vm7540, %v7541, %v7539
        %v7543 = vclz %v7542
        %v7544 = vsub.s32 %v7543, 2
        %vm7545 = vcmp.gt.s32.totalorder 0, %v7544
        %v7546 = vsel %vm7545, 0, %v7544
        %v7547 = vsub.s32 32, %v7546
        %v7548 = vshll.u32 %v7539, %v7546
        %v7549 = vshrl.u32 %v7531, %v7547
        %v7550 = vor.u32 %v7548, %v7549
        %v7551 = vsub.s32 4294967266, %v7546
        %v7552 = vadd.s32 %v7551, 127
        %v7553 = vshll.u32 %v7552, 23
        %v7554 = vor.u32 4788187, %v7553
        %v7555 = vand.u32 2147483647, %v7554
        %v7557 = vcvt.s32.f32 %v7550
        %v7558 = vmul.f32 %v7557, %v7555
        %v7559 = vxor.u32 %v7558, 2147483648
        %v7560 = vsel %vm7439, %v7559, %v7558
        %v7561 = vsub.s32 4, %v7537
        %v7562 = vsel %vm7439, %v7561, %v7537
        %v7563 = vsel %vm7438, %v641, %v7560
        %v7564 = vsel %vm7438, 0, %v7562
        %v7565 = vmul.f32 %v7563, %v7563
        %v7566 = vmul.f32 %v7565, -0.001358992
        %v7567 = vadd.f32 %v7566, 0.041655596
        %v7568 = vmul.f32 %v7565, %v7567
        %v7569 = vadd.f32 %v7568, -0.4999988
        %v7570 = vmul.f32 %v7565, %v7569
        %v7571 = vadd.f32 1.0, %v7570
        %v7572 = vmul.f32 %v7563, %v7563
        %v7573 = vmul.f32 %v7572, -0.00019511016
        %v7574 = vadd.f32 %v7573, 0.008332121
        %v7575 = vmul.f32 %v7572, %v7574
        %v7576 = vadd.f32 %v7575, -0.16666654
        %v7577 = vmul.f32 %v7572, %v7576
        %v7578 = vadd.f32 %v7577, 1.0
        %v7579 = vmul.f32 %v7578, %v7563
        %vm7580 = vweird.f32 %v641
        %v7581 = vand.u32 %v7564, 3
        %vm7582 = vcmp.lt.s32.totalorder %v7581, 2
        %vm7583 = vcmp.eq.s32.totalorder %v7581, 0
        %v7584 = vxor.u32 %v7579, 2147483648
        %v7585 = vsel %vm7583, %v7571, %v7584
        %vm7586 = vcmp.eq.s32.totalorder %v7581, 2
        %v7587 = vxor.u32 %v7571, 2147483648
        %v7588 = vsel %vm7586, %v7587, %v7579
        %v7589 = vsel %vm7582, %v7585, %v7588
        %v7590 = vsel %vm7580, nan, %v7589
        %v7591 = vand.u32 2147483647, %v642
        %vm7592 = vcmp.le.f32.partialorder %v7591, 0.7853982
        %vm7593 = vcmp.lt.s32.totalorder %v642, 0
        %v7594 = vand.u32 %v642, 2139095040
        %v7595 = vshrl.u32 %v7594, 23
        %v7596 = vsub.s32 %v7595, 127
        %v7597 = vand.u32 2147483647, %v642
        %v7598 = vand.u32 %v7597, 8388607
        %v7599 = vor.u32 %v7598, 8388608
        %v7600 = vsub.s32 0, %v7599
        %v7601 = vadd.s32 %v7596, 1
        %vm7602 = vcmp.gt.s32.totalorder %v7601, 0
        %v7603 = vsel %vm7602, %v7601, 0
        %v7604 = vshrl.u32 %v7603, 5
        %v7605 = vand.u32 %v7603, 31
        %v7606 = vsub.s32 32, %v7605
        %v7607 = vshrl.u32 683565275, %v7606
        %v7608 = vshll.u32 683565275, %v7605
        %v7609 = vshrl.u32 2475754826, %v7606
        %v7610 = vor.u32 %v7608, %v7609
        %v7611 = vshll.u32 2475754826, %v7605
        %v7612 = vshrl.u32 2131351028, %v7606
        %v7613 = vor.u32 %v7611, %v7612
        %v7614 = vshll.u32 2131351028, %v7605
        %v7615 = vshrl.u32 2102212464, %v7606
        %v7616 = vor.u32 %v7614, %v7615
        %v7617 = vshll.u32 2102212464, %v7605
        %v7618 = vshrl.u32 920167782, %v7606
        %v7619 = vor.u32 %v7617, %v7618
        %v7620 = vshll.u32 920167782, %v7605
        %v7621 = vshrl.u32 1326507024, %v7606
        %v7622 = vor.u32 %v7620, %v7621
        %vm7623 = vcmp.lt.s32.totalorder %v7604, 1
        %vm7624 = vcmp.lt.s32.totalorder %v7604, 2
        %vm7625 = vcmp.lt.s32.totalorder %v7604, 3
        %vm7626 = vcmp.lt.s32.totalorder %v7604, 4
        %v7627 = vsel %vm7623, %v7607, %v7610
        %v7628 = vsel %vm7626, %v7616, 2102212464
        %v7629 = vsel %vm7625, %v7613, %v7628
        %v7630 = vsel %vm7624, %v7627, %v7629
        %v7631 = vsel %vm7623, %v7610, %v7613
        %v7632 = vsel %vm7626, %v7619, 920167782
        %v7633 = vsel %vm7625, %v7616, %v7632
        %v7634 = vsel %vm7624, %v7631, %v7633
        %v7635 = vsel %vm7623, %v7613, %v7616
        %v7636 = vsel %vm7626, %v7622, 1326507024
        %v7637 = vsel %vm7625, %v7619, %v7636
        %v7638 = vsel %vm7624, %v7635, %v7637
        %v7639 = vshll.u32 %v7599, 8
        %v7640 = vand.u32 %v7639, 65535
        %v7641 = vshrl.u32 %v7639, 16
        %v7642 = vand.u32 %v7638, 65535
        %v7643 = vshrl.u32 %v7638, 16
        %v7644 = vmul.u32 %v7640, %v7642
        %v7645 = vmul.u32 %v7640, %v7643
        %v7646 = vmul.u32 %v7641, %v7642
        %v7647 = vmul.u32 %v7641, %v7643
        %v7648 = vshll.u32 %v7645, 16
        %v7649 = vshrl.u32 %v7645, 16
        %v7650 = vshll.u32 %v7646, 16
        %v7651 = vshrl.u32 %v7646, 16
        %vm7652 = vc.u32 %v7644, %v7648
        %v7653 = vsel %vm7652, 1, 0
        %v7654 = vadd.s32 %v7644, %v7648
        %v7655 = vadd.s32 %v7647, %v7653
        %vm7656 = vc.u32 %v7654, %v7650
        %v7657 = vsel %vm7656, 1, 0
        %v7658 = vadd.s32 %v7654, %v7650
        %v7659 = vadd.s32 %v7655, %v7657
        %v7660 = vadd.s32 %v7659, %v7649
        %v7661 = vadd.s32 %v7660, %v7651
        %v7662 = vand.u32 %v7639, 65535
        %v7663 = vshrl.u32 %v7639, 16
        %v7664 = vand.u32 %v7634, 65535
        %v7665 = vshrl.u32 %v7634, 16
        %v7666 = vmul.u32 %v7662, %v7664
        %v7667 = vmul.u32 %v7662, %v7665
        %v7668 = vmul.u32 %v7663, %v7664
        %v7669 = vmul.u32 %v7663, %v7665
        %v7670 = vshll.u32 %v7667, 16
        %v7671 = vshrl.u32 %v7667, 16
        %v7672 = vshll.u32 %v7668, 16
        %v7673 = vshrl.u32 %v7668, 16
        %vm7674 = vc.u32 %v7666, %v7670
        %v7675 = vsel %vm7674, 1, 0
        %v7676 = vadd.s32 %v7666, %v7670
        %v7677 = vadd.s32 %v7669, %v7675
        %vm7678 = vc.u32 %v7676, %v7672
        %v7679 = vsel %vm7678, 1, 0
        %v7680 = vadd.s32 %v7676, %v7672
        %v7681 = vadd.s32 %v7677, %v7679
        %v7682 = vadd.s32 %v7681, %v7671
        %v7683 = vadd.s32 %v7682, %v7673
        %v7684 = vmul.u32 %v7639, %v7630
        %v7685 = vadd.s32 %v7661, %v7680
        %vm7686 = vc.u32 %v7661, %v7680
        %v7687 = vadd.s32 %v7683, 1
        %v7688 = vsel %vm7686, %v7687, %v7683
        %v7689 = vadd.s32 %v7684, %v7688
        %v7690 = vadd.s32 %v7689, 536870912
        %v7691 = vshrl.u32 %v7690, 30
        %v7692 = vshll.u32 %v7691, 30
        %v7693 = vsub.s32 %v7689, %v7692
        %vm7694 = vcmp.lt.s32.totalorder %v7693, 0
        %v7695 = vsub.s32 0, %v7693
        %v7696 = vsel %vm7694, %v7695, %v7693
        %v7697 = vclz %v7696
        %v7698 = vsub.s32 %v7697, 2
        %vm7699 = vcmp.gt.s32.totalorder 0, %v7698
        %v7700 = vsel %vm7699, 0, %v7698
        %v7701 = vsub.s32 32, %v7700
        %v7702 = vshll.u32 %v7693, %v7700
        %v7703 = vshrl.u32 %v7685, %v7701
        %v7704 = vor.u32 %v7702, %v7703
        %v7705 = vsub.s32 4294967266, %v7700
        %v7706 = vadd.s32 %v7705, 127
        %v7707 = vshll.u32 %v7706, 23
        %v7708 = vor.u32 4788187, %v7707
        %v7709 = vand.u32 2147483647, %v7708
        %v7711 = vcvt.s32.f32 %v7704
        %v7712 = vmul.f32 %v7711, %v7709
        %v7713 = vxor.u32 %v7712, 2147483648
        %v7714 = vsel %vm7593, %v7713, %v7712
        %v7715 = vsub.s32 4, %v7691
        %v7716 = vsel %vm7593, %v7715, %v7691
        %v7717 = vsel %vm7592, %v642, %v7714
        %v7718 = vsel %vm7592, 0, %v7716
        %v7719 = vmul.f32 %v7717, %v7717
        %v7720 = vmul.f32 %v7719, -0.001358992
        %v7721 = vadd.f32 %v7720, 0.041655596
        %v7722 = vmul.f32 %v7719, %v7721
        %v7723 = vadd.f32 %v7722, -0.4999988
        %v7724 = vmul.f32 %v7719, %v7723
        %v7725 = vadd.f32 1.0, %v7724
        %v7726 = vmul.f32 %v7717, %v7717
        %v7727 = vmul.f32 %v7726, -0.00019511016
        %v7728 = vadd.f32 %v7727, 0.008332121
        %v7729 = vmul.f32 %v7726, %v7728
        %v7730 = vadd.f32 %v7729, -0.16666654
        %v7731 = vmul.f32 %v7726, %v7730
        %v7732 = vadd.f32 %v7731, 1.0
        %v7733 = vmul.f32 %v7732, %v7717
        %vm7734 = vweird.f32 %v642
        %v7735 = vand.u32 %v7718, 3
        %vm7736 = vcmp.lt.s32.totalorder %v7735, 2
        %vm7737 = vcmp.eq.s32.totalorder %v7735, 0
        %v7738 = vxor.u32 %v7733, 2147483648
        %v7739 = vsel %vm7737, %v7725, %v7738
        %vm7740 = vcmp.eq.s32.totalorder %v7735, 2
        %v7741 = vxor.u32 %v7725, 2147483648
        %v7742 = vsel %vm7740, %v7741, %v7733
        %v7743 = vsel %vm7736, %v7739, %v7742
        %v7744 = vsel %vm7734, nan, %v7743
        %v7745 = vand.u32 2147483647, %v643
        %vm7746 = vcmp.le.f32.partialorder %v7745, 0.7853982
        %vm7747 = vcmp.lt.s32.totalorder %v643, 0
        %v7748 = vand.u32 %v643, 2139095040
        %v7749 = vshrl.u32 %v7748, 23
        %v7750 = vsub.s32 %v7749, 127
        %v7751 = vand.u32 2147483647, %v643
        %v7752 = vand.u32 %v7751, 8388607
        %v7753 = vor.u32 %v7752, 8388608
        %v7754 = vsub.s32 0, %v7753
        %v7755 = vadd.s32 %v7750, 1
        %vm7756 = vcmp.gt.s32.totalorder %v7755, 0
        %v7757 = vsel %vm7756, %v7755, 0
        %v7758 = vshrl.u32 %v7757, 5
        %v7759 = vand.u32 %v7757, 31
        %v7760 = vsub.s32 32, %v7759
        %v7761 = vshrl.u32 683565275, %v7760
        %v7762 = vshll.u32 683565275, %v7759
        %v7763 = vshrl.u32 2475754826, %v7760
        %v7764 = vor.u32 %v7762, %v7763
        %v7765 = vshll.u32 2475754826, %v7759
        %v7766 = vshrl.u32 2131351028, %v7760
        %v7767 = vor.u32 %v7765, %v7766
        %v7768 = vshll.u32 2131351028, %v7759
        %v7769 = vshrl.u32 2102212464, %v7760
        %v7770 = vor.u32 %v7768, %v7769
        %v7771 = vshll.u32 2102212464, %v7759
        %v7772 = vshrl.u32 920167782, %v7760
        %v7773 = vor.u32 %v7771, %v7772
        %v7774 = vshll.u32 920167782, %v7759
        %v7775 = vshrl.u32 1326507024, %v7760
        %v7776 = vor.u32 %v7774, %v7775
        %vm7777 = vcmp.lt.s32.totalorder %v7758, 1
        %vm7778 = vcmp.lt.s32.totalorder %v7758, 2
        %vm7779 = vcmp.lt.s32.totalorder %v7758, 3
        %vm7780 = vcmp.lt.s32.totalorder %v7758, 4
        %v7781 = vsel %vm7777, %v7761, %v7764
        %v7782 = vsel %vm7780, %v7770, 2102212464
        %v7783 = vsel %vm7779, %v7767, %v7782
        %v7784 = vsel %vm7778, %v7781, %v7783
        %v7785 = vsel %vm7777, %v7764, %v7767
        %v7786 = vsel %vm7780, %v7773, 920167782
        %v7787 = vsel %vm7779, %v7770, %v7786
        %v7788 = vsel %vm7778, %v7785, %v7787
        %v7789 = vsel %vm7777, %v7767, %v7770
        %v7790 = vsel %vm7780, %v7776, 1326507024
        %v7791 = vsel %vm7779, %v7773, %v7790
        %v7792 = vsel %vm7778, %v7789, %v7791
        %v7793 = vshll.u32 %v7753, 8
        %v7794 = vand.u32 %v7793, 65535
        %v7795 = vshrl.u32 %v7793, 16
        %v7796 = vand.u32 %v7792, 65535
        %v7797 = vshrl.u32 %v7792, 16
        %v7798 = vmul.u32 %v7794, %v7796
        %v7799 = vmul.u32 %v7794, %v7797
        %v7800 = vmul.u32 %v7795, %v7796
        %v7801 = vmul.u32 %v7795, %v7797
        %v7802 = vshll.u32 %v7799, 16
        %v7803 = vshrl.u32 %v7799, 16
        %v7804 = vshll.u32 %v7800, 16
        %v7805 = vshrl.u32 %v7800, 16
        %vm7806 = vc.u32 %v7798, %v7802
        %v7807 = vsel %vm7806, 1, 0
        %v7808 = vadd.s32 %v7798, %v7802
        %v7809 = vadd.s32 %v7801, %v7807
        %vm7810 = vc.u32 %v7808, %v7804
        %v7811 = vsel %vm7810, 1, 0
        %v7812 = vadd.s32 %v7808, %v7804
        %v7813 = vadd.s32 %v7809, %v7811
        %v7814 = vadd.s32 %v7813, %v7803
        %v7815 = vadd.s32 %v7814, %v7805
        %v7816 = vand.u32 %v7793, 65535
        %v7817 = vshrl.u32 %v7793, 16
        %v7818 = vand.u32 %v7788, 65535
        %v7819 = vshrl.u32 %v7788, 16
        %v7820 = vmul.u32 %v7816, %v7818
        %v7821 = vmul.u32 %v7816, %v7819
        %v7822 = vmul.u32 %v7817, %v7818
        %v7823 = vmul.u32 %v7817, %v7819
        %v7824 = vshll.u32 %v7821, 16
        %v7825 = vshrl.u32 %v7821, 16
        %v7826 = vshll.u32 %v7822, 16
        %v7827 = vshrl.u32 %v7822, 16
        %vm7828 = vc.u32 %v7820, %v7824
        %v7829 = vsel %vm7828, 1, 0
        %v7830 = vadd.s32 %v7820, %v7824
        %v7831 = vadd.s32 %v7823, %v7829
        %vm7832 = vc.u32 %v7830, %v7826
        %v7833 = vsel %vm7832, 1, 0
        %v7834 = vadd.s32 %v7830, %v7826
        %v7835 = vadd.s32 %v7831, %v7833
        %v7836 = vadd.s32 %v7835, %v7825
        %v7837 = vadd.s32 %v7836, %v7827
        %v7838 = vmul.u32 %v7793, %v7784
        %v7839 = vadd.s32 %v7815, %v7834
        %vm7840 = vc.u32 %v7815, %v7834
        %v7841 = vadd.s32 %v7837, 1
        %v7842 = vsel %vm7840, %v7841, %v7837
        %v7843 = vadd.s32 %v7838, %v7842
        %v7844 = vadd.s32 %v7843, 536870912
        %v7845 = vshrl.u32 %v7844, 30
        %v7846 = vshll.u32 %v7845, 30
        %v7847 = vsub.s32 %v7843, %v7846
        %vm7848 = vcmp.lt.s32.totalorder %v7847, 0
        %v7849 = vsub.s32 0, %v7847
        %v7850 = vsel %vm7848, %v7849, %v7847
        %v7851 = vclz %v7850
        %v7852 = vsub.s32 %v7851, 2
        %vm7853 = vcmp.gt.s32.totalorder 0, %v7852
        %v7854 = vsel %vm7853, 0, %v7852
        %v7855 = vsub.s32 32, %v7854
        %v7856 = vshll.u32 %v7847, %v7854
        %v7857 = vshrl.u32 %v7839, %v7855
        %v7858 = vor.u32 %v7856, %v7857
        %v7859 = vsub.s32 4294967266, %v7854
        %v7860 = vadd.s32 %v7859, 127
        %v7861 = vshll.u32 %v7860, 23
        %v7862 = vor.u32 4788187, %v7861
        %v7863 = vand.u32 2147483647, %v7862
        %v7865 = vcvt.s32.f32 %v7858
        %v7866 = vmul.f32 %v7865, %v7863
        %v7867 = vxor.u32 %v7866, 2147483648
        %v7868 = vsel %vm7747, %v7867, %v7866
        %v7869 = vsub.s32 4, %v7845
        %v7870 = vsel %vm7747, %v7869, %v7845
        %v7871 = vsel %vm7746, %v643, %v7868
        %v7872 = vsel %vm7746, 0, %v7870
        %v7873 = vmul.f32 %v7871, %v7871
        %v7874 = vmul.f32 %v7873, -0.001358992
        %v7875 = vadd.f32 %v7874, 0.041655596
        %v7876 = vmul.f32 %v7873, %v7875
        %v7877 = vadd.f32 %v7876, -0.4999988
        %v7878 = vmul.f32 %v7873, %v7877
        %v7879 = vadd.f32 1.0, %v7878
        %v7880 = vmul.f32 %v7871, %v7871
        %v7881 = vmul.f32 %v7880, -0.00019511016
        %v7882 = vadd.f32 %v7881, 0.008332121
        %v7883 = vmul.f32 %v7880, %v7882
        %v7884 = vadd.f32 %v7883, -0.16666654
        %v7885 = vmul.f32 %v7880, %v7884
        %v7886 = vadd.f32 %v7885, 1.0
        %v7887 = vmul.f32 %v7886, %v7871
        %vm7888 = vweird.f32 %v643
        %v7889 = vand.u32 %v7872, 3
        %vm7890 = vcmp.lt.s32.totalorder %v7889, 2
        %vm7891 = vcmp.eq.s32.totalorder %v7889, 0
        %v7892 = vxor.u32 %v7887, 2147483648
        %v7893 = vsel %vm7891, %v7879, %v7892
        %vm7894 = vcmp.eq.s32.totalorder %v7889, 2
        %v7895 = vxor.u32 %v7879, 2147483648
        %v7896 = vsel %vm7894, %v7895, %v7887
        %v7897 = vsel %vm7890, %v7893, %v7896
        %v7898 = vsel %vm7888, nan, %v7897
        %v7899 = vand.u32 2147483647, %v644
        %vm7900 = vcmp.le.f32.partialorder %v7899, 0.7853982
        %vm7901 = vcmp.lt.s32.totalorder %v644, 0
        %v7902 = vand.u32 %v644, 2139095040
        %v7903 = vshrl.u32 %v7902, 23
        %v7904 = vsub.s32 %v7903, 127
        %v7905 = vand.u32 2147483647, %v644
        %v7906 = vand.u32 %v7905, 8388607
        %v7907 = vor.u32 %v7906, 8388608
        %v7908 = vsub.s32 0, %v7907
        %v7909 = vadd.s32 %v7904, 1
        %vm7910 = vcmp.gt.s32.totalorder %v7909, 0
        %v7911 = vsel %vm7910, %v7909, 0
        %v7912 = vshrl.u32 %v7911, 5
        %v7913 = vand.u32 %v7911, 31
        %v7914 = vsub.s32 32, %v7913
        %v7915 = vshrl.u32 683565275, %v7914
        %v7916 = vshll.u32 683565275, %v7913
        %v7917 = vshrl.u32 2475754826, %v7914
        %v7918 = vor.u32 %v7916, %v7917
        %v7919 = vshll.u32 2475754826, %v7913
        %v7920 = vshrl.u32 2131351028, %v7914
        %v7921 = vor.u32 %v7919, %v7920
        %v7922 = vshll.u32 2131351028, %v7913
        %v7923 = vshrl.u32 2102212464, %v7914
        %v7924 = vor.u32 %v7922, %v7923
        %v7925 = vshll.u32 2102212464, %v7913
        %v7926 = vshrl.u32 920167782, %v7914
        %v7927 = vor.u32 %v7925, %v7926
        %v7928 = vshll.u32 920167782, %v7913
        %v7929 = vshrl.u32 1326507024, %v7914
        %v7930 = vor.u32 %v7928, %v7929
        %vm7931 = vcmp.lt.s32.totalorder %v7912, 1
        %vm7932 = vcmp.lt.s32.totalorder %v7912, 2
        %vm7933 = vcmp.lt.s32.totalorder %v7912, 3
        %vm7934 = vcmp.lt.s32.totalorder %v7912, 4
        %v7935 = vsel %vm7931, %v7915, %v7918
        %v7936 = vsel %vm7934, %v7924, 2102212464
        %v7937 = vsel %vm7933, %v7921, %v7936
        %v7938 = vsel %vm7932, %v7935, %v7937
        %v7939 = vsel %vm7931, %v7918, %v7921
        %v7940 = vsel %vm7934, %v7927, 920167782
        %v7941 = vsel %vm7933, %v7924, %v7940
        %v7942 = vsel %vm7932, %v7939, %v7941
        %v7943 = vsel %vm7931, %v7921, %v7924
        %v7944 = vsel %vm7934, %v7930, 1326507024
        %v7945 = vsel %vm7933, %v7927, %v7944
        %v7946 = vsel %vm7932, %v7943, %v7945
        %v7947 = vshll.u32 %v7907, 8
        %v7948 = vand.u32 %v7947, 65535
        %v7949 = vshrl.u32 %v7947, 16
        %v7950 = vand.u32 %v7946, 65535
        %v7951 = vshrl.u32 %v7946, 16
        %v7952 = vmul.u32 %v7948, %v7950
        %v7953 = vmul.u32 %v7948, %v7951
        %v7954 = vmul.u32 %v7949, %v7950
        %v7955 = vmul.u32 %v7949, %v7951
        %v7956 = vshll.u32 %v7953, 16
        %v7957 = vshrl.u32 %v7953, 16
        %v7958 = vshll.u32 %v7954, 16
        %v7959 = vshrl.u32 %v7954, 16
        %vm7960 = vc.u32 %v7952, %v7956
        %v7961 = vsel %vm7960, 1, 0
        %v7962 = vadd.s32 %v7952, %v7956
        %v7963 = vadd.s32 %v7955, %v7961
        %vm7964 = vc.u32 %v7962, %v7958
        %v7965 = vsel %vm7964, 1, 0
        %v7966 = vadd.s32 %v7962, %v7958
        %v7967 = vadd.s32 %v7963, %v7965
        %v7968 = vadd.s32 %v7967, %v7957
        %v7969 = vadd.s32 %v7968, %v7959
        %v7970 = vand.u32 %v7947, 65535
        %v7971 = vshrl.u32 %v7947, 16
        %v7972 = vand.u32 %v7942, 65535
        %v7973 = vshrl.u32 %v7942, 16
        %v7974 = vmul.u32 %v7970, %v7972
        %v7975 = vmul.u32 %v7970, %v7973
        %v7976 = vmul.u32 %v7971, %v7972
        %v7977 = vmul.u32 %v7971, %v7973
        %v7978 = vshll.u32 %v7975, 16
        %v7979 = vshrl.u32 %v7975, 16
        %v7980 = vshll.u32 %v7976, 16
        %v7981 = vshrl.u32 %v7976, 16
        %vm7982 = vc.u32 %v7974, %v7978
        %v7983 = vsel %vm7982, 1, 0
        %v7984 = vadd.s32 %v7974, %v7978
        %v7985 = vadd.s32 %v7977, %v7983
        %vm7986 = vc.u32 %v7984, %v7980
        %v7987 = vsel %vm7986, 1, 0
        %v7988 = vadd.s32 %v7984, %v7980
        %v7989 = vadd.s32 %v7985, %v7987
        %v7990 = vadd.s32 %v7989, %v7979
        %v7991 = vadd.s32 %v7990, %v7981
        %v7992 = vmul.u32 %v7947, %v7938
        %v7993 = vadd.s32 %v7969, %v7988
        %vm7994 = vc.u32 %v7969, %v7988
        %v7995 = vadd.s32 %v7991, 1
        %v7996 = vsel %vm7994, %v7995, %v7991
        %v7997 = vadd.s32 %v7992, %v7996
        %v7998 = vadd.s32 %v7997, 536870912
        %v7999 = vshrl.u32 %v7998, 30
        %v8000 = vshll.u32 %v7999, 30
        %v8001 = vsub.s32 %v7997, %v8000
        %vm8002 = vcmp.lt.s32.totalorder %v8001, 0
        %v8003 = vsub.s32 0, %v8001
        %v8004 = vsel %vm8002, %v8003, %v8001
        %v8005 = vclz %v8004
        %v8006 = vsub.s32 %v8005, 2
        %vm8007 = vcmp.gt.s32.totalorder 0, %v8006
        %v8008 = vsel %vm8007, 0, %v8006
        %v8009 = vsub.s32 32, %v8008
        %v8010 = vshll.u32 %v8001, %v8008
        %v8011 = vshrl.u32 %v7993, %v8009
        %v8012 = vor.u32 %v8010, %v8011
        %v8013 = vsub.s32 4294967266, %v8008
        %v8014 = vadd.s32 %v8013, 127
        %v8015 = vshll.u32 %v8014, 23
        %v8016 = vor.u32 4788187, %v8015
        %v8017 = vand.u32 2147483647, %v8016
        %v8019 = vcvt.s32.f32 %v8012
        %v8020 = vmul.f32 %v8019, %v8017
        %v8021 = vxor.u32 %v8020, 2147483648
        %v8022 = vsel %vm7901, %v8021, %v8020
        %v8023 = vsub.s32 4, %v7999
        %v8024 = vsel %vm7901, %v8023, %v7999
        %v8025 = vsel %vm7900, %v644, %v8022
        %v8026 = vsel %vm7900, 0, %v8024
        %v8027 = vmul.f32 %v8025, %v8025
        %v8028 = vmul.f32 %v8027, -0.001358992
        %v8029 = vadd.f32 %v8028, 0.041655596
        %v8030 = vmul.f32 %v8027, %v8029
        %v8031 = vadd.f32 %v8030, -0.4999988
        %v8032 = vmul.f32 %v8027, %v8031
        %v8033 = vadd.f32 1.0, %v8032
        %v8034 = vmul.f32 %v8025, %v8025
        %v8035 = vmul.f32 %v8034, -0.00019511016
        %v8036 = vadd.f32 %v8035, 0.008332121
        %v8037 = vmul.f32 %v8034, %v8036
        %v8038 = vadd.f32 %v8037, -0.16666654
        %v8039 = vmul.f32 %v8034, %v8038
        %v8040 = vadd.f32 %v8039, 1.0
        %v8041 = vmul.f32 %v8040, %v8025
        %vm8042 = vweird.f32 %v644
        %v8043 = vand.u32 %v8026, 3
        %vm8044 = vcmp.lt.s32.totalorder %v8043, 2
        %vm8045 = vcmp.eq.s32.totalorder %v8043, 0
        %v8046 = vxor.u32 %v8041, 2147483648
        %v8047 = vsel %vm8045, %v8033, %v8046
        %vm8048 = vcmp.eq.s32.totalorder %v8043, 2
        %v8049 = vxor.u32 %v8033, 2147483648
        %v8050 = vsel %vm8048, %v8049, %v8041
        %v8051 = vsel %vm8044, %v8047, %v8050
        %v8052 = vsel %vm8042, nan, %v8051
        %v8053 = vand.u32 2147483647, %v645
        %vm8054 = vcmp.le.f32.partialorder %v8053, 0.7853982
        %vm8055 = vcmp.lt.s32.totalorder %v645, 0
        %v8056 = vand.u32 %v645, 2139095040
        %v8057 = vshrl.u32 %v8056, 23
        %v8058 = vsub.s32 %v8057, 127
        %v8059 = vand.u32 2147483647, %v645
        %v8060 = vand.u32 %v8059, 8388607
        %v8061 = vor.u32 %v8060, 8388608
        %v8062 = vsub.s32 0, %v8061
        %v8063 = vadd.s32 %v8058, 1
        %vm8064 = vcmp.gt.s32.totalorder %v8063, 0
        %v8065 = vsel %vm8064, %v8063, 0
        %v8066 = vshrl.u32 %v8065, 5
        %v8067 = vand.u32 %v8065, 31
        %v8068 = vsub.s32 32, %v8067
        %v8069 = vshrl.u32 683565275, %v8068
        %v8070 = vshll.u32 683565275, %v8067
        %v8071 = vshrl.u32 2475754826, %v8068
        %v8072 = vor.u32 %v8070, %v8071
        %v8073 = vshll.u32 2475754826, %v8067
        %v8074 = vshrl.u32 2131351028, %v8068
        %v8075 = vor.u32 %v8073, %v8074
        %v8076 = vshll.u32 2131351028, %v8067
        %v8077 = vshrl.u32 2102212464, %v8068
        %v8078 = vor.u32 %v8076, %v8077
        %v8079 = vshll.u32 2102212464, %v8067
        %v8080 = vshrl.u32 920167782, %v8068
        %v8081 = vor.u32 %v8079, %v8080
        %v8082 = vshll.u32 920167782, %v8067
        %v8083 = vshrl.u32 1326507024, %v8068
        %v8084 = vor.u32 %v8082, %v8083
        %vm8085 = vcmp.lt.s32.totalorder %v8066, 1
        %vm8086 = vcmp.lt.s32.totalorder %v8066, 2
        %vm8087 = vcmp.lt.s32.totalorder %v8066, 3
        %vm8088 = vcmp.lt.s32.totalorder %v8066, 4
        %v8089 = vsel %vm8085, %v8069, %v8072
        %v8090 = vsel %vm8088, %v8078, 2102212464
        %v8091 = vsel %vm8087, %v8075, %v8090
        %v8092 = vsel %vm8086, %v8089, %v8091
        %v8093 = vsel %vm8085, %v8072, %v8075
        %v8094 = vsel %vm8088, %v8081, 920167782
        %v8095 = vsel %vm8087, %v8078, %v8094
        %v8096 = vsel %vm8086, %v8093, %v8095
        %v8097 = vsel %vm8085, %v8075, %v8078
        %v8098 = vsel %vm8088, %v8084, 1326507024
        %v8099 = vsel %vm8087, %v8081, %v8098
        %v8100 = vsel %vm8086, %v8097, %v8099
        %v8101 = vshll.u32 %v8061, 8
        %v8102 = vand.u32 %v8101, 65535
        %v8103 = vshrl.u32 %v8101, 16
        %v8104 = vand.u32 %v8100, 65535
        %v8105 = vshrl.u32 %v8100, 16
        %v8106 = vmul.u32 %v8102, %v8104
        %v8107 = vmul.u32 %v8102, %v8105
        %v8108 = vmul.u32 %v8103, %v8104
        %v8109 = vmul.u32 %v8103, %v8105
        %v8110 = vshll.u32 %v8107, 16
        %v8111 = vshrl.u32 %v8107, 16
        %v8112 = vshll.u32 %v8108, 16
        %v8113 = vshrl.u32 %v8108, 16
        %vm8114 = vc.u32 %v8106, %v8110
        %v8115 = vsel %vm8114, 1, 0
        %v8116 = vadd.s32 %v8106, %v8110
        %v8117 = vadd.s32 %v8109, %v8115
        %vm8118 = vc.u32 %v8116, %v8112
        %v8119 = vsel %vm8118, 1, 0
        %v8120 = vadd.s32 %v8116, %v8112
        %v8121 = vadd.s32 %v8117, %v8119
        %v8122 = vadd.s32 %v8121, %v8111
        %v8123 = vadd.s32 %v8122, %v8113
        %v8124 = vand.u32 %v8101, 65535
        %v8125 = vshrl.u32 %v8101, 16
        %v8126 = vand.u32 %v8096, 65535
        %v8127 = vshrl.u32 %v8096, 16
        %v8128 = vmul.u32 %v8124, %v8126
        %v8129 = vmul.u32 %v8124, %v8127
        %v8130 = vmul.u32 %v8125, %v8126
        %v8131 = vmul.u32 %v8125, %v8127
        %v8132 = vshll.u32 %v8129, 16
        %v8133 = vshrl.u32 %v8129, 16
        %v8134 = vshll.u32 %v8130, 16
        %v8135 = vshrl.u32 %v8130, 16
        %vm8136 = vc.u32 %v8128, %v8132
        %v8137 = vsel %vm8136, 1, 0
        %v8138 = vadd.s32 %v8128, %v8132
        %v8139 = vadd.s32 %v8131, %v8137
        %vm8140 = vc.u32 %v8138, %v8134
        %v8141 = vsel %vm8140, 1, 0
        %v8142 = vadd.s32 %v8138, %v8134
        %v8143 = vadd.s32 %v8139, %v8141
        %v8144 = vadd.s32 %v8143, %v8133
        %v8145 = vadd.s32 %v8144, %v8135
        %v8146 = vmul.u32 %v8101, %v8092
        %v8147 = vadd.s32 %v8123, %v8142
        %vm8148 = vc.u32 %v8123, %v8142
        %v8149 = vadd.s32 %v8145, 1
        %v8150 = vsel %vm8148, %v8149, %v8145
        %v8151 = vadd.s32 %v8146, %v8150
        %v8152 = vadd.s32 %v8151, 536870912
        %v8153 = vshrl.u32 %v8152, 30
        %v8154 = vshll.u32 %v8153, 30
        %v8155 = vsub.s32 %v8151, %v8154
        %vm8156 = vcmp.lt.s32.totalorder %v8155, 0
        %v8157 = vsub.s32 0, %v8155
        %v8158 = vsel %vm8156, %v8157, %v8155
        %v8159 = vclz %v8158
        %v8160 = vsub.s32 %v8159, 2
        %vm8161 = vcmp.gt.s32.totalorder 0, %v8160
        %v8162 = vsel %vm8161, 0, %v8160
        %v8163 = vsub.s32 32, %v8162
        %v8164 = vshll.u32 %v8155, %v8162
        %v8165 = vshrl.u32 %v8147, %v8163
        %v8166 = vor.u32 %v8164, %v8165
        %v8167 = vsub.s32 4294967266, %v8162
        %v8168 = vadd.s32 %v8167, 127
        %v8169 = vshll.u32 %v8168, 23
        %v8170 = vor.u32 4788187, %v8169
        %v8171 = vand.u32 2147483647, %v8170
        %v8173 = vcvt.s32.f32 %v8166
        %v8174 = vmul.f32 %v8173, %v8171
        %v8175 = vxor.u32 %v8174, 2147483648
        %v8176 = vsel %vm8055, %v8175, %v8174
        %v8177 = vsub.s32 4, %v8153
        %v8178 = vsel %vm8055, %v8177, %v8153
        %v8179 = vsel %vm8054, %v645, %v8176
        %v8180 = vsel %vm8054, 0, %v8178
        %v8181 = vmul.f32 %v8179, %v8179
        %v8182 = vmul.f32 %v8181, -0.001358992
        %v8183 = vadd.f32 %v8182, 0.041655596
        %v8184 = vmul.f32 %v8181, %v8183
        %v8185 = vadd.f32 %v8184, -0.4999988
        %v8186 = vmul.f32 %v8181, %v8185
        %v8187 = vadd.f32 1.0, %v8186
        %v8188 = vmul.f32 %v8179, %v8179
        %v8189 = vmul.f32 %v8188, -0.00019511016
        %v8190 = vadd.f32 %v8189, 0.008332121
        %v8191 = vmul.f32 %v8188, %v8190
        %v8192 = vadd.f32 %v8191, -0.16666654
        %v8193 = vmul.f32 %v8188, %v8192
        %v8194 = vadd.f32 %v8193, 1.0
        %v8195 = vmul.f32 %v8194, %v8179
        %vm8196 = vweird.f32 %v645
        %v8197 = vand.u32 %v8180, 3
        %vm8198 = vcmp.lt.s32.totalorder %v8197, 2
        %vm8199 = vcmp.eq.s32.totalorder %v8197, 0
        %v8200 = vxor.u32 %v8195, 2147483648
        %v8201 = vsel %vm8199, %v8187, %v8200
        %vm8202 = vcmp.eq.s32.totalorder %v8197, 2
        %v8203 = vxor.u32 %v8187, 2147483648
        %v8204 = vsel %vm8202, %v8203, %v8195
        %v8205 = vsel %vm8198, %v8201, %v8204
        %v8206 = vsel %vm8196, nan, %v8205
        %v8207 = vand.u32 2147483647, %v646
        %vm8208 = vcmp.le.f32.partialorder %v8207, 0.7853982
        %vm8209 = vcmp.lt.s32.totalorder %v646, 0
        %v8210 = vand.u32 %v646, 2139095040
        %v8211 = vshrl.u32 %v8210, 23
        %v8212 = vsub.s32 %v8211, 127
        %v8213 = vand.u32 2147483647, %v646
        %v8214 = vand.u32 %v8213, 8388607
        %v8215 = vor.u32 %v8214, 8388608
        %v8216 = vsub.s32 0, %v8215
        %v8217 = vadd.s32 %v8212, 1
        %vm8218 = vcmp.gt.s32.totalorder %v8217, 0
        %v8219 = vsel %vm8218, %v8217, 0
        %v8220 = vshrl.u32 %v8219, 5
        %v8221 = vand.u32 %v8219, 31
        %v8222 = vsub.s32 32, %v8221
        %v8223 = vshrl.u32 683565275, %v8222
        %v8224 = vshll.u32 683565275, %v8221
        %v8225 = vshrl.u32 2475754826, %v8222
        %v8226 = vor.u32 %v8224, %v8225
        %v8227 = vshll.u32 2475754826, %v8221
        %v8228 = vshrl.u32 2131351028, %v8222
        %v8229 = vor.u32 %v8227, %v8228
        %v8230 = vshll.u32 2131351028, %v8221
        %v8231 = vshrl.u32 2102212464, %v8222
        %v8232 = vor.u32 %v8230, %v8231
        %v8233 = vshll.u32 2102212464, %v8221
        %v8234 = vshrl.u32 920167782, %v8222
        %v8235 = vor.u32 %v8233, %v8234
        %v8236 = vshll.u32 920167782, %v8221
        %v8237 = vshrl.u32 1326507024, %v8222
        %v8238 = vor.u32 %v8236, %v8237
        %vm8239 = vcmp.lt.s32.totalorder %v8220, 1
        %vm8240 = vcmp.lt.s32.totalorder %v8220, 2
        %vm8241 = vcmp.lt.s32.totalorder %v8220, 3
        %vm8242 = vcmp.lt.s32.totalorder %v8220, 4
        %v8243 = vsel %vm8239, %v8223, %v8226
        %v8244 = vsel %vm8242, %v8232, 2102212464
        %v8245 = vsel %vm8241, %v8229, %v8244
        %v8246 = vsel %vm8240, %v8243, %v8245
        %v8247 = vsel %vm8239, %v8226, %v8229
        %v8248 = vsel %vm8242, %v8235, 920167782
        %v8249 = vsel %vm8241, %v8232, %v8248
        %v8250 = vsel %vm8240, %v8247, %v8249
        %v8251 = vsel %vm8239, %v8229, %v8232
        %v8252 = vsel %vm8242, %v8238, 1326507024
        %v8253 = vsel %vm8241, %v8235, %v8252
        %v8254 = vsel %vm8240, %v8251, %v8253
        %v8255 = vshll.u32 %v8215, 8
        %v8256 = vand.u32 %v8255, 65535
        %v8257 = vshrl.u32 %v8255, 16
        %v8258 = vand.u32 %v8254, 65535
        %v8259 = vshrl.u32 %v8254, 16
        %v8260 = vmul.u32 %v8256, %v8258
        %v8261 = vmul.u32 %v8256, %v8259
        %v8262 = vmul.u32 %v8257, %v8258
        %v8263 = vmul.u32 %v8257, %v8259
        %v8264 = vshll.u32 %v8261, 16
        %v8265 = vshrl.u32 %v8261, 16
        %v8266 = vshll.u32 %v8262, 16
        %v8267 = vshrl.u32 %v8262, 16
        %vm8268 = vc.u32 %v8260, %v8264
        %v8269 = vsel %vm8268, 1, 0
        %v8270 = vadd.s32 %v8260, %v8264
        %v8271 = vadd.s32 %v8263, %v8269
        %vm8272 = vc.u32 %v8270, %v8266
        %v8273 = vsel %vm8272, 1, 0
        %v8274 = vadd.s32 %v8270, %v8266
        %v8275 = vadd.s32 %v8271, %v8273
        %v8276 = vadd.s32 %v8275, %v8265
        %v8277 = vadd.s32 %v8276, %v8267
        %v8278 = vand.u32 %v8255, 65535
        %v8279 = vshrl.u32 %v8255, 16
        %v8280 = vand.u32 %v8250, 65535
        %v8281 = vshrl.u32 %v8250, 16
        %v8282 = vmul.u32 %v8278, %v8280
        %v8283 = vmul.u32 %v8278, %v8281
        %v8284 = vmul.u32 %v8279, %v8280
        %v8285 = vmul.u32 %v8279, %v8281
        %v8286 = vshll.u32 %v8283, 16
        %v8287 = vshrl.u32 %v8283, 16
        %v8288 = vshll.u32 %v8284, 16
        %v8289 = vshrl.u32 %v8284, 16
        %vm8290 = vc.u32 %v8282, %v8286
        %v8291 = vsel %vm8290, 1, 0
        %v8292 = vadd.s32 %v8282, %v8286
        %v8293 = vadd.s32 %v8285, %v8291
        %vm8294 = vc.u32 %v8292, %v8288
        %v8295 = vsel %vm8294, 1, 0
        %v8296 = vadd.s32 %v8292, %v8288
        %v8297 = vadd.s32 %v8293, %v8295
        %v8298 = vadd.s32 %v8297, %v8287
        %v8299 = vadd.s32 %v8298, %v8289
        %v8300 = vmul.u32 %v8255, %v8246
        %v8301 = vadd.s32 %v8277, %v8296
        %vm8302 = vc.u32 %v8277, %v8296
        %v8303 = vadd.s32 %v8299, 1
        %v8304 = vsel %vm8302, %v8303, %v8299
        %v8305 = vadd.s32 %v8300, %v8304
        %v8306 = vadd.s32 %v8305, 536870912
        %v8307 = vshrl.u32 %v8306, 30
        %v8308 = vshll.u32 %v8307, 30
        %v8309 = vsub.s32 %v8305, %v8308
        %vm8310 = vcmp.lt.s32.totalorder %v8309, 0
        %v8311 = vsub.s32 0, %v8309
        %v8312 = vsel %vm8310, %v8311, %v8309
        %v8313 = vclz %v8312
        %v8314 = vsub.s32 %v8313, 2
        %vm8315 = vcmp.gt.s32.totalorder 0, %v8314
        %v8316 = vsel %vm8315, 0, %v8314
        %v8317 = vsub.s32 32, %v8316
        %v8318 = vshll.u32 %v8309, %v8316
        %v8319 = vshrl.u32 %v8301, %v8317
        %v8320 = vor.u32 %v8318, %v8319
        %v8321 = vsub.s32 4294967266, %v8316
        %v8322 = vadd.s32 %v8321, 127
        %v8323 = vshll.u32 %v8322, 23
        %v8324 = vor.u32 4788187, %v8323
        %v8325 = vand.u32 2147483647, %v8324
        %v8327 = vcvt.s32.f32 %v8320
        %v8328 = vmul.f32 %v8327, %v8325
        %v8329 = vxor.u32 %v8328, 2147483648
        %v8330 = vsel %vm8209, %v8329, %v8328
        %v8331 = vsub.s32 4, %v8307
        %v8332 = vsel %vm8209, %v8331, %v8307
        %v8333 = vsel %vm8208, %v646, %v8330
        %v8334 = vsel %vm8208, 0, %v8332
        %v8335 = vmul.f32 %v8333, %v8333
        %v8336 = vmul.f32 %v8335, -0.001358992
        %v8337 = vadd.f32 %v8336, 0.041655596
        %v8338 = vmul.f32 %v8335, %v8337
        %v8339 = vadd.f32 %v8338, -0.4999988
        %v8340 = vmul.f32 %v8335, %v8339
        %v8341 = vadd.f32 1.0, %v8340
        %v8342 = vmul.f32 %v8333, %v8333
        %v8343 = vmul.f32 %v8342, -0.00019511016
        %v8344 = vadd.f32 %v8343, 0.008332121
        %v8345 = vmul.f32 %v8342, %v8344
        %v8346 = vadd.f32 %v8345, -0.16666654
        %v8347 = vmul.f32 %v8342, %v8346
        %v8348 = vadd.f32 %v8347, 1.0
        %v8349 = vmul.f32 %v8348, %v8333
        %vm8350 = vweird.f32 %v646
        %v8351 = vand.u32 %v8334, 3
        %vm8352 = vcmp.lt.s32.totalorder %v8351, 2
        %vm8353 = vcmp.eq.s32.totalorder %v8351, 0
        %v8354 = vxor.u32 %v8349, 2147483648
        %v8355 = vsel %vm8353, %v8341, %v8354
        %vm8356 = vcmp.eq.s32.totalorder %v8351, 2
        %v8357 = vxor.u32 %v8341, 2147483648
        %v8358 = vsel %vm8356, %v8357, %v8349
        %v8359 = vsel %vm8352, %v8355, %v8358
        %v8360 = vsel %vm8350, nan, %v8359
        %v8361 = vand.u32 2147483647, %v647
        %vm8362 = vcmp.le.f32.partialorder %v8361, 0.7853982
        %vm8363 = vcmp.lt.s32.totalorder %v647, 0
        %v8364 = vand.u32 %v647, 2139095040
        %v8365 = vshrl.u32 %v8364, 23
        %v8366 = vsub.s32 %v8365, 127
        %v8367 = vand.u32 2147483647, %v647
        %v8368 = vand.u32 %v8367, 8388607
        %v8369 = vor.u32 %v8368, 8388608
        %v8370 = vsub.s32 0, %v8369
        %v8371 = vadd.s32 %v8366, 1
        %vm8372 = vcmp.gt.s32.totalorder %v8371, 0
        %v8373 = vsel %vm8372, %v8371, 0
        %v8374 = vshrl.u32 %v8373, 5
        %v8375 = vand.u32 %v8373, 31
        %v8376 = vsub.s32 32, %v8375
        %v8377 = vshrl.u32 683565275, %v8376
        %v8378 = vshll.u32 683565275, %v8375
        %v8379 = vshrl.u32 2475754826, %v8376
        %v8380 = vor.u32 %v8378, %v8379
        %v8381 = vshll.u32 2475754826, %v8375
        %v8382 = vshrl.u32 2131351028, %v8376
        %v8383 = vor.u32 %v8381, %v8382
        %v8384 = vshll.u32 2131351028, %v8375
        %v8385 = vshrl.u32 2102212464, %v8376
        %v8386 = vor.u32 %v8384, %v8385
        %v8387 = vshll.u32 2102212464, %v8375
        %v8388 = vshrl.u32 920167782, %v8376
        %v8389 = vor.u32 %v8387, %v8388
        %v8390 = vshll.u32 920167782, %v8375
        %v8391 = vshrl.u32 1326507024, %v8376
        %v8392 = vor.u32 %v8390, %v8391
        %vm8393 = vcmp.lt.s32.totalorder %v8374, 1
        %vm8394 = vcmp.lt.s32.totalorder %v8374, 2
        %vm8395 = vcmp.lt.s32.totalorder %v8374, 3
        %vm8396 = vcmp.lt.s32.totalorder %v8374, 4
        %v8397 = vsel %vm8393, %v8377, %v8380
        %v8398 = vsel %vm8396, %v8386, 2102212464
        %v8399 = vsel %vm8395, %v8383, %v8398
        %v8400 = vsel %vm8394, %v8397, %v8399
        %v8401 = vsel %vm8393, %v8380, %v8383
        %v8402 = vsel %vm8396, %v8389, 920167782
        %v8403 = vsel %vm8395, %v8386, %v8402
        %v8404 = vsel %vm8394, %v8401, %v8403
        %v8405 = vsel %vm8393, %v8383, %v8386
        %v8406 = vsel %vm8396, %v8392, 1326507024
        %v8407 = vsel %vm8395, %v8389, %v8406
        %v8408 = vsel %vm8394, %v8405, %v8407
        %v8409 = vshll.u32 %v8369, 8
        %v8410 = vand.u32 %v8409, 65535
        %v8411 = vshrl.u32 %v8409, 16
        %v8412 = vand.u32 %v8408, 65535
        %v8413 = vshrl.u32 %v8408, 16
        %v8414 = vmul.u32 %v8410, %v8412
        %v8415 = vmul.u32 %v8410, %v8413
        %v8416 = vmul.u32 %v8411, %v8412
        %v8417 = vmul.u32 %v8411, %v8413
        %v8418 = vshll.u32 %v8415, 16
        %v8419 = vshrl.u32 %v8415, 16
        %v8420 = vshll.u32 %v8416, 16
        %v8421 = vshrl.u32 %v8416, 16
        %vm8422 = vc.u32 %v8414, %v8418
        %v8423 = vsel %vm8422, 1, 0
        %v8424 = vadd.s32 %v8414, %v8418
        %v8425 = vadd.s32 %v8417, %v8423
        %vm8426 = vc.u32 %v8424, %v8420
        %v8427 = vsel %vm8426, 1, 0
        %v8428 = vadd.s32 %v8424, %v8420
        %v8429 = vadd.s32 %v8425, %v8427
        %v8430 = vadd.s32 %v8429, %v8419
        %v8431 = vadd.s32 %v8430, %v8421
        %v8432 = vand.u32 %v8409, 65535
        %v8433 = vshrl.u32 %v8409, 16
        %v8434 = vand.u32 %v8404, 65535
        %v8435 = vshrl.u32 %v8404, 16
        %v8436 = vmul.u32 %v8432, %v8434
        %v8437 = vmul.u32 %v8432, %v8435
        %v8438 = vmul.u32 %v8433, %v8434
        %v8439 = vmul.u32 %v8433, %v8435
        %v8440 = vshll.u32 %v8437, 16
        %v8441 = vshrl.u32 %v8437, 16
        %v8442 = vshll.u32 %v8438, 16
        %v8443 = vshrl.u32 %v8438, 16
        %vm8444 = vc.u32 %v8436, %v8440
        %v8445 = vsel %vm8444, 1, 0
        %v8446 = vadd.s32 %v8436, %v8440
        %v8447 = vadd.s32 %v8439, %v8445
        %vm8448 = vc.u32 %v8446, %v8442
        %v8449 = vsel %vm8448, 1, 0
        %v8450 = vadd.s32 %v8446, %v8442
        %v8451 = vadd.s32 %v8447, %v8449
        %v8452 = vadd.s32 %v8451, %v8441
        %v8453 = vadd.s32 %v8452, %v8443
        %v8454 = vmul.u32 %v8409, %v8400
        %v8455 = vadd.s32 %v8431, %v8450
        %vm8456 = vc.u32 %v8431, %v8450
        %v8457 = vadd.s32 %v8453, 1
        %v8458 = vsel %vm8456, %v8457, %v8453
        %v8459 = vadd.s32 %v8454, %v8458
        %v8460 = vadd.s32 %v8459, 536870912
        %v8461 = vshrl.u32 %v8460, 30
        %v8462 = vshll.u32 %v8461, 30
        %v8463 = vsub.s32 %v8459, %v8462
        %vm8464 = vcmp.lt.s32.totalorder %v8463, 0
        %v8465 = vsub.s32 0, %v8463
        %v8466 = vsel %vm8464, %v8465, %v8463
        %v8467 = vclz %v8466
        %v8468 = vsub.s32 %v8467, 2
        %vm8469 = vcmp.gt.s32.totalorder 0, %v8468
        %v8470 = vsel %vm8469, 0, %v8468
        %v8471 = vsub.s32 32, %v8470
        %v8472 = vshll.u32 %v8463, %v8470
        %v8473 = vshrl.u32 %v8455, %v8471
        %v8474 = vor.u32 %v8472, %v8473
        %v8475 = vsub.s32 4294967266, %v8470
        %v8476 = vadd.s32 %v8475, 127
        %v8477 = vshll.u32 %v8476, 23
        %v8478 = vor.u32 4788187, %v8477
        %v8479 = vand.u32 2147483647, %v8478
        %v8481 = vcvt.s32.f32 %v8474
        %v8482 = vmul.f32 %v8481, %v8479
        %v8483 = vxor.u32 %v8482, 2147483648
        %v8484 = vsel %vm8363, %v8483, %v8482
        %v8485 = vsub.s32 4, %v8461
        %v8486 = vsel %vm8363, %v8485, %v8461
        %v8487 = vsel %vm8362, %v647, %v8484
        %v8488 = vsel %vm8362, 0, %v8486
        %v8489 = vmul.f32 %v8487, %v8487
        %v8490 = vmul.f32 %v8489, -0.001358992
        %v8491 = vadd.f32 %v8490, 0.041655596
        %v8492 = vmul.f32 %v8489, %v8491
        %v8493 = vadd.f32 %v8492, -0.4999988
        %v8494 = vmul.f32 %v8489, %v8493
        %v8495 = vadd.f32 1.0, %v8494
        %v8496 = vmul.f32 %v8487, %v8487
        %v8497 = vmul.f32 %v8496, -0.00019511016
        %v8498 = vadd.f32 %v8497, 0.008332121
        %v8499 = vmul.f32 %v8496, %v8498
        %v8500 = vadd.f32 %v8499, -0.16666654
        %v8501 = vmul.f32 %v8496, %v8500
        %v8502 = vadd.f32 %v8501, 1.0
        %v8503 = vmul.f32 %v8502, %v8487
        %vm8504 = vweird.f32 %v647
        %v8505 = vand.u32 %v8488, 3
        %vm8506 = vcmp.lt.s32.totalorder %v8505, 2
        %vm8507 = vcmp.eq.s32.totalorder %v8505, 0
        %v8508 = vxor.u32 %v8503, 2147483648
        %v8509 = vsel %vm8507, %v8495, %v8508
        %vm8510 = vcmp.eq.s32.totalorder %v8505, 2
        %v8511 = vxor.u32 %v8495, 2147483648
        %v8512 = vsel %vm8510, %v8511, %v8503
        %v8513 = vsel %vm8506, %v8509, %v8512
        %v8514 = vsel %vm8504, nan, %v8513
        %v8515 = vand.u32 2147483647, %v648
        %vm8516 = vcmp.le.f32.partialorder %v8515, 0.7853982
        %vm8517 = vcmp.lt.s32.totalorder %v648, 0
        %v8518 = vand.u32 %v648, 2139095040
        %v8519 = vshrl.u32 %v8518, 23
        %v8520 = vsub.s32 %v8519, 127
        %v8521 = vand.u32 2147483647, %v648
        %v8522 = vand.u32 %v8521, 8388607
        %v8523 = vor.u32 %v8522, 8388608
        %v8524 = vsub.s32 0, %v8523
        %v8525 = vadd.s32 %v8520, 1
        %vm8526 = vcmp.gt.s32.totalorder %v8525, 0
        %v8527 = vsel %vm8526, %v8525, 0
        %v8528 = vshrl.u32 %v8527, 5
        %v8529 = vand.u32 %v8527, 31
        %v8530 = vsub.s32 32, %v8529
        %v8531 = vshrl.u32 683565275, %v8530
        %v8532 = vshll.u32 683565275, %v8529
        %v8533 = vshrl.u32 2475754826, %v8530
        %v8534 = vor.u32 %v8532, %v8533
        %v8535 = vshll.u32 2475754826, %v8529
        %v8536 = vshrl.u32 2131351028, %v8530
        %v8537 = vor.u32 %v8535, %v8536
        %v8538 = vshll.u32 2131351028, %v8529
        %v8539 = vshrl.u32 2102212464, %v8530
        %v8540 = vor.u32 %v8538, %v8539
        %v8541 = vshll.u32 2102212464, %v8529
        %v8542 = vshrl.u32 920167782, %v8530
        %v8543 = vor.u32 %v8541, %v8542
        %v8544 = vshll.u32 920167782, %v8529
        %v8545 = vshrl.u32 1326507024, %v8530
        %v8546 = vor.u32 %v8544, %v8545
        %vm8547 = vcmp.lt.s32.totalorder %v8528, 1
        %vm8548 = vcmp.lt.s32.totalorder %v8528, 2
        %vm8549 = vcmp.lt.s32.totalorder %v8528, 3
        %vm8550 = vcmp.lt.s32.totalorder %v8528, 4
        %v8551 = vsel %vm8547, %v8531, %v8534
        %v8552 = vsel %vm8550, %v8540, 2102212464
        %v8553 = vsel %vm8549, %v8537, %v8552
        %v8554 = vsel %vm8548, %v8551, %v8553
        %v8555 = vsel %vm8547, %v8534, %v8537
        %v8556 = vsel %vm8550, %v8543, 920167782
        %v8557 = vsel %vm8549, %v8540, %v8556
        %v8558 = vsel %vm8548, %v8555, %v8557
        %v8559 = vsel %vm8547, %v8537, %v8540
        %v8560 = vsel %vm8550, %v8546, 1326507024
        %v8561 = vsel %vm8549, %v8543, %v8560
        %v8562 = vsel %vm8548, %v8559, %v8561
        %v8563 = vshll.u32 %v8523, 8
        %v8564 = vand.u32 %v8563, 65535
        %v8565 = vshrl.u32 %v8563, 16
        %v8566 = vand.u32 %v8562, 65535
        %v8567 = vshrl.u32 %v8562, 16
        %v8568 = vmul.u32 %v8564, %v8566
        %v8569 = vmul.u32 %v8564, %v8567
        %v8570 = vmul.u32 %v8565, %v8566
        %v8571 = vmul.u32 %v8565, %v8567
        %v8572 = vshll.u32 %v8569, 16
        %v8573 = vshrl.u32 %v8569, 16
        %v8574 = vshll.u32 %v8570, 16
        %v8575 = vshrl.u32 %v8570, 16
        %vm8576 = vc.u32 %v8568, %v8572
        %v8577 = vsel %vm8576, 1, 0
        %v8578 = vadd.s32 %v8568, %v8572
        %v8579 = vadd.s32 %v8571, %v8577
        %vm8580 = vc.u32 %v8578, %v8574
        %v8581 = vsel %vm8580, 1, 0
        %v8582 = vadd.s32 %v8578, %v8574
        %v8583 = vadd.s32 %v8579, %v8581
        %v8584 = vadd.s32 %v8583, %v8573
        %v8585 = vadd.s32 %v8584, %v8575
        %v8586 = vand.u32 %v8563, 65535
        %v8587 = vshrl.u32 %v8563, 16
        %v8588 = vand.u32 %v8558, 65535
        %v8589 = vshrl.u32 %v8558, 16
        %v8590 = vmul.u32 %v8586, %v8588
        %v8591 = vmul.u32 %v8586, %v8589
        %v8592 = vmul.u32 %v8587, %v8588
        %v8593 = vmul.u32 %v8587, %v8589
        %v8594 = vshll.u32 %v8591, 16
        %v8595 = vshrl.u32 %v8591, 16
        %v8596 = vshll.u32 %v8592, 16
        %v8597 = vshrl.u32 %v8592, 16
        %vm8598 = vc.u32 %v8590, %v8594
        %v8599 = vsel %vm8598, 1, 0
        %v8600 = vadd.s32 %v8590, %v8594
        %v8601 = vadd.s32 %v8593, %v8599
        %vm8602 = vc.u32 %v8600, %v8596
        %v8603 = vsel %vm8602, 1, 0
        %v8604 = vadd.s32 %v8600, %v8596
        %v8605 = vadd.s32 %v8601, %v8603
        %v8606 = vadd.s32 %v8605, %v8595
        %v8607 = vadd.s32 %v8606, %v8597
        %v8608 = vmul.u32 %v8563, %v8554
        %v8609 = vadd.s32 %v8585, %v8604
        %vm8610 = vc.u32 %v8585, %v8604
        %v8611 = vadd.s32 %v8607, 1
        %v8612 = vsel %vm8610, %v8611, %v8607
        %v8613 = vadd.s32 %v8608, %v8612
        %v8614 = vadd.s32 %v8613, 536870912
        %v8615 = vshrl.u32 %v8614, 30
        %v8616 = vshll.u32 %v8615, 30
        %v8617 = vsub.s32 %v8613, %v8616
        %vm8618 = vcmp.lt.s32.totalorder %v8617, 0
        %v8619 = vsub.s32 0, %v8617
        %v8620 = vsel %vm8618, %v8619, %v8617
        %v8621 = vclz %v8620
        %v8622 = vsub.s32 %v8621, 2
        %vm8623 = vcmp.gt.s32.totalorder 0, %v8622
        %v8624 = vsel %vm8623, 0, %v8622
        %v8625 = vsub.s32 32, %v8624
        %v8626 = vshll.u32 %v8617, %v8624
        %v8627 = vshrl.u32 %v8609, %v8625
        %v8628 = vor.u32 %v8626, %v8627
        %v8629 = vsub.s32 4294967266, %v8624
        %v8630 = vadd.s32 %v8629, 127
        %v8631 = vshll.u32 %v8630, 23
        %v8632 = vor.u32 4788187, %v8631
        %v8633 = vand.u32 2147483647, %v8632
        %v8635 = vcvt.s32.f32 %v8628
        %v8636 = vmul.f32 %v8635, %v8633
        %v8637 = vxor.u32 %v8636, 2147483648
        %v8638 = vsel %vm8517, %v8637, %v8636
        %v8639 = vsub.s32 4, %v8615
        %v8640 = vsel %vm8517, %v8639, %v8615
        %v8641 = vsel %vm8516, %v648, %v8638
        %v8642 = vsel %vm8516, 0, %v8640
        %v8643 = vmul.f32 %v8641, %v8641
        %v8644 = vmul.f32 %v8643, -0.001358992
        %v8645 = vadd.f32 %v8644, 0.041655596
        %v8646 = vmul.f32 %v8643, %v8645
        %v8647 = vadd.f32 %v8646, -0.4999988
        %v8648 = vmul.f32 %v8643, %v8647
        %v8649 = vadd.f32 1.0, %v8648
        %v8650 = vmul.f32 %v8641, %v8641
        %v8651 = vmul.f32 %v8650, -0.00019511016
        %v8652 = vadd.f32 %v8651, 0.008332121
        %v8653 = vmul.f32 %v8650, %v8652
        %v8654 = vadd.f32 %v8653, -0.16666654
        %v8655 = vmul.f32 %v8650, %v8654
        %v8656 = vadd.f32 %v8655, 1.0
        %v8657 = vmul.f32 %v8656, %v8641
        %vm8658 = vweird.f32 %v648
        %v8659 = vand.u32 %v8642, 3
        %vm8660 = vcmp.lt.s32.totalorder %v8659, 2
        %vm8661 = vcmp.eq.s32.totalorder %v8659, 0
        %v8662 = vxor.u32 %v8657, 2147483648
        %v8663 = vsel %vm8661, %v8649, %v8662
        %vm8664 = vcmp.eq.s32.totalorder %v8659, 2
        %v8665 = vxor.u32 %v8649, 2147483648
        %v8666 = vsel %vm8664, %v8665, %v8657
        %v8667 = vsel %vm8660, %v8663, %v8666
        %v8668 = vsel %vm8658, nan, %v8667
        %v8669 = vand.u32 2147483647, %v649
        %vm8670 = vcmp.le.f32.partialorder %v8669, 0.7853982
        %vm8671 = vcmp.lt.s32.totalorder %v649, 0
        %v8672 = vand.u32 %v649, 2139095040
        %v8673 = vshrl.u32 %v8672, 23
        %v8674 = vsub.s32 %v8673, 127
        %v8675 = vand.u32 2147483647, %v649
        %v8676 = vand.u32 %v8675, 8388607
        %v8677 = vor.u32 %v8676, 8388608
        %v8678 = vsub.s32 0, %v8677
        %v8679 = vadd.s32 %v8674, 1
        %vm8680 = vcmp.gt.s32.totalorder %v8679, 0
        %v8681 = vsel %vm8680, %v8679, 0
        %v8682 = vshrl.u32 %v8681, 5
        %v8683 = vand.u32 %v8681, 31
        %v8684 = vsub.s32 32, %v8683
        %v8685 = vshrl.u32 683565275, %v8684
        %v8686 = vshll.u32 683565275, %v8683
        %v8687 = vshrl.u32 2475754826, %v8684
        %v8688 = vor.u32 %v8686, %v8687
        %v8689 = vshll.u32 2475754826, %v8683
        %v8690 = vshrl.u32 2131351028, %v8684
        %v8691 = vor.u32 %v8689, %v8690
        %v8692 = vshll.u32 2131351028, %v8683
        %v8693 = vshrl.u32 2102212464, %v8684
        %v8694 = vor.u32 %v8692, %v8693
        %v8695 = vshll.u32 2102212464, %v8683
        %v8696 = vshrl.u32 920167782, %v8684
        %v8697 = vor.u32 %v8695, %v8696
        %v8698 = vshll.u32 920167782, %v8683
        %v8699 = vshrl.u32 1326507024, %v8684
        %v8700 = vor.u32 %v8698, %v8699
        %vm8701 = vcmp.lt.s32.totalorder %v8682, 1
        %vm8702 = vcmp.lt.s32.totalorder %v8682, 2
        %vm8703 = vcmp.lt.s32.totalorder %v8682, 3
        %vm8704 = vcmp.lt.s32.totalorder %v8682, 4
        %v8705 = vsel %vm8701, %v8685, %v8688
        %v8706 = vsel %vm8704, %v8694, 2102212464
        %v8707 = vsel %vm8703, %v8691, %v8706
        %v8708 = vsel %vm8702, %v8705, %v8707
        %v8709 = vsel %vm8701, %v8688, %v8691
        %v8710 = vsel %vm8704, %v8697, 920167782
        %v8711 = vsel %vm8703, %v8694, %v8710
        %v8712 = vsel %vm8702, %v8709, %v8711
        %v8713 = vsel %vm8701, %v8691, %v8694
        %v8714 = vsel %vm8704, %v8700, 1326507024
        %v8715 = vsel %vm8703, %v8697, %v8714
        %v8716 = vsel %vm8702, %v8713, %v8715
        %v8717 = vshll.u32 %v8677, 8
        %v8718 = vand.u32 %v8717, 65535
        %v8719 = vshrl.u32 %v8717, 16
        %v8720 = vand.u32 %v8716, 65535
        %v8721 = vshrl.u32 %v8716, 16
        %v8722 = vmul.u32 %v8718, %v8720
        %v8723 = vmul.u32 %v8718, %v8721
        %v8724 = vmul.u32 %v8719, %v8720
        %v8725 = vmul.u32 %v8719, %v8721
        %v8726 = vshll.u32 %v8723, 16
        %v8727 = vshrl.u32 %v8723, 16
        %v8728 = vshll.u32 %v8724, 16
        %v8729 = vshrl.u32 %v8724, 16
        %vm8730 = vc.u32 %v8722, %v8726
        %v8731 = vsel %vm8730, 1, 0
        %v8732 = vadd.s32 %v8722, %v8726
        %v8733 = vadd.s32 %v8725, %v8731
        %vm8734 = vc.u32 %v8732, %v8728
        %v8735 = vsel %vm8734, 1, 0
        %v8736 = vadd.s32 %v8732, %v8728
        %v8737 = vadd.s32 %v8733, %v8735
        %v8738 = vadd.s32 %v8737, %v8727
        %v8739 = vadd.s32 %v8738, %v8729
        %v8740 = vand.u32 %v8717, 65535
        %v8741 = vshrl.u32 %v8717, 16
        %v8742 = vand.u32 %v8712, 65535
        %v8743 = vshrl.u32 %v8712, 16
        %v8744 = vmul.u32 %v8740, %v8742
        %v8745 = vmul.u32 %v8740, %v8743
        %v8746 = vmul.u32 %v8741, %v8742
        %v8747 = vmul.u32 %v8741, %v8743
        %v8748 = vshll.u32 %v8745, 16
        %v8749 = vshrl.u32 %v8745, 16
        %v8750 = vshll.u32 %v8746, 16
        %v8751 = vshrl.u32 %v8746, 16
        %vm8752 = vc.u32 %v8744, %v8748
        %v8753 = vsel %vm8752, 1, 0
        %v8754 = vadd.s32 %v8744, %v8748
        %v8755 = vadd.s32 %v8747, %v8753
        %vm8756 = vc.u32 %v8754, %v8750
        %v8757 = vsel %vm8756, 1, 0
        %v8758 = vadd.s32 %v8754, %v8750
        %v8759 = vadd.s32 %v8755, %v8757
        %v8760 = vadd.s32 %v8759, %v8749
        %v8761 = vadd.s32 %v8760, %v8751
        %v8762 = vmul.u32 %v8717, %v8708
        %v8763 = vadd.s32 %v8739, %v8758
        %vm8764 = vc.u32 %v8739, %v8758
        %v8765 = vadd.s32 %v8761, 1
        %v8766 = vsel %vm8764, %v8765, %v8761
        %v8767 = vadd.s32 %v8762, %v8766
        %v8768 = vadd.s32 %v8767, 536870912
        %v8769 = vshrl.u32 %v8768, 30
        %v8770 = vshll.u32 %v8769, 30
        %v8771 = vsub.s32 %v8767, %v8770
        %vm8772 = vcmp.lt.s32.totalorder %v8771, 0
        %v8773 = vsub.s32 0, %v8771
        %v8774 = vsel %vm8772, %v8773, %v8771
        %v8775 = vclz %v8774
        %v8776 = vsub.s32 %v8775, 2
        %vm8777 = vcmp.gt.s32.totalorder 0, %v8776
        %v8778 = vsel %vm8777, 0, %v8776
        %v8779 = vsub.s32 32, %v8778
        %v8780 = vshll.u32 %v8771, %v8778
        %v8781 = vshrl.u32 %v8763, %v8779
        %v8782 = vor.u32 %v8780, %v8781
        %v8783 = vsub.s32 4294967266, %v8778
        %v8784 = vadd.s32 %v8783, 127
        %v8785 = vshll.u32 %v8784, 23
        %v8786 = vor.u32 4788187, %v8785
        %v8787 = vand.u32 2147483647, %v8786
        %v8789 = vcvt.s32.f32 %v8782
        %v8790 = vmul.f32 %v8789, %v8787
        %v8791 = vxor.u32 %v8790, 2147483648
        %v8792 = vsel %vm8671, %v8791, %v8790
        %v8793 = vsub.s32 4, %v8769
        %v8794 = vsel %vm8671, %v8793, %v8769
        %v8795 = vsel %vm8670, %v649, %v8792
        %v8796 = vsel %vm8670, 0, %v8794
        %v8797 = vmul.f32 %v8795, %v8795
        %v8798 = vmul.f32 %v8797, -0.001358992
        %v8799 = vadd.f32 %v8798, 0.041655596
        %v8800 = vmul.f32 %v8797, %v8799
        %v8801 = vadd.f32 %v8800, -0.4999988
        %v8802 = vmul.f32 %v8797, %v8801
        %v8803 = vadd.f32 1.0, %v8802
        %v8804 = vmul.f32 %v8795, %v8795
        %v8805 = vmul.f32 %v8804, -0.00019511016
        %v8806 = vadd.f32 %v8805, 0.008332121
        %v8807 = vmul.f32 %v8804, %v8806
        %v8808 = vadd.f32 %v8807, -0.16666654
        %v8809 = vmul.f32 %v8804, %v8808
        %v8810 = vadd.f32 %v8809, 1.0
        %v8811 = vmul.f32 %v8810, %v8795
        %vm8812 = vweird.f32 %v649
        %v8813 = vand.u32 %v8796, 3
        %vm8814 = vcmp.lt.s32.totalorder %v8813, 2
        %vm8815 = vcmp.eq.s32.totalorder %v8813, 0
        %v8816 = vxor.u32 %v8811, 2147483648
        %v8817 = vsel %vm8815, %v8803, %v8816
        %vm8818 = vcmp.eq.s32.totalorder %v8813, 2
        %v8819 = vxor.u32 %v8803, 2147483648
        %v8820 = vsel %vm8818, %v8819, %v8811
        %v8821 = vsel %vm8814, %v8817, %v8820
        %v8822 = vsel %vm8812, nan, %v8821
        %v8823 = vand.u32 2147483647, %v650
        %vm8824 = vcmp.le.f32.partialorder %v8823, 0.7853982
        %vm8825 = vcmp.lt.s32.totalorder %v650, 0
        %v8826 = vand.u32 %v650, 2139095040
        %v8827 = vshrl.u32 %v8826, 23
        %v8828 = vsub.s32 %v8827, 127
        %v8829 = vand.u32 2147483647, %v650
        %v8830 = vand.u32 %v8829, 8388607
        %v8831 = vor.u32 %v8830, 8388608
        %v8832 = vsub.s32 0, %v8831
        %v8833 = vadd.s32 %v8828, 1
        %vm8834 = vcmp.gt.s32.totalorder %v8833, 0
        %v8835 = vsel %vm8834, %v8833, 0
        %v8836 = vshrl.u32 %v8835, 5
        %v8837 = vand.u32 %v8835, 31
        %v8838 = vsub.s32 32, %v8837
        %v8839 = vshrl.u32 683565275, %v8838
        %v8840 = vshll.u32 683565275, %v8837
        %v8841 = vshrl.u32 2475754826, %v8838
        %v8842 = vor.u32 %v8840, %v8841
        %v8843 = vshll.u32 2475754826, %v8837
        %v8844 = vshrl.u32 2131351028, %v8838
        %v8845 = vor.u32 %v8843, %v8844
        %v8846 = vshll.u32 2131351028, %v8837
        %v8847 = vshrl.u32 2102212464, %v8838
        %v8848 = vor.u32 %v8846, %v8847
        %v8849 = vshll.u32 2102212464, %v8837
        %v8850 = vshrl.u32 920167782, %v8838
        %v8851 = vor.u32 %v8849, %v8850
        %v8852 = vshll.u32 920167782, %v8837
        %v8853 = vshrl.u32 1326507024, %v8838
        %v8854 = vor.u32 %v8852, %v8853
        %vm8855 = vcmp.lt.s32.totalorder %v8836, 1
        %vm8856 = vcmp.lt.s32.totalorder %v8836, 2
        %vm8857 = vcmp.lt.s32.totalorder %v8836, 3
        %vm8858 = vcmp.lt.s32.totalorder %v8836, 4
        %v8859 = vsel %vm8855, %v8839, %v8842
        %v8860 = vsel %vm8858, %v8848, 2102212464
        %v8861 = vsel %vm8857, %v8845, %v8860
        %v8862 = vsel %vm8856, %v8859, %v8861
        %v8863 = vsel %vm8855, %v8842, %v8845
        %v8864 = vsel %vm8858, %v8851, 920167782
        %v8865 = vsel %vm8857, %v8848, %v8864
        %v8866 = vsel %vm8856, %v8863, %v8865
        %v8867 = vsel %vm8855, %v8845, %v8848
        %v8868 = vsel %vm8858, %v8854, 1326507024
        %v8869 = vsel %vm8857, %v8851, %v8868
        %v8870 = vsel %vm8856, %v8867, %v8869
        %v8871 = vshll.u32 %v8831, 8
        %v8872 = vand.u32 %v8871, 65535
        %v8873 = vshrl.u32 %v8871, 16
        %v8874 = vand.u32 %v8870, 65535
        %v8875 = vshrl.u32 %v8870, 16
        %v8876 = vmul.u32 %v8872, %v8874
        %v8877 = vmul.u32 %v8872, %v8875
        %v8878 = vmul.u32 %v8873, %v8874
        %v8879 = vmul.u32 %v8873, %v8875
        %v8880 = vshll.u32 %v8877, 16
        %v8881 = vshrl.u32 %v8877, 16
        %v8882 = vshll.u32 %v8878, 16
        %v8883 = vshrl.u32 %v8878, 16
        %vm8884 = vc.u32 %v8876, %v8880
        %v8885 = vsel %vm8884, 1, 0
        %v8886 = vadd.s32 %v8876, %v8880
        %v8887 = vadd.s32 %v8879, %v8885
        %vm8888 = vc.u32 %v8886, %v8882
        %v8889 = vsel %vm8888, 1, 0
        %v8890 = vadd.s32 %v8886, %v8882
        %v8891 = vadd.s32 %v8887, %v8889
        %v8892 = vadd.s32 %v8891, %v8881
        %v8893 = vadd.s32 %v8892, %v8883
        %v8894 = vand.u32 %v8871, 65535
        %v8895 = vshrl.u32 %v8871, 16
        %v8896 = vand.u32 %v8866, 65535
        %v8897 = vshrl.u32 %v8866, 16
        %v8898 = vmul.u32 %v8894, %v8896
        %v8899 = vmul.u32 %v8894, %v8897
        %v8900 = vmul.u32 %v8895, %v8896
        %v8901 = vmul.u32 %v8895, %v8897
        %v8902 = vshll.u32 %v8899, 16
        %v8903 = vshrl.u32 %v8899, 16
        %v8904 = vshll.u32 %v8900, 16
        %v8905 = vshrl.u32 %v8900, 16
        %vm8906 = vc.u32 %v8898, %v8902
        %v8907 = vsel %vm8906, 1, 0
        %v8908 = vadd.s32 %v8898, %v8902
        %v8909 = vadd.s32 %v8901, %v8907
        %vm8910 = vc.u32 %v8908, %v8904
        %v8911 = vsel %vm8910, 1, 0
        %v8912 = vadd.s32 %v8908, %v8904
        %v8913 = vadd.s32 %v8909, %v8911
        %v8914 = vadd.s32 %v8913, %v8903
        %v8915 = vadd.s32 %v8914, %v8905
        %v8916 = vmul.u32 %v8871, %v8862
        %v8917 = vadd.s32 %v8893, %v8912
        %vm8918 = vc.u32 %v8893, %v8912
        %v8919 = vadd.s32 %v8915, 1
        %v8920 = vsel %vm8918, %v8919, %v8915
        %v8921 = vadd.s32 %v8916, %v8920
        %v8922 = vadd.s32 %v8921, 536870912
        %v8923 = vshrl.u32 %v8922, 30
        %v8924 = vshll.u32 %v8923, 30
        %v8925 = vsub.s32 %v8921, %v8924
        %vm8926 = vcmp.lt.s32.totalorder %v8925, 0
        %v8927 = vsub.s32 0, %v8925
        %v8928 = vsel %vm8926, %v8927, %v8925
        %v8929 = vclz %v8928
        %v8930 = vsub.s32 %v8929, 2
        %vm8931 = vcmp.gt.s32.totalorder 0, %v8930
        %v8932 = vsel %vm8931, 0, %v8930
        %v8933 = vsub.s32 32, %v8932
        %v8934 = vshll.u32 %v8925, %v8932
        %v8935 = vshrl.u32 %v8917, %v8933
        %v8936 = vor.u32 %v8934, %v8935
        %v8937 = vsub.s32 4294967266, %v8932
        %v8938 = vadd.s32 %v8937, 127
        %v8939 = vshll.u32 %v8938, 23
        %v8940 = vor.u32 4788187, %v8939
        %v8941 = vand.u32 2147483647, %v8940
        %v8943 = vcvt.s32.f32 %v8936
        %v8944 = vmul.f32 %v8943, %v8941
        %v8945 = vxor.u32 %v8944, 2147483648
        %v8946 = vsel %vm8825, %v8945, %v8944
        %v8947 = vsub.s32 4, %v8923
        %v8948 = vsel %vm8825, %v8947, %v8923
        %v8949 = vsel %vm8824, %v650, %v8946
        %v8950 = vsel %vm8824, 0, %v8948
        %v8951 = vmul.f32 %v8949, %v8949
        %v8952 = vmul.f32 %v8951, -0.001358992
        %v8953 = vadd.f32 %v8952, 0.041655596
        %v8954 = vmul.f32 %v8951, %v8953
        %v8955 = vadd.f32 %v8954, -0.4999988
        %v8956 = vmul.f32 %v8951, %v8955
        %v8957 = vadd.f32 1.0, %v8956
        %v8958 = vmul.f32 %v8949, %v8949
        %v8959 = vmul.f32 %v8958, -0.00019511016
        %v8960 = vadd.f32 %v8959, 0.008332121
        %v8961 = vmul.f32 %v8958, %v8960
        %v8962 = vadd.f32 %v8961, -0.16666654
        %v8963 = vmul.f32 %v8958, %v8962
        %v8964 = vadd.f32 %v8963, 1.0
        %v8965 = vmul.f32 %v8964, %v8949
        %vm8966 = vweird.f32 %v650
        %v8967 = vand.u32 %v8950, 3
        %vm8968 = vcmp.lt.s32.totalorder %v8967, 2
        %vm8969 = vcmp.eq.s32.totalorder %v8967, 0
        %v8970 = vxor.u32 %v8965, 2147483648
        %v8971 = vsel %vm8969, %v8957, %v8970
        %vm8972 = vcmp.eq.s32.totalorder %v8967, 2
        %v8973 = vxor.u32 %v8957, 2147483648
        %v8974 = vsel %vm8972, %v8973, %v8965
        %v8975 = vsel %vm8968, %v8971, %v8974
        %v8976 = vsel %vm8966, nan, %v8975
        %v8977 = vand.u32 2147483647, %v651
        %vm8978 = vcmp.le.f32.partialorder %v8977, 0.7853982
        %vm8979 = vcmp.lt.s32.totalorder %v651, 0
        %v8980 = vand.u32 %v651, 2139095040
        %v8981 = vshrl.u32 %v8980, 23
        %v8982 = vsub.s32 %v8981, 127
        %v8983 = vand.u32 2147483647, %v651
        %v8984 = vand.u32 %v8983, 8388607
        %v8985 = vor.u32 %v8984, 8388608
        %v8986 = vsub.s32 0, %v8985
        %v8987 = vadd.s32 %v8982, 1
        %vm8988 = vcmp.gt.s32.totalorder %v8987, 0
        %v8989 = vsel %vm8988, %v8987, 0
        %v8990 = vshrl.u32 %v8989, 5
        %v8991 = vand.u32 %v8989, 31
        %v8992 = vsub.s32 32, %v8991
        %v8993 = vshrl.u32 683565275, %v8992
        %v8994 = vshll.u32 683565275, %v8991
        %v8995 = vshrl.u32 2475754826, %v8992
        %v8996 = vor.u32 %v8994, %v8995
        %v8997 = vshll.u32 2475754826, %v8991
        %v8998 = vshrl.u32 2131351028, %v8992
        %v8999 = vor.u32 %v8997, %v8998
        %v9000 = vshll.u32 2131351028, %v8991
        %v9001 = vshrl.u32 2102212464, %v8992
        %v9002 = vor.u32 %v9000, %v9001
        %v9003 = vshll.u32 2102212464, %v8991
        %v9004 = vshrl.u32 920167782, %v8992
        %v9005 = vor.u32 %v9003, %v9004
        %v9006 = vshll.u32 920167782, %v8991
        %v9007 = vshrl.u32 1326507024, %v8992
        %v9008 = vor.u32 %v9006, %v9007
        %vm9009 = vcmp.lt.s32.totalorder %v8990, 1
        %vm9010 = vcmp.lt.s32.totalorder %v8990, 2
        %vm9011 = vcmp.lt.s32.totalorder %v8990, 3
        %vm9012 = vcmp.lt.s32.totalorder %v8990, 4
        %v9013 = vsel %vm9009, %v8993, %v8996
        %v9014 = vsel %vm9012, %v9002, 2102212464
        %v9015 = vsel %vm9011, %v8999, %v9014
        %v9016 = vsel %vm9010, %v9013, %v9015
        %v9017 = vsel %vm9009, %v8996, %v8999
        %v9018 = vsel %vm9012, %v9005, 920167782
        %v9019 = vsel %vm9011, %v9002, %v9018
        %v9020 = vsel %vm9010, %v9017, %v9019
        %v9021 = vsel %vm9009, %v8999, %v9002
        %v9022 = vsel %vm9012, %v9008, 1326507024
        %v9023 = vsel %vm9011, %v9005, %v9022
        %v9024 = vsel %vm9010, %v9021, %v9023
        %v9025 = vshll.u32 %v8985, 8
        %v9026 = vand.u32 %v9025, 65535
        %v9027 = vshrl.u32 %v9025, 16
        %v9028 = vand.u32 %v9024, 65535
        %v9029 = vshrl.u32 %v9024, 16
        %v9030 = vmul.u32 %v9026, %v9028
        %v9031 = vmul.u32 %v9026, %v9029
        %v9032 = vmul.u32 %v9027, %v9028
        %v9033 = vmul.u32 %v9027, %v9029
        %v9034 = vshll.u32 %v9031, 16
        %v9035 = vshrl.u32 %v9031, 16
        %v9036 = vshll.u32 %v9032, 16
        %v9037 = vshrl.u32 %v9032, 16
        %vm9038 = vc.u32 %v9030, %v9034
        %v9039 = vsel %vm9038, 1, 0
        %v9040 = vadd.s32 %v9030, %v9034
        %v9041 = vadd.s32 %v9033, %v9039
        %vm9042 = vc.u32 %v9040, %v9036
        %v9043 = vsel %vm9042, 1, 0
        %v9044 = vadd.s32 %v9040, %v9036
        %v9045 = vadd.s32 %v9041, %v9043
        %v9046 = vadd.s32 %v9045, %v9035
        %v9047 = vadd.s32 %v9046, %v9037
        %v9048 = vand.u32 %v9025, 65535
        %v9049 = vshrl.u32 %v9025, 16
        %v9050 = vand.u32 %v9020, 65535
        %v9051 = vshrl.u32 %v9020, 16
        %v9052 = vmul.u32 %v9048, %v9050
        %v9053 = vmul.u32 %v9048, %v9051
        %v9054 = vmul.u32 %v9049, %v9050
        %v9055 = vmul.u32 %v9049, %v9051
        %v9056 = vshll.u32 %v9053, 16
        %v9057 = vshrl.u32 %v9053, 16
        %v9058 = vshll.u32 %v9054, 16
        %v9059 = vshrl.u32 %v9054, 16
        %vm9060 = vc.u32 %v9052, %v9056
        %v9061 = vsel %vm9060, 1, 0
        %v9062 = vadd.s32 %v9052, %v9056
        %v9063 = vadd.s32 %v9055, %v9061
        %vm9064 = vc.u32 %v9062, %v9058
        %v9065 = vsel %vm9064, 1, 0
        %v9066 = vadd.s32 %v9062, %v9058
        %v9067 = vadd.s32 %v9063, %v9065
        %v9068 = vadd.s32 %v9067, %v9057
        %v9069 = vadd.s32 %v9068, %v9059
        %v9070 = vmul.u32 %v9025, %v9016
        %v9071 = vadd.s32 %v9047, %v9066
        %vm9072 = vc.u32 %v9047, %v9066
        %v9073 = vadd.s32 %v9069, 1
        %v9074 = vsel %vm9072, %v9073, %v9069
        %v9075 = vadd.s32 %v9070, %v9074
        %v9076 = vadd.s32 %v9075, 536870912
        %v9077 = vshrl.u32 %v9076, 30
        %v9078 = vshll.u32 %v9077, 30
        %v9079 = vsub.s32 %v9075, %v9078
        %vm9080 = vcmp.lt.s32.totalorder %v9079, 0
        %v9081 = vsub.s32 0, %v9079
        %v9082 = vsel %vm9080, %v9081, %v9079
        %v9083 = vclz %v9082
        %v9084 = vsub.s32 %v9083, 2
        %vm9085 = vcmp.gt.s32.totalorder 0, %v9084
        %v9086 = vsel %vm9085, 0, %v9084
        %v9087 = vsub.s32 32, %v9086
        %v9088 = vshll.u32 %v9079, %v9086
        %v9089 = vshrl.u32 %v9071, %v9087
        %v9090 = vor.u32 %v9088, %v9089
        %v9091 = vsub.s32 4294967266, %v9086
        %v9092 = vadd.s32 %v9091, 127
        %v9093 = vshll.u32 %v9092, 23
        %v9094 = vor.u32 4788187, %v9093
        %v9095 = vand.u32 2147483647, %v9094
        %v9097 = vcvt.s32.f32 %v9090
        %v9098 = vmul.f32 %v9097, %v9095
        %v9099 = vxor.u32 %v9098, 2147483648
        %v9100 = vsel %vm8979, %v9099, %v9098
        %v9101 = vsub.s32 4, %v9077
        %v9102 = vsel %vm8979, %v9101, %v9077
        %v9103 = vsel %vm8978, %v651, %v9100
        %v9104 = vsel %vm8978, 0, %v9102
        %v9105 = vmul.f32 %v9103, %v9103
        %v9106 = vmul.f32 %v9105, -0.001358992
        %v9107 = vadd.f32 %v9106, 0.041655596
        %v9108 = vmul.f32 %v9105, %v9107
        %v9109 = vadd.f32 %v9108, -0.4999988
        %v9110 = vmul.f32 %v9105, %v9109
        %v9111 = vadd.f32 1.0, %v9110
        %v9112 = vmul.f32 %v9103, %v9103
        %v9113 = vmul.f32 %v9112, -0.00019511016
        %v9114 = vadd.f32 %v9113, 0.008332121
        %v9115 = vmul.f32 %v9112, %v9114
        %v9116 = vadd.f32 %v9115, -0.16666654
        %v9117 = vmul.f32 %v9112, %v9116
        %v9118 = vadd.f32 %v9117, 1.0
        %v9119 = vmul.f32 %v9118, %v9103
        %vm9120 = vweird.f32 %v651
        %v9121 = vand.u32 %v9104, 3
        %vm9122 = vcmp.lt.s32.totalorder %v9121, 2
        %vm9123 = vcmp.eq.s32.totalorder %v9121, 0
        %v9124 = vxor.u32 %v9119, 2147483648
        %v9125 = vsel %vm9123, %v9111, %v9124
        %vm9126 = vcmp.eq.s32.totalorder %v9121, 2
        %v9127 = vxor.u32 %v9111, 2147483648
        %v9128 = vsel %vm9126, %v9127, %v9119
        %v9129 = vsel %vm9122, %v9125, %v9128
        %v9130 = vsel %vm9120, nan, %v9129
        %v9131 = vand.u32 2147483647, %v652
        %vm9132 = vcmp.le.f32.partialorder %v9131, 0.7853982
        %vm9133 = vcmp.lt.s32.totalorder %v652, 0
        %v9134 = vand.u32 %v652, 2139095040
        %v9135 = vshrl.u32 %v9134, 23
        %v9136 = vsub.s32 %v9135, 127
        %v9137 = vand.u32 2147483647, %v652
        %v9138 = vand.u32 %v9137, 8388607
        %v9139 = vor.u32 %v9138, 8388608
        %v9140 = vsub.s32 0, %v9139
        %v9141 = vadd.s32 %v9136, 1
        %vm9142 = vcmp.gt.s32.totalorder %v9141, 0
        %v9143 = vsel %vm9142, %v9141, 0
        %v9144 = vshrl.u32 %v9143, 5
        %v9145 = vand.u32 %v9143, 31
        %v9146 = vsub.s32 32, %v9145
        %v9147 = vshrl.u32 683565275, %v9146
        %v9148 = vshll.u32 683565275, %v9145
        %v9149 = vshrl.u32 2475754826, %v9146
        %v9150 = vor.u32 %v9148, %v9149
        %v9151 = vshll.u32 2475754826, %v9145
        %v9152 = vshrl.u32 2131351028, %v9146
        %v9153 = vor.u32 %v9151, %v9152
        %v9154 = vshll.u32 2131351028, %v9145
        %v9155 = vshrl.u32 2102212464, %v9146
        %v9156 = vor.u32 %v9154, %v9155
        %v9157 = vshll.u32 2102212464, %v9145
        %v9158 = vshrl.u32 920167782, %v9146
        %v9159 = vor.u32 %v9157, %v9158
        %v9160 = vshll.u32 920167782, %v9145
        %v9161 = vshrl.u32 1326507024, %v9146
        %v9162 = vor.u32 %v9160, %v9161
        %vm9163 = vcmp.lt.s32.totalorder %v9144, 1
        %vm9164 = vcmp.lt.s32.totalorder %v9144, 2
        %vm9165 = vcmp.lt.s32.totalorder %v9144, 3
        %vm9166 = vcmp.lt.s32.totalorder %v9144, 4
        %v9167 = vsel %vm9163, %v9147, %v9150
        %v9168 = vsel %vm9166, %v9156, 2102212464
        %v9169 = vsel %vm9165, %v9153, %v9168
        %v9170 = vsel %vm9164, %v9167, %v9169
        %v9171 = vsel %vm9163, %v9150, %v9153
        %v9172 = vsel %vm9166, %v9159, 920167782
        %v9173 = vsel %vm9165, %v9156, %v9172
        %v9174 = vsel %vm9164, %v9171, %v9173
        %v9175 = vsel %vm9163, %v9153, %v9156
        %v9176 = vsel %vm9166, %v9162, 1326507024
        %v9177 = vsel %vm9165, %v9159, %v9176
        %v9178 = vsel %vm9164, %v9175, %v9177
        %v9179 = vshll.u32 %v9139, 8
        %v9180 = vand.u32 %v9179, 65535
        %v9181 = vshrl.u32 %v9179, 16
        %v9182 = vand.u32 %v9178, 65535
        %v9183 = vshrl.u32 %v9178, 16
        %v9184 = vmul.u32 %v9180, %v9182
        %v9185 = vmul.u32 %v9180, %v9183
        %v9186 = vmul.u32 %v9181, %v9182
        %v9187 = vmul.u32 %v9181, %v9183
        %v9188 = vshll.u32 %v9185, 16
        %v9189 = vshrl.u32 %v9185, 16
        %v9190 = vshll.u32 %v9186, 16
        %v9191 = vshrl.u32 %v9186, 16
        %vm9192 = vc.u32 %v9184, %v9188
        %v9193 = vsel %vm9192, 1, 0
        %v9194 = vadd.s32 %v9184, %v9188
        %v9195 = vadd.s32 %v9187, %v9193
        %vm9196 = vc.u32 %v9194, %v9190
        %v9197 = vsel %vm9196, 1, 0
        %v9198 = vadd.s32 %v9194, %v9190
        %v9199 = vadd.s32 %v9195, %v9197
        %v9200 = vadd.s32 %v9199, %v9189
        %v9201 = vadd.s32 %v9200, %v9191
        %v9202 = vand.u32 %v9179, 65535
        %v9203 = vshrl.u32 %v9179, 16
        %v9204 = vand.u32 %v9174, 65535
        %v9205 = vshrl.u32 %v9174, 16
        %v9206 = vmul.u32 %v9202, %v9204
        %v9207 = vmul.u32 %v9202, %v9205
        %v9208 = vmul.u32 %v9203, %v9204
        %v9209 = vmul.u32 %v9203, %v9205
        %v9210 = vshll.u32 %v9207, 16
        %v9211 = vshrl.u32 %v9207, 16
        %v9212 = vshll.u32 %v9208, 16
        %v9213 = vshrl.u32 %v9208, 16
        %vm9214 = vc.u32 %v9206, %v9210
        %v9215 = vsel %vm9214, 1, 0
        %v9216 = vadd.s32 %v9206, %v9210
        %v9217 = vadd.s32 %v9209, %v9215
        %vm9218 = vc.u32 %v9216, %v9212
        %v9219 = vsel %vm9218, 1, 0
        %v9220 = vadd.s32 %v9216, %v9212
        %v9221 = vadd.s32 %v9217, %v9219
        %v9222 = vadd.s32 %v9221, %v9211
        %v9223 = vadd.s32 %v9222, %v9213
        %v9224 = vmul.u32 %v9179, %v9170
        %v9225 = vadd.s32 %v9201, %v9220
        %vm9226 = vc.u32 %v9201, %v9220
        %v9227 = vadd.s32 %v9223, 1
        %v9228 = vsel %vm9226, %v9227, %v9223
        %v9229 = vadd.s32 %v9224, %v9228
        %v9230 = vadd.s32 %v9229, 536870912
        %v9231 = vshrl.u32 %v9230, 30
        %v9232 = vshll.u32 %v9231, 30
        %v9233 = vsub.s32 %v9229, %v9232
        %vm9234 = vcmp.lt.s32.totalorder %v9233, 0
        %v9235 = vsub.s32 0, %v9233
        %v9236 = vsel %vm9234, %v9235, %v9233
        %v9237 = vclz %v9236
        %v9238 = vsub.s32 %v9237, 2
        %vm9239 = vcmp.gt.s32.totalorder 0, %v9238
        %v9240 = vsel %vm9239, 0, %v9238
        %v9241 = vsub.s32 32, %v9240
        %v9242 = vshll.u32 %v9233, %v9240
        %v9243 = vshrl.u32 %v9225, %v9241
        %v9244 = vor.u32 %v9242, %v9243
        %v9245 = vsub.s32 4294967266, %v9240
        %v9246 = vadd.s32 %v9245, 127
        %v9247 = vshll.u32 %v9246, 23
        %v9248 = vor.u32 4788187, %v9247
        %v9249 = vand.u32 2147483647, %v9248
        %v9251 = vcvt.s32.f32 %v9244
        %v9252 = vmul.f32 %v9251, %v9249
        %v9253 = vxor.u32 %v9252, 2147483648
        %v9254 = vsel %vm9133, %v9253, %v9252
        %v9255 = vsub.s32 4, %v9231
        %v9256 = vsel %vm9133, %v9255, %v9231
        %v9257 = vsel %vm9132, %v652, %v9254
        %v9258 = vsel %vm9132, 0, %v9256
        %v9259 = vmul.f32 %v9257, %v9257
        %v9260 = vmul.f32 %v9259, -0.001358992
        %v9261 = vadd.f32 %v9260, 0.041655596
        %v9262 = vmul.f32 %v9259, %v9261
        %v9263 = vadd.f32 %v9262, -0.4999988
        %v9264 = vmul.f32 %v9259, %v9263
        %v9265 = vadd.f32 1.0, %v9264
        %v9266 = vmul.f32 %v9257, %v9257
        %v9267 = vmul.f32 %v9266, -0.00019511016
        %v9268 = vadd.f32 %v9267, 0.008332121
        %v9269 = vmul.f32 %v9266, %v9268
        %v9270 = vadd.f32 %v9269, -0.16666654
        %v9271 = vmul.f32 %v9266, %v9270
        %v9272 = vadd.f32 %v9271, 1.0
        %v9273 = vmul.f32 %v9272, %v9257
        %vm9274 = vweird.f32 %v652
        %v9275 = vand.u32 %v9258, 3
        %vm9276 = vcmp.lt.s32.totalorder %v9275, 2
        %vm9277 = vcmp.eq.s32.totalorder %v9275, 0
        %v9278 = vxor.u32 %v9273, 2147483648
        %v9279 = vsel %vm9277, %v9265, %v9278
        %vm9280 = vcmp.eq.s32.totalorder %v9275, 2
        %v9281 = vxor.u32 %v9265, 2147483648
        %v9282 = vsel %vm9280, %v9281, %v9273
        %v9283 = vsel %vm9276, %v9279, %v9282
        %v9284 = vsel %vm9274, nan, %v9283
        %v9285 = vand.u32 2147483647, %v653
        %vm9286 = vcmp.le.f32.partialorder %v9285, 0.7853982
        %vm9287 = vcmp.lt.s32.totalorder %v653, 0
        %v9288 = vand.u32 %v653, 2139095040
        %v9289 = vshrl.u32 %v9288, 23
        %v9290 = vsub.s32 %v9289, 127
        %v9291 = vand.u32 2147483647, %v653
        %v9292 = vand.u32 %v9291, 8388607
        %v9293 = vor.u32 %v9292, 8388608
        %v9294 = vsub.s32 0, %v9293
        %v9295 = vadd.s32 %v9290, 1
        %vm9296 = vcmp.gt.s32.totalorder %v9295, 0
        %v9297 = vsel %vm9296, %v9295, 0
        %v9298 = vshrl.u32 %v9297, 5
        %v9299 = vand.u32 %v9297, 31
        %v9300 = vsub.s32 32, %v9299
        %v9301 = vshrl.u32 683565275, %v9300
        %v9302 = vshll.u32 683565275, %v9299
        %v9303 = vshrl.u32 2475754826, %v9300
        %v9304 = vor.u32 %v9302, %v9303
        %v9305 = vshll.u32 2475754826, %v9299
        %v9306 = vshrl.u32 2131351028, %v9300
        %v9307 = vor.u32 %v9305, %v9306
        %v9308 = vshll.u32 2131351028, %v9299
        %v9309 = vshrl.u32 2102212464, %v9300
        %v9310 = vor.u32 %v9308, %v9309
        %v9311 = vshll.u32 2102212464, %v9299
        %v9312 = vshrl.u32 920167782, %v9300
        %v9313 = vor.u32 %v9311, %v9312
        %v9314 = vshll.u32 920167782, %v9299
        %v9315 = vshrl.u32 1326507024, %v9300
        %v9316 = vor.u32 %v9314, %v9315
        %vm9317 = vcmp.lt.s32.totalorder %v9298, 1
        %vm9318 = vcmp.lt.s32.totalorder %v9298, 2
        %vm9319 = vcmp.lt.s32.totalorder %v9298, 3
        %vm9320 = vcmp.lt.s32.totalorder %v9298, 4
        %v9321 = vsel %vm9317, %v9301, %v9304
        %v9322 = vsel %vm9320, %v9310, 2102212464
        %v9323 = vsel %vm9319, %v9307, %v9322
        %v9324 = vsel %vm9318, %v9321, %v9323
        %v9325 = vsel %vm9317, %v9304, %v9307
        %v9326 = vsel %vm9320, %v9313, 920167782
        %v9327 = vsel %vm9319, %v9310, %v9326
        %v9328 = vsel %vm9318, %v9325, %v9327
        %v9329 = vsel %vm9317, %v9307, %v9310
        %v9330 = vsel %vm9320, %v9316, 1326507024
        %v9331 = vsel %vm9319, %v9313, %v9330
        %v9332 = vsel %vm9318, %v9329, %v9331
        %v9333 = vshll.u32 %v9293, 8
        %v9334 = vand.u32 %v9333, 65535
        %v9335 = vshrl.u32 %v9333, 16
        %v9336 = vand.u32 %v9332, 65535
        %v9337 = vshrl.u32 %v9332, 16
        %v9338 = vmul.u32 %v9334, %v9336
        %v9339 = vmul.u32 %v9334, %v9337
        %v9340 = vmul.u32 %v9335, %v9336
        %v9341 = vmul.u32 %v9335, %v9337
        %v9342 = vshll.u32 %v9339, 16
        %v9343 = vshrl.u32 %v9339, 16
        %v9344 = vshll.u32 %v9340, 16
        %v9345 = vshrl.u32 %v9340, 16
        %vm9346 = vc.u32 %v9338, %v9342
        %v9347 = vsel %vm9346, 1, 0
        %v9348 = vadd.s32 %v9338, %v9342
        %v9349 = vadd.s32 %v9341, %v9347
        %vm9350 = vc.u32 %v9348, %v9344
        %v9351 = vsel %vm9350, 1, 0
        %v9352 = vadd.s32 %v9348, %v9344
        %v9353 = vadd.s32 %v9349, %v9351
        %v9354 = vadd.s32 %v9353, %v9343
        %v9355 = vadd.s32 %v9354, %v9345
        %v9356 = vand.u32 %v9333, 65535
        %v9357 = vshrl.u32 %v9333, 16
        %v9358 = vand.u32 %v9328, 65535
        %v9359 = vshrl.u32 %v9328, 16
        %v9360 = vmul.u32 %v9356, %v9358
        %v9361 = vmul.u32 %v9356, %v9359
        %v9362 = vmul.u32 %v9357, %v9358
        %v9363 = vmul.u32 %v9357, %v9359
        %v9364 = vshll.u32 %v9361, 16
        %v9365 = vshrl.u32 %v9361, 16
        %v9366 = vshll.u32 %v9362, 16
        %v9367 = vshrl.u32 %v9362, 16
        %vm9368 = vc.u32 %v9360, %v9364
        %v9369 = vsel %vm9368, 1, 0
        %v9370 = vadd.s32 %v9360, %v9364
        %v9371 = vadd.s32 %v9363, %v9369
        %vm9372 = vc.u32 %v9370, %v9366
        %v9373 = vsel %vm9372, 1, 0
        %v9374 = vadd.s32 %v9370, %v9366
        %v9375 = vadd.s32 %v9371, %v9373
        %v9376 = vadd.s32 %v9375, %v9365
        %v9377 = vadd.s32 %v9376, %v9367
        %v9378 = vmul.u32 %v9333, %v9324
        %v9379 = vadd.s32 %v9355, %v9374
        %vm9380 = vc.u32 %v9355, %v9374
        %v9381 = vadd.s32 %v9377, 1
        %v9382 = vsel %vm9380, %v9381, %v9377
        %v9383 = vadd.s32 %v9378, %v9382
        %v9384 = vadd.s32 %v9383, 536870912
        %v9385 = vshrl.u32 %v9384, 30
        %v9386 = vshll.u32 %v9385, 30
        %v9387 = vsub.s32 %v9383, %v9386
        %vm9388 = vcmp.lt.s32.totalorder %v9387, 0
        %v9389 = vsub.s32 0, %v9387
        %v9390 = vsel %vm9388, %v9389, %v9387
        %v9391 = vclz %v9390
        %v9392 = vsub.s32 %v9391, 2
        %vm9393 = vcmp.gt.s32.totalorder 0, %v9392
        %v9394 = vsel %vm9393, 0, %v9392
        %v9395 = vsub.s32 32, %v9394
        %v9396 = vshll.u32 %v9387, %v9394
        %v9397 = vshrl.u32 %v9379, %v9395
        %v9398 = vor.u32 %v9396, %v9397
        %v9399 = vsub.s32 4294967266, %v9394
        %v9400 = vadd.s32 %v9399, 127
        %v9401 = vshll.u32 %v9400, 23
        %v9402 = vor.u32 4788187, %v9401
        %v9403 = vand.u32 2147483647, %v9402
        %v9405 = vcvt.s32.f32 %v9398
        %v9406 = vmul.f32 %v9405, %v9403
        %v9407 = vxor.u32 %v9406, 2147483648
        %v9408 = vsel %vm9287, %v9407, %v9406
        %v9409 = vsub.s32 4, %v9385
        %v9410 = vsel %vm9287, %v9409, %v9385
        %v9411 = vsel %vm9286, %v653, %v9408
        %v9412 = vsel %vm9286, 0, %v9410
        %v9413 = vmul.f32 %v9411, %v9411
        %v9414 = vmul.f32 %v9413, -0.001358992
        %v9415 = vadd.f32 %v9414, 0.041655596
        %v9416 = vmul.f32 %v9413, %v9415
        %v9417 = vadd.f32 %v9416, -0.4999988
        %v9418 = vmul.f32 %v9413, %v9417
        %v9419 = vadd.f32 1.0, %v9418
        %v9420 = vmul.f32 %v9411, %v9411
        %v9421 = vmul.f32 %v9420, -0.00019511016
        %v9422 = vadd.f32 %v9421, 0.008332121
        %v9423 = vmul.f32 %v9420, %v9422
        %v9424 = vadd.f32 %v9423, -0.16666654
        %v9425 = vmul.f32 %v9420, %v9424
        %v9426 = vadd.f32 %v9425, 1.0
        %v9427 = vmul.f32 %v9426, %v9411
        %vm9428 = vweird.f32 %v653
        %v9429 = vand.u32 %v9412, 3
        %vm9430 = vcmp.lt.s32.totalorder %v9429, 2
        %vm9431 = vcmp.eq.s32.totalorder %v9429, 0
        %v9432 = vxor.u32 %v9427, 2147483648
        %v9433 = vsel %vm9431, %v9419, %v9432
        %vm9434 = vcmp.eq.s32.totalorder %v9429, 2
        %v9435 = vxor.u32 %v9419, 2147483648
        %v9436 = vsel %vm9434, %v9435, %v9427
        %v9437 = vsel %vm9430, %v9433, %v9436
        %v9438 = vsel %vm9428, nan, %v9437
        %v9439 = vand.u32 2147483647, %v654
        %vm9440 = vcmp.le.f32.partialorder %v9439, 0.7853982
        %vm9441 = vcmp.lt.s32.totalorder %v654, 0
        %v9442 = vand.u32 %v654, 2139095040
        %v9443 = vshrl.u32 %v9442, 23
        %v9444 = vsub.s32 %v9443, 127
        %v9445 = vand.u32 2147483647, %v654
        %v9446 = vand.u32 %v9445, 8388607
        %v9447 = vor.u32 %v9446, 8388608
        %v9448 = vsub.s32 0, %v9447
        %v9449 = vadd.s32 %v9444, 1
        %vm9450 = vcmp.gt.s32.totalorder %v9449, 0
        %v9451 = vsel %vm9450, %v9449, 0
        %v9452 = vshrl.u32 %v9451, 5
        %v9453 = vand.u32 %v9451, 31
        %v9454 = vsub.s32 32, %v9453
        %v9455 = vshrl.u32 683565275, %v9454
        %v9456 = vshll.u32 683565275, %v9453
        %v9457 = vshrl.u32 2475754826, %v9454
        %v9458 = vor.u32 %v9456, %v9457
        %v9459 = vshll.u32 2475754826, %v9453
        %v9460 = vshrl.u32 2131351028, %v9454
        %v9461 = vor.u32 %v9459, %v9460
        %v9462 = vshll.u32 2131351028, %v9453
        %v9463 = vshrl.u32 2102212464, %v9454
        %v9464 = vor.u32 %v9462, %v9463
        %v9465 = vshll.u32 2102212464, %v9453
        %v9466 = vshrl.u32 920167782, %v9454
        %v9467 = vor.u32 %v9465, %v9466
        %v9468 = vshll.u32 920167782, %v9453
        %v9469 = vshrl.u32 1326507024, %v9454
        %v9470 = vor.u32 %v9468, %v9469
        %vm9471 = vcmp.lt.s32.totalorder %v9452, 1
        %vm9472 = vcmp.lt.s32.totalorder %v9452, 2
        %vm9473 = vcmp.lt.s32.totalorder %v9452, 3
        %vm9474 = vcmp.lt.s32.totalorder %v9452, 4
        %v9475 = vsel %vm9471, %v9455, %v9458
        %v9476 = vsel %vm9474, %v9464, 2102212464
        %v9477 = vsel %vm9473, %v9461, %v9476
        %v9478 = vsel %vm9472, %v9475, %v9477
        %v9479 = vsel %vm9471, %v9458, %v9461
        %v9480 = vsel %vm9474, %v9467, 920167782
        %v9481 = vsel %vm9473, %v9464, %v9480
        %v9482 = vsel %vm9472, %v9479, %v9481
        %v9483 = vsel %vm9471, %v9461, %v9464
        %v9484 = vsel %vm9474, %v9470, 1326507024
        %v9485 = vsel %vm9473, %v9467, %v9484
        %v9486 = vsel %vm9472, %v9483, %v9485
        %v9487 = vshll.u32 %v9447, 8
        %v9488 = vand.u32 %v9487, 65535
        %v9489 = vshrl.u32 %v9487, 16
        %v9490 = vand.u32 %v9486, 65535
        %v9491 = vshrl.u32 %v9486, 16
        %v9492 = vmul.u32 %v9488, %v9490
        %v9493 = vmul.u32 %v9488, %v9491
        %v9494 = vmul.u32 %v9489, %v9490
        %v9495 = vmul.u32 %v9489, %v9491
        %v9496 = vshll.u32 %v9493, 16
        %v9497 = vshrl.u32 %v9493, 16
        %v9498 = vshll.u32 %v9494, 16
        %v9499 = vshrl.u32 %v9494, 16
        %vm9500 = vc.u32 %v9492, %v9496
        %v9501 = vsel %vm9500, 1, 0
        %v9502 = vadd.s32 %v9492, %v9496
        %v9503 = vadd.s32 %v9495, %v9501
        %vm9504 = vc.u32 %v9502, %v9498
        %v9505 = vsel %vm9504, 1, 0
        %v9506 = vadd.s32 %v9502, %v9498
        %v9507 = vadd.s32 %v9503, %v9505
        %v9508 = vadd.s32 %v9507, %v9497
        %v9509 = vadd.s32 %v9508, %v9499
        %v9510 = vand.u32 %v9487, 65535
        %v9511 = vshrl.u32 %v9487, 16
        %v9512 = vand.u32 %v9482, 65535
        %v9513 = vshrl.u32 %v9482, 16
        %v9514 = vmul.u32 %v9510, %v9512
        %v9515 = vmul.u32 %v9510, %v9513
        %v9516 = vmul.u32 %v9511, %v9512
        %v9517 = vmul.u32 %v9511, %v9513
        %v9518 = vshll.u32 %v9515, 16
        %v9519 = vshrl.u32 %v9515, 16
        %v9520 = vshll.u32 %v9516, 16
        %v9521 = vshrl.u32 %v9516, 16
        %vm9522 = vc.u32 %v9514, %v9518
        %v9523 = vsel %vm9522, 1, 0
        %v9524 = vadd.s32 %v9514, %v9518
        %v9525 = vadd.s32 %v9517, %v9523
        %vm9526 = vc.u32 %v9524, %v9520
        %v9527 = vsel %vm9526, 1, 0
        %v9528 = vadd.s32 %v9524, %v9520
        %v9529 = vadd.s32 %v9525, %v9527
        %v9530 = vadd.s32 %v9529, %v9519
        %v9531 = vadd.s32 %v9530, %v9521
        %v9532 = vmul.u32 %v9487, %v9478
        %v9533 = vadd.s32 %v9509, %v9528
        %vm9534 = vc.u32 %v9509, %v9528
        %v9535 = vadd.s32 %v9531, 1
        %v9536 = vsel %vm9534, %v9535, %v9531
        %v9537 = vadd.s32 %v9532, %v9536
        %v9538 = vadd.s32 %v9537, 536870912
        %v9539 = vshrl.u32 %v9538, 30
        %v9540 = vshll.u32 %v9539, 30
        %v9541 = vsub.s32 %v9537, %v9540
        %vm9542 = vcmp.lt.s32.totalorder %v9541, 0
        %v9543 = vsub.s32 0, %v9541
        %v9544 = vsel %vm9542, %v9543, %v9541
        %v9545 = vclz %v9544
        %v9546 = vsub.s32 %v9545, 2
        %vm9547 = vcmp.gt.s32.totalorder 0, %v9546
        %v9548 = vsel %vm9547, 0, %v9546
        %v9549 = vsub.s32 32, %v9548
        %v9550 = vshll.u32 %v9541, %v9548
        %v9551 = vshrl.u32 %v9533, %v9549
        %v9552 = vor.u32 %v9550, %v9551
        %v9553 = vsub.s32 4294967266, %v9548
        %v9554 = vadd.s32 %v9553, 127
        %v9555 = vshll.u32 %v9554, 23
        %v9556 = vor.u32 4788187, %v9555
        %v9557 = vand.u32 2147483647, %v9556
        %v9559 = vcvt.s32.f32 %v9552
        %v9560 = vmul.f32 %v9559, %v9557
        %v9561 = vxor.u32 %v9560, 2147483648
        %v9562 = vsel %vm9441, %v9561, %v9560
        %v9563 = vsub.s32 4, %v9539
        %v9564 = vsel %vm9441, %v9563, %v9539
        %v9565 = vsel %vm9440, %v654, %v9562
        %v9566 = vsel %vm9440, 0, %v9564
        %v9567 = vmul.f32 %v9565, %v9565
        %v9568 = vmul.f32 %v9567, -0.001358992
        %v9569 = vadd.f32 %v9568, 0.041655596
        %v9570 = vmul.f32 %v9567, %v9569
        %v9571 = vadd.f32 %v9570, -0.4999988
        %v9572 = vmul.f32 %v9567, %v9571
        %v9573 = vadd.f32 1.0, %v9572
        %v9574 = vmul.f32 %v9565, %v9565
        %v9575 = vmul.f32 %v9574, -0.00019511016
        %v9576 = vadd.f32 %v9575, 0.008332121
        %v9577 = vmul.f32 %v9574, %v9576
        %v9578 = vadd.f32 %v9577, -0.16666654
        %v9579 = vmul.f32 %v9574, %v9578
        %v9580 = vadd.f32 %v9579, 1.0
        %v9581 = vmul.f32 %v9580, %v9565
        %vm9582 = vweird.f32 %v654
        %v9583 = vand.u32 %v9566, 3
        %vm9584 = vcmp.lt.s32.totalorder %v9583, 2
        %vm9585 = vcmp.eq.s32.totalorder %v9583, 0
        %v9586 = vxor.u32 %v9581, 2147483648
        %v9587 = vsel %vm9585, %v9573, %v9586
        %vm9588 = vcmp.eq.s32.totalorder %v9583, 2
        %v9589 = vxor.u32 %v9573, 2147483648
        %v9590 = vsel %vm9588, %v9589, %v9581
        %v9591 = vsel %vm9584, %v9587, %v9590
        %v9592 = vsel %vm9582, nan, %v9591
        %v9593 = vand.u32 2147483647, %v655
        %vm9594 = vcmp.le.f32.partialorder %v9593, 0.7853982
        %vm9595 = vcmp.lt.s32.totalorder %v655, 0
        %v9596 = vand.u32 %v655, 2139095040
        %v9597 = vshrl.u32 %v9596, 23
        %v9598 = vsub.s32 %v9597, 127
        %v9599 = vand.u32 2147483647, %v655
        %v9600 = vand.u32 %v9599, 8388607
        %v9601 = vor.u32 %v9600, 8388608
        %v9602 = vsub.s32 0, %v9601
        %v9603 = vadd.s32 %v9598, 1
        %vm9604 = vcmp.gt.s32.totalorder %v9603, 0
        %v9605 = vsel %vm9604, %v9603, 0
        %v9606 = vshrl.u32 %v9605, 5
        %v9607 = vand.u32 %v9605, 31
        %v9608 = vsub.s32 32, %v9607
        %v9609 = vshrl.u32 683565275, %v9608
        %v9610 = vshll.u32 683565275, %v9607
        %v9611 = vshrl.u32 2475754826, %v9608
        %v9612 = vor.u32 %v9610, %v9611
        %v9613 = vshll.u32 2475754826, %v9607
        %v9614 = vshrl.u32 2131351028, %v9608
        %v9615 = vor.u32 %v9613, %v9614
        %v9616 = vshll.u32 2131351028, %v9607
        %v9617 = vshrl.u32 2102212464, %v9608
        %v9618 = vor.u32 %v9616, %v9617
        %v9619 = vshll.u32 2102212464, %v9607
        %v9620 = vshrl.u32 920167782, %v9608
        %v9621 = vor.u32 %v9619, %v9620
        %v9622 = vshll.u32 920167782, %v9607
        %v9623 = vshrl.u32 1326507024, %v9608
        %v9624 = vor.u32 %v9622, %v9623
        %vm9625 = vcmp.lt.s32.totalorder %v9606, 1
        %vm9626 = vcmp.lt.s32.totalorder %v9606, 2
        %vm9627 = vcmp.lt.s32.totalorder %v9606, 3
        %vm9628 = vcmp.lt.s32.totalorder %v9606, 4
        %v9629 = vsel %vm9625, %v9609, %v9612
        %v9630 = vsel %vm9628, %v9618, 2102212464
        %v9631 = vsel %vm9627, %v9615, %v9630
        %v9632 = vsel %vm9626, %v9629, %v9631
        %v9633 = vsel %vm9625, %v9612, %v9615
        %v9634 = vsel %vm9628, %v9621, 920167782
        %v9635 = vsel %vm9627, %v9618, %v9634
        %v9636 = vsel %vm9626, %v9633, %v9635
        %v9637 = vsel %vm9625, %v9615, %v9618
        %v9638 = vsel %vm9628, %v9624, 1326507024
        %v9639 = vsel %vm9627, %v9621, %v9638
        %v9640 = vsel %vm9626, %v9637, %v9639
        %v9641 = vshll.u32 %v9601, 8
        %v9642 = vand.u32 %v9641, 65535
        %v9643 = vshrl.u32 %v9641, 16
        %v9644 = vand.u32 %v9640, 65535
        %v9645 = vshrl.u32 %v9640, 16
        %v9646 = vmul.u32 %v9642, %v9644
        %v9647 = vmul.u32 %v9642, %v9645
        %v9648 = vmul.u32 %v9643, %v9644
        %v9649 = vmul.u32 %v9643, %v9645
        %v9650 = vshll.u32 %v9647, 16
        %v9651 = vshrl.u32 %v9647, 16
        %v9652 = vshll.u32 %v9648, 16
        %v9653 = vshrl.u32 %v9648, 16
        %vm9654 = vc.u32 %v9646, %v9650
        %v9655 = vsel %vm9654, 1, 0
        %v9656 = vadd.s32 %v9646, %v9650
        %v9657 = vadd.s32 %v9649, %v9655
        %vm9658 = vc.u32 %v9656, %v9652
        %v9659 = vsel %vm9658, 1, 0
        %v9660 = vadd.s32 %v9656, %v9652
        %v9661 = vadd.s32 %v9657, %v9659
        %v9662 = vadd.s32 %v9661, %v9651
        %v9663 = vadd.s32 %v9662, %v9653
        %v9664 = vand.u32 %v9641, 65535
        %v9665 = vshrl.u32 %v9641, 16
        %v9666 = vand.u32 %v9636, 65535
        %v9667 = vshrl.u32 %v9636, 16
        %v9668 = vmul.u32 %v9664, %v9666
        %v9669 = vmul.u32 %v9664, %v9667
        %v9670 = vmul.u32 %v9665, %v9666
        %v9671 = vmul.u32 %v9665, %v9667
        %v9672 = vshll.u32 %v9669, 16
        %v9673 = vshrl.u32 %v9669, 16
        %v9674 = vshll.u32 %v9670, 16
        %v9675 = vshrl.u32 %v9670, 16
        %vm9676 = vc.u32 %v9668, %v9672
        %v9677 = vsel %vm9676, 1, 0
        %v9678 = vadd.s32 %v9668, %v9672
        %v9679 = vadd.s32 %v9671, %v9677
        %vm9680 = vc.u32 %v9678, %v9674
        %v9681 = vsel %vm9680, 1, 0
        %v9682 = vadd.s32 %v9678, %v9674
        %v9683 = vadd.s32 %v9679, %v9681
        %v9684 = vadd.s32 %v9683, %v9673
        %v9685 = vadd.s32 %v9684, %v9675
        %v9686 = vmul.u32 %v9641, %v9632
        %v9687 = vadd.s32 %v9663, %v9682
        %vm9688 = vc.u32 %v9663, %v9682
        %v9689 = vadd.s32 %v9685, 1
        %v9690 = vsel %vm9688, %v9689, %v9685
        %v9691 = vadd.s32 %v9686, %v9690
        %v9692 = vadd.s32 %v9691, 536870912
        %v9693 = vshrl.u32 %v9692, 30
        %v9694 = vshll.u32 %v9693, 30
        %v9695 = vsub.s32 %v9691, %v9694
        %vm9696 = vcmp.lt.s32.totalorder %v9695, 0
        %v9697 = vsub.s32 0, %v9695
        %v9698 = vsel %vm9696, %v9697, %v9695
        %v9699 = vclz %v9698
        %v9700 = vsub.s32 %v9699, 2
        %vm9701 = vcmp.gt.s32.totalorder 0, %v9700
        %v9702 = vsel %vm9701, 0, %v9700
        %v9703 = vsub.s32 32, %v9702
        %v9704 = vshll.u32 %v9695, %v9702
        %v9705 = vshrl.u32 %v9687, %v9703
        %v9706 = vor.u32 %v9704, %v9705
        %v9707 = vsub.s32 4294967266, %v9702
        %v9708 = vadd.s32 %v9707, 127
        %v9709 = vshll.u32 %v9708, 23
        %v9710 = vor.u32 4788187, %v9709
        %v9711 = vand.u32 2147483647, %v9710
        %v9713 = vcvt.s32.f32 %v9706
        %v9714 = vmul.f32 %v9713, %v9711
        %v9715 = vxor.u32 %v9714, 2147483648
        %v9716 = vsel %vm9595, %v9715, %v9714
        %v9717 = vsub.s32 4, %v9693
        %v9718 = vsel %vm9595, %v9717, %v9693
        %v9719 = vsel %vm9594, %v655, %v9716
        %v9720 = vsel %vm9594, 0, %v9718
        %v9721 = vmul.f32 %v9719, %v9719
        %v9722 = vmul.f32 %v9721, -0.001358992
        %v9723 = vadd.f32 %v9722, 0.041655596
        %v9724 = vmul.f32 %v9721, %v9723
        %v9725 = vadd.f32 %v9724, -0.4999988
        %v9726 = vmul.f32 %v9721, %v9725
        %v9727 = vadd.f32 1.0, %v9726
        %v9728 = vmul.f32 %v9719, %v9719
        %v9729 = vmul.f32 %v9728, -0.00019511016
        %v9730 = vadd.f32 %v9729, 0.008332121
        %v9731 = vmul.f32 %v9728, %v9730
        %v9732 = vadd.f32 %v9731, -0.16666654
        %v9733 = vmul.f32 %v9728, %v9732
        %v9734 = vadd.f32 %v9733, 1.0
        %v9735 = vmul.f32 %v9734, %v9719
        %vm9736 = vweird.f32 %v655
        %v9737 = vand.u32 %v9720, 3
        %vm9738 = vcmp.lt.s32.totalorder %v9737, 2
        %vm9739 = vcmp.eq.s32.totalorder %v9737, 0
        %v9740 = vxor.u32 %v9735, 2147483648
        %v9741 = vsel %vm9739, %v9727, %v9740
        %vm9742 = vcmp.eq.s32.totalorder %v9737, 2
        %v9743 = vxor.u32 %v9727, 2147483648
        %v9744 = vsel %vm9742, %v9743, %v9735
        %v9745 = vsel %vm9738, %v9741, %v9744
        %v9746 = vsel %vm9736, nan, %v9745
        %v9747 = vand.u32 2147483647, %v656
        %vm9748 = vcmp.le.f32.partialorder %v9747, 0.7853982
        %vm9749 = vcmp.lt.s32.totalorder %v656, 0
        %v9750 = vand.u32 %v656, 2139095040
        %v9751 = vshrl.u32 %v9750, 23
        %v9752 = vsub.s32 %v9751, 127
        %v9753 = vand.u32 2147483647, %v656
        %v9754 = vand.u32 %v9753, 8388607
        %v9755 = vor.u32 %v9754, 8388608
        %v9756 = vsub.s32 0, %v9755
        %v9757 = vadd.s32 %v9752, 1
        %vm9758 = vcmp.gt.s32.totalorder %v9757, 0
        %v9759 = vsel %vm9758, %v9757, 0
        %v9760 = vshrl.u32 %v9759, 5
        %v9761 = vand.u32 %v9759, 31
        %v9762 = vsub.s32 32, %v9761
        %v9763 = vshrl.u32 683565275, %v9762
        %v9764 = vshll.u32 683565275, %v9761
        %v9765 = vshrl.u32 2475754826, %v9762
        %v9766 = vor.u32 %v9764, %v9765
        %v9767 = vshll.u32 2475754826, %v9761
        %v9768 = vshrl.u32 2131351028, %v9762
        %v9769 = vor.u32 %v9767, %v9768
        %v9770 = vshll.u32 2131351028, %v9761
        %v9771 = vshrl.u32 2102212464, %v9762
        %v9772 = vor.u32 %v9770, %v9771
        %v9773 = vshll.u32 2102212464, %v9761
        %v9774 = vshrl.u32 920167782, %v9762
        %v9775 = vor.u32 %v9773, %v9774
        %v9776 = vshll.u32 920167782, %v9761
        %v9777 = vshrl.u32 1326507024, %v9762
        %v9778 = vor.u32 %v9776, %v9777
        %vm9779 = vcmp.lt.s32.totalorder %v9760, 1
        %vm9780 = vcmp.lt.s32.totalorder %v9760, 2
        %vm9781 = vcmp.lt.s32.totalorder %v9760, 3
        %vm9782 = vcmp.lt.s32.totalorder %v9760, 4
        %v9783 = vsel %vm9779, %v9763, %v9766
        %v9784 = vsel %vm9782, %v9772, 2102212464
        %v9785 = vsel %vm9781, %v9769, %v9784
        %v9786 = vsel %vm9780, %v9783, %v9785
        %v9787 = vsel %vm9779, %v9766, %v9769
        %v9788 = vsel %vm9782, %v9775, 920167782
        %v9789 = vsel %vm9781, %v9772, %v9788
        %v9790 = vsel %vm9780, %v9787, %v9789
        %v9791 = vsel %vm9779, %v9769, %v9772
        %v9792 = vsel %vm9782, %v9778, 1326507024
        %v9793 = vsel %vm9781, %v9775, %v9792
        %v9794 = vsel %vm9780, %v9791, %v9793
        %v9795 = vshll.u32 %v9755, 8
        %v9796 = vand.u32 %v9795, 65535
        %v9797 = vshrl.u32 %v9795, 16
        %v9798 = vand.u32 %v9794, 65535
        %v9799 = vshrl.u32 %v9794, 16
        %v9800 = vmul.u32 %v9796, %v9798
        %v9801 = vmul.u32 %v9796, %v9799
        %v9802 = vmul.u32 %v9797, %v9798
        %v9803 = vmul.u32 %v9797, %v9799
        %v9804 = vshll.u32 %v9801, 16
        %v9805 = vshrl.u32 %v9801, 16
        %v9806 = vshll.u32 %v9802, 16
        %v9807 = vshrl.u32 %v9802, 16
        %vm9808 = vc.u32 %v9800, %v9804
        %v9809 = vsel %vm9808, 1, 0
        %v9810 = vadd.s32 %v9800, %v9804
        %v9811 = vadd.s32 %v9803, %v9809
        %vm9812 = vc.u32 %v9810, %v9806
        %v9813 = vsel %vm9812, 1, 0
        %v9814 = vadd.s32 %v9810, %v9806
        %v9815 = vadd.s32 %v9811, %v9813
        %v9816 = vadd.s32 %v9815, %v9805
        %v9817 = vadd.s32 %v9816, %v9807
        %v9818 = vand.u32 %v9795, 65535
        %v9819 = vshrl.u32 %v9795, 16
        %v9820 = vand.u32 %v9790, 65535
        %v9821 = vshrl.u32 %v9790, 16
        %v9822 = vmul.u32 %v9818, %v9820
        %v9823 = vmul.u32 %v9818, %v9821
        %v9824 = vmul.u32 %v9819, %v9820
        %v9825 = vmul.u32 %v9819, %v9821
        %v9826 = vshll.u32 %v9823, 16
        %v9827 = vshrl.u32 %v9823, 16
        %v9828 = vshll.u32 %v9824, 16
        %v9829 = vshrl.u32 %v9824, 16
        %vm9830 = vc.u32 %v9822, %v9826
        %v9831 = vsel %vm9830, 1, 0
        %v9832 = vadd.s32 %v9822, %v9826
        %v9833 = vadd.s32 %v9825, %v9831
        %vm9834 = vc.u32 %v9832, %v9828
        %v9835 = vsel %vm9834, 1, 0
        %v9836 = vadd.s32 %v9832, %v9828
        %v9837 = vadd.s32 %v9833, %v9835
        %v9838 = vadd.s32 %v9837, %v9827
        %v9839 = vadd.s32 %v9838, %v9829
        %v9840 = vmul.u32 %v9795, %v9786
        %v9841 = vadd.s32 %v9817, %v9836
        %vm9842 = vc.u32 %v9817, %v9836
        %v9843 = vadd.s32 %v9839, 1
        %v9844 = vsel %vm9842, %v9843, %v9839
        %v9845 = vadd.s32 %v9840, %v9844
        %v9846 = vadd.s32 %v9845, 536870912
        %v9847 = vshrl.u32 %v9846, 30
        %v9848 = vshll.u32 %v9847, 30
        %v9849 = vsub.s32 %v9845, %v9848
        %vm9850 = vcmp.lt.s32.totalorder %v9849, 0
        %v9851 = vsub.s32 0, %v9849
        %v9852 = vsel %vm9850, %v9851, %v9849
        %v9853 = vclz %v9852
        %v9854 = vsub.s32 %v9853, 2
        %vm9855 = vcmp.gt.s32.totalorder 0, %v9854
        %v9856 = vsel %vm9855, 0, %v9854
        %v9857 = vsub.s32 32, %v9856
        %v9858 = vshll.u32 %v9849, %v9856
        %v9859 = vshrl.u32 %v9841, %v9857
        %v9860 = vor.u32 %v9858, %v9859
        %v9861 = vsub.s32 4294967266, %v9856
        %v9862 = vadd.s32 %v9861, 127
        %v9863 = vshll.u32 %v9862, 23
        %v9864 = vor.u32 4788187, %v9863
        %v9865 = vand.u32 2147483647, %v9864
        %v9867 = vcvt.s32.f32 %v9860
        %v9868 = vmul.f32 %v9867, %v9865
        %v9869 = vxor.u32 %v9868, 2147483648
        %v9870 = vsel %vm9749, %v9869, %v9868
        %v9871 = vsub.s32 4, %v9847
        %v9872 = vsel %vm9749, %v9871, %v9847
        %v9873 = vsel %vm9748, %v656, %v9870
        %v9874 = vsel %vm9748, 0, %v9872
        %v9875 = vmul.f32 %v9873, %v9873
        %v9876 = vmul.f32 %v9875, -0.001358992
        %v9877 = vadd.f32 %v9876, 0.041655596
        %v9878 = vmul.f32 %v9875, %v9877
        %v9879 = vadd.f32 %v9878, -0.4999988
        %v9880 = vmul.f32 %v9875, %v9879
        %v9881 = vadd.f32 1.0, %v9880
        %v9882 = vmul.f32 %v9873, %v9873
        %v9883 = vmul.f32 %v9882, -0.00019511016
        %v9884 = vadd.f32 %v9883, 0.008332121
        %v9885 = vmul.f32 %v9882, %v9884
        %v9886 = vadd.f32 %v9885, -0.16666654
        %v9887 = vmul.f32 %v9882, %v9886
        %v9888 = vadd.f32 %v9887, 1.0
        %v9889 = vmul.f32 %v9888, %v9873
        %vm9890 = vweird.f32 %v656
        %v9891 = vand.u32 %v9874, 3
        %vm9892 = vcmp.lt.s32.totalorder %v9891, 2
        %vm9893 = vcmp.eq.s32.totalorder %v9891, 0
        %v9894 = vxor.u32 %v9889, 2147483648
        %v9895 = vsel %vm9893, %v9881, %v9894
        %vm9896 = vcmp.eq.s32.totalorder %v9891, 2
        %v9897 = vxor.u32 %v9881, 2147483648
        %v9898 = vsel %vm9896, %v9897, %v9889
        %v9899 = vsel %vm9892, %v9895, %v9898
        %v9900 = vsel %vm9890, nan, %v9899
        %v9901 = vand.u32 2147483647, %v657
        %vm9902 = vcmp.le.f32.partialorder %v9901, 0.7853982
        %vm9903 = vcmp.lt.s32.totalorder %v657, 0
        %v9904 = vand.u32 %v657, 2139095040
        %v9905 = vshrl.u32 %v9904, 23
        %v9906 = vsub.s32 %v9905, 127
        %v9907 = vand.u32 2147483647, %v657
        %v9908 = vand.u32 %v9907, 8388607
        %v9909 = vor.u32 %v9908, 8388608
        %v9910 = vsub.s32 0, %v9909
        %v9911 = vadd.s32 %v9906, 1
        %vm9912 = vcmp.gt.s32.totalorder %v9911, 0
        %v9913 = vsel %vm9912, %v9911, 0
        %v9914 = vshrl.u32 %v9913, 5
        %v9915 = vand.u32 %v9913, 31
        %v9916 = vsub.s32 32, %v9915
        %v9917 = vshrl.u32 683565275, %v9916
        %v9918 = vshll.u32 683565275, %v9915
        %v9919 = vshrl.u32 2475754826, %v9916
        %v9920 = vor.u32 %v9918, %v9919
        %v9921 = vshll.u32 2475754826, %v9915
        %v9922 = vshrl.u32 2131351028, %v9916
        %v9923 = vor.u32 %v9921, %v9922
        %v9924 = vshll.u32 2131351028, %v9915
        %v9925 = vshrl.u32 2102212464, %v9916
        %v9926 = vor.u32 %v9924, %v9925
        %v9927 = vshll.u32 2102212464, %v9915
        %v9928 = vshrl.u32 920167782, %v9916
        %v9929 = vor.u32 %v9927, %v9928
        %v9930 = vshll.u32 920167782, %v9915
        %v9931 = vshrl.u32 1326507024, %v9916
        %v9932 = vor.u32 %v9930, %v9931
        %vm9933 = vcmp.lt.s32.totalorder %v9914, 1
        %vm9934 = vcmp.lt.s32.totalorder %v9914, 2
        %vm9935 = vcmp.lt.s32.totalorder %v9914, 3
        %vm9936 = vcmp.lt.s32.totalorder %v9914, 4
        %v9937 = vsel %vm9933, %v9917, %v9920
        %v9938 = vsel %vm9936, %v9926, 2102212464
        %v9939 = vsel %vm9935, %v9923, %v9938
        %v9940 = vsel %vm9934, %v9937, %v9939
        %v9941 = vsel %vm9933, %v9920, %v9923
        %v9942 = vsel %vm9936, %v9929, 920167782
        %v9943 = vsel %vm9935, %v9926, %v9942
        %v9944 = vsel %vm9934, %v9941, %v9943
        %v9945 = vsel %vm9933, %v9923, %v9926
        %v9946 = vsel %vm9936, %v9932, 1326507024
        %v9947 = vsel %vm9935, %v9929, %v9946
        %v9948 = vsel %vm9934, %v9945, %v9947
        %v9949 = vshll.u32 %v9909, 8
        %v9950 = vand.u32 %v9949, 65535
        %v9951 = vshrl.u32 %v9949, 16
        %v9952 = vand.u32 %v9948, 65535
        %v9953 = vshrl.u32 %v9948, 16
        %v9954 = vmul.u32 %v9950, %v9952
        %v9955 = vmul.u32 %v9950, %v9953
        %v9956 = vmul.u32 %v9951, %v9952
        %v9957 = vmul.u32 %v9951, %v9953
        %v9958 = vshll.u32 %v9955, 16
        %v9959 = vshrl.u32 %v9955, 16
        %v9960 = vshll.u32 %v9956, 16
        %v9961 = vshrl.u32 %v9956, 16
        %vm9962 = vc.u32 %v9954, %v9958
        %v9963 = vsel %vm9962, 1, 0
        %v9964 = vadd.s32 %v9954, %v9958
        %v9965 = vadd.s32 %v9957, %v9963
        %vm9966 = vc.u32 %v9964, %v9960
        %v9967 = vsel %vm9966, 1, 0
        %v9968 = vadd.s32 %v9964, %v9960
        %v9969 = vadd.s32 %v9965, %v9967
        %v9970 = vadd.s32 %v9969, %v9959
        %v9971 = vadd.s32 %v9970, %v9961
        %v9972 = vand.u32 %v9949, 65535
        %v9973 = vshrl.u32 %v9949, 16
        %v9974 = vand.u32 %v9944, 65535
        %v9975 = vshrl.u32 %v9944, 16
        %v9976 = vmul.u32 %v9972, %v9974
        %v9977 = vmul.u32 %v9972, %v9975
        %v9978 = vmul.u32 %v9973, %v9974
        %v9979 = vmul.u32 %v9973, %v9975
        %v9980 = vshll.u32 %v9977, 16
        %v9981 = vshrl.u32 %v9977, 16
        %v9982 = vshll.u32 %v9978, 16
        %v9983 = vshrl.u32 %v9978, 16
        %vm9984 = vc.u32 %v9976, %v9980
        %v9985 = vsel %vm9984, 1, 0
        %v9986 = vadd.s32 %v9976, %v9980
        %v9987 = vadd.s32 %v9979, %v9985
        %vm9988 = vc.u32 %v9986, %v9982
        %v9989 = vsel %vm9988, 1, 0
        %v9990 = vadd.s32 %v9986, %v9982
        %v9991 = vadd.s32 %v9987, %v9989
        %v9992 = vadd.s32 %v9991, %v9981
        %v9993 = vadd.s32 %v9992, %v9983
        %v9994 = vmul.u32 %v9949, %v9940
        %v9995 = vadd.s32 %v9971, %v9990
        %vm9996 = vc.u32 %v9971, %v9990
        %v9997 = vadd.s32 %v9993, 1
        %v9998 = vsel %vm9996, %v9997, %v9993
        %v9999 = vadd.s32 %v9994, %v9998
        %v10000 = vadd.s32 %v9999, 536870912
        %v10001 = vshrl.u32 %v10000, 30
        %v10002 = vshll.u32 %v10001, 30
        %v10003 = vsub.s32 %v9999, %v10002
        %vm10004 = vcmp.lt.s32.totalorder %v10003, 0
        %v10005 = vsub.s32 0, %v10003
        %v10006 = vsel %vm10004, %v10005, %v10003
        %v10007 = vclz %v10006
        %v10008 = vsub.s32 %v10007, 2
        %vm10009 = vcmp.gt.s32.totalorder 0, %v10008
        %v10010 = vsel %vm10009, 0, %v10008
        %v10011 = vsub.s32 32, %v10010
        %v10012 = vshll.u32 %v10003, %v10010
        %v10013 = vshrl.u32 %v9995, %v10011
        %v10014 = vor.u32 %v10012, %v10013
        %v10015 = vsub.s32 4294967266, %v10010
        %v10016 = vadd.s32 %v10015, 127
        %v10017 = vshll.u32 %v10016, 23
        %v10018 = vor.u32 4788187, %v10017
        %v10019 = vand.u32 2147483647, %v10018
        %v10021 = vcvt.s32.f32 %v10014
        %v10022 = vmul.f32 %v10021, %v10019
        %v10023 = vxor.u32 %v10022, 2147483648
        %v10024 = vsel %vm9903, %v10023, %v10022
        %v10025 = vsub.s32 4, %v10001
        %v10026 = vsel %vm9903, %v10025, %v10001
        %v10027 = vsel %vm9902, %v657, %v10024
        %v10028 = vsel %vm9902, 0, %v10026
        %v10029 = vmul.f32 %v10027, %v10027
        %v10030 = vmul.f32 %v10029, -0.001358992
        %v10031 = vadd.f32 %v10030, 0.041655596
        %v10032 = vmul.f32 %v10029, %v10031
        %v10033 = vadd.f32 %v10032, -0.4999988
        %v10034 = vmul.f32 %v10029, %v10033
        %v10035 = vadd.f32 1.0, %v10034
        %v10036 = vmul.f32 %v10027, %v10027
        %v10037 = vmul.f32 %v10036, -0.00019511016
        %v10038 = vadd.f32 %v10037, 0.008332121
        %v10039 = vmul.f32 %v10036, %v10038
        %v10040 = vadd.f32 %v10039, -0.16666654
        %v10041 = vmul.f32 %v10036, %v10040
        %v10042 = vadd.f32 %v10041, 1.0
        %v10043 = vmul.f32 %v10042, %v10027
        %vm10044 = vweird.f32 %v657
        %v10045 = vand.u32 %v10028, 3
        %vm10046 = vcmp.lt.s32.totalorder %v10045, 2
        %vm10047 = vcmp.eq.s32.totalorder %v10045, 0
        %v10048 = vxor.u32 %v10043, 2147483648
        %v10049 = vsel %vm10047, %v10035, %v10048
        %vm10050 = vcmp.eq.s32.totalorder %v10045, 2
        %v10051 = vxor.u32 %v10035, 2147483648
        %v10052 = vsel %vm10050, %v10051, %v10043
        %v10053 = vsel %vm10046, %v10049, %v10052
        %v10054 = vsel %vm10044, nan, %v10053
        %v10055 = vand.u32 2147483647, %v658
        %vm10056 = vcmp.le.f32.partialorder %v10055, 0.7853982
        %vm10057 = vcmp.lt.s32.totalorder %v658, 0
        %v10058 = vand.u32 %v658, 2139095040
        %v10059 = vshrl.u32 %v10058, 23
        %v10060 = vsub.s32 %v10059, 127
        %v10061 = vand.u32 2147483647, %v658
        %v10062 = vand.u32 %v10061, 8388607
        %v10063 = vor.u32 %v10062, 8388608
        %v10064 = vsub.s32 0, %v10063
        %v10065 = vadd.s32 %v10060, 1
        %vm10066 = vcmp.gt.s32.totalorder %v10065, 0
        %v10067 = vsel %vm10066, %v10065, 0
        %v10068 = vshrl.u32 %v10067, 5
        %v10069 = vand.u32 %v10067, 31
        %v10070 = vsub.s32 32, %v10069
        %v10071 = vshrl.u32 683565275, %v10070
        %v10072 = vshll.u32 683565275, %v10069
        %v10073 = vshrl.u32 2475754826, %v10070
        %v10074 = vor.u32 %v10072, %v10073
        %v10075 = vshll.u32 2475754826, %v10069
        %v10076 = vshrl.u32 2131351028, %v10070
        %v10077 = vor.u32 %v10075, %v10076
        %v10078 = vshll.u32 2131351028, %v10069
        %v10079 = vshrl.u32 2102212464, %v10070
        %v10080 = vor.u32 %v10078, %v10079
        %v10081 = vshll.u32 2102212464, %v10069
        %v10082 = vshrl.u32 920167782, %v10070
        %v10083 = vor.u32 %v10081, %v10082
        %v10084 = vshll.u32 920167782, %v10069
        %v10085 = vshrl.u32 1326507024, %v10070
        %v10086 = vor.u32 %v10084, %v10085
        %vm10087 = vcmp.lt.s32.totalorder %v10068, 1
        %vm10088 = vcmp.lt.s32.totalorder %v10068, 2
        %vm10089 = vcmp.lt.s32.totalorder %v10068, 3
        %vm10090 = vcmp.lt.s32.totalorder %v10068, 4
        %v10091 = vsel %vm10087, %v10071, %v10074
        %v10092 = vsel %vm10090, %v10080, 2102212464
        %v10093 = vsel %vm10089, %v10077, %v10092
        %v10094 = vsel %vm10088, %v10091, %v10093
        %v10095 = vsel %vm10087, %v10074, %v10077
        %v10096 = vsel %vm10090, %v10083, 920167782
        %v10097 = vsel %vm10089, %v10080, %v10096
        %v10098 = vsel %vm10088, %v10095, %v10097
        %v10099 = vsel %vm10087, %v10077, %v10080
        %v10100 = vsel %vm10090, %v10086, 1326507024
        %v10101 = vsel %vm10089, %v10083, %v10100
        %v10102 = vsel %vm10088, %v10099, %v10101
        %v10103 = vshll.u32 %v10063, 8
        %v10104 = vand.u32 %v10103, 65535
        %v10105 = vshrl.u32 %v10103, 16
        %v10106 = vand.u32 %v10102, 65535
        %v10107 = vshrl.u32 %v10102, 16
        %v10108 = vmul.u32 %v10104, %v10106
        %v10109 = vmul.u32 %v10104, %v10107
        %v10110 = vmul.u32 %v10105, %v10106
        %v10111 = vmul.u32 %v10105, %v10107
        %v10112 = vshll.u32 %v10109, 16
        %v10113 = vshrl.u32 %v10109, 16
        %v10114 = vshll.u32 %v10110, 16
        %v10115 = vshrl.u32 %v10110, 16
        %vm10116 = vc.u32 %v10108, %v10112
        %v10117 = vsel %vm10116, 1, 0
        %v10118 = vadd.s32 %v10108, %v10112
        %v10119 = vadd.s32 %v10111, %v10117
        %vm10120 = vc.u32 %v10118, %v10114
        %v10121 = vsel %vm10120, 1, 0
        %v10122 = vadd.s32 %v10118, %v10114
        %v10123 = vadd.s32 %v10119, %v10121
        %v10124 = vadd.s32 %v10123, %v10113
        %v10125 = vadd.s32 %v10124, %v10115
        %v10126 = vand.u32 %v10103, 65535
        %v10127 = vshrl.u32 %v10103, 16
        %v10128 = vand.u32 %v10098, 65535
        %v10129 = vshrl.u32 %v10098, 16
        %v10130 = vmul.u32 %v10126, %v10128
        %v10131 = vmul.u32 %v10126, %v10129
        %v10132 = vmul.u32 %v10127, %v10128
        %v10133 = vmul.u32 %v10127, %v10129
        %v10134 = vshll.u32 %v10131, 16
        %v10135 = vshrl.u32 %v10131, 16
        %v10136 = vshll.u32 %v10132, 16
        %v10137 = vshrl.u32 %v10132, 16
        %vm10138 = vc.u32 %v10130, %v10134
        %v10139 = vsel %vm10138, 1, 0
        %v10140 = vadd.s32 %v10130, %v10134
        %v10141 = vadd.s32 %v10133, %v10139
        %vm10142 = vc.u32 %v10140, %v10136
        %v10143 = vsel %vm10142, 1, 0
        %v10144 = vadd.s32 %v10140, %v10136
        %v10145 = vadd.s32 %v10141, %v10143
        %v10146 = vadd.s32 %v10145, %v10135
        %v10147 = vadd.s32 %v10146, %v10137
        %v10148 = vmul.u32 %v10103, %v10094
        %v10149 = vadd.s32 %v10125, %v10144
        %vm10150 = vc.u32 %v10125, %v10144
        %v10151 = vadd.s32 %v10147, 1
        %v10152 = vsel %vm10150, %v10151, %v10147
        %v10153 = vadd.s32 %v10148, %v10152
        %v10154 = vadd.s32 %v10153, 536870912
        %v10155 = vshrl.u32 %v10154, 30
        %v10156 = vshll.u32 %v10155, 30
        %v10157 = vsub.s32 %v10153, %v10156
        %vm10158 = vcmp.lt.s32.totalorder %v10157, 0
        %v10159 = vsub.s32 0, %v10157
        %v10160 = vsel %vm10158, %v10159, %v10157
        %v10161 = vclz %v10160
        %v10162 = vsub.s32 %v10161, 2
        %vm10163 = vcmp.gt.s32.totalorder 0, %v10162
        %v10164 = vsel %vm10163, 0, %v10162
        %v10165 = vsub.s32 32, %v10164
        %v10166 = vshll.u32 %v10157, %v10164
        %v10167 = vshrl.u32 %v10149, %v10165
        %v10168 = vor.u32 %v10166, %v10167
        %v10169 = vsub.s32 4294967266, %v10164
        %v10170 = vadd.s32 %v10169, 127
        %v10171 = vshll.u32 %v10170, 23
        %v10172 = vor.u32 4788187, %v10171
        %v10173 = vand.u32 2147483647, %v10172
        %v10175 = vcvt.s32.f32 %v10168
        %v10176 = vmul.f32 %v10175, %v10173
        %v10177 = vxor.u32 %v10176, 2147483648
        %v10178 = vsel %vm10057, %v10177, %v10176
        %v10179 = vsub.s32 4, %v10155
        %v10180 = vsel %vm10057, %v10179, %v10155
        %v10181 = vsel %vm10056, %v658, %v10178
        %v10182 = vsel %vm10056, 0, %v10180
        %v10183 = vmul.f32 %v10181, %v10181
        %v10184 = vmul.f32 %v10183, -0.001358992
        %v10185 = vadd.f32 %v10184, 0.041655596
        %v10186 = vmul.f32 %v10183, %v10185
        %v10187 = vadd.f32 %v10186, -0.4999988
        %v10188 = vmul.f32 %v10183, %v10187
        %v10189 = vadd.f32 1.0, %v10188
        %v10190 = vmul.f32 %v10181, %v10181
        %v10191 = vmul.f32 %v10190, -0.00019511016
        %v10192 = vadd.f32 %v10191, 0.008332121
        %v10193 = vmul.f32 %v10190, %v10192
        %v10194 = vadd.f32 %v10193, -0.16666654
        %v10195 = vmul.f32 %v10190, %v10194
        %v10196 = vadd.f32 %v10195, 1.0
        %v10197 = vmul.f32 %v10196, %v10181
        %vm10198 = vweird.f32 %v658
        %v10199 = vand.u32 %v10182, 3
        %vm10200 = vcmp.lt.s32.totalorder %v10199, 2
        %vm10201 = vcmp.eq.s32.totalorder %v10199, 0
        %v10202 = vxor.u32 %v10197, 2147483648
        %v10203 = vsel %vm10201, %v10189, %v10202
        %vm10204 = vcmp.eq.s32.totalorder %v10199, 2
        %v10205 = vxor.u32 %v10189, 2147483648
        %v10206 = vsel %vm10204, %v10205, %v10197
        %v10207 = vsel %vm10200, %v10203, %v10206
        %v10208 = vsel %vm10198, nan, %v10207
        %v10209 = vand.u32 2147483647, %v659
        %vm10210 = vcmp.le.f32.partialorder %v10209, 0.7853982
        %vm10211 = vcmp.lt.s32.totalorder %v659, 0
        %v10212 = vand.u32 %v659, 2139095040
        %v10213 = vshrl.u32 %v10212, 23
        %v10214 = vsub.s32 %v10213, 127
        %v10215 = vand.u32 2147483647, %v659
        %v10216 = vand.u32 %v10215, 8388607
        %v10217 = vor.u32 %v10216, 8388608
        %v10218 = vsub.s32 0, %v10217
        %v10219 = vadd.s32 %v10214, 1
        %vm10220 = vcmp.gt.s32.totalorder %v10219, 0
        %v10221 = vsel %vm10220, %v10219, 0
        %v10222 = vshrl.u32 %v10221, 5
        %v10223 = vand.u32 %v10221, 31
        %v10224 = vsub.s32 32, %v10223
        %v10225 = vshrl.u32 683565275, %v10224
        %v10226 = vshll.u32 683565275, %v10223
        %v10227 = vshrl.u32 2475754826, %v10224
        %v10228 = vor.u32 %v10226, %v10227
        %v10229 = vshll.u32 2475754826, %v10223
        %v10230 = vshrl.u32 2131351028, %v10224
        %v10231 = vor.u32 %v10229, %v10230
        %v10232 = vshll.u32 2131351028, %v10223
        %v10233 = vshrl.u32 2102212464, %v10224
        %v10234 = vor.u32 %v10232, %v10233
        %v10235 = vshll.u32 2102212464, %v10223
        %v10236 = vshrl.u32 920167782, %v10224
        %v10237 = vor.u32 %v10235, %v10236
        %v10238 = vshll.u32 920167782, %v10223
        %v10239 = vshrl.u32 1326507024, %v10224
        %v10240 = vor.u32 %v10238, %v10239
        %vm10241 = vcmp.lt.s32.totalorder %v10222, 1
        %vm10242 = vcmp.lt.s32.totalorder %v10222, 2
        %vm10243 = vcmp.lt.s32.totalorder %v10222, 3
        %vm10244 = vcmp.lt.s32.totalorder %v10222, 4
        %v10245 = vsel %vm10241, %v10225, %v10228
        %v10246 = vsel %vm10244, %v10234, 2102212464
        %v10247 = vsel %vm10243, %v10231, %v10246
        %v10248 = vsel %vm10242, %v10245, %v10247
        %v10249 = vsel %vm10241, %v10228, %v10231
        %v10250 = vsel %vm10244, %v10237, 920167782
        %v10251 = vsel %vm10243, %v10234, %v10250
        %v10252 = vsel %vm10242, %v10249, %v10251
        %v10253 = vsel %vm10241, %v10231, %v10234
        %v10254 = vsel %vm10244, %v10240, 1326507024
        %v10255 = vsel %vm10243, %v10237, %v10254
        %v10256 = vsel %vm10242, %v10253, %v10255
        %v10257 = vshll.u32 %v10217, 8
        %v10258 = vand.u32 %v10257, 65535
        %v10259 = vshrl.u32 %v10257, 16
        %v10260 = vand.u32 %v10256, 65535
        %v10261 = vshrl.u32 %v10256, 16
        %v10262 = vmul.u32 %v10258, %v10260
        %v10263 = vmul.u32 %v10258, %v10261
        %v10264 = vmul.u32 %v10259, %v10260
        %v10265 = vmul.u32 %v10259, %v10261
        %v10266 = vshll.u32 %v10263, 16
        %v10267 = vshrl.u32 %v10263, 16
        %v10268 = vshll.u32 %v10264, 16
        %v10269 = vshrl.u32 %v10264, 16
        %vm10270 = vc.u32 %v10262, %v10266
        %v10271 = vsel %vm10270, 1, 0
        %v10272 = vadd.s32 %v10262, %v10266
        %v10273 = vadd.s32 %v10265, %v10271
        %vm10274 = vc.u32 %v10272, %v10268
        %v10275 = vsel %vm10274, 1, 0
        %v10276 = vadd.s32 %v10272, %v10268
        %v10277 = vadd.s32 %v10273, %v10275
        %v10278 = vadd.s32 %v10277, %v10267
        %v10279 = vadd.s32 %v10278, %v10269
        %v10280 = vand.u32 %v10257, 65535
        %v10281 = vshrl.u32 %v10257, 16
        %v10282 = vand.u32 %v10252, 65535
        %v10283 = vshrl.u32 %v10252, 16
        %v10284 = vmul.u32 %v10280, %v10282
        %v10285 = vmul.u32 %v10280, %v10283
        %v10286 = vmul.u32 %v10281, %v10282
        %v10287 = vmul.u32 %v10281, %v10283
        %v10288 = vshll.u32 %v10285, 16
        %v10289 = vshrl.u32 %v10285, 16
        %v10290 = vshll.u32 %v10286, 16
        %v10291 = vshrl.u32 %v10286, 16
        %vm10292 = vc.u32 %v10284, %v10288
        %v10293 = vsel %vm10292, 1, 0
        %v10294 = vadd.s32 %v10284, %v10288
        %v10295 = vadd.s32 %v10287, %v10293
        %vm10296 = vc.u32 %v10294, %v10290
        %v10297 = vsel %vm10296, 1, 0
        %v10298 = vadd.s32 %v10294, %v10290
        %v10299 = vadd.s32 %v10295, %v10297
        %v10300 = vadd.s32 %v10299, %v10289
        %v10301 = vadd.s32 %v10300, %v10291
        %v10302 = vmul.u32 %v10257, %v10248
        %v10303 = vadd.s32 %v10279, %v10298
        %vm10304 = vc.u32 %v10279, %v10298
        %v10305 = vadd.s32 %v10301, 1
        %v10306 = vsel %vm10304, %v10305, %v10301
        %v10307 = vadd.s32 %v10302, %v10306
        %v10308 = vadd.s32 %v10307, 536870912
        %v10309 = vshrl.u32 %v10308, 30
        %v10310 = vshll.u32 %v10309, 30
        %v10311 = vsub.s32 %v10307, %v10310
        %vm10312 = vcmp.lt.s32.totalorder %v10311, 0
        %v10313 = vsub.s32 0, %v10311
        %v10314 = vsel %vm10312, %v10313, %v10311
        %v10315 = vclz %v10314
        %v10316 = vsub.s32 %v10315, 2
        %vm10317 = vcmp.gt.s32.totalorder 0, %v10316
        %v10318 = vsel %vm10317, 0, %v10316
        %v10319 = vsub.s32 32, %v10318
        %v10320 = vshll.u32 %v10311, %v10318
        %v10321 = vshrl.u32 %v10303, %v10319
        %v10322 = vor.u32 %v10320, %v10321
        %v10323 = vsub.s32 4294967266, %v10318
        %v10324 = vadd.s32 %v10323, 127
        %v10325 = vshll.u32 %v10324, 23
        %v10326 = vor.u32 4788187, %v10325
        %v10327 = vand.u32 2147483647, %v10326
        %v10329 = vcvt.s32.f32 %v10322
        %v10330 = vmul.f32 %v10329, %v10327
        %v10331 = vxor.u32 %v10330, 2147483648
        %v10332 = vsel %vm10211, %v10331, %v10330
        %v10333 = vsub.s32 4, %v10309
        %v10334 = vsel %vm10211, %v10333, %v10309
        %v10335 = vsel %vm10210, %v659, %v10332
        %v10336 = vsel %vm10210, 0, %v10334
        %v10337 = vmul.f32 %v10335, %v10335
        %v10338 = vmul.f32 %v10337, -0.001358992
        %v10339 = vadd.f32 %v10338, 0.041655596
        %v10340 = vmul.f32 %v10337, %v10339
        %v10341 = vadd.f32 %v10340, -0.4999988
        %v10342 = vmul.f32 %v10337, %v10341
        %v10343 = vadd.f32 1.0, %v10342
        %v10344 = vmul.f32 %v10335, %v10335
        %v10345 = vmul.f32 %v10344, -0.00019511016
        %v10346 = vadd.f32 %v10345, 0.008332121
        %v10347 = vmul.f32 %v10344, %v10346
        %v10348 = vadd.f32 %v10347, -0.16666654
        %v10349 = vmul.f32 %v10344, %v10348
        %v10350 = vadd.f32 %v10349, 1.0
        %v10351 = vmul.f32 %v10350, %v10335
        %vm10352 = vweird.f32 %v659
        %v10353 = vand.u32 %v10336, 3
        %vm10354 = vcmp.lt.s32.totalorder %v10353, 2
        %vm10355 = vcmp.eq.s32.totalorder %v10353, 0
        %v10356 = vxor.u32 %v10351, 2147483648
        %v10357 = vsel %vm10355, %v10343, %v10356
        %vm10358 = vcmp.eq.s32.totalorder %v10353, 2
        %v10359 = vxor.u32 %v10343, 2147483648
        %v10360 = vsel %vm10358, %v10359, %v10351
        %v10361 = vsel %vm10354, %v10357, %v10360
        %v10362 = vsel %vm10352, nan, %v10361
        %v10363 = vand.u32 2147483647, %v660
        %vm10364 = vcmp.le.f32.partialorder %v10363, 0.7853982
        %vm10365 = vcmp.lt.s32.totalorder %v660, 0
        %v10366 = vand.u32 %v660, 2139095040
        %v10367 = vshrl.u32 %v10366, 23
        %v10368 = vsub.s32 %v10367, 127
        %v10369 = vand.u32 2147483647, %v660
        %v10370 = vand.u32 %v10369, 8388607
        %v10371 = vor.u32 %v10370, 8388608
        %v10372 = vsub.s32 0, %v10371
        %v10373 = vadd.s32 %v10368, 1
        %vm10374 = vcmp.gt.s32.totalorder %v10373, 0
        %v10375 = vsel %vm10374, %v10373, 0
        %v10376 = vshrl.u32 %v10375, 5
        %v10377 = vand.u32 %v10375, 31
        %v10378 = vsub.s32 32, %v10377
        %v10379 = vshrl.u32 683565275, %v10378
        %v10380 = vshll.u32 683565275, %v10377
        %v10381 = vshrl.u32 2475754826, %v10378
        %v10382 = vor.u32 %v10380, %v10381
        %v10383 = vshll.u32 2475754826, %v10377
        %v10384 = vshrl.u32 2131351028, %v10378
        %v10385 = vor.u32 %v10383, %v10384
        %v10386 = vshll.u32 2131351028, %v10377
        %v10387 = vshrl.u32 2102212464, %v10378
        %v10388 = vor.u32 %v10386, %v10387
        %v10389 = vshll.u32 2102212464, %v10377
        %v10390 = vshrl.u32 920167782, %v10378
        %v10391 = vor.u32 %v10389, %v10390
        %v10392 = vshll.u32 920167782, %v10377
        %v10393 = vshrl.u32 1326507024, %v10378
        %v10394 = vor.u32 %v10392, %v10393
        %vm10395 = vcmp.lt.s32.totalorder %v10376, 1
        %vm10396 = vcmp.lt.s32.totalorder %v10376, 2
        %vm10397 = vcmp.lt.s32.totalorder %v10376, 3
        %vm10398 = vcmp.lt.s32.totalorder %v10376, 4
        %v10399 = vsel %vm10395, %v10379, %v10382
        %v10400 = vsel %vm10398, %v10388, 2102212464
        %v10401 = vsel %vm10397, %v10385, %v10400
        %v10402 = vsel %vm10396, %v10399, %v10401
        %v10403 = vsel %vm10395, %v10382, %v10385
        %v10404 = vsel %vm10398, %v10391, 920167782
        %v10405 = vsel %vm10397, %v10388, %v10404
        %v10406 = vsel %vm10396, %v10403, %v10405
        %v10407 = vsel %vm10395, %v10385, %v10388
        %v10408 = vsel %vm10398, %v10394, 1326507024
        %v10409 = vsel %vm10397, %v10391, %v10408
        %v10410 = vsel %vm10396, %v10407, %v10409
        %v10411 = vshll.u32 %v10371, 8
        %v10412 = vand.u32 %v10411, 65535
        %v10413 = vshrl.u32 %v10411, 16
        %v10414 = vand.u32 %v10410, 65535
        %v10415 = vshrl.u32 %v10410, 16
        %v10416 = vmul.u32 %v10412, %v10414
        %v10417 = vmul.u32 %v10412, %v10415
        %v10418 = vmul.u32 %v10413, %v10414
        %v10419 = vmul.u32 %v10413, %v10415
        %v10420 = vshll.u32 %v10417, 16
        %v10421 = vshrl.u32 %v10417, 16
        %v10422 = vshll.u32 %v10418, 16
        %v10423 = vshrl.u32 %v10418, 16
        %vm10424 = vc.u32 %v10416, %v10420
        %v10425 = vsel %vm10424, 1, 0
        %v10426 = vadd.s32 %v10416, %v10420
        %v10427 = vadd.s32 %v10419, %v10425
        %vm10428 = vc.u32 %v10426, %v10422
        %v10429 = vsel %vm10428, 1, 0
        %v10430 = vadd.s32 %v10426, %v10422
        %v10431 = vadd.s32 %v10427, %v10429
        %v10432 = vadd.s32 %v10431, %v10421
        %v10433 = vadd.s32 %v10432, %v10423
        %v10434 = vand.u32 %v10411, 65535
        %v10435 = vshrl.u32 %v10411, 16
        %v10436 = vand.u32 %v10406, 65535
        %v10437 = vshrl.u32 %v10406, 16
        %v10438 = vmul.u32 %v10434, %v10436
        %v10439 = vmul.u32 %v10434, %v10437
        %v10440 = vmul.u32 %v10435, %v10436
        %v10441 = vmul.u32 %v10435, %v10437
        %v10442 = vshll.u32 %v10439, 16
        %v10443 = vshrl.u32 %v10439, 16
        %v10444 = vshll.u32 %v10440, 16
        %v10445 = vshrl.u32 %v10440, 16
        %vm10446 = vc.u32 %v10438, %v10442
        %v10447 = vsel %vm10446, 1, 0
        %v10448 = vadd.s32 %v10438, %v10442
        %v10449 = vadd.s32 %v10441, %v10447
        %vm10450 = vc.u32 %v10448, %v10444
        %v10451 = vsel %vm10450, 1, 0
        %v10452 = vadd.s32 %v10448, %v10444
        %v10453 = vadd.s32 %v10449, %v10451
        %v10454 = vadd.s32 %v10453, %v10443
        %v10455 = vadd.s32 %v10454, %v10445
        %v10456 = vmul.u32 %v10411, %v10402
        %v10457 = vadd.s32 %v10433, %v10452
        %vm10458 = vc.u32 %v10433, %v10452
        %v10459 = vadd.s32 %v10455, 1
        %v10460 = vsel %vm10458, %v10459, %v10455
        %v10461 = vadd.s32 %v10456, %v10460
        %v10462 = vadd.s32 %v10461, 536870912
        %v10463 = vshrl.u32 %v10462, 30
        %v10464 = vshll.u32 %v10463, 30
        %v10465 = vsub.s32 %v10461, %v10464
        %vm10466 = vcmp.lt.s32.totalorder %v10465, 0
        %v10467 = vsub.s32 0, %v10465
        %v10468 = vsel %vm10466, %v10467, %v10465
        %v10469 = vclz %v10468
        %v10470 = vsub.s32 %v10469, 2
        %vm10471 = vcmp.gt.s32.totalorder 0, %v10470
        %v10472 = vsel %vm10471, 0, %v10470
        %v10473 = vsub.s32 32, %v10472
        %v10474 = vshll.u32 %v10465, %v10472
        %v10475 = vshrl.u32 %v10457, %v10473
        %v10476 = vor.u32 %v10474, %v10475
        %v10477 = vsub.s32 4294967266, %v10472
        %v10478 = vadd.s32 %v10477, 127
        %v10479 = vshll.u32 %v10478, 23
        %v10480 = vor.u32 4788187, %v10479
        %v10481 = vand.u32 2147483647, %v10480
        %v10483 = vcvt.s32.f32 %v10476
        %v10484 = vmul.f32 %v10483, %v10481
        %v10485 = vxor.u32 %v10484, 2147483648
        %v10486 = vsel %vm10365, %v10485, %v10484
        %v10487 = vsub.s32 4, %v10463
        %v10488 = vsel %vm10365, %v10487, %v10463
        %v10489 = vsel %vm10364, %v660, %v10486
        %v10490 = vsel %vm10364, 0, %v10488
        %v10491 = vmul.f32 %v10489, %v10489
        %v10492 = vmul.f32 %v10491, -0.001358992
        %v10493 = vadd.f32 %v10492, 0.041655596
        %v10494 = vmul.f32 %v10491, %v10493
        %v10495 = vadd.f32 %v10494, -0.4999988
        %v10496 = vmul.f32 %v10491, %v10495
        %v10497 = vadd.f32 1.0, %v10496
        %v10498 = vmul.f32 %v10489, %v10489
        %v10499 = vmul.f32 %v10498, -0.00019511016
        %v10500 = vadd.f32 %v10499, 0.008332121
        %v10501 = vmul.f32 %v10498, %v10500
        %v10502 = vadd.f32 %v10501, -0.16666654
        %v10503 = vmul.f32 %v10498, %v10502
        %v10504 = vadd.f32 %v10503, 1.0
        %v10505 = vmul.f32 %v10504, %v10489
        %vm10506 = vweird.f32 %v660
        %v10507 = vand.u32 %v10490, 3
        %vm10508 = vcmp.lt.s32.totalorder %v10507, 2
        %vm10509 = vcmp.eq.s32.totalorder %v10507, 0
        %v10510 = vxor.u32 %v10505, 2147483648
        %v10511 = vsel %vm10509, %v10497, %v10510
        %vm10512 = vcmp.eq.s32.totalorder %v10507, 2
        %v10513 = vxor.u32 %v10497, 2147483648
        %v10514 = vsel %vm10512, %v10513, %v10505
        %v10515 = vsel %vm10508, %v10511, %v10514
        %v10516 = vsel %vm10506, nan, %v10515
        %10517 = vst [vmem:[%s137] sm:$0xff] %v814
        %10518 = vst [vmem:[%s137 + $0x8] sm:$0xff] %v968
        %10519 = vst [vmem:[%s137 + $0x10] sm:$0xff] %v1122
        %10520 = vst [vmem:[%s137 + $0x18] sm:$0xff] %v1276
        %10521 = vst [vmem:[%s137 + $0x20] sm:$0xff] %v1430
        %10522 = vst [vmem:[%s137 + $0x28] sm:$0xff] %v1584
        %10523 = vst [vmem:[%s137 + $0x30] sm:$0xff] %v1738
        %10524 = vst [vmem:[%s137 + $0x38] sm:$0xff] %v1892
        %10525 = vst [vmem:[%s137 + $0x40] sm:$0xff] %v2046
        %10526 = vst [vmem:[%s137 + $0x48] sm:$0xff] %v2200
        %10527 = vst [vmem:[%s137 + $0x50] sm:$0xff] %v2354
        %10528 = vst [vmem:[%s137 + $0x58] sm:$0xff] %v2508
        %10529 = vst [vmem:[%s137 + $0x60] sm:$0xff] %v2662
        %10530 = vst [vmem:[%s137 + $0x68] sm:$0xff] %v2816
        %10531 = vst [vmem:[%s137 + $0x70] sm:$0xff] %v2970
        %10532 = vst [vmem:[%s137 + $0x78] sm:$0xff] %v3124
        %10533 = vst [vmem:[%s137 + $0x80] sm:$0xff] %v3278
        %10534 = vst [vmem:[%s137 + $0x88] sm:$0xff] %v3432
        %10535 = vst [vmem:[%s137 + $0x90] sm:$0xff] %v3586
        %10536 = vst [vmem:[%s137 + $0x98] sm:$0xff] %v3740
        %10537 = vst [vmem:[%s137 + $0xa0] sm:$0xff] %v3894
        %10538 = vst [vmem:[%s137 + $0xa8] sm:$0xff] %v4048
        %10539 = vst [vmem:[%s137 + $0xb0] sm:$0xff] %v4202
        %10540 = vst [vmem:[%s137 + $0xb8] sm:$0xff] %v4356
        %10541 = vst [vmem:[%s137 + $0xc0] sm:$0xff] %v4510
        %10542 = vst [vmem:[%s137 + $0xc8] sm:$0xff] %v4664
        %10543 = vst [vmem:[%s137 + $0xd0] sm:$0xff] %v4818
        %10544 = vst [vmem:[%s137 + $0xd8] sm:$0xff] %v4972
        %10545 = vst [vmem:[%s137 + $0xe0] sm:$0xff] %v5126
        %10546 = vst [vmem:[%s137 + $0xe8] sm:$0xff] %v5280
        %10547 = vst [vmem:[%s137 + $0xf0] sm:$0xff] %v5434
        %10548 = vst [vmem:[%s137 + $0xf8] sm:$0xff] %v5588
        %10549 = vst [vmem:[%s137 + $0x100] sm:$0xff] %v5742
        %10550 = vst [vmem:[%s137 + $0x108] sm:$0xff] %v5896
        %10551 = vst [vmem:[%s137 + $0x110] sm:$0xff] %v6050
        %10552 = vst [vmem:[%s137 + $0x118] sm:$0xff] %v6204
        %10553 = vst [vmem:[%s137 + $0x120] sm:$0xff] %v6358
        %10554 = vst [vmem:[%s137 + $0x128] sm:$0xff] %v6512
        %10555 = vst [vmem:[%s137 + $0x130] sm:$0xff] %v6666
        %10556 = vst [vmem:[%s137 + $0x138] sm:$0xff] %v6820
        %10557 = vst [vmem:[%s137 + $0x140] sm:$0xff] %v6974
        %10558 = vst [vmem:[%s137 + $0x148] sm:$0xff] %v7128
        %10559 = vst [vmem:[%s137 + $0x150] sm:$0xff] %v7282
        %10560 = vst [vmem:[%s137 + $0x158] sm:$0xff] %v7436
        %10561 = vst [vmem:[%s137 + $0x160] sm:$0xff] %v7590
        %10562 = vst [vmem:[%s137 + $0x168] sm:$0xff] %v7744
        %10563 = vst [vmem:[%s137 + $0x170] sm:$0xff] %v7898
        %10564 = vst [vmem:[%s137 + $0x178] sm:$0xff] %v8052
        %10565 = vst [vmem:[%s137 + $0x180] sm:$0xff] %v8206
        %10566 = vst [vmem:[%s137 + $0x188] sm:$0xff] %v8360
        %10567 = vst [vmem:[%s137 + $0x190] sm:$0xff] %v8514
        %10568 = vst [vmem:[%s137 + $0x198] sm:$0xff] %v8668
        %10569 = vst [vmem:[%s137 + $0x1a0] sm:$0xff] %v8822
        %10570 = vst [vmem:[%s137 + $0x1a8] sm:$0xff] %v8976
        %10571 = vst [vmem:[%s137 + $0x1b0] sm:$0xff] %v9130
        %10572 = vst [vmem:[%s137 + $0x1b8] sm:$0xff] %v9284
        %10573 = vst [vmem:[%s137 + $0x1c0] sm:$0xff] %v9438
        %10574 = vst [vmem:[%s137 + $0x1c8] sm:$0xff] %v9592
        %10575 = vst [vmem:[%s137 + $0x1d0] sm:$0xff] %v9746
        %10576 = vst [vmem:[%s137 + $0x1d8] sm:$0xff] %v9900
        %10577 = vst [vmem:[%s137 + $0x1e0] sm:$0xff] %v10054
        %10578 = vst [vmem:[%s137 + $0x1e8] sm:$0xff] %v10208
        %10579 = vst [vmem:[%s137 + $0x1f0] sm:$0xff] %v10362
        %10580 = vst [vmem:[%s137 + $0x1f8] sm:$0xff] %v10516
        %s10581 = sand.u32 %s71, 1
        %s10582 = scalar_lea.sflag [#allocation3], %s10581
        %s10583 = sand.u32 %s71, 1
        %s10584 = smul.addr %s10583, 512
        %s10585 = scalar_lea.vmem [#allocation2], %s10584
        // Predicated region
        $region29: #{time_encoder_mixer.1} parent=27 // pred_check
          %p10586 = pneg %p81
        $region30: #{time_encoder_mixer.1} parent=27 // pred_check_branch
          %10588 = sbr.rel (%p10586) target = $region32
        $region31: #{time_encoder_mixer.1} parent=27 // pred_region
          %s10589 = smul.u32 64, %s16
          %10591 = vsyncadd %s10582, 0
          %s10592 = smul.addr %s10589, 8
          %s10593 = scalar_lea.hbm %s2, %s10592
          %s10594 = sshll.u32 %s10585, 4
          %s10595 = int_to_ptr.vmem [resolvable:$true] %s10594
          %s10596 = sshll.u32 %s10593, 4
          %s10597 = int_to_ptr.hbm [resolvable:$true] %s10596
          %10602 = dma.vmem_to_hbm [thread:$0]  %s10595, 8192, %s10597, %s10582, 128, 128, 8
        $region32: #{time_encoder_mixer.1} parent=27 // pred_fallthru
          _
      $region28: #{time_encoder_mixer.1} parent=5 // pred_fallthru
        _
      %p10603 = scmp.le.s32.totalorder 2, %s11
      // Predicated region
      $region33: #{time_encoder_mixer.1} parent=5 // pred_check
        %p10604 = pneg %p10603
      $region34: #{time_encoder_mixer.1} parent=5 // pred_check_branch
        %10606 = sbr.rel (%p10604) target = $region36
      $region35: #{time_encoder_mixer.1} parent=5 // pred_region
        %s10607 = ssub.s32 %s11, 2
        // Predicated region
        $region37: #{time_encoder_mixer.1} parent=35 // pred_check
          %p10608 = pneg %p87
        $region38: #{time_encoder_mixer.1} parent=35 // pred_check_branch
          %10610 = sbr.rel (%p10608) target = $region40
        $region39: #{time_encoder_mixer.1} parent=35 // pred_region
          %s10611 = sand.u32 %s72, 1
          %s10612 = scalar_lea.sflag [#allocation3], %s10611
          %s10613 = sand.u32 %s72, 1
          %s10614 = smul.addr %s10613, 512
          %s10615 = scalar_lea.vmem [#allocation2], %s10614
          %10617 = dma.done %s10612, 8192
        $region40: #{time_encoder_mixer.1} parent=35 // pred_fallthru
          _
      $region36: #{time_encoder_mixer.1} parent=5 // pred_fallthru
        _
    $region6: #{time_encoder_mixer.1} parent=1 // loop_footer
      %s15 = sadd.s32 1, %s11
    $region7: #{time_encoder_mixer.1} parent=1 // loop_footer_branch
      %10 = sbr.rel target = $region3
    $region8: #{time_encoder_mixer.1} parent=1 // loop_exit
      _
    %10618 = vsyncpa [#allocation3], 1
    %s10619 = scalar_lea.sflag [#allocation3], 1
    %10620 = vsyncpa %s10619, 1

</llo_original>
